<compile_context>
chip_gen: v5e
topology: v5e:2x2
jax: 0.10.0
libtpu: 0.0.40
codegen_flags: <defaults>
</compile_context>

<pallas_src>
import functools

import jax
import jax.numpy as jnp
import numpy as np
from jax import lax
from jax.experimental import pallas as pl
from jax.experimental.pallas import tpu as pltpu


def _round_up(x, m):
    return (x + m - 1) // m * m


def _classifier_kernel(x_ref, w_ref, b_ref, o_ref, slab_ref, *,
                       taps, H, W, Cin, compute_dtype):
    """One batch element per grid step.

    x_ref   : (1, H, W, Cin)      f32 unpadded NHWC input
    w_ref   : (K, Cout_pad)       compute_dtype; row t*Cin + c == weights[b,i,j,c,:]
                                  with tap index t = b*9 + i*3 + j
    b_ref   : (1, Cout_pad)       f32, biases summed over branches, zero padded
    o_ref   : (1, H*W, Cout_pad)  lane-dense flat output
    slab_ref: (H, W, K)           f32 VMEM im2col scratch (zeros = conv padding)
    """
    K = slab_ref.shape[-1]

    # Zero the whole slab every step: columns of out-of-range taps and the halo
    # of partially valid taps must be zero (== the conv's zero padding).  Done
    # per step so it is also correct when the batch grid is split across cores.
    slab_ref[...] = jnp.zeros_like(slab_ref)

    # Scatter the valid window of every (branch, tap) shifted view into its
    # K-column block.  All offsets / sizes are Python ints -> fully static.
    for t, (dy, dx) in enumerate(taps):
        hh = H - abs(dy)
        ww = W - abs(dx)
        if hh <= 0 or ww <= 0:
            continue  # this tap only ever reads zero padding -> stays zero
        y0 = max(0, -dy)
        x0 = max(0, -dx)
        slab_ref[pl.ds(y0, hh), pl.ds(x0, ww), pl.ds(t * Cin, Cin)] = (
            x_ref[0, pl.ds(y0 + dy, hh), pl.ds(x0 + dx, ww), :]
        )

    # Single fused big-K matmul on the MXU: (H*W, K) x (K, Cout_pad).
    slab = slab_ref[...].reshape(H * W, K).astype(compute_dtype)
    acc = jnp.dot(slab, w_ref[...], preferred_element_type=jnp.float32)
    acc = acc + b_ref[...].astype(jnp.float32)          # (1, Cout_pad) broadcast
    o_ref[0] = acc.astype(o_ref.dtype)


def classifier_module_pallas(x_nchw, weights, biases, dilations,
                             compute_dtype=jnp.bfloat16):
    """weights: (B, 3, 3, Cin, Cout) HWIO per branch; biases: (B, Cout)."""
    N, Cin, H, W = x_nchw.shape
    B = weights.shape[0]
    Cout = weights.shape[-1]
    Cout_pad = _round_up(Cout, 128)          # lane-dense output / weight slab
    K = B * 9 * Cin                          # fused contraction depth

    # NHWC so channels map to the 128-lane axis.
    x_nhwc = jnp.transpose(x_nchw, (0, 2, 3, 1)).astype(jnp.float32)

    # Weights -> lane-dense 2-D slab (K, Cout_pad); row order (b, i, j, c)
    # matches the tap ordering used when building the im2col slab.
    w2d = weights.reshape(K, Cout)
    w2d = jnp.pad(w2d, ((0, 0), (0, Cout_pad - Cout))).astype(compute_dtype)

    # forward() sums the branch outputs, so the biases simply sum.
    bias_sum = jnp.sum(biases.astype(jnp.float32), axis=0)
    bias_pad = jnp.pad(bias_sum, (0, Cout_pad - Cout)).reshape(1, Cout_pad)

    # Tap spatial offsets; index t = b*9 + i*3 + j.
    taps = []
    for d in dilations:
        for i in range(3):
            for j in range(3):
                taps.append(((i - 1) * d, (j - 1) * d))

    kernel = functools.partial(
        _classifier_kernel, taps=tuple(taps), H=H, W=W, Cin=Cin,
        compute_dtype=compute_dtype)

    out_flat = pl.pallas_call(
        kernel,
        out_shape=jax.ShapeDtypeStruct((N, H * W, Cout_pad), jnp.float32),
        grid=(N,),
        in_specs=[
            pl.BlockSpec((1, H, W, Cin), lambda n: (n, 0, 0, 0)),
            pl.BlockSpec((K, Cout_pad), lambda n: (0, 0)),
            pl.BlockSpec((1, Cout_pad), lambda n: (0, 0)),
        ],
        out_specs=pl.BlockSpec((1, H * W, Cout_pad), lambda n: (n, 0, 0)),
        scratch_shapes=[pltpu.VMEM((H, W, K), jnp.float32)],
        compiler_params=pltpu.CompilerParams(
            # Parallel batch axis -> shards across v7x's two TensorCores.
            dimension_semantics=("parallel",),
        ),
    )(x_nhwc, w2d, bias_pad)

    # Wrapper-side layout plumbing: drop the Cout padding, restore NCHW.
    out = out_flat[:, :, :Cout].reshape(N, H, W, Cout)
    return jnp.transpose(out, (0, 3, 1, 2)).astype(x_nchw.dtype)


def classifier_module_ref(x_nchw, weights, biases, dilations):
    """Pure-JAX reference (lax conv), mirrors the PyTorch forward exactly."""
    out = None
    for b, d in enumerate(dilations):
        w_oihw = jnp.transpose(weights[b], (3, 2, 0, 1))  # (Cout, Cin, 3, 3)
        y = lax.conv_general_dilated(
            x_nchw, w_oihw,
            window_strides=(1, 1),
            padding=((d, d), (d, d)),
            rhs_dilation=(d, d),
            dimension_numbers=("NCHW", "OIHW", "NCHW"),
        )
        y = y + biases[b][None, :, None, None]
        out = y if out is None else out + y
    return out


if __name__ == "__main__":
    # Small shapes consistent with the module:
    # Classifier_Module([6,12,18,24], [6,12,18,24], NoLabels=5, input_channel=8)
    dilation_series = [6, 12, 18, 24]
    NoLabels = 5
    input_channel = 8
    N, H, W = 2, 20, 20
    num_branches = len(dilation_series)

    key = jax.random.PRNGKey(0)
    kx, kw, kb = jax.random.split(key, 3)

    x = jax.random.normal(kx, (N, input_channel, H, W), dtype=jnp.float32)
    # weight.data.normal_(0, 0.01), stored HWIO per branch: (B, 3, 3, Cin, Cout)
    weights = 0.01 * jax.random.normal(
        kw, (num_branches, 3, 3, input_channel, NoLabels), dtype=jnp.float32)
    # deterministic small bias init (PyTorch default is uniform; synthetic here)
    biases = 0.1 * jax.random.normal(kb, (num_branches, NoLabels),
                                     dtype=jnp.float32)

    ref = jax.block_until_ready(
        classifier_module_ref(x, weights, biases, dilation_series))

    # Exact path: f32 MXU inputs, tight tolerance against the lax.conv reference.
    out_f32 = jax.block_until_ready(
        classifier_module_pallas(x, weights, biases, dilation_series,
                                 compute_dtype=jnp.float32))
    assert out_f32.shape == (N, NoLabels, H, W), out_f32.shape
    np.testing.assert_allclose(np.asarray(out_f32), np.asarray(ref),
                               rtol=1e-4, atol=1e-5)

    # Default perf path: bf16 MXU inputs with f32 accumulation.
    out_bf16 = jax.block_until_ready(
        classifier_module_pallas(x, weights, biases, dilation_series,
                                 compute_dtype=jnp.bfloat16))
    assert out_bf16.shape == (N, NoLabels, H, W), out_bf16.shape
    np.testing.assert_allclose(np.asarray(out_bf16), np.asarray(ref),
                               rtol=2e-2, atol=2e-2)

    print("KERNEL_OK")
</pallas_src>

<mosaic_0001>
module attributes {stable_mosaic.version = 11 : i64} {
  func.func @_classifier_kernel(%arg0: i32, %arg1: memref<1x20x20x8xf32, #tpu.memory_space<vmem>>, %arg2: memref<288x128xf32, #tpu.memory_space<vmem>>, %arg3: memref<1x128xf32, #tpu.memory_space<vmem>>, %arg4: memref<1x400x128xf32, #tpu.memory_space<vmem>>, %arg5: memref<20x20x288xf32, #tpu.memory_space<vmem>>) attributes {dimension_semantics = [#tpu.dimension_semantics<parallel>], iteration_bounds = array<i64: 2>, scalar_prefetch = 0 : i64, scratch_operands = 1 : i64, tpu.core_type = #tpu.core_type<tc>, window_params = [{transform_indices = @transform_0, window_bounds = array<i64: 1, 20, 20, 8>}, {pipeline_mode = #tpu.pipeline_mode<synchronous>, transform_indices = @transform_1, window_bounds = array<i64: 288, 128>}, {pipeline_mode = #tpu.pipeline_mode<synchronous>, transform_indices = @transform_2, window_bounds = array<i64: 1, 128>}, {transform_indices = @transform_3, window_bounds = array<i64: 1, 400, 128>}]} {
    %cst = arith.constant 0.000000e+00 : f32
    %0 = vector.broadcast %cst : f32 to vector<20x20x288xf32>
    %c0 = arith.constant 0 : index
    %c0_0 = arith.constant 0 : index
    %c0_1 = arith.constant 0 : index
    %1 = vector.load %arg5[%c0, %c0_0, %c0_1] : memref<20x20x288xf32, #tpu.memory_space<vmem>>, vector<20x20x288xf32>
    tpu.vector_store %arg5[%c0, %c0_0, %c0_1], %0 {strides = array<i32>} : memref<20x20x288xf32, #tpu.memory_space<vmem>>, vector<20x20x288xf32>,
    %c0_2 = arith.constant 0 : index
    %c0_3 = arith.constant 0 : index
    %c0_4 = arith.constant 0 : index
    %c0_5 = arith.constant 0 : index
    %2 = vector.load %arg1[%c0_2, %c0_3, %c0_4, %c0_5] : memref<1x20x20x8xf32, #tpu.memory_space<vmem>>, vector<1x14x14x8xf32>
    %3 = vector.shape_cast %2 : vector<1x14x14x8xf32> to vector<14x14x8xf32>
    %c6 = arith.constant 6 : index
    %c6_6 = arith.constant 6 : index
    %c0_7 = arith.constant 0 : index
    %4 = vector.load %arg5[%c6, %c6_6, %c0_7] : memref<20x20x288xf32, #tpu.memory_space<vmem>>, vector<14x14x8xf32>
    tpu.vector_store %arg5[%c6, %c6_6, %c0_7], %3 {strides = array<i32>} : memref<20x20x288xf32, #tpu.memory_space<vmem>>, vector<14x14x8xf32>,
    %c0_8 = arith.constant 0 : index
    %c0_9 = arith.constant 0 : index
    %c0_10 = arith.constant 0 : index
    %c0_11 = arith.constant 0 : index
    %5 = vector.load %arg1[%c0_8, %c0_9, %c0_10, %c0_11] : memref<1x20x20x8xf32, #tpu.memory_space<vmem>>, vector<1x14x20x8xf32>
    %6 = vector.shape_cast %5 : vector<1x14x20x8xf32> to vector<14x20x8xf32>
    %c6_12 = arith.constant 6 : index
    %c0_13 = arith.constant 0 : index
    %c8 = arith.constant 8 : index
    %7 = vector.load %arg5[%c6_12, %c0_13, %c8] : memref<20x20x288xf32, #tpu.memory_space<vmem>>, vector<14x20x8xf32>
    tpu.vector_store %arg5[%c6_12, %c0_13, %c8], %6 {strides = array<i32>} : memref<20x20x288xf32, #tpu.memory_space<vmem>>, vector<14x20x8xf32>,
    %c0_14 = arith.constant 0 : index
    %c0_15 = arith.constant 0 : index
    %c6_16 = arith.constant 6 : index
    %c0_17 = arith.constant 0 : index
    %8 = vector.load %arg1[%c0_14, %c0_15, %c6_16, %c0_17] : memref<1x20x20x8xf32, #tpu.memory_space<vmem>>, vector<1x14x14x8xf32>
    %9 = vector.shape_cast %8 : vector<1x14x14x8xf32> to vector<14x14x8xf32>
    %c6_18 = arith.constant 6 : index
    %c0_19 = arith.constant 0 : index
    %c16 = arith.constant 16 : index
    %10 = vector.load %arg5[%c6_18, %c0_19, %c16] : memref<20x20x288xf32, #tpu.memory_space<vmem>>, vector<14x14x8xf32>
    tpu.vector_store %arg5[%c6_18, %c0_19, %c16], %9 {strides = array<i32>} : memref<20x20x288xf32, #tpu.memory_space<vmem>>, vector<14x14x8xf32>,
    %c0_20 = arith.constant 0 : index
    %c0_21 = arith.constant 0 : index
    %c0_22 = arith.constant 0 : index
    %c0_23 = arith.constant 0 : index
    %11 = vector.load %arg1[%c0_20, %c0_21, %c0_22, %c0_23] : memref<1x20x20x8xf32, #tpu.memory_space<vmem>>, vector<1x20x14x8xf32>
    %12 = vector.shape_cast %11 : vector<1x20x14x8xf32> to vector<20x14x8xf32>
    %c0_24 = arith.constant 0 : index
    %c6_25 = arith.constant 6 : index
    %c24 = arith.constant 24 : index
    %13 = vector.load %arg5[%c0_24, %c6_25, %c24] : memref<20x20x288xf32, #tpu.memory_space<vmem>>, vector<20x14x8xf32>
    tpu.vector_store %arg5[%c0_24, %c6_25, %c24], %12 {strides = array<i32>} : memref<20x20x288xf32, #tpu.memory_space<vmem>>, vector<20x14x8xf32>,
    %c0_26 = arith.constant 0 : index
    %c0_27 = arith.constant 0 : index
    %c0_28 = arith.constant 0 : index
    %c0_29 = arith.constant 0 : index
    %14 = vector.load %arg1[%c0_26, %c0_27, %c0_28, %c0_29] : memref<1x20x20x8xf32, #tpu.memory_space<vmem>>, vector<1x20x20x8xf32>
    %15 = vector.shape_cast %14 : vector<1x20x20x8xf32> to vector<20x20x8xf32>
    %c0_30 = arith.constant 0 : index
    %c0_31 = arith.constant 0 : index
    %c32 = arith.constant 32 : index
    %16 = vector.load %arg5[%c0_30, %c0_31, %c32] : memref<20x20x288xf32, #tpu.memory_space<vmem>>, vector<20x20x8xf32>
    tpu.vector_store %arg5[%c0_30, %c0_31, %c32], %15 {strides = array<i32>} : memref<20x20x288xf32, #tpu.memory_space<vmem>>, vector<20x20x8xf32>,
    %c0_32 = arith.constant 0 : index
    %c0_33 = arith.constant 0 : index
    %c6_34 = arith.constant 6 : index
    %c0_35 = arith.constant 0 : index
    %17 = vector.load %arg1[%c0_32, %c0_33, %c6_34, %c0_35] : memref<1x20x20x8xf32, #tpu.memory_space<vmem>>, vector<1x20x14x8xf32>
    %18 = vector.shape_cast %17 : vector<1x20x14x8xf32> to vector<20x14x8xf32>
    %c0_36 = arith.constant 0 : index
    %c0_37 = arith.constant 0 : index
    %c40 = arith.constant 40 : index
    %19 = vector.load %arg5[%c0_36, %c0_37, %c40] : memref<20x20x288xf32, #tpu.memory_space<vmem>>, vector<20x14x8xf32>
    tpu.vector_store %arg5[%c0_36, %c0_37, %c40], %18 {strides = array<i32>} : memref<20x20x288xf32, #tpu.memory_space<vmem>>, vector<20x14x8xf32>,
    %c0_38 = arith.constant 0 : index
    %c6_39 = arith.constant 6 : index
    %c0_40 = arith.constant 0 : index
    %c0_41 = arith.constant 0 : index
    %20 = vector.load %arg1[%c0_38, %c6_39, %c0_40, %c0_41] : memref<1x20x20x8xf32, #tpu.memory_space<vmem>>, vector<1x14x14x8xf32>
    %21 = vector.shape_cast %20 : vector<1x14x14x8xf32> to vector<14x14x8xf32>
    %c0_42 = arith.constant 0 : index
    %c6_43 = arith.constant 6 : index
    %c48 = arith.constant 48 : index
    %22 = vector.load %arg5[%c0_42, %c6_43, %c48] : memref<20x20x288xf32, #tpu.memory_space<vmem>>, vector<14x14x8xf32>
    tpu.vector_store %arg5[%c0_42, %c6_43, %c48], %21 {strides = array<i32>} : memref<20x20x288xf32, #tpu.memory_space<vmem>>, vector<14x14x8xf32>,
    %c0_44 = arith.constant 0 : index
    %c6_45 = arith.constant 6 : index
    %c0_46 = arith.constant 0 : index
    %c0_47 = arith.constant 0 : index
    %23 = vector.load %arg1[%c0_44, %c6_45, %c0_46, %c0_47] : memref<1x20x20x8xf32, #tpu.memory_space<vmem>>, vector<1x14x20x8xf32>
    %24 = vector.shape_cast %23 : vector<1x14x20x8xf32> to vector<14x20x8xf32>
    %c0_48 = arith.constant 0 : index
    %c0_49 = arith.constant 0 : index
    %c56 = arith.constant 56 : index
    %25 = vector.load %arg5[%c0_48, %c0_49, %c56] : memref<20x20x288xf32, #tpu.memory_space<vmem>>, vector<14x20x8xf32>
    tpu.vector_store %arg5[%c0_48, %c0_49, %c56], %24 {strides = array<i32>} : memref<20x20x288xf32, #tpu.memory_space<vmem>>, vector<14x20x8xf32>,
    %c0_50 = arith.constant 0 : index
    %c6_51 = arith.constant 6 : index
    %c6_52 = arith.constant 6 : index
    %c0_53 = arith.constant 0 : index
    %26 = vector.load %arg1[%c0_50, %c6_51, %c6_52, %c0_53] : memref<1x20x20x8xf32, #tpu.memory_space<vmem>>, vector<1x14x14x8xf32>
    %27 = vector.shape_cast %26 : vector<1x14x14x8xf32> to vector<14x14x8xf32>
    %c0_54 = arith.constant 0 : index
    %c0_55 = arith.constant 0 : index
    %c64 = arith.constant 64 : index
    %28 = vector.load %arg5[%c0_54, %c0_55, %c64] : memref<20x20x288xf32, #tpu.memory_space<vmem>>, vector<14x14x8xf32>
    tpu.vector_store %arg5[%c0_54, %c0_55, %c64], %27 {strides = array<i32>} : memref<20x20x288xf32, #tpu.memory_space<vmem>>, vector<14x14x8xf32>,
    %c0_56 = arith.constant 0 : index
    %c0_57 = arith.constant 0 : index
    %c0_58 = arith.constant 0 : index
    %c0_59 = arith.constant 0 : index
    %29 = vector.load %arg1[%c0_56, %c0_57, %c0_58, %c0_59] : memref<1x20x20x8xf32, #tpu.memory_space<vmem>>, vector<1x8x8x8xf32>
    %30 = vector.shape_cast %29 : vector<1x8x8x8xf32> to vector<8x8x8xf32>
    %c12 = arith.constant 12 : index
    %c12_60 = arith.constant 12 : index
    %c72 = arith.constant 72 : index
    %31 = vector.load %arg5[%c12, %c12_60, %c72] : memref<20x20x288xf32, #tpu.memory_space<vmem>>, vector<8x8x8xf32>
    tpu.vector_store %arg5[%c12, %c12_60, %c72], %30 {strides = array<i32>} : memref<20x20x288xf32, #tpu.memory_space<vmem>>, vector<8x8x8xf32>,
    %c0_61 = arith.constant 0 : index
    %c0_62 = arith.constant 0 : index
    %c0_63 = arith.constant 0 : index
    %c0_64 = arith.constant 0 : index
    %32 = vector.load %arg1[%c0_61, %c0_62, %c0_63, %c0_64] : memref<1x20x20x8xf32, #tpu.memory_space<vmem>>, vector<1x8x20x8xf32>
    %33 = vector.shape_cast %32 : vector<1x8x20x8xf32> to vector<8x20x8xf32>
    %c12_65 = arith.constant 12 : index
    %c0_66 = arith.constant 0 : index
    %c80 = arith.constant 80 : index
    %34 = vector.load %arg5[%c12_65, %c0_66, %c80] : memref<20x20x288xf32, #tpu.memory_space<vmem>>, vector<8x20x8xf32>
    tpu.vector_store %arg5[%c12_65, %c0_66, %c80], %33 {strides = array<i32>} : memref<20x20x288xf32, #tpu.memory_space<vmem>>, vector<8x20x8xf32>,
    %c0_67 = arith.constant 0 : index
    %c0_68 = arith.constant 0 : index
    %c12_69 = arith.constant 12 : index
    %c0_70 = arith.constant 0 : index
    %35 = vector.load %arg1[%c0_67, %c0_68, %c12_69, %c0_70] : memref<1x20x20x8xf32, #tpu.memory_space<vmem>>, vector<1x8x8x8xf32>
    %36 = vector.shape_cast %35 : vector<1x8x8x8xf32> to vector<8x8x8xf32>
    %c12_71 = arith.constant 12 : index
    %c0_72 = arith.constant 0 : index
    %c88 = arith.constant 88 : index
    %37 = vector.load %arg5[%c12_71, %c0_72, %c88] : memref<20x20x288xf32, #tpu.memory_space<vmem>>, vector<8x8x8xf32>
    tpu.vector_store %arg5[%c12_71, %c0_72, %c88], %36 {strides = array<i32>} : memref<20x20x288xf32, #tpu.memory_space<vmem>>, vector<8x8x8xf32>,
    %c0_73 = arith.constant 0 : index
    %c0_74 = arith.constant 0 : index
    %c0_75 = arith.constant 0 : index
    %c0_76 = arith.constant 0 : index
    %38 = vector.load %arg1[%c0_73, %c0_74, %c0_75, %c0_76] : memref<1x20x20x8xf32, #tpu.memory_space<vmem>>, vector<1x20x8x8xf32>
    %39 = vector.shape_cast %38 : vector<1x20x8x8xf32> to vector<20x8x8xf32>
    %c0_77 = arith.constant 0 : index
    %c12_78 = arith.constant 12 : index
    %c96 = arith.constant 96 : index
    %40 = vector.load %arg5[%c0_77, %c12_78, %c96] : memref<20x20x288xf32, #tpu.memory_space<vmem>>, vector<20x8x8xf32>
    tpu.vector_store %arg5[%c0_77, %c12_78, %c96], %39 {strides = array<i32>} : memref<20x20x288xf32, #tpu.memory_space<vmem>>, vector<20x8x8xf32>,
    %c0_79 = arith.constant 0 : index
    %c0_80 = arith.constant 0 : index
    %c0_81 = arith.constant 0 : index
    %c0_82 = arith.constant 0 : index
    %41 = vector.load %arg1[%c0_79, %c0_80, %c0_81, %c0_82] : memref<1x20x20x8xf32, #tpu.memory_space<vmem>>, vector<1x20x20x8xf32>
    %42 = vector.shape_cast %41 : vector<1x20x20x8xf32> to vector<20x20x8xf32>
    %c0_83 = arith.constant 0 : index
    %c0_84 = arith.constant 0 : index
    %c104 = arith.constant 104 : index
    %43 = vector.load %arg5[%c0_83, %c0_84, %c104] : memref<20x20x288xf32, #tpu.memory_space<vmem>>, vector<20x20x8xf32>
    tpu.vector_store %arg5[%c0_83, %c0_84, %c104], %42 {strides = array<i32>} : memref<20x20x288xf32, #tpu.memory_space<vmem>>, vector<20x20x8xf32>,
    %c0_85 = arith.constant 0 : index
    %c0_86 = arith.constant 0 : index
    %c12_87 = arith.constant 12 : index
    %c0_88 = arith.constant 0 : index
    %44 = vector.load %arg1[%c0_85, %c0_86, %c12_87, %c0_88] : memref<1x20x20x8xf32, #tpu.memory_space<vmem>>, vector<1x20x8x8xf32>
    %45 = vector.shape_cast %44 : vector<1x20x8x8xf32> to vector<20x8x8xf32>
    %c0_89 = arith.constant 0 : index
    %c0_90 = arith.constant 0 : index
    %c112 = arith.constant 112 : index
    %46 = vector.load %arg5[%c0_89, %c0_90, %c112] : memref<20x20x288xf32, #tpu.memory_space<vmem>>, vector<20x8x8xf32>
    tpu.vector_store %arg5[%c0_89, %c0_90, %c112], %45 {strides = array<i32>} : memref<20x20x288xf32, #tpu.memory_space<vmem>>, vector<20x8x8xf32>,
    %c0_91 = arith.constant 0 : index
    %c12_92 = arith.constant 12 : index
    %c0_93 = arith.constant 0 : index
    %c0_94 = arith.constant 0 : index
    %47 = vector.load %arg1[%c0_91, %c12_92, %c0_93, %c0_94] : memref<1x20x20x8xf32, #tpu.memory_space<vmem>>, vector<1x8x8x8xf32>
    %48 = vector.shape_cast %47 : vector<1x8x8x8xf32> to vector<8x8x8xf32>
    %c0_95 = arith.constant 0 : index
    %c12_96 = arith.constant 12 : index
    %c120 = arith.constant 120 : index
    %49 = vector.load %arg5[%c0_95, %c12_96, %c120] : memref<20x20x288xf32, #tpu.memory_space<vmem>>, vector<8x8x8xf32>
    tpu.vector_store %arg5[%c0_95, %c12_96, %c120], %48 {strides = array<i32>} : memref<20x20x288xf32, #tpu.memory_space<vmem>>, vector<8x8x8xf32>,
    %c0_97 = arith.constant 0 : index
    %c12_98 = arith.constant 12 : index
    %c0_99 = arith.constant 0 : index
    %c0_100 = arith.constant 0 : index
    %50 = vector.load %arg1[%c0_97, %c12_98, %c0_99, %c0_100] : memref<1x20x20x8xf32, #tpu.memory_space<vmem>>, vector<1x8x20x8xf32>
    %51 = vector.shape_cast %50 : vector<1x8x20x8xf32> to vector<8x20x8xf32>
    %c0_101 = arith.constant 0 : index
    %c0_102 = arith.constant 0 : index
    %c128 = arith.constant 128 : index
    %52 = vector.load %arg5[%c0_101, %c0_102, %c128] : memref<20x20x288xf32, #tpu.memory_space<vmem>>, vector<8x20x8xf32>
    tpu.vector_store %arg5[%c0_101, %c0_102, %c128], %51 {strides = array<i32>} : memref<20x20x288xf32, #tpu.memory_space<vmem>>, vector<8x20x8xf32>,
    %c0_103 = arith.constant 0 : index
    %c12_104 = arith.constant 12 : index
    %c12_105 = arith.constant 12 : index
    %c0_106 = arith.constant 0 : index
    %53 = vector.load %arg1[%c0_103, %c12_104, %c12_105, %c0_106] : memref<1x20x20x8xf32, #tpu.memory_space<vmem>>, vector<1x8x8x8xf32>
    %54 = vector.shape_cast %53 : vector<1x8x8x8xf32> to vector<8x8x8xf32>
    %c0_107 = arith.constant 0 : index
    %c0_108 = arith.constant 0 : index
    %c136 = arith.constant 136 : index
    %55 = vector.load %arg5[%c0_107, %c0_108, %c136] : memref<20x20x288xf32, #tpu.memory_space<vmem>>, vector<8x8x8xf32>
    tpu.vector_store %arg5[%c0_107, %c0_108, %c136], %54 {strides = array<i32>} : memref<20x20x288xf32, #tpu.memory_space<vmem>>, vector<8x8x8xf32>,
    %c0_109 = arith.constant 0 : index
    %c0_110 = arith.constant 0 : index
    %c0_111 = arith.constant 0 : index
    %c0_112 = arith.constant 0 : index
    %56 = vector.load %arg1[%c0_109, %c0_110, %c0_111, %c0_112] : memref<1x20x20x8xf32, #tpu.memory_space<vmem>>, vector<1x2x2x8xf32>
    %57 = vector.shape_cast %56 : vector<1x2x2x8xf32> to vector<2x2x8xf32>
    %c18 = arith.constant 18 : index
    %c18_113 = arith.constant 18 : index
    %c144 = arith.constant 144 : index
    %58 = vector.load %arg5[%c18, %c18_113, %c144] : memref<20x20x288xf32, #tpu.memory_space<vmem>>, vector<2x2x8xf32>
    tpu.vector_store %arg5[%c18, %c18_113, %c144], %57 {strides = array<i32>} : memref<20x20x288xf32, #tpu.memory_space<vmem>>, vector<2x2x8xf32>,
    %c0_114 = arith.constant 0 : index
    %c0_115 = arith.constant 0 : index
    %c0_116 = arith.constant 0 : index
    %c0_117 = arith.constant 0 : index
    %59 = vector.load %arg1[%c0_114, %c0_115, %c0_116, %c0_117] : memref<1x20x20x8xf32, #tpu.memory_space<vmem>>, vector<1x2x20x8xf32>
    %60 = vector.shape_cast %59 : vector<1x2x20x8xf32> to vector<2x20x8xf32>
    %c18_118 = arith.constant 18 : index
    %c0_119 = arith.constant 0 : index
    %c152 = arith.constant 152 : index
    %61 = vector.load %arg5[%c18_118, %c0_119, %c152] : memref<20x20x288xf32, #tpu.memory_space<vmem>>, vector<2x20x8xf32>
    tpu.vector_store %arg5[%c18_118, %c0_119, %c152], %60 {strides = array<i32>} : memref<20x20x288xf32, #tpu.memory_space<vmem>>, vector<2x20x8xf32>,
    %c0_120 = arith.constant 0 : index
    %c0_121 = arith.constant 0 : index
    %c18_122 = arith.constant 18 : index
    %c0_123 = arith.constant 0 : index
    %62 = vector.load %arg1[%c0_120, %c0_121, %c18_122, %c0_123] : memref<1x20x20x8xf32, #tpu.memory_space<vmem>>, vector<1x2x2x8xf32>
    %63 = vector.shape_cast %62 : vector<1x2x2x8xf32> to vector<2x2x8xf32>
    %c18_124 = arith.constant 18 : index
    %c0_125 = arith.constant 0 : index
    %c160 = arith.constant 160 : index
    %64 = vector.load %arg5[%c18_124, %c0_125, %c160] : memref<20x20x288xf32, #tpu.memory_space<vmem>>, vector<2x2x8xf32>
    tpu.vector_store %arg5[%c18_124, %c0_125, %c160], %63 {strides = array<i32>} : memref<20x20x288xf32, #tpu.memory_space<vmem>>, vector<2x2x8xf32>,
    %c0_126 = arith.constant 0 : index
    %c0_127 = arith.constant 0 : index
    %c0_128 = arith.constant 0 : index
    %c0_129 = arith.constant 0 : index
    %65 = vector.load %arg1[%c0_126, %c0_127, %c0_128, %c0_129] : memref<1x20x20x8xf32, #tpu.memory_space<vmem>>, vector<1x20x2x8xf32>
    %66 = vector.shape_cast %65 : vector<1x20x2x8xf32> to vector<20x2x8xf32>
    %c0_130 = arith.constant 0 : index
    %c18_131 = arith.constant 18 : index
    %c168 = arith.constant 168 : index
    %67 = vector.load %arg5[%c0_130, %c18_131, %c168] : memref<20x20x288xf32, #tpu.memory_space<vmem>>, vector<20x2x8xf32>
    tpu.vector_store %arg5[%c0_130, %c18_131, %c168], %66 {strides = array<i32>} : memref<20x20x288xf32, #tpu.memory_space<vmem>>, vector<20x2x8xf32>,
    %c0_132 = arith.constant 0 : index
    %c0_133 = arith.constant 0 : index
    %c0_134 = arith.constant 0 : index
    %c0_135 = arith.constant 0 : index
    %68 = vector.load %arg1[%c0_132, %c0_133, %c0_134, %c0_135] : memref<1x20x20x8xf32, #tpu.memory_space<vmem>>, vector<1x20x20x8xf32>
    %69 = vector.shape_cast %68 : vector<1x20x20x8xf32> to vector<20x20x8xf32>
    %c0_136 = arith.constant 0 : index
    %c0_137 = arith.constant 0 : index
    %c176 = arith.constant 176 : index
    %70 = vector.load %arg5[%c0_136, %c0_137, %c176] : memref<20x20x288xf32, #tpu.memory_space<vmem>>, vector<20x20x8xf32>
    tpu.vector_store %arg5[%c0_136, %c0_137, %c176], %69 {strides = array<i32>} : memref<20x20x288xf32, #tpu.memory_space<vmem>>, vector<20x20x8xf32>,
    %c0_138 = arith.constant 0 : index
    %c0_139 = arith.constant 0 : index
    %c18_140 = arith.constant 18 : index
    %c0_141 = arith.constant 0 : index
    %71 = vector.load %arg1[%c0_138, %c0_139, %c18_140, %c0_141] : memref<1x20x20x8xf32, #tpu.memory_space<vmem>>, vector<1x20x2x8xf32>
    %72 = vector.shape_cast %71 : vector<1x20x2x8xf32> to vector<20x2x8xf32>
    %c0_142 = arith.constant 0 : index
    %c0_143 = arith.constant 0 : index
    %c184 = arith.constant 184 : index
    %73 = vector.load %arg5[%c0_142, %c0_143, %c184] : memref<20x20x288xf32, #tpu.memory_space<vmem>>, vector<20x2x8xf32>
    tpu.vector_store %arg5[%c0_142, %c0_143, %c184], %72 {strides = array<i32>} : memref<20x20x288xf32, #tpu.memory_space<vmem>>, vector<20x2x8xf32>,
    %c0_144 = arith.constant 0 : index
    %c18_145 = arith.constant 18 : index
    %c0_146 = arith.constant 0 : index
    %c0_147 = arith.constant 0 : index
    %74 = vector.load %arg1[%c0_144, %c18_145, %c0_146, %c0_147] : memref<1x20x20x8xf32, #tpu.memory_space<vmem>>, vector<1x2x2x8xf32>
    %75 = vector.shape_cast %74 : vector<1x2x2x8xf32> to vector<2x2x8xf32>
    %c0_148 = arith.constant 0 : index
    %c18_149 = arith.constant 18 : index
    %c192 = arith.constant 192 : index
    %76 = vector.load %arg5[%c0_148, %c18_149, %c192] : memref<20x20x288xf32, #tpu.memory_space<vmem>>, vector<2x2x8xf32>
    tpu.vector_store %arg5[%c0_148, %c18_149, %c192], %75 {strides = array<i32>} : memref<20x20x288xf32, #tpu.memory_space<vmem>>, vector<2x2x8xf32>,
    %c0_150 = arith.constant 0 : index
    %c18_151 = arith.constant 18 : index
    %c0_152 = arith.constant 0 : index
    %c0_153 = arith.constant 0 : index
    %77 = vector.load %arg1[%c0_150, %c18_151, %c0_152, %c0_153] : memref<1x20x20x8xf32, #tpu.memory_space<vmem>>, vector<1x2x20x8xf32>
    %78 = vector.shape_cast %77 : vector<1x2x20x8xf32> to vector<2x20x8xf32>
    %c0_154 = arith.constant 0 : index
    %c0_155 = arith.constant 0 : index
    %c200 = arith.constant 200 : index
    %79 = vector.load %arg5[%c0_154, %c0_155, %c200] : memref<20x20x288xf32, #tpu.memory_space<vmem>>, vector<2x20x8xf32>
    tpu.vector_store %arg5[%c0_154, %c0_155, %c200], %78 {strides = array<i32>} : memref<20x20x288xf32, #tpu.memory_space<vmem>>, vector<2x20x8xf32>,
    %c0_156 = arith.constant 0 : index
    %c18_157 = arith.constant 18 : index
    %c18_158 = arith.constant 18 : index
    %c0_159 = arith.constant 0 : index
    %80 = vector.load %arg1[%c0_156, %c18_157, %c18_158, %c0_159] : memref<1x20x20x8xf32, #tpu.memory_space<vmem>>, vector<1x2x2x8xf32>
    %81 = vector.shape_cast %80 : vector<1x2x2x8xf32> to vector<2x2x8xf32>
    %c0_160 = arith.constant 0 : index
    %c0_161 = arith.constant 0 : index
    %c208 = arith.constant 208 : index
    %82 = vector.load %arg5[%c0_160, %c0_161, %c208] : memref<20x20x288xf32, #tpu.memory_space<vmem>>, vector<2x2x8xf32>
    tpu.vector_store %arg5[%c0_160, %c0_161, %c208], %81 {strides = array<i32>} : memref<20x20x288xf32, #tpu.memory_space<vmem>>, vector<2x2x8xf32>,
    %c0_162 = arith.constant 0 : index
    %c0_163 = arith.constant 0 : index
    %c0_164 = arith.constant 0 : index
    %c0_165 = arith.constant 0 : index
    %83 = vector.load %arg1[%c0_162, %c0_163, %c0_164, %c0_165] : memref<1x20x20x8xf32, #tpu.memory_space<vmem>>, vector<1x20x20x8xf32>
    %84 = vector.shape_cast %83 : vector<1x20x20x8xf32> to vector<20x20x8xf32>
    %c0_166 = arith.constant 0 : index
    %c0_167 = arith.constant 0 : index
    %c248 = arith.constant 248 : index
    %85 = vector.load %arg5[%c0_166, %c0_167, %c248] : memref<20x20x288xf32, #tpu.memory_space<vmem>>, vector<20x20x8xf32>
    tpu.vector_store %arg5[%c0_166, %c0_167, %c248], %84 {strides = array<i32>} : memref<20x20x288xf32, #tpu.memory_space<vmem>>, vector<20x20x8xf32>,
    %c0_168 = arith.constant 0 : index
    %c0_169 = arith.constant 0 : index
    %c0_170 = arith.constant 0 : index
    %86 = vector.load %arg5[%c0_168, %c0_169, %c0_170] : memref<20x20x288xf32, #tpu.memory_space<vmem>>, vector<20x20x288xf32>
    %87 = vector.shape_cast %86 : vector<20x20x288xf32> to vector<400x288xf32>
    %c0_171 = arith.constant 0 : index
    %c0_172 = arith.constant 0 : index
    %88 = vector.load %arg2[%c0_171, %c0_172] : memref<288x128xf32, #tpu.memory_space<vmem>>, vector<288x128xf32>
    %cst_173 = arith.constant dense<0.000000e+00> : vector<400x128xf32>
    %89 = tpu.matmul %87, %88, %cst_173 {dimension_numbers = #tpu.dot_dimension_numbers<[1], [0], [0], [1], [0, 0, 1, 1], [], []>} : vector<400x288xf32>, vector<288x128xf32>, vector<400x128xf32> -> vector<400x128xf32>
    %c0_174 = arith.constant 0 : index
    %c0_175 = arith.constant 0 : index
    %90 = vector.load %arg3[%c0_174, %c0_175] : memref<1x128xf32, #tpu.memory_space<vmem>>, vector<1x128xf32>
    %91 = vector.broadcast %90 : vector<1x128xf32> to vector<400x128xf32>
    %92 = arith.addf %89, %91 : vector<400x128xf32>
    %c0_176 = arith.constant 0 : index
    %c0_177 = arith.constant 0 : index
    %c0_178 = arith.constant 0 : index
    %93 = vector.load %arg4[%c0_176, %c0_177, %c0_178] : memref<1x400x128xf32, #tpu.memory_space<vmem>>, vector<1x400x128xf32>
    %94 = vector.shape_cast %93 : vector<1x400x128xf32> to vector<400x128xf32>
    %95 = vector.shape_cast %92 : vector<400x128xf32> to vector<1x400x128xf32>
    tpu.vector_store %arg4[%c0_176, %c0_177, %c0_178], %95 {strides = array<i32>} : memref<1x400x128xf32, #tpu.memory_space<vmem>>, vector<1x400x128xf32>,
    return
  }
  func.func @transform_0(%arg0: i32) -> (i32, i32, i32, i32) {
    %c0_i32 = arith.constant 0 : i32
    %c0_i32_0 = arith.constant 0 : i32
    %c0_i32_1 = arith.constant 0 : i32
    %c0_i32_2 = arith.constant 0 : i32
    return %arg0, %c0_i32, %c0_i32_0, %c0_i32_1 : i32, i32, i32, i32
  }
  func.func @transform_1(%arg0: i32) -> (i32, i32) {
    %c0_i32 = arith.constant 0 : i32
    %c0_i32_0 = arith.constant 0 : i32
    %c0_i32_1 = arith.constant 0 : i32
    return %c0_i32, %c0_i32_0 : i32, i32
  }
  func.func @transform_2(%arg0: i32) -> (i32, i32) {
    %c0_i32 = arith.constant 0 : i32
    %c0_i32_0 = arith.constant 0 : i32
    %c0_i32_1 = arith.constant 0 : i32
    return %c0_i32, %c0_i32_0 : i32, i32
  }
  func.func @transform_3(%arg0: i32) -> (i32, i32, i32) {
    %c0_i32 = arith.constant 0 : i32
    %c0_i32_0 = arith.constant 0 : i32
    %c0_i32_1 = arith.constant 0 : i32
    return %arg0, %c0_i32, %c0_i32_0 : i32, i32, i32
  }
}

</mosaic_0001>

<llo_original>
// kernel: tpu_custom_call.1
$region0: #{tpu_custom_call.1}
  #allocation0 [shape = 'u32[]', space=smem, size = 0x4, offset = 0x4, fixed_abs, tag = 'smem constant byte address 0x4 - core index']
  #allocation1 [shape = 'u32[72,128]{1,0:T(1,128)}', space=vmem, size = 0x9000, scoped, tag = 'internal scratch']
  #allocation2 [shape = 'f32[20,20,288]{2,1,0:T(8,128)}', space=vmem, size = 0xb4000, scoped, tag = 'scratch operand']
  %s0 = inlined_call_operand.vmem [shape: f32[2,20,20,8], index: 0, kind: input, shape index: {}]
  %s1 = inlined_call_operand.vmem [shape: f32[288,128], index: 1, kind: input, shape index: {}]
  %s2 = inlined_call_operand.vmem [shape: f32[1,128], index: 2, kind: input, shape index: {}]
  %s3 = inlined_call_operand.hbm [shape: f32[2,400,128], index: 3, kind: output, shape index: {}]
  %s4 = sld [smem:[#allocation0]]
  $region45: #{tpu_custom_call.1} parent=0
    _
  %s6 = ssub.s32 1, %s4
  %s7 = scalar_select 0, %s6, %s4
  $region1: #{tpu_custom_call.1} parent=0
    #allocation3 [shape = 'u8[409600]{0}', space=vmem, size = 0x64000, scoped, tag = 'output window, operand 0']
    #allocation4 [shape = 's32[2]{0}', space=sflag, size = 0x8, scoped, tag = 'scoped memory for tpu_custom_call.1']
    %8 = vsyncpa [#allocation4], 0
    %s9 = scalar_lea.sflag [#allocation4], 1
    %10 = vsyncpa %s9, 0
    loop: start=0, step=1, limit=4
    $region2: #{tpu_custom_call.1} parent=1 // loop_pre_header
      _
    $region3: #{tpu_custom_call.1} parent=1 // loop_header
      %s12 = sphi 0, %s16
      %p13 = scmp.ge.s32.totalorder %s12, 4
      %s22 = sphi 0, %s24
      %s25 = sphi 0, %s22
      %s26 = sphi 0, %s25
      %s42 = sphi 0, %s26
      %s46 = sphi 0, %s46
      %s48 = sphi 0, %s46
      %s49 = sphi 0, %s48
      %s63 = sphi 0, %s49
      %s67 = sphi 0, %s67
      %s69 = sphi 0, %s67
      %s70 = sphi 0, %s69
      %s84 = sphi 0, %s70
      %s90 = sphi 0, %s92
      %s93 = sphi 0, %s90
      %s94 = sphi 0, %s93
      %s110 = sphi 0, %s94
    $region4: #{tpu_custom_call.1} parent=1 // loop_header_branch
      %15 = sbr.rel (%p13) target = $region8
    $region5: #{tpu_custom_call.1} parent=1 // loop_body
      %s17 = ssub.s32 %s12, 1
      %s18 = ssub.s32 %s12, 2
      %s19 = sadd.s32 %s12, 1
      %s20 = ssub.s32 %s12, %s19
      %p21 = scmp.eq.s32.totalorder %s20, 0
      %s23 = sadd.s32 %s22, 1
      %s24 = scalar_select %p21, %s22, %s23
      %p27 = pneg %p21
      %p28 = scmp.eq.s32.totalorder %s12, 1
      %p29 = por %p27, %p28
      %p30 = scmp.ne.s32.totalorder %s22, %s25
      %p31 = scmp.eq.s32.totalorder %s12, 0
      %p32 = por %p30, %p31
      %p33 = scmp.ne.s32.totalorder %s22, %s25
      %p34 = scmp.eq.s32.totalorder %s17, 1
      %p35 = por %p33, %p34
      %p36 = scmp.ne.s32.totalorder %s25, %s26
      %p37 = scmp.eq.s32.totalorder %s17, 0
      %p38 = por %p36, %p37
      %p39 = scmp.ne.s32.totalorder %s25, %s26
      %p40 = scmp.eq.s32.totalorder %s18, 1
      %p41 = por %p39, %p40
      %p43 = scmp.ne.s32.totalorder %s26, %s42
      %p44 = scmp.eq.s32.totalorder %s18, 0
      %p45 = por %p43, %p44
      %s47 = sadd.s32 %s46, 1
      %p50 = scmp.eq.s32.totalorder %s12, 1
      %p51 = scmp.ne.s32.totalorder %s46, %s48
      %p52 = scmp.eq.s32.totalorder %s12, 0
      %p53 = por %p51, %p52
      %p54 = scmp.ne.s32.totalorder %s46, %s48
      %p55 = scmp.eq.s32.totalorder %s17, 1
      %p56 = por %p54, %p55
      %p57 = scmp.ne.s32.totalorder %s48, %s49
      %p58 = scmp.eq.s32.totalorder %s17, 0
      %p59 = por %p57, %p58
      %p60 = scmp.ne.s32.totalorder %s48, %s49
      %p61 = scmp.eq.s32.totalorder %s18, 1
      %p62 = por %p60, %p61
      %p64 = scmp.ne.s32.totalorder %s49, %s63
      %p65 = scmp.eq.s32.totalorder %s18, 0
      %p66 = por %p64, %p65
      %s68 = sadd.s32 %s67, 1
      %p71 = scmp.eq.s32.totalorder %s12, 1
      %p72 = scmp.ne.s32.totalorder %s67, %s69
      %p73 = scmp.eq.s32.totalorder %s12, 0
      %p74 = por %p72, %p73
      %p75 = scmp.ne.s32.totalorder %s67, %s69
      %p76 = scmp.eq.s32.totalorder %s17, 1
      %p77 = por %p75, %p76
      %p78 = scmp.ne.s32.totalorder %s69, %s70
      %p79 = scmp.eq.s32.totalorder %s17, 0
      %p80 = por %p78, %p79
      %p81 = scmp.ne.s32.totalorder %s69, %s70
      %p82 = scmp.eq.s32.totalorder %s18, 1
      %p83 = por %p81, %p82
      %p85 = scmp.ne.s32.totalorder %s70, %s84
      %p86 = scmp.eq.s32.totalorder %s18, 0
      %p87 = por %p85, %p86
      %s88 = ssub.s32 %s12, %s19
      %p89 = scmp.eq.s32.totalorder %s88, 0
      %s91 = sadd.s32 %s90, 1
      %s92 = scalar_select %p89, %s90, %s91
      %p95 = pneg %p89
      %p96 = scmp.eq.s32.totalorder %s12, 1
      %p97 = por %p95, %p96
      %p98 = scmp.ne.s32.totalorder %s90, %s93
      %p99 = scmp.eq.s32.totalorder %s12, 0
      %p100 = por %p98, %p99
      %p101 = scmp.ne.s32.totalorder %s90, %s93
      %p102 = scmp.eq.s32.totalorder %s17, 1
      %p103 = por %p101, %p102
      %p104 = scmp.ne.s32.totalorder %s93, %s94
      %p105 = scmp.eq.s32.totalorder %s17, 0
      %p106 = por %p104, %p105
      %p107 = scmp.ne.s32.totalorder %s93, %s94
      %p108 = scmp.eq.s32.totalorder %s18, 1
      %p109 = por %p107, %p108
      %p111 = scmp.ne.s32.totalorder %s94, %s110
      %p112 = scmp.eq.s32.totalorder %s18, 0
      %p113 = por %p111, %p112
      %p114 = scmp.le.s32.totalorder 1, %s12
      %p115 = scmp.lt.s32.totalorder %s12, 3
      %p116 = pnand %p114, %p115
      %p117 = pneg %p116
      // Predicated region
      $region9: #{tpu_custom_call.1} parent=5 // pred_check
        _
      $region10: #{tpu_custom_call.1} parent=5 // pred_check_branch
        %119 = sbr.rel (%p116) target = $region12
      $region11: #{tpu_custom_call.1} parent=5 // pred_region
        %s120 = ssub.s32 %s12, 1
        // Predicated region
        $region13: #{tpu_custom_call.1} parent=11 // pred_check
          %p121 = pneg %p59
        $region14: #{tpu_custom_call.1} parent=11 // pred_check_branch
          %123 = sbr.rel (%p121) target = $region16
        $region15: #{tpu_custom_call.1} parent=11 // pred_region
          _
        $region16: #{tpu_custom_call.1} parent=11 // pred_fallthru
          _
        // Predicated region
        $region17: #{tpu_custom_call.1} parent=11 // pred_check
          %p124 = pneg %p80
        $region18: #{tpu_custom_call.1} parent=11 // pred_check_branch
          %126 = sbr.rel (%p124) target = $region20
        $region19: #{tpu_custom_call.1} parent=11 // pred_region
          _
        $region20: #{tpu_custom_call.1} parent=11 // pred_fallthru
          _
      $region12: #{tpu_custom_call.1} parent=5 // pred_fallthru
        _
      %p127 = scmp.lt.s32.totalorder %s12, 2
      // Predicated region
      $region21: #{tpu_custom_call.1} parent=5 // pred_check
        %p128 = pneg %p127
      $region22: #{tpu_custom_call.1} parent=5 // pred_check_branch
        %130 = sbr.rel (%p128) target = $region24
      $region23: #{tpu_custom_call.1} parent=5 // pred_region
        // Predicated region
        $region25: #{tpu_custom_call.1} parent=23 // pred_check
          %p131 = pneg %p32
        $region26: #{tpu_custom_call.1} parent=23 // pred_check_branch
          %133 = sbr.rel (%p131) target = $region28
        $region27: #{tpu_custom_call.1} parent=23 // pred_region
          %p134 = scmp.lt.s32.totalorder %s12, 1
          %s135 = scalar_select %p134, %s12, 1
          %s136 = smul.addr %s135, 60
          %s137 = smul.addr %s136, 8
          %s138 = scalar_lea.vmem %s0, %s137
        $region28: #{tpu_custom_call.1} parent=23 // pred_fallthru
          _
      $region24: #{tpu_custom_call.1} parent=5 // pred_fallthru
        _
      %p139 = scmp.le.s32.totalorder 1, %s12
      %p140 = scmp.lt.s32.totalorder %s12, 3
      %p141 = pnand %p139, %p140
      %p142 = pneg %p141
      // Predicated region
      $region29: #{tpu_custom_call.1} parent=5 // pred_check
        _
      $region30: #{tpu_custom_call.1} parent=5 // pred_check_branch
        %144 = sbr.rel (%p141) target = $region32
      $region31: #{tpu_custom_call.1} parent=5 // pred_region
        %s145 = ssub.s32 %s12, 1
        %p146 = scmp.lt.s32.totalorder %s17, 1
        %s147 = scalar_select %p146, %s17, 1
        %s148 = smul.addr %s147, 60
        %s149 = smul.addr %s148, 8
        %s150 = scalar_lea.vmem %s0, %s149
        %p151 = pneg %p38
        %p152 = pneg %p35
        %p153 = pneg %p59
        %p154 = pneg %p56
        %p155 = pneg %p80
        %p156 = pneg %p77
        %p157 = pneg %p106
        %p158 = pneg %p103
        %s159 = sand.u32 %s93, 1
        %s160 = scalar_lea.sflag [#allocation4], %s159
        %s161 = sand.u32 %s93, 1
        %s162 = smul.addr %s161, 400
        %s163 = scalar_lea.vmem [#allocation3], %s162
        %p164 = scmp.lt.s32.totalorder %s17, 1
        %s165 = scalar_select %p164, %s17, 1
        %s166 = smul.addr %s165, 60
        %s167 = smul.addr %s166, 8
        %s168 = scalar_lea.vmem %s0, %s167
        %169 = vst [vmem:[#allocation2] sm:$0xff] 0.0
        %170 = vst [vmem:[#allocation2 + $0x8] sm:$0xff] 0.0
        %vm171 = vcmask 261120
        %172 = vst.msk [vmem:[#allocation2 + $0x10] sm:$0xff] %vm171, 0.0
        %173 = vst [vmem:[#allocation2 + $0x18] sm:$0xff] 0.0
        %174 = vst [vmem:[#allocation2 + $0x20] sm:$0xff] 0.0
        %175 = vst.msk [vmem:[#allocation2 + $0x28] sm:$0xff] %vm171, 0.0
        %176 = vst [vmem:[#allocation2 + $0x30] sm:$0xf] 0.0
        %177 = vst [vmem:[#allocation2 + $0x38] sm:$0xf] 0.0
        %vm178 = vcmask 257024
        %179 = vst.msk [vmem:[#allocation2 + $0x40] sm:$0xf] %vm178, 0.0
        %180 = vst [vmem:[#allocation2 + $0x48] sm:$0xff] 0.0
        %181 = vst [vmem:[#allocation2 + $0x50] sm:$0xff] 0.0
        %182 = vst.msk [vmem:[#allocation2 + $0x58] sm:$0xff] %vm171, 0.0
        %183 = vst [vmem:[#allocation2 + $0x60] sm:$0xff] 0.0
        %184 = vst [vmem:[#allocation2 + $0x68] sm:$0xff] 0.0
        %185 = vst.msk [vmem:[#allocation2 + $0x70] sm:$0xff] %vm171, 0.0
        %186 = vst [vmem:[#allocation2 + $0x78] sm:$0xf] 0.0
        %187 = vst [vmem:[#allocation2 + $0x80] sm:$0xf] 0.0
        %188 = vst.msk [vmem:[#allocation2 + $0x88] sm:$0xf] %vm178, 0.0
        %189 = vst [vmem:[#allocation2 + $0x90] sm:$0xff] 0.0
        %190 = vst [vmem:[#allocation2 + $0x98] sm:$0xff] 0.0
        %191 = vst.msk [vmem:[#allocation2 + $0xa0] sm:$0xff] %vm171, 0.0
        %192 = vst [vmem:[#allocation2 + $0xa8] sm:$0xff] 0.0
        %193 = vst [vmem:[#allocation2 + $0xb0] sm:$0xff] 0.0
        %194 = vst.msk [vmem:[#allocation2 + $0xb8] sm:$0xff] %vm171, 0.0
        %195 = vst [vmem:[#allocation2 + $0xc0] sm:$0xf] 0.0
        %196 = vst [vmem:[#allocation2 + $0xc8] sm:$0xf] 0.0
        %197 = vst.msk [vmem:[#allocation2 + $0xd0] sm:$0xf] %vm178, 0.0
        %198 = vst [vmem:[#allocation2 + $0xd8] sm:$0xff] 0.0
        %199 = vst [vmem:[#allocation2 + $0xe0] sm:$0xff] 0.0
        %200 = vst.msk [vmem:[#allocation2 + $0xe8] sm:$0xff] %vm171, 0.0
        %201 = vst [vmem:[#allocation2 + $0xf0] sm:$0xff] 0.0
        %202 = vst [vmem:[#allocation2 + $0xf8] sm:$0xff] 0.0
        %203 = vst.msk [vmem:[#allocation2 + $0x100] sm:$0xff] %vm171, 0.0
        %204 = vst [vmem:[#allocation2 + $0x108] sm:$0xf] 0.0
        %205 = vst [vmem:[#allocation2 + $0x110] sm:$0xf] 0.0
        %206 = vst.msk [vmem:[#allocation2 + $0x118] sm:$0xf] %vm178, 0.0
        %207 = vst [vmem:[#allocation2 + $0x120] sm:$0xff] 0.0
        %208 = vst [vmem:[#allocation2 + $0x128] sm:$0xff] 0.0
        %209 = vst.msk [vmem:[#allocation2 + $0x130] sm:$0xff] %vm171, 0.0
        %210 = vst [vmem:[#allocation2 + $0x138] sm:$0xff] 0.0
        %211 = vst [vmem:[#allocation2 + $0x140] sm:$0xff] 0.0
        %212 = vst.msk [vmem:[#allocation2 + $0x148] sm:$0xff] %vm171, 0.0
        %213 = vst [vmem:[#allocation2 + $0x150] sm:$0xf] 0.0
        %214 = vst [vmem:[#allocation2 + $0x158] sm:$0xf] 0.0
        %215 = vst.msk [vmem:[#allocation2 + $0x160] sm:$0xf] %vm178, 0.0
        %216 = vst [vmem:[#allocation2 + $0x168] sm:$0xff] 0.0
        %217 = vst [vmem:[#allocation2 + $0x170] sm:$0xff] 0.0
        %218 = vst.msk [vmem:[#allocation2 + $0x178] sm:$0xff] %vm171, 0.0
        %219 = vst [vmem:[#allocation2 + $0x180] sm:$0xff] 0.0
        %220 = vst [vmem:[#allocation2 + $0x188] sm:$0xff] 0.0
        %221 = vst.msk [vmem:[#allocation2 + $0x190] sm:$0xff] %vm171, 0.0
        %222 = vst [vmem:[#allocation2 + $0x198] sm:$0xf] 0.0
        %223 = vst [vmem:[#allocation2 + $0x1a0] sm:$0xf] 0.0
        %224 = vst.msk [vmem:[#allocation2 + $0x1a8] sm:$0xf] %vm178, 0.0
        %225 = vst [vmem:[#allocation2 + $0x1b0] sm:$0xff] 0.0
        %226 = vst [vmem:[#allocation2 + $0x1b8] sm:$0xff] 0.0
        %227 = vst.msk [vmem:[#allocation2 + $0x1c0] sm:$0xff] %vm171, 0.0
        %228 = vst [vmem:[#allocation2 + $0x1c8] sm:$0xff] 0.0
        %229 = vst [vmem:[#allocation2 + $0x1d0] sm:$0xff] 0.0
        %230 = vst.msk [vmem:[#allocation2 + $0x1d8] sm:$0xff] %vm171, 0.0
        %231 = vst [vmem:[#allocation2 + $0x1e0] sm:$0xf] 0.0
        %232 = vst [vmem:[#allocation2 + $0x1e8] sm:$0xf] 0.0
        %233 = vst.msk [vmem:[#allocation2 + $0x1f0] sm:$0xf] %vm178, 0.0
        %234 = vst [vmem:[#allocation2 + $0x1f8] sm:$0xff] 0.0
        %235 = vst [vmem:[#allocation2 + $0x200] sm:$0xff] 0.0
        %236 = vst.msk [vmem:[#allocation2 + $0x208] sm:$0xff] %vm171, 0.0
        %237 = vst [vmem:[#allocation2 + $0x210] sm:$0xff] 0.0
        %238 = vst [vmem:[#allocation2 + $0x218] sm:$0xff] 0.0
        %239 = vst.msk [vmem:[#allocation2 + $0x220] sm:$0xff] %vm171, 0.0
        %240 = vst [vmem:[#allocation2 + $0x228] sm:$0xf] 0.0
        %241 = vst [vmem:[#allocation2 + $0x230] sm:$0xf] 0.0
        %242 = vst.msk [vmem:[#allocation2 + $0x238] sm:$0xf] %vm178, 0.0
        %243 = vst [vmem:[#allocation2 + $0x240] sm:$0xff] 0.0
        %244 = vst [vmem:[#allocation2 + $0x248] sm:$0xff] 0.0
        %245 = vst.msk [vmem:[#allocation2 + $0x250] sm:$0xff] %vm171, 0.0
        %246 = vst [vmem:[#allocation2 + $0x258] sm:$0xff] 0.0
        %247 = vst [vmem:[#allocation2 + $0x260] sm:$0xff] 0.0
        %248 = vst.msk [vmem:[#allocation2 + $0x268] sm:$0xff] %vm171, 0.0
        %249 = vst [vmem:[#allocation2 + $0x270] sm:$0xf] 0.0
        %250 = vst [vmem:[#allocation2 + $0x278] sm:$0xf] 0.0
        %251 = vst.msk [vmem:[#allocation2 + $0x280] sm:$0xf] %vm178, 0.0
        %252 = vst [vmem:[#allocation2 + $0x288] sm:$0xff] 0.0
        %253 = vst [vmem:[#allocation2 + $0x290] sm:$0xff] 0.0
        %254 = vst.msk [vmem:[#allocation2 + $0x298] sm:$0xff] %vm171, 0.0
        %255 = vst [vmem:[#allocation2 + $0x2a0] sm:$0xff] 0.0
        %256 = vst [vmem:[#allocation2 + $0x2a8] sm:$0xff] 0.0
        %257 = vst.msk [vmem:[#allocation2 + $0x2b0] sm:$0xff] %vm171, 0.0
        %258 = vst [vmem:[#allocation2 + $0x2b8] sm:$0xf] 0.0
        %259 = vst [vmem:[#allocation2 + $0x2c0] sm:$0xf] 0.0
        %260 = vst.msk [vmem:[#allocation2 + $0x2c8] sm:$0xf] %vm178, 0.0
        %261 = vst [vmem:[#allocation2 + $0x2d0] sm:$0xff] 0.0
        %262 = vst [vmem:[#allocation2 + $0x2d8] sm:$0xff] 0.0
        %263 = vst.msk [vmem:[#allocation2 + $0x2e0] sm:$0xff] %vm171, 0.0
        %264 = vst [vmem:[#allocation2 + $0x2e8] sm:$0xff] 0.0
        %265 = vst [vmem:[#allocation2 + $0x2f0] sm:$0xff] 0.0
        %266 = vst.msk [vmem:[#allocation2 + $0x2f8] sm:$0xff] %vm171, 0.0
        %267 = vst [vmem:[#allocation2 + $0x300] sm:$0xf] 0.0
        %268 = vst [vmem:[#allocation2 + $0x308] sm:$0xf] 0.0
        %269 = vst.msk [vmem:[#allocation2 + $0x310] sm:$0xf] %vm178, 0.0
        %270 = vst [vmem:[#allocation2 + $0x318] sm:$0xff] 0.0
        %271 = vst [vmem:[#allocation2 + $0x320] sm:$0xff] 0.0
        %272 = vst.msk [vmem:[#allocation2 + $0x328] sm:$0xff] %vm171, 0.0
        %273 = vst [vmem:[#allocation2 + $0x330] sm:$0xff] 0.0
        %274 = vst [vmem:[#allocation2 + $0x338] sm:$0xff] 0.0
        %275 = vst.msk [vmem:[#allocation2 + $0x340] sm:$0xff] %vm171, 0.0
        %276 = vst [vmem:[#allocation2 + $0x348] sm:$0xf] 0.0
        %277 = vst [vmem:[#allocation2 + $0x350] sm:$0xf] 0.0
        %278 = vst.msk [vmem:[#allocation2 + $0x358] sm:$0xf] %vm178, 0.0
        %279 = vst [vmem:[#allocation2 + $0x360] sm:$0xff] 0.0
        %280 = vst [vmem:[#allocation2 + $0x368] sm:$0xff] 0.0
        %281 = vst.msk [vmem:[#allocation2 + $0x370] sm:$0xff] %vm171, 0.0
        %282 = vst [vmem:[#allocation2 + $0x378] sm:$0xff] 0.0
        %283 = vst [vmem:[#allocation2 + $0x380] sm:$0xff] 0.0
        %284 = vst.msk [vmem:[#allocation2 + $0x388] sm:$0xff] %vm171, 0.0
        %285 = vst [vmem:[#allocation2 + $0x390] sm:$0xf] 0.0
        %286 = vst [vmem:[#allocation2 + $0x398] sm:$0xf] 0.0
        %287 = vst.msk [vmem:[#allocation2 + $0x3a0] sm:$0xf] %vm178, 0.0
        %288 = vst [vmem:[#allocation2 + $0x3a8] sm:$0xff] 0.0
        %289 = vst [vmem:[#allocation2 + $0x3b0] sm:$0xff] 0.0
        %290 = vst.msk [vmem:[#allocation2 + $0x3b8] sm:$0xff] %vm171, 0.0
        %291 = vst [vmem:[#allocation2 + $0x3c0] sm:$0xff] 0.0
        %292 = vst [vmem:[#allocation2 + $0x3c8] sm:$0xff] 0.0
        %293 = vst.msk [vmem:[#allocation2 + $0x3d0] sm:$0xff] %vm171, 0.0
        %294 = vst [vmem:[#allocation2 + $0x3d8] sm:$0xf] 0.0
        %295 = vst [vmem:[#allocation2 + $0x3e0] sm:$0xf] 0.0
        %296 = vst.msk [vmem:[#allocation2 + $0x3e8] sm:$0xf] %vm178, 0.0
        %297 = vst [vmem:[#allocation2 + $0x3f0] sm:$0xff] 0.0
        %298 = vst [vmem:[#allocation2 + $0x3f8] sm:$0xff] 0.0
        %299 = vst.msk [vmem:[#allocation2 + $0x400] sm:$0xff] %vm171, 0.0
        %300 = vst [vmem:[#allocation2 + $0x408] sm:$0xff] 0.0
        %301 = vst [vmem:[#allocation2 + $0x410] sm:$0xff] 0.0
        %302 = vst.msk [vmem:[#allocation2 + $0x418] sm:$0xff] %vm171, 0.0
        %303 = vst [vmem:[#allocation2 + $0x420] sm:$0xf] 0.0
        %304 = vst [vmem:[#allocation2 + $0x428] sm:$0xf] 0.0
        %305 = vst.msk [vmem:[#allocation2 + $0x430] sm:$0xf] %vm178, 0.0
        %306 = vst [vmem:[#allocation2 + $0x438] sm:$0xff] 0.0
        %307 = vst [vmem:[#allocation2 + $0x440] sm:$0xff] 0.0
        %308 = vst.msk [vmem:[#allocation2 + $0x448] sm:$0xff] %vm171, 0.0
        %309 = vst [vmem:[#allocation2 + $0x450] sm:$0xff] 0.0
        %310 = vst [vmem:[#allocation2 + $0x458] sm:$0xff] 0.0
        %311 = vst.msk [vmem:[#allocation2 + $0x460] sm:$0xff] %vm171, 0.0
        %312 = vst [vmem:[#allocation2 + $0x468] sm:$0xf] 0.0
        %313 = vst [vmem:[#allocation2 + $0x470] sm:$0xf] 0.0
        %314 = vst.msk [vmem:[#allocation2 + $0x478] sm:$0xf] %vm178, 0.0
        %315 = vst [vmem:[#allocation2 + $0x480] sm:$0xff] 0.0
        %316 = vst [vmem:[#allocation2 + $0x488] sm:$0xff] 0.0
        %317 = vst.msk [vmem:[#allocation2 + $0x490] sm:$0xff] %vm171, 0.0
        %318 = vst [vmem:[#allocation2 + $0x498] sm:$0xff] 0.0
        %319 = vst [vmem:[#allocation2 + $0x4a0] sm:$0xff] 0.0
        %320 = vst.msk [vmem:[#allocation2 + $0x4a8] sm:$0xff] %vm171, 0.0
        %321 = vst [vmem:[#allocation2 + $0x4b0] sm:$0xf] 0.0
        %322 = vst [vmem:[#allocation2 + $0x4b8] sm:$0xf] 0.0
        %323 = vst.msk [vmem:[#allocation2 + $0x4c0] sm:$0xf] %vm178, 0.0
        %324 = vst [vmem:[#allocation2 + $0x4c8] sm:$0xff] 0.0
        %325 = vst [vmem:[#allocation2 + $0x4d0] sm:$0xff] 0.0
        %326 = vst.msk [vmem:[#allocation2 + $0x4d8] sm:$0xff] %vm171, 0.0
        %327 = vst [vmem:[#allocation2 + $0x4e0] sm:$0xff] 0.0
        %328 = vst [vmem:[#allocation2 + $0x4e8] sm:$0xff] 0.0
        %329 = vst.msk [vmem:[#allocation2 + $0x4f0] sm:$0xff] %vm171, 0.0
        %330 = vst [vmem:[#allocation2 + $0x4f8] sm:$0xf] 0.0
        %331 = vst [vmem:[#allocation2 + $0x500] sm:$0xf] 0.0
        %332 = vst.msk [vmem:[#allocation2 + $0x508] sm:$0xf] %vm178, 0.0
        %333 = vst [vmem:[#allocation2 + $0x510] sm:$0xff] 0.0
        %334 = vst [vmem:[#allocation2 + $0x518] sm:$0xff] 0.0
        %335 = vst.msk [vmem:[#allocation2 + $0x520] sm:$0xff] %vm171, 0.0
        %336 = vst [vmem:[#allocation2 + $0x528] sm:$0xff] 0.0
        %337 = vst [vmem:[#allocation2 + $0x530] sm:$0xff] 0.0
        %338 = vst.msk [vmem:[#allocation2 + $0x538] sm:$0xff] %vm171, 0.0
        %339 = vst [vmem:[#allocation2 + $0x540] sm:$0xf] 0.0
        %340 = vst [vmem:[#allocation2 + $0x548] sm:$0xf] 0.0
        %341 = vst.msk [vmem:[#allocation2 + $0x550] sm:$0xf] %vm178, 0.0
        %342 = vst [vmem:[#allocation2 + $0x558] sm:$0xff] 0.0
        %343 = vst [vmem:[#allocation2 + $0x560] sm:$0xff] 0.0
        %344 = vst.msk [vmem:[#allocation2 + $0x568] sm:$0xff] %vm171, 0.0
        %345 = vst [vmem:[#allocation2 + $0x570] sm:$0xff] 0.0
        %346 = vst [vmem:[#allocation2 + $0x578] sm:$0xff] 0.0
        %347 = vst.msk [vmem:[#allocation2 + $0x580] sm:$0xff] %vm171, 0.0
        %348 = vst [vmem:[#allocation2 + $0x588] sm:$0xf] 0.0
        %349 = vst [vmem:[#allocation2 + $0x590] sm:$0xf] 0.0
        %350 = vst.msk [vmem:[#allocation2 + $0x598] sm:$0xf] %vm178, 0.0
        %v351 = vld [vmem:[%s168] sm:$0xff]
        %v352 = vld [vmem:[%s168 + $0x8] sm:$0x3f]
        %v353 = vld [vmem:[%s168 + $0x18] sm:$0xff]
        %v354 = vld [vmem:[%s168 + $0x20] sm:$0x3f]
        %v355 = vld [vmem:[%s168 + $0x30] sm:$0xff]
        %v356 = vld [vmem:[%s168 + $0x38] sm:$0x3f]
        %v357 = vld [vmem:[%s168 + $0x48] sm:$0xff]
        %v358 = vld [vmem:[%s168 + $0x50] sm:$0x3f]
        %v359 = vld [vmem:[%s168 + $0x60] sm:$0xff]
        %v360 = vld [vmem:[%s168 + $0x68] sm:$0x3f]
        %v361 = vld [vmem:[%s168 + $0x78] sm:$0xff]
        %v362 = vld [vmem:[%s168 + $0x80] sm:$0x3f]
        %v363 = vld [vmem:[%s168 + $0x90] sm:$0xff]
        %v364 = vld [vmem:[%s168 + $0x98] sm:$0x3f]
        %v365 = vld [vmem:[%s168 + $0xa8] sm:$0xff]
        %v366 = vld [vmem:[%s168 + $0xb0] sm:$0x3f]
        %v367 = vld [vmem:[%s168 + $0xc0] sm:$0xff]
        %v368 = vld [vmem:[%s168 + $0xc8] sm:$0x3f]
        %v369 = vld [vmem:[%s168 + $0xd8] sm:$0xff]
        %v370 = vld [vmem:[%s168 + $0xe0] sm:$0x3f]
        %v371 = vld [vmem:[%s168 + $0xf0] sm:$0xff]
        %v372 = vld [vmem:[%s168 + $0xf8] sm:$0x3f]
        %v373 = vld [vmem:[%s168 + $0x108] sm:$0xff]
        %v374 = vld [vmem:[%s168 + $0x110] sm:$0x3f]
        %v375 = vld [vmem:[%s168 + $0x120] sm:$0xff]
        %v376 = vld [vmem:[%s168 + $0x128] sm:$0x3f]
        %v377 = vld [vmem:[%s168 + $0x138] sm:$0xff]
        %v378 = vld [vmem:[%s168 + $0x140] sm:$0x3f]
        %vm407 = vcmask 1045504
        %v408 = vrot.slane %v351, 2
        %v409 = vrot.slane %v352, 2
        %v410 = vsel %vm407, %v408, %v409
        %v411 = vrot.slane %v353, 2
        %v412 = vrot.slane %v354, 2
        %v413 = vsel %vm407, %v411, %v412
        %v414 = vrot.slane %v355, 2
        %v415 = vrot.slane %v356, 2
        %v416 = vsel %vm407, %v414, %v415
        %v417 = vrot.slane %v357, 2
        %v418 = vrot.slane %v358, 2
        %v419 = vsel %vm407, %v417, %v418
        %v420 = vrot.slane %v359, 2
        %v421 = vrot.slane %v360, 2
        %v422 = vsel %vm407, %v420, %v421
        %v423 = vrot.slane %v361, 2
        %v424 = vrot.slane %v362, 2
        %v425 = vsel %vm407, %v423, %v424
        %v426 = vrot.slane %v363, 2
        %v427 = vrot.slane %v364, 2
        %v428 = vsel %vm407, %v426, %v427
        %v429 = vrot.slane %v365, 2
        %v430 = vrot.slane %v366, 2
        %v431 = vsel %vm407, %v429, %v430
        %v432 = vrot.slane %v367, 2
        %v433 = vrot.slane %v368, 2
        %v434 = vsel %vm407, %v432, %v433
        %v435 = vrot.slane %v369, 2
        %v436 = vrot.slane %v370, 2
        %v437 = vsel %vm407, %v435, %v436
        %v438 = vrot.slane %v371, 2
        %v439 = vrot.slane %v372, 2
        %v440 = vsel %vm407, %v438, %v439
        %v441 = vrot.slane %v373, 2
        %v442 = vrot.slane %v374, 2
        %v443 = vsel %vm407, %v441, %v442
        %v444 = vrot.slane %v375, 2
        %v445 = vrot.slane %v376, 2
        %v446 = vsel %vm407, %v444, %v445
        %v447 = vrot.slane %v377, 2
        %v448 = vrot.slane %v378, 2
        %v449 = vsel %vm407, %v447, %v448
        %s492 = scalar_lea.vmem [#allocation2], 432
        %vm493 = vcmask 64518
        %494 = vst.msk [vmem:[%s492] sm:$0xc0] %vm493, %v408
        %vm495 = vcmask 64512
        %496 = vst.msk [vmem:[%s492 + $0x18] sm:$0xff] %vm495, %v410
        %vm497 = vcmask 60416
        %498 = vst.msk [vmem:[%s492 + $0x30] sm:$0xf] %vm497, %v409
        %499 = vst.msk [vmem:[%s492 + $0x48] sm:$0xc0] %vm493, %v411
        %500 = vst.msk [vmem:[%s492 + $0x60] sm:$0xff] %vm495, %v413
        %501 = vst.msk [vmem:[%s492 + $0x78] sm:$0xf] %vm497, %v412
        %502 = vst.msk [vmem:[%s492 + $0x90] sm:$0xc0] %vm493, %v414
        %503 = vst.msk [vmem:[%s492 + $0xa8] sm:$0xff] %vm495, %v416
        %504 = vst.msk [vmem:[%s492 + $0xc0] sm:$0xf] %vm497, %v415
        %505 = vst.msk [vmem:[%s492 + $0xd8] sm:$0xc0] %vm493, %v417
        %506 = vst.msk [vmem:[%s492 + $0xf0] sm:$0xff] %vm495, %v419
        %507 = vst.msk [vmem:[%s492 + $0x108] sm:$0xf] %vm497, %v418
        %508 = vst.msk [vmem:[%s492 + $0x120] sm:$0xc0] %vm493, %v420
        %509 = vst.msk [vmem:[%s492 + $0x138] sm:$0xff] %vm495, %v422
        %510 = vst.msk [vmem:[%s492 + $0x150] sm:$0xf] %vm497, %v421
        %511 = vst.msk [vmem:[%s492 + $0x168] sm:$0xc0] %vm493, %v423
        %512 = vst.msk [vmem:[%s492 + $0x180] sm:$0xff] %vm495, %v425
        %513 = vst.msk [vmem:[%s492 + $0x198] sm:$0xf] %vm497, %v424
        %514 = vst.msk [vmem:[%s492 + $0x1b0] sm:$0xc0] %vm493, %v426
        %515 = vst.msk [vmem:[%s492 + $0x1c8] sm:$0xff] %vm495, %v428
        %516 = vst.msk [vmem:[%s492 + $0x1e0] sm:$0xf] %vm497, %v427
        %517 = vst.msk [vmem:[%s492 + $0x1f8] sm:$0xc0] %vm493, %v429
        %518 = vst.msk [vmem:[%s492 + $0x210] sm:$0xff] %vm495, %v431
        %519 = vst.msk [vmem:[%s492 + $0x228] sm:$0xf] %vm497, %v430
        %520 = vst.msk [vmem:[%s492 + $0x240] sm:$0xc0] %vm493, %v432
        %521 = vst.msk [vmem:[%s492 + $0x258] sm:$0xff] %vm495, %v434
        %522 = vst.msk [vmem:[%s492 + $0x270] sm:$0xf] %vm497, %v433
        %523 = vst.msk [vmem:[%s492 + $0x288] sm:$0xc0] %vm493, %v435
        %524 = vst.msk [vmem:[%s492 + $0x2a0] sm:$0xff] %vm495, %v437
        %525 = vst.msk [vmem:[%s492 + $0x2b8] sm:$0xf] %vm497, %v436
        %526 = vst.msk [vmem:[%s492 + $0x2d0] sm:$0xc0] %vm493, %v438
        %527 = vst.msk [vmem:[%s492 + $0x2e8] sm:$0xff] %vm495, %v440
        %528 = vst.msk [vmem:[%s492 + $0x300] sm:$0xf] %vm497, %v439
        %529 = vst.msk [vmem:[%s492 + $0x318] sm:$0xc0] %vm493, %v441
        %530 = vst.msk [vmem:[%s492 + $0x330] sm:$0xff] %vm495, %v443
        %531 = vst.msk [vmem:[%s492 + $0x348] sm:$0xf] %vm497, %v442
        %532 = vst.msk [vmem:[%s492 + $0x360] sm:$0xc0] %vm493, %v444
        %533 = vst.msk [vmem:[%s492 + $0x378] sm:$0xff] %vm495, %v446
        %534 = vst.msk [vmem:[%s492 + $0x390] sm:$0xf] %vm497, %v445
        %535 = vst.msk [vmem:[%s492 + $0x3a8] sm:$0xc0] %vm493, %v447
        %536 = vst.msk [vmem:[%s492 + $0x3c0] sm:$0xff] %vm495, %v449
        %537 = vst.msk [vmem:[%s492 + $0x3d8] sm:$0xf] %vm497, %v448
        %v538 = vld [vmem:[%s168] sm:$0xff]
        %v539 = vld [vmem:[%s168 + $0x8] sm:$0xff]
        %v540 = vld [vmem:[%s168 + $0x10] sm:$0xf]
        %v541 = vld [vmem:[%s168 + $0x18] sm:$0xff]
        %v542 = vld [vmem:[%s168 + $0x20] sm:$0xff]
        %v543 = vld [vmem:[%s168 + $0x28] sm:$0xf]
        %v544 = vld [vmem:[%s168 + $0x30] sm:$0xff]
        %v545 = vld [vmem:[%s168 + $0x38] sm:$0xff]
        %v546 = vld [vmem:[%s168 + $0x40] sm:$0xf]
        %v547 = vld [vmem:[%s168 + $0x48] sm:$0xff]
        %v548 = vld [vmem:[%s168 + $0x50] sm:$0xff]
        %v549 = vld [vmem:[%s168 + $0x58] sm:$0xf]
        %v550 = vld [vmem:[%s168 + $0x60] sm:$0xff]
        %v551 = vld [vmem:[%s168 + $0x68] sm:$0xff]
        %v552 = vld [vmem:[%s168 + $0x70] sm:$0xf]
        %v553 = vld [vmem:[%s168 + $0x78] sm:$0xff]
        %v554 = vld [vmem:[%s168 + $0x80] sm:$0xff]
        %v555 = vld [vmem:[%s168 + $0x88] sm:$0xf]
        %v556 = vld [vmem:[%s168 + $0x90] sm:$0xff]
        %v557 = vld [vmem:[%s168 + $0x98] sm:$0xff]
        %v558 = vld [vmem:[%s168 + $0xa0] sm:$0xf]
        %v559 = vld [vmem:[%s168 + $0xa8] sm:$0xff]
        %v560 = vld [vmem:[%s168 + $0xb0] sm:$0xff]
        %v561 = vld [vmem:[%s168 + $0xb8] sm:$0xf]
        %v562 = vld [vmem:[%s168 + $0xc0] sm:$0xff]
        %v563 = vld [vmem:[%s168 + $0xc8] sm:$0xff]
        %v564 = vld [vmem:[%s168 + $0xd0] sm:$0xf]
        %v565 = vld [vmem:[%s168 + $0xd8] sm:$0xff]
        %v566 = vld [vmem:[%s168 + $0xe0] sm:$0xff]
        %v567 = vld [vmem:[%s168 + $0xe8] sm:$0xf]
        %v568 = vld [vmem:[%s168 + $0xf0] sm:$0xff]
        %v569 = vld [vmem:[%s168 + $0xf8] sm:$0xff]
        %v570 = vld [vmem:[%s168 + $0x100] sm:$0xf]
        %v571 = vld [vmem:[%s168 + $0x108] sm:$0xff]
        %v572 = vld [vmem:[%s168 + $0x110] sm:$0xff]
        %v573 = vld [vmem:[%s168 + $0x118] sm:$0xf]
        %v574 = vld [vmem:[%s168 + $0x120] sm:$0xff]
        %v575 = vld [vmem:[%s168 + $0x128] sm:$0xff]
        %v576 = vld [vmem:[%s168 + $0x130] sm:$0xf]
        %v577 = vld [vmem:[%s168 + $0x138] sm:$0xff]
        %v578 = vld [vmem:[%s168 + $0x140] sm:$0xff]
        %v579 = vld [vmem:[%s168 + $0x148] sm:$0xf]
        %622 = vrot.lane.b32.xlu0 %v538, 8
        %v623 = vpop.permute.xlu0 %622
        %624 = vrot.lane.b32.xlu0 %v539, 8
        %v625 = vpop.permute.xlu0 %624
        %626 = vrot.lane.b32.xlu0 %v540, 8
        %v627 = vpop.permute.xlu0 %626
        %628 = vrot.lane.b32.xlu0 %v541, 8
        %v629 = vpop.permute.xlu0 %628
        %630 = vrot.lane.b32.xlu0 %v542, 8
        %v631 = vpop.permute.xlu0 %630
        %632 = vrot.lane.b32.xlu0 %v543, 8
        %v633 = vpop.permute.xlu0 %632
        %634 = vrot.lane.b32.xlu0 %v544, 8
        %v635 = vpop.permute.xlu0 %634
        %636 = vrot.lane.b32.xlu0 %v545, 8
        %v637 = vpop.permute.xlu0 %636
        %638 = vrot.lane.b32.xlu0 %v546, 8
        %v639 = vpop.permute.xlu0 %638
        %640 = vrot.lane.b32.xlu0 %v547, 8
        %v641 = vpop.permute.xlu0 %640
        %642 = vrot.lane.b32.xlu0 %v548, 8
        %v643 = vpop.permute.xlu0 %642
        %644 = vrot.lane.b32.xlu0 %v549, 8
        %v645 = vpop.permute.xlu0 %644
        %646 = vrot.lane.b32.xlu0 %v550, 8
        %v647 = vpop.permute.xlu0 %646
        %648 = vrot.lane.b32.xlu0 %v551, 8
        %v649 = vpop.permute.xlu0 %648
        %650 = vrot.lane.b32.xlu0 %v552, 8
        %v651 = vpop.permute.xlu0 %650
        %652 = vrot.lane.b32.xlu0 %v553, 8
        %v653 = vpop.permute.xlu0 %652
        %654 = vrot.lane.b32.xlu0 %v554, 8
        %v655 = vpop.permute.xlu0 %654
        %656 = vrot.lane.b32.xlu0 %v555, 8
        %v657 = vpop.permute.xlu0 %656
        %658 = vrot.lane.b32.xlu0 %v556, 8
        %v659 = vpop.permute.xlu0 %658
        %660 = vrot.lane.b32.xlu0 %v557, 8
        %v661 = vpop.permute.xlu0 %660
        %662 = vrot.lane.b32.xlu0 %v558, 8
        %v663 = vpop.permute.xlu0 %662
        %664 = vrot.lane.b32.xlu0 %v559, 8
        %v665 = vpop.permute.xlu0 %664
        %666 = vrot.lane.b32.xlu0 %v560, 8
        %v667 = vpop.permute.xlu0 %666
        %668 = vrot.lane.b32.xlu0 %v561, 8
        %v669 = vpop.permute.xlu0 %668
        %670 = vrot.lane.b32.xlu0 %v562, 8
        %v671 = vpop.permute.xlu0 %670
        %672 = vrot.lane.b32.xlu0 %v563, 8
        %v673 = vpop.permute.xlu0 %672
        %674 = vrot.lane.b32.xlu0 %v564, 8
        %v675 = vpop.permute.xlu0 %674
        %676 = vrot.lane.b32.xlu0 %v565, 8
        %v677 = vpop.permute.xlu0 %676
        %678 = vrot.lane.b32.xlu0 %v566, 8
        %v679 = vpop.permute.xlu0 %678
        %680 = vrot.lane.b32.xlu0 %v567, 8
        %v681 = vpop.permute.xlu0 %680
        %682 = vrot.lane.b32.xlu0 %v568, 8
        %v683 = vpop.permute.xlu0 %682
        %684 = vrot.lane.b32.xlu0 %v569, 8
        %v685 = vpop.permute.xlu0 %684
        %686 = vrot.lane.b32.xlu0 %v570, 8
        %v687 = vpop.permute.xlu0 %686
        %688 = vrot.lane.b32.xlu0 %v571, 8
        %v689 = vpop.permute.xlu0 %688
        %690 = vrot.lane.b32.xlu0 %v572, 8
        %v691 = vpop.permute.xlu0 %690
        %692 = vrot.lane.b32.xlu0 %v573, 8
        %v693 = vpop.permute.xlu0 %692
        %694 = vrot.lane.b32.xlu0 %v574, 8
        %v695 = vpop.permute.xlu0 %694
        %696 = vrot.lane.b32.xlu0 %v575, 8
        %v697 = vpop.permute.xlu0 %696
        %698 = vrot.lane.b32.xlu0 %v576, 8
        %v699 = vpop.permute.xlu0 %698
        %700 = vrot.lane.b32.xlu0 %v577, 8
        %v701 = vpop.permute.xlu0 %700
        %702 = vrot.lane.b32.xlu0 %v578, 8
        %v703 = vpop.permute.xlu0 %702
        %704 = vrot.lane.b32.xlu0 %v579, 8
        %v705 = vpop.permute.xlu0 %704
        %vm748 = vcmask 130112
        %749 = vst.msk [vmem:[%s492] sm:$0xff] %vm748, %v623
        %750 = vst.msk [vmem:[%s492 + $0x18] sm:$0xff] %vm748, %v625
        %vm751 = vcmask 126016
        %752 = vst.msk [vmem:[%s492 + $0x30] sm:$0xf] %vm751, %v627
        %753 = vst.msk [vmem:[%s492 + $0x48] sm:$0xff] %vm748, %v629
        %754 = vst.msk [vmem:[%s492 + $0x60] sm:$0xff] %vm748, %v631
        %755 = vst.msk [vmem:[%s492 + $0x78] sm:$0xf] %vm751, %v633
        %756 = vst.msk [vmem:[%s492 + $0x90] sm:$0xff] %vm748, %v635
        %757 = vst.msk [vmem:[%s492 + $0xa8] sm:$0xff] %vm748, %v637
        %758 = vst.msk [vmem:[%s492 + $0xc0] sm:$0xf] %vm751, %v639
        %759 = vst.msk [vmem:[%s492 + $0xd8] sm:$0xff] %vm748, %v641
        %760 = vst.msk [vmem:[%s492 + $0xf0] sm:$0xff] %vm748, %v643
        %761 = vst.msk [vmem:[%s492 + $0x108] sm:$0xf] %vm751, %v645
        %762 = vst.msk [vmem:[%s492 + $0x120] sm:$0xff] %vm748, %v647
        %763 = vst.msk [vmem:[%s492 + $0x138] sm:$0xff] %vm748, %v649
        %764 = vst.msk [vmem:[%s492 + $0x150] sm:$0xf] %vm751, %v651
        %765 = vst.msk [vmem:[%s492 + $0x168] sm:$0xff] %vm748, %v653
        %766 = vst.msk [vmem:[%s492 + $0x180] sm:$0xff] %vm748, %v655
        %767 = vst.msk [vmem:[%s492 + $0x198] sm:$0xf] %vm751, %v657
        %768 = vst.msk [vmem:[%s492 + $0x1b0] sm:$0xff] %vm748, %v659
        %769 = vst.msk [vmem:[%s492 + $0x1c8] sm:$0xff] %vm748, %v661
        %770 = vst.msk [vmem:[%s492 + $0x1e0] sm:$0xf] %vm751, %v663
        %771 = vst.msk [vmem:[%s492 + $0x1f8] sm:$0xff] %vm748, %v665
        %772 = vst.msk [vmem:[%s492 + $0x210] sm:$0xff] %vm748, %v667
        %773 = vst.msk [vmem:[%s492 + $0x228] sm:$0xf] %vm751, %v669
        %774 = vst.msk [vmem:[%s492 + $0x240] sm:$0xff] %vm748, %v671
        %775 = vst.msk [vmem:[%s492 + $0x258] sm:$0xff] %vm748, %v673
        %776 = vst.msk [vmem:[%s492 + $0x270] sm:$0xf] %vm751, %v675
        %777 = vst.msk [vmem:[%s492 + $0x288] sm:$0xff] %vm748, %v677
        %778 = vst.msk [vmem:[%s492 + $0x2a0] sm:$0xff] %vm748, %v679
        %779 = vst.msk [vmem:[%s492 + $0x2b8] sm:$0xf] %vm751, %v681
        %780 = vst.msk [vmem:[%s492 + $0x2d0] sm:$0xff] %vm748, %v683
        %781 = vst.msk [vmem:[%s492 + $0x2e8] sm:$0xff] %vm748, %v685
        %782 = vst.msk [vmem:[%s492 + $0x300] sm:$0xf] %vm751, %v687
        %783 = vst.msk [vmem:[%s492 + $0x318] sm:$0xff] %vm748, %v689
        %784 = vst.msk [vmem:[%s492 + $0x330] sm:$0xff] %vm748, %v691
        %785 = vst.msk [vmem:[%s492 + $0x348] sm:$0xf] %vm751, %v693
        %786 = vst.msk [vmem:[%s492 + $0x360] sm:$0xff] %vm748, %v695
        %787 = vst.msk [vmem:[%s492 + $0x378] sm:$0xff] %vm748, %v697
        %788 = vst.msk [vmem:[%s492 + $0x390] sm:$0xf] %vm751, %v699
        %789 = vst.msk [vmem:[%s492 + $0x3a8] sm:$0xff] %vm748, %v701
        %790 = vst.msk [vmem:[%s492 + $0x3c0] sm:$0xff] %vm748, %v703
        %791 = vst.msk [vmem:[%s492 + $0x3d8] sm:$0xf] %vm751, %v705
        %v792 = vld [vmem:[%s168 + $0x6] sm:$0xff]
        %v793 = vld [vmem:[%s168 + $0xe] sm:$0x3f]
        %v794 = vld [vmem:[%s168 + $0x1e] sm:$0xff]
        %v795 = vld [vmem:[%s168 + $0x26] sm:$0x3f]
        %v796 = vld [vmem:[%s168 + $0x36] sm:$0xff]
        %v797 = vld [vmem:[%s168 + $0x3e] sm:$0x3f]
        %v798 = vld [vmem:[%s168 + $0x4e] sm:$0xff]
        %v799 = vld [vmem:[%s168 + $0x56] sm:$0x3f]
        %v800 = vld [vmem:[%s168 + $0x66] sm:$0xff]
        %v801 = vld [vmem:[%s168 + $0x6e] sm:$0x3f]
        %v802 = vld [vmem:[%s168 + $0x7e] sm:$0xff]
        %v803 = vld [vmem:[%s168 + $0x86] sm:$0x3f]
        %v804 = vld [vmem:[%s168 + $0x96] sm:$0xff]
        %v805 = vld [vmem:[%s168 + $0x9e] sm:$0x3f]
        %v806 = vld [vmem:[%s168 + $0xae] sm:$0xff]
        %v807 = vld [vmem:[%s168 + $0xb6] sm:$0x3f]
        %v808 = vld [vmem:[%s168 + $0xc6] sm:$0xff]
        %v809 = vld [vmem:[%s168 + $0xce] sm:$0x3f]
        %v810 = vld [vmem:[%s168 + $0xde] sm:$0xff]
        %v811 = vld [vmem:[%s168 + $0xe6] sm:$0x3f]
        %v812 = vld [vmem:[%s168 + $0xf6] sm:$0xff]
        %v813 = vld [vmem:[%s168 + $0xfe] sm:$0x3f]
        %v814 = vld [vmem:[%s168 + $0x10e] sm:$0xff]
        %v815 = vld [vmem:[%s168 + $0x116] sm:$0x3f]
        %v816 = vld [vmem:[%s168 + $0x126] sm:$0xff]
        %v817 = vld [vmem:[%s168 + $0x12e] sm:$0x3f]
        %v818 = vld [vmem:[%s168 + $0x13e] sm:$0xff]
        %v819 = vld [vmem:[%s168 + $0x146] sm:$0x3f]
        %848 = vrot.lane.b32.xlu0 %v792, 16
        %v849 = vpop.permute.xlu0 %848
        %850 = vrot.lane.b32.xlu0 %v793, 16
        %v851 = vpop.permute.xlu0 %850
        %852 = vrot.lane.b32.xlu0 %v794, 16
        %v853 = vpop.permute.xlu0 %852
        %854 = vrot.lane.b32.xlu0 %v795, 16
        %v855 = vpop.permute.xlu0 %854
        %856 = vrot.lane.b32.xlu0 %v796, 16
        %v857 = vpop.permute.xlu0 %856
        %858 = vrot.lane.b32.xlu0 %v797, 16
        %v859 = vpop.permute.xlu0 %858
        %860 = vrot.lane.b32.xlu0 %v798, 16
        %v861 = vpop.permute.xlu0 %860
        %862 = vrot.lane.b32.xlu0 %v799, 16
        %v863 = vpop.permute.xlu0 %862
        %864 = vrot.lane.b32.xlu0 %v800, 16
        %v865 = vpop.permute.xlu0 %864
        %866 = vrot.lane.b32.xlu0 %v801, 16
        %v867 = vpop.permute.xlu0 %866
        %868 = vrot.lane.b32.xlu0 %v802, 16
        %v869 = vpop.permute.xlu0 %868
        %870 = vrot.lane.b32.xlu0 %v803, 16
        %v871 = vpop.permute.xlu0 %870
        %872 = vrot.lane.b32.xlu0 %v804, 16
        %v873 = vpop.permute.xlu0 %872
        %874 = vrot.lane.b32.xlu0 %v805, 16
        %v875 = vpop.permute.xlu0 %874
        %876 = vrot.lane.b32.xlu0 %v806, 16
        %v877 = vpop.permute.xlu0 %876
        %878 = vrot.lane.b32.xlu0 %v807, 16
        %v879 = vpop.permute.xlu0 %878
        %880 = vrot.lane.b32.xlu0 %v808, 16
        %v881 = vpop.permute.xlu0 %880
        %882 = vrot.lane.b32.xlu0 %v809, 16
        %v883 = vpop.permute.xlu0 %882
        %884 = vrot.lane.b32.xlu0 %v810, 16
        %v885 = vpop.permute.xlu0 %884
        %886 = vrot.lane.b32.xlu0 %v811, 16
        %v887 = vpop.permute.xlu0 %886
        %888 = vrot.lane.b32.xlu0 %v812, 16
        %v889 = vpop.permute.xlu0 %888
        %890 = vrot.lane.b32.xlu0 %v813, 16
        %v891 = vpop.permute.xlu0 %890
        %892 = vrot.lane.b32.xlu0 %v814, 16
        %v893 = vpop.permute.xlu0 %892
        %894 = vrot.lane.b32.xlu0 %v815, 16
        %v895 = vpop.permute.xlu0 %894
        %896 = vrot.lane.b32.xlu0 %v816, 16
        %v897 = vpop.permute.xlu0 %896
        %898 = vrot.lane.b32.xlu0 %v817, 16
        %v899 = vpop.permute.xlu0 %898
        %900 = vrot.lane.b32.xlu0 %v818, 16
        %v901 = vpop.permute.xlu0 %900
        %902 = vrot.lane.b32.xlu0 %v819, 16
        %v903 = vpop.permute.xlu0 %902
        %vm932 = vcmask 195712
        %933 = vst.msk [vmem:[%s492] sm:$0xff] %vm932, %v849
        %vm934 = vcmask 193664
        %935 = vst.msk [vmem:[%s492 + $0x18] sm:$0x3f] %vm934, %v851
        %936 = vst.msk [vmem:[%s492 + $0x48] sm:$0xff] %vm932, %v853
        %937 = vst.msk [vmem:[%s492 + $0x60] sm:$0x3f] %vm934, %v855
        %938 = vst.msk [vmem:[%s492 + $0x90] sm:$0xff] %vm932, %v857
        %939 = vst.msk [vmem:[%s492 + $0xa8] sm:$0x3f] %vm934, %v859
        %940 = vst.msk [vmem:[%s492 + $0xd8] sm:$0xff] %vm932, %v861
        %941 = vst.msk [vmem:[%s492 + $0xf0] sm:$0x3f] %vm934, %v863
        %942 = vst.msk [vmem:[%s492 + $0x120] sm:$0xff] %vm932, %v865
        %943 = vst.msk [vmem:[%s492 + $0x138] sm:$0x3f] %vm934, %v867
        %944 = vst.msk [vmem:[%s492 + $0x168] sm:$0xff] %vm932, %v869
        %945 = vst.msk [vmem:[%s492 + $0x180] sm:$0x3f] %vm934, %v871
        %946 = vst.msk [vmem:[%s492 + $0x1b0] sm:$0xff] %vm932, %v873
        %947 = vst.msk [vmem:[%s492 + $0x1c8] sm:$0x3f] %vm934, %v875
        %948 = vst.msk [vmem:[%s492 + $0x1f8] sm:$0xff] %vm932, %v877
        %949 = vst.msk [vmem:[%s492 + $0x210] sm:$0x3f] %vm934, %v879
        %950 = vst.msk [vmem:[%s492 + $0x240] sm:$0xff] %vm932, %v881
        %951 = vst.msk [vmem:[%s492 + $0x258] sm:$0x3f] %vm934, %v883
        %952 = vst.msk [vmem:[%s492 + $0x288] sm:$0xff] %vm932, %v885
        %953 = vst.msk [vmem:[%s492 + $0x2a0] sm:$0x3f] %vm934, %v887
        %954 = vst.msk [vmem:[%s492 + $0x2d0] sm:$0xff] %vm932, %v889
        %955 = vst.msk [vmem:[%s492 + $0x2e8] sm:$0x3f] %vm934, %v891
        %956 = vst.msk [vmem:[%s492 + $0x318] sm:$0xff] %vm932, %v893
        %957 = vst.msk [vmem:[%s492 + $0x330] sm:$0x3f] %vm934, %v895
        %958 = vst.msk [vmem:[%s492 + $0x360] sm:$0xff] %vm932, %v897
        %959 = vst.msk [vmem:[%s492 + $0x378] sm:$0x3f] %vm934, %v899
        %960 = vst.msk [vmem:[%s492 + $0x3a8] sm:$0xff] %vm932, %v901
        %961 = vst.msk [vmem:[%s492 + $0x3c0] sm:$0x3f] %vm934, %v903
        %v962 = vld [vmem:[%s168] sm:$0xff]
        %v963 = vld [vmem:[%s168 + $0x8] sm:$0x3f]
        %v964 = vld [vmem:[%s168 + $0x18] sm:$0xff]
        %v965 = vld [vmem:[%s168 + $0x20] sm:$0x3f]
        %v966 = vld [vmem:[%s168 + $0x30] sm:$0xff]
        %v967 = vld [vmem:[%s168 + $0x38] sm:$0x3f]
        %v968 = vld [vmem:[%s168 + $0x48] sm:$0xff]
        %v969 = vld [vmem:[%s168 + $0x50] sm:$0x3f]
        %v970 = vld [vmem:[%s168 + $0x60] sm:$0xff]
        %v971 = vld [vmem:[%s168 + $0x68] sm:$0x3f]
        %v972 = vld [vmem:[%s168 + $0x78] sm:$0xff]
        %v973 = vld [vmem:[%s168 + $0x80] sm:$0x3f]
        %v974 = vld [vmem:[%s168 + $0x90] sm:$0xff]
        %v975 = vld [vmem:[%s168 + $0x98] sm:$0x3f]
        %v976 = vld [vmem:[%s168 + $0xa8] sm:$0xff]
        %v977 = vld [vmem:[%s168 + $0xb0] sm:$0x3f]
        %v978 = vld [vmem:[%s168 + $0xc0] sm:$0xff]
        %v979 = vld [vmem:[%s168 + $0xc8] sm:$0x3f]
        %v980 = vld [vmem:[%s168 + $0xd8] sm:$0xff]
        %v981 = vld [vmem:[%s168 + $0xe0] sm:$0x3f]
        %v982 = vld [vmem:[%s168 + $0xf0] sm:$0xff]
        %v983 = vld [vmem:[%s168 + $0xf8] sm:$0x3f]
        %v984 = vld [vmem:[%s168 + $0x108] sm:$0xff]
        %v985 = vld [vmem:[%s168 + $0x110] sm:$0x3f]
        %v986 = vld [vmem:[%s168 + $0x120] sm:$0xff]
        %v987 = vld [vmem:[%s168 + $0x128] sm:$0x3f]
        %v988 = vld [vmem:[%s168 + $0x138] sm:$0xff]
        %v989 = vld [vmem:[%s168 + $0x140] sm:$0x3f]
        %v990 = vld [vmem:[%s168 + $0x150] sm:$0xff]
        %v991 = vld [vmem:[%s168 + $0x158] sm:$0x3f]
        %v992 = vld [vmem:[%s168 + $0x168] sm:$0xff]
        %v993 = vld [vmem:[%s168 + $0x170] sm:$0x3f]
        %v994 = vld [vmem:[%s168 + $0x180] sm:$0xff]
        %v995 = vld [vmem:[%s168 + $0x188] sm:$0x3f]
        %v996 = vld [vmem:[%s168 + $0x198] sm:$0xff]
        %v997 = vld [vmem:[%s168 + $0x1a0] sm:$0x3f]
        %v998 = vld [vmem:[%s168 + $0x1b0] sm:$0xff]
        %v999 = vld [vmem:[%s168 + $0x1b8] sm:$0x3f]
        %v1000 = vld [vmem:[%s168 + $0x1c8] sm:$0xff]
        %v1001 = vld [vmem:[%s168 + $0x1d0] sm:$0x3f]
        %v1042 = vrot.slane %v962, 2
        %v1043 = vrot.slane %v963, 2
        %v1044 = vsel %vm407, %v1042, %v1043
        %v1045 = vrot.slane %v964, 2
        %v1046 = vrot.slane %v965, 2
        %v1047 = vsel %vm407, %v1045, %v1046
        %v1048 = vrot.slane %v966, 2
        %v1049 = vrot.slane %v967, 2
        %v1050 = vsel %vm407, %v1048, %v1049
        %v1051 = vrot.slane %v968, 2
        %v1052 = vrot.slane %v969, 2
        %v1053 = vsel %vm407, %v1051, %v1052
        %v1054 = vrot.slane %v970, 2
        %v1055 = vrot.slane %v971, 2
        %v1056 = vsel %vm407, %v1054, %v1055
        %v1057 = vrot.slane %v972, 2
        %v1058 = vrot.slane %v973, 2
        %v1059 = vsel %vm407, %v1057, %v1058
        %v1060 = vrot.slane %v974, 2
        %v1061 = vrot.slane %v975, 2
        %v1062 = vsel %vm407, %v1060, %v1061
        %v1063 = vrot.slane %v976, 2
        %v1064 = vrot.slane %v977, 2
        %v1065 = vsel %vm407, %v1063, %v1064
        %v1066 = vrot.slane %v978, 2
        %v1067 = vrot.slane %v979, 2
        %v1068 = vsel %vm407, %v1066, %v1067
        %v1069 = vrot.slane %v980, 2
        %v1070 = vrot.slane %v981, 2
        %v1071 = vsel %vm407, %v1069, %v1070
        %v1072 = vrot.slane %v982, 2
        %v1073 = vrot.slane %v983, 2
        %v1074 = vsel %vm407, %v1072, %v1073
        %v1075 = vrot.slane %v984, 2
        %v1076 = vrot.slane %v985, 2
        %v1077 = vsel %vm407, %v1075, %v1076
        %v1078 = vrot.slane %v986, 2
        %v1079 = vrot.slane %v987, 2
        %v1080 = vsel %vm407, %v1078, %v1079
        %v1081 = vrot.slane %v988, 2
        %v1082 = vrot.slane %v989, 2
        %v1083 = vsel %vm407, %v1081, %v1082
        %v1084 = vrot.slane %v990, 2
        %v1085 = vrot.slane %v991, 2
        %v1086 = vsel %vm407, %v1084, %v1085
        %v1087 = vrot.slane %v992, 2
        %v1088 = vrot.slane %v993, 2
        %v1089 = vsel %vm407, %v1087, %v1088
        %v1090 = vrot.slane %v994, 2
        %v1091 = vrot.slane %v995, 2
        %v1092 = vsel %vm407, %v1090, %v1091
        %v1093 = vrot.slane %v996, 2
        %v1094 = vrot.slane %v997, 2
        %v1095 = vsel %vm407, %v1093, %v1094
        %v1096 = vrot.slane %v998, 2
        %v1097 = vrot.slane %v999, 2
        %v1098 = vsel %vm407, %v1096, %v1097
        %v1099 = vrot.slane %v1000, 2
        %v1100 = vrot.slane %v1001, 2
        %v1101 = vsel %vm407, %v1099, %v1100
        %1102 = vrot.lane.b32.xlu0 %v1042, 24
        %v1103 = vpop.permute.xlu0 %1102
        %1104 = vrot.lane.b32.xlu0 %v1044, 24
        %v1105 = vpop.permute.xlu0 %1104
        %1106 = vrot.lane.b32.xlu0 %v1043, 24
        %v1107 = vpop.permute.xlu0 %1106
        %1108 = vrot.lane.b32.xlu0 %v1045, 24
        %v1109 = vpop.permute.xlu0 %1108
        %1110 = vrot.lane.b32.xlu0 %v1047, 24
        %v1111 = vpop.permute.xlu0 %1110
        %1112 = vrot.lane.b32.xlu0 %v1046, 24
        %v1113 = vpop.permute.xlu0 %1112
        %1114 = vrot.lane.b32.xlu0 %v1048, 24
        %v1115 = vpop.permute.xlu0 %1114
        %1116 = vrot.lane.b32.xlu0 %v1050, 24
        %v1117 = vpop.permute.xlu0 %1116
        %1118 = vrot.lane.b32.xlu0 %v1049, 24
        %v1119 = vpop.permute.xlu0 %1118
        %1120 = vrot.lane.b32.xlu0 %v1051, 24
        %v1121 = vpop.permute.xlu0 %1120
        %1122 = vrot.lane.b32.xlu0 %v1053, 24
        %v1123 = vpop.permute.xlu0 %1122
        %1124 = vrot.lane.b32.xlu0 %v1052, 24
        %v1125 = vpop.permute.xlu0 %1124
        %1126 = vrot.lane.b32.xlu0 %v1054, 24
        %v1127 = vpop.permute.xlu0 %1126
        %1128 = vrot.lane.b32.xlu0 %v1056, 24
        %v1129 = vpop.permute.xlu0 %1128
        %1130 = vrot.lane.b32.xlu0 %v1055, 24
        %v1131 = vpop.permute.xlu0 %1130
        %1132 = vrot.lane.b32.xlu0 %v1057, 24
        %v1133 = vpop.permute.xlu0 %1132
        %1134 = vrot.lane.b32.xlu0 %v1059, 24
        %v1135 = vpop.permute.xlu0 %1134
        %1136 = vrot.lane.b32.xlu0 %v1058, 24
        %v1137 = vpop.permute.xlu0 %1136
        %1138 = vrot.lane.b32.xlu0 %v1060, 24
        %v1139 = vpop.permute.xlu0 %1138
        %1140 = vrot.lane.b32.xlu0 %v1062, 24
        %v1141 = vpop.permute.xlu0 %1140
        %1142 = vrot.lane.b32.xlu0 %v1061, 24
        %v1143 = vpop.permute.xlu0 %1142
        %1144 = vrot.lane.b32.xlu0 %v1063, 24
        %v1145 = vpop.permute.xlu0 %1144
        %1146 = vrot.lane.b32.xlu0 %v1065, 24
        %v1147 = vpop.permute.xlu0 %1146
        %1148 = vrot.lane.b32.xlu0 %v1064, 24
        %v1149 = vpop.permute.xlu0 %1148
        %1150 = vrot.lane.b32.xlu0 %v1066, 24
        %v1151 = vpop.permute.xlu0 %1150
        %1152 = vrot.lane.b32.xlu0 %v1068, 24
        %v1153 = vpop.permute.xlu0 %1152
        %1154 = vrot.lane.b32.xlu0 %v1067, 24
        %v1155 = vpop.permute.xlu0 %1154
        %1156 = vrot.lane.b32.xlu0 %v1069, 24
        %v1157 = vpop.permute.xlu0 %1156
        %1158 = vrot.lane.b32.xlu0 %v1071, 24
        %v1159 = vpop.permute.xlu0 %1158
        %1160 = vrot.lane.b32.xlu0 %v1070, 24
        %v1161 = vpop.permute.xlu0 %1160
        %1162 = vrot.lane.b32.xlu0 %v1072, 24
        %v1163 = vpop.permute.xlu0 %1162
        %1164 = vrot.lane.b32.xlu0 %v1074, 24
        %v1165 = vpop.permute.xlu0 %1164
        %1166 = vrot.lane.b32.xlu0 %v1073, 24
        %v1167 = vpop.permute.xlu0 %1166
        %1168 = vrot.lane.b32.xlu0 %v1075, 24
        %v1169 = vpop.permute.xlu0 %1168
        %1170 = vrot.lane.b32.xlu0 %v1077, 24
        %v1171 = vpop.permute.xlu0 %1170
        %1172 = vrot.lane.b32.xlu0 %v1076, 24
        %v1173 = vpop.permute.xlu0 %1172
        %1174 = vrot.lane.b32.xlu0 %v1078, 24
        %v1175 = vpop.permute.xlu0 %1174
        %1176 = vrot.lane.b32.xlu0 %v1080, 24
        %v1177 = vpop.permute.xlu0 %1176
        %1178 = vrot.lane.b32.xlu0 %v1079, 24
        %v1179 = vpop.permute.xlu0 %1178
        %1180 = vrot.lane.b32.xlu0 %v1081, 24
        %v1181 = vpop.permute.xlu0 %1180
        %1182 = vrot.lane.b32.xlu0 %v1083, 24
        %v1183 = vpop.permute.xlu0 %1182
        %1184 = vrot.lane.b32.xlu0 %v1082, 24
        %v1185 = vpop.permute.xlu0 %1184
        %1186 = vrot.lane.b32.xlu0 %v1084, 24
        %v1187 = vpop.permute.xlu0 %1186
        %1188 = vrot.lane.b32.xlu0 %v1086, 24
        %v1189 = vpop.permute.xlu0 %1188
        %1190 = vrot.lane.b32.xlu0 %v1085, 24
        %v1191 = vpop.permute.xlu0 %1190
        %1192 = vrot.lane.b32.xlu0 %v1087, 24
        %v1193 = vpop.permute.xlu0 %1192
        %1194 = vrot.lane.b32.xlu0 %v1089, 24
        %v1195 = vpop.permute.xlu0 %1194
        %1196 = vrot.lane.b32.xlu0 %v1088, 24
        %v1197 = vpop.permute.xlu0 %1196
        %1198 = vrot.lane.b32.xlu0 %v1090, 24
        %v1199 = vpop.permute.xlu0 %1198
        %1200 = vrot.lane.b32.xlu0 %v1092, 24
        %v1201 = vpop.permute.xlu0 %1200
        %1202 = vrot.lane.b32.xlu0 %v1091, 24
        %v1203 = vpop.permute.xlu0 %1202
        %1204 = vrot.lane.b32.xlu0 %v1093, 24
        %v1205 = vpop.permute.xlu0 %1204
        %1206 = vrot.lane.b32.xlu0 %v1095, 24
        %v1207 = vpop.permute.xlu0 %1206
        %1208 = vrot.lane.b32.xlu0 %v1094, 24
        %v1209 = vpop.permute.xlu0 %1208
        %1210 = vrot.lane.b32.xlu0 %v1096, 24
        %v1211 = vpop.permute.xlu0 %1210
        %1212 = vrot.lane.b32.xlu0 %v1098, 24
        %v1213 = vpop.permute.xlu0 %1212
        %1214 = vrot.lane.b32.xlu0 %v1097, 24
        %v1215 = vpop.permute.xlu0 %1214
        %1216 = vrot.lane.b32.xlu0 %v1099, 24
        %v1217 = vpop.permute.xlu0 %1216
        %1218 = vrot.lane.b32.xlu0 %v1101, 24
        %v1219 = vpop.permute.xlu0 %1218
        %1220 = vrot.lane.b32.xlu0 %v1100, 24
        %v1221 = vpop.permute.xlu0 %1220
        %vm1282 = vcmask 261318
        %1283 = vst.msk [vmem:[#allocation2] sm:$0xc0] %vm1282, %v1103
        %vm1284 = vcmask 261312
        %1285 = vst.msk [vmem:[#allocation2 + $0x18] sm:$0xff] %vm1284, %v1105
        %vm1286 = vcmask 257216
        %1287 = vst.msk [vmem:[#allocation2 + $0x30] sm:$0xf] %vm1286, %v1107
        %1288 = vst.msk [vmem:[#allocation2 + $0x48] sm:$0xc0] %vm1282, %v1109
        %1289 = vst.msk [vmem:[#allocation2 + $0x60] sm:$0xff] %vm1284, %v1111
        %1290 = vst.msk [vmem:[#allocation2 + $0x78] sm:$0xf] %vm1286, %v1113
        %1291 = vst.msk [vmem:[#allocation2 + $0x90] sm:$0xc0] %vm1282, %v1115
        %1292 = vst.msk [vmem:[#allocation2 + $0xa8] sm:$0xff] %vm1284, %v1117
        %1293 = vst.msk [vmem:[#allocation2 + $0xc0] sm:$0xf] %vm1286, %v1119
        %1294 = vst.msk [vmem:[#allocation2 + $0xd8] sm:$0xc0] %vm1282, %v1121
        %1295 = vst.msk [vmem:[#allocation2 + $0xf0] sm:$0xff] %vm1284, %v1123
        %1296 = vst.msk [vmem:[#allocation2 + $0x108] sm:$0xf] %vm1286, %v1125
        %1297 = vst.msk [vmem:[#allocation2 + $0x120] sm:$0xc0] %vm1282, %v1127
        %1298 = vst.msk [vmem:[#allocation2 + $0x138] sm:$0xff] %vm1284, %v1129
        %1299 = vst.msk [vmem:[#allocation2 + $0x150] sm:$0xf] %vm1286, %v1131
        %1300 = vst.msk [vmem:[#allocation2 + $0x168] sm:$0xc0] %vm1282, %v1133
        %1301 = vst.msk [vmem:[#allocation2 + $0x180] sm:$0xff] %vm1284, %v1135
        %1302 = vst.msk [vmem:[#allocation2 + $0x198] sm:$0xf] %vm1286, %v1137
        %1303 = vst.msk [vmem:[#allocation2 + $0x1b0] sm:$0xc0] %vm1282, %v1139
        %1304 = vst.msk [vmem:[#allocation2 + $0x1c8] sm:$0xff] %vm1284, %v1141
        %1305 = vst.msk [vmem:[#allocation2 + $0x1e0] sm:$0xf] %vm1286, %v1143
        %1306 = vst.msk [vmem:[#allocation2 + $0x1f8] sm:$0xc0] %vm1282, %v1145
        %1307 = vst.msk [vmem:[#allocation2 + $0x210] sm:$0xff] %vm1284, %v1147
        %1308 = vst.msk [vmem:[#allocation2 + $0x228] sm:$0xf] %vm1286, %v1149
        %1309 = vst.msk [vmem:[#allocation2 + $0x240] sm:$0xc0] %vm1282, %v1151
        %1310 = vst.msk [vmem:[#allocation2 + $0x258] sm:$0xff] %vm1284, %v1153
        %1311 = vst.msk [vmem:[#allocation2 + $0x270] sm:$0xf] %vm1286, %v1155
        %1312 = vst.msk [vmem:[#allocation2 + $0x288] sm:$0xc0] %vm1282, %v1157
        %1313 = vst.msk [vmem:[#allocation2 + $0x2a0] sm:$0xff] %vm1284, %v1159
        %1314 = vst.msk [vmem:[#allocation2 + $0x2b8] sm:$0xf] %vm1286, %v1161
        %1315 = vst.msk [vmem:[#allocation2 + $0x2d0] sm:$0xc0] %vm1282, %v1163
        %1316 = vst.msk [vmem:[#allocation2 + $0x2e8] sm:$0xff] %vm1284, %v1165
        %1317 = vst.msk [vmem:[#allocation2 + $0x300] sm:$0xf] %vm1286, %v1167
        %1318 = vst.msk [vmem:[#allocation2 + $0x318] sm:$0xc0] %vm1282, %v1169
        %1319 = vst.msk [vmem:[#allocation2 + $0x330] sm:$0xff] %vm1284, %v1171
        %1320 = vst.msk [vmem:[#allocation2 + $0x348] sm:$0xf] %vm1286, %v1173
        %1321 = vst.msk [vmem:[#allocation2 + $0x360] sm:$0xc0] %vm1282, %v1175
        %1322 = vst.msk [vmem:[#allocation2 + $0x378] sm:$0xff] %vm1284, %v1177
        %1323 = vst.msk [vmem:[#allocation2 + $0x390] sm:$0xf] %vm1286, %v1179
        %1324 = vst.msk [vmem:[#allocation2 + $0x3a8] sm:$0xc0] %vm1282, %v1181
        %1325 = vst.msk [vmem:[#allocation2 + $0x3c0] sm:$0xff] %vm1284, %v1183
        %1326 = vst.msk [vmem:[#allocation2 + $0x3d8] sm:$0xf] %vm1286, %v1185
        %1327 = vst.msk [vmem:[#allocation2 + $0x3f0] sm:$0xc0] %vm1282, %v1187
        %1328 = vst.msk [vmem:[#allocation2 + $0x408] sm:$0xff] %vm1284, %v1189
        %1329 = vst.msk [vmem:[#allocation2 + $0x420] sm:$0xf] %vm1286, %v1191
        %1330 = vst.msk [vmem:[#allocation2 + $0x438] sm:$0xc0] %vm1282, %v1193
        %1331 = vst.msk [vmem:[#allocation2 + $0x450] sm:$0xff] %vm1284, %v1195
        %1332 = vst.msk [vmem:[#allocation2 + $0x468] sm:$0xf] %vm1286, %v1197
        %1333 = vst.msk [vmem:[#allocation2 + $0x480] sm:$0xc0] %vm1282, %v1199
        %1334 = vst.msk [vmem:[#allocation2 + $0x498] sm:$0xff] %vm1284, %v1201
        %1335 = vst.msk [vmem:[#allocation2 + $0x4b0] sm:$0xf] %vm1286, %v1203
        %1336 = vst.msk [vmem:[#allocation2 + $0x4c8] sm:$0xc0] %vm1282, %v1205
        %1337 = vst.msk [vmem:[#allocation2 + $0x4e0] sm:$0xff] %vm1284, %v1207
        %1338 = vst.msk [vmem:[#allocation2 + $0x4f8] sm:$0xf] %vm1286, %v1209
        %1339 = vst.msk [vmem:[#allocation2 + $0x510] sm:$0xc0] %vm1282, %v1211
        %1340 = vst.msk [vmem:[#allocation2 + $0x528] sm:$0xff] %vm1284, %v1213
        %1341 = vst.msk [vmem:[#allocation2 + $0x540] sm:$0xf] %vm1286, %v1215
        %1342 = vst.msk [vmem:[#allocation2 + $0x558] sm:$0xc0] %vm1282, %v1217
        %1343 = vst.msk [vmem:[#allocation2 + $0x570] sm:$0xff] %vm1284, %v1219
        %1344 = vst.msk [vmem:[#allocation2 + $0x588] sm:$0xf] %vm1286, %v1221
        %v1345 = vld [vmem:[%s168] sm:$0xff]
        %v1346 = vld [vmem:[%s168 + $0x8] sm:$0xff]
        %v1347 = vld [vmem:[%s168 + $0x10] sm:$0xf]
        %v1348 = vld [vmem:[%s168 + $0x18] sm:$0xff]
        %v1349 = vld [vmem:[%s168 + $0x20] sm:$0xff]
        %v1350 = vld [vmem:[%s168 + $0x28] sm:$0xf]
        %v1351 = vld [vmem:[%s168 + $0x30] sm:$0xff]
        %v1352 = vld [vmem:[%s168 + $0x38] sm:$0xff]
        %v1353 = vld [vmem:[%s168 + $0x40] sm:$0xf]
        %v1354 = vld [vmem:[%s168 + $0x48] sm:$0xff]
        %v1355 = vld [vmem:[%s168 + $0x50] sm:$0xff]
        %v1356 = vld [vmem:[%s168 + $0x58] sm:$0xf]
        %v1357 = vld [vmem:[%s168 + $0x60] sm:$0xff]
        %v1358 = vld [vmem:[%s168 + $0x68] sm:$0xff]
        %v1359 = vld [vmem:[%s168 + $0x70] sm:$0xf]
        %v1360 = vld [vmem:[%s168 + $0x78] sm:$0xff]
        %v1361 = vld [vmem:[%s168 + $0x80] sm:$0xff]
        %v1362 = vld [vmem:[%s168 + $0x88] sm:$0xf]
        %v1363 = vld [vmem:[%s168 + $0x90] sm:$0xff]
        %v1364 = vld [vmem:[%s168 + $0x98] sm:$0xff]
        %v1365 = vld [vmem:[%s168 + $0xa0] sm:$0xf]
        %v1366 = vld [vmem:[%s168 + $0xa8] sm:$0xff]
        %v1367 = vld [vmem:[%s168 + $0xb0] sm:$0xff]
        %v1368 = vld [vmem:[%s168 + $0xb8] sm:$0xf]
        %v1369 = vld [vmem:[%s168 + $0xc0] sm:$0xff]
        %v1370 = vld [vmem:[%s168 + $0xc8] sm:$0xff]
        %v1371 = vld [vmem:[%s168 + $0xd0] sm:$0xf]
        %v1372 = vld [vmem:[%s168 + $0xd8] sm:$0xff]
        %v1373 = vld [vmem:[%s168 + $0xe0] sm:$0xff]
        %v1374 = vld [vmem:[%s168 + $0xe8] sm:$0xf]
        %v1375 = vld [vmem:[%s168 + $0xf0] sm:$0xff]
        %v1376 = vld [vmem:[%s168 + $0xf8] sm:$0xff]
        %v1377 = vld [vmem:[%s168 + $0x100] sm:$0xf]
        %v1378 = vld [vmem:[%s168 + $0x108] sm:$0xff]
        %v1379 = vld [vmem:[%s168 + $0x110] sm:$0xff]
        %v1380 = vld [vmem:[%s168 + $0x118] sm:$0xf]
        %v1381 = vld [vmem:[%s168 + $0x120] sm:$0xff]
        %v1382 = vld [vmem:[%s168 + $0x128] sm:$0xff]
        %v1383 = vld [vmem:[%s168 + $0x130] sm:$0xf]
        %v1384 = vld [vmem:[%s168 + $0x138] sm:$0xff]
        %v1385 = vld [vmem:[%s168 + $0x140] sm:$0xff]
        %v1386 = vld [vmem:[%s168 + $0x148] sm:$0xf]
        %v1387 = vld [vmem:[%s168 + $0x150] sm:$0xff]
        %v1388 = vld [vmem:[%s168 + $0x158] sm:$0xff]
        %v1389 = vld [vmem:[%s168 + $0x160] sm:$0xf]
        %v1390 = vld [vmem:[%s168 + $0x168] sm:$0xff]
        %v1391 = vld [vmem:[%s168 + $0x170] sm:$0xff]
        %v1392 = vld [vmem:[%s168 + $0x178] sm:$0xf]
        %v1393 = vld [vmem:[%s168 + $0x180] sm:$0xff]
        %v1394 = vld [vmem:[%s168 + $0x188] sm:$0xff]
        %v1395 = vld [vmem:[%s168 + $0x190] sm:$0xf]
        %v1396 = vld [vmem:[%s168 + $0x198] sm:$0xff]
        %v1397 = vld [vmem:[%s168 + $0x1a0] sm:$0xff]
        %v1398 = vld [vmem:[%s168 + $0x1a8] sm:$0xf]
        %v1399 = vld [vmem:[%s168 + $0x1b0] sm:$0xff]
        %v1400 = vld [vmem:[%s168 + $0x1b8] sm:$0xff]
        %v1401 = vld [vmem:[%s168 + $0x1c0] sm:$0xf]
        %v1402 = vld [vmem:[%s168 + $0x1c8] sm:$0xff]
        %v1403 = vld [vmem:[%s168 + $0x1d0] sm:$0xff]
        %v1404 = vld [vmem:[%s168 + $0x1d8] sm:$0xf]
        %1465 = vrot.lane.b32.xlu0 %v1345, 32
        %v1466 = vpop.permute.xlu0 %1465
        %1467 = vrot.lane.b32.xlu0 %v1346, 32
        %v1468 = vpop.permute.xlu0 %1467
        %1469 = vrot.lane.b32.xlu0 %v1347, 32
        %v1470 = vpop.permute.xlu0 %1469
        %1471 = vrot.lane.b32.xlu0 %v1348, 32
        %v1472 = vpop.permute.xlu0 %1471
        %1473 = vrot.lane.b32.xlu0 %v1349, 32
        %v1474 = vpop.permute.xlu0 %1473
        %1475 = vrot.lane.b32.xlu0 %v1350, 32
        %v1476 = vpop.permute.xlu0 %1475
        %1477 = vrot.lane.b32.xlu0 %v1351, 32
        %v1478 = vpop.permute.xlu0 %1477
        %1479 = vrot.lane.b32.xlu0 %v1352, 32
        %v1480 = vpop.permute.xlu0 %1479
        %1481 = vrot.lane.b32.xlu0 %v1353, 32
        %v1482 = vpop.permute.xlu0 %1481
        %1483 = vrot.lane.b32.xlu0 %v1354, 32
        %v1484 = vpop.permute.xlu0 %1483
        %1485 = vrot.lane.b32.xlu0 %v1355, 32
        %v1486 = vpop.permute.xlu0 %1485
        %1487 = vrot.lane.b32.xlu0 %v1356, 32
        %v1488 = vpop.permute.xlu0 %1487
        %1489 = vrot.lane.b32.xlu0 %v1357, 32
        %v1490 = vpop.permute.xlu0 %1489
        %1491 = vrot.lane.b32.xlu0 %v1358, 32
        %v1492 = vpop.permute.xlu0 %1491
        %1493 = vrot.lane.b32.xlu0 %v1359, 32
        %v1494 = vpop.permute.xlu0 %1493
        %1495 = vrot.lane.b32.xlu0 %v1360, 32
        %v1496 = vpop.permute.xlu0 %1495
        %1497 = vrot.lane.b32.xlu0 %v1361, 32
        %v1498 = vpop.permute.xlu0 %1497
        %1499 = vrot.lane.b32.xlu0 %v1362, 32
        %v1500 = vpop.permute.xlu0 %1499
        %1501 = vrot.lane.b32.xlu0 %v1363, 32
        %v1502 = vpop.permute.xlu0 %1501
        %1503 = vrot.lane.b32.xlu0 %v1364, 32
        %v1504 = vpop.permute.xlu0 %1503
        %1505 = vrot.lane.b32.xlu0 %v1365, 32
        %v1506 = vpop.permute.xlu0 %1505
        %1507 = vrot.lane.b32.xlu0 %v1366, 32
        %v1508 = vpop.permute.xlu0 %1507
        %1509 = vrot.lane.b32.xlu0 %v1367, 32
        %v1510 = vpop.permute.xlu0 %1509
        %1511 = vrot.lane.b32.xlu0 %v1368, 32
        %v1512 = vpop.permute.xlu0 %1511
        %1513 = vrot.lane.b32.xlu0 %v1369, 32
        %v1514 = vpop.permute.xlu0 %1513
        %1515 = vrot.lane.b32.xlu0 %v1370, 32
        %v1516 = vpop.permute.xlu0 %1515
        %1517 = vrot.lane.b32.xlu0 %v1371, 32
        %v1518 = vpop.permute.xlu0 %1517
        %1519 = vrot.lane.b32.xlu0 %v1372, 32
        %v1520 = vpop.permute.xlu0 %1519
        %1521 = vrot.lane.b32.xlu0 %v1373, 32
        %v1522 = vpop.permute.xlu0 %1521
        %1523 = vrot.lane.b32.xlu0 %v1374, 32
        %v1524 = vpop.permute.xlu0 %1523
        %1525 = vrot.lane.b32.xlu0 %v1375, 32
        %v1526 = vpop.permute.xlu0 %1525
        %1527 = vrot.lane.b32.xlu0 %v1376, 32
        %v1528 = vpop.permute.xlu0 %1527
        %1529 = vrot.lane.b32.xlu0 %v1377, 32
        %v1530 = vpop.permute.xlu0 %1529
        %1531 = vrot.lane.b32.xlu0 %v1378, 32
        %v1532 = vpop.permute.xlu0 %1531
        %1533 = vrot.lane.b32.xlu0 %v1379, 32
        %v1534 = vpop.permute.xlu0 %1533
        %1535 = vrot.lane.b32.xlu0 %v1380, 32
        %v1536 = vpop.permute.xlu0 %1535
        %1537 = vrot.lane.b32.xlu0 %v1381, 32
        %v1538 = vpop.permute.xlu0 %1537
        %1539 = vrot.lane.b32.xlu0 %v1382, 32
        %v1540 = vpop.permute.xlu0 %1539
        %1541 = vrot.lane.b32.xlu0 %v1383, 32
        %v1542 = vpop.permute.xlu0 %1541
        %1543 = vrot.lane.b32.xlu0 %v1384, 32
        %v1544 = vpop.permute.xlu0 %1543
        %1545 = vrot.lane.b32.xlu0 %v1385, 32
        %v1546 = vpop.permute.xlu0 %1545
        %1547 = vrot.lane.b32.xlu0 %v1386, 32
        %v1548 = vpop.permute.xlu0 %1547
        %1549 = vrot.lane.b32.xlu0 %v1387, 32
        %v1550 = vpop.permute.xlu0 %1549
        %1551 = vrot.lane.b32.xlu0 %v1388, 32
        %v1552 = vpop.permute.xlu0 %1551
        %1553 = vrot.lane.b32.xlu0 %v1389, 32
        %v1554 = vpop.permute.xlu0 %1553
        %1555 = vrot.lane.b32.xlu0 %v1390, 32
        %v1556 = vpop.permute.xlu0 %1555
        %1557 = vrot.lane.b32.xlu0 %v1391, 32
        %v1558 = vpop.permute.xlu0 %1557
        %1559 = vrot.lane.b32.xlu0 %v1392, 32
        %v1560 = vpop.permute.xlu0 %1559
        %1561 = vrot.lane.b32.xlu0 %v1393, 32
        %v1562 = vpop.permute.xlu0 %1561
        %1563 = vrot.lane.b32.xlu0 %v1394, 32
        %v1564 = vpop.permute.xlu0 %1563
        %1565 = vrot.lane.b32.xlu0 %v1395, 32
        %v1566 = vpop.permute.xlu0 %1565
        %1567 = vrot.lane.b32.xlu0 %v1396, 32
        %v1568 = vpop.permute.xlu0 %1567
        %1569 = vrot.lane.b32.xlu0 %v1397, 32
        %v1570 = vpop.permute.xlu0 %1569
        %1571 = vrot.lane.b32.xlu0 %v1398, 32
        %v1572 = vpop.permute.xlu0 %1571
        %1573 = vrot.lane.b32.xlu0 %v1399, 32
        %v1574 = vpop.permute.xlu0 %1573
        %1575 = vrot.lane.b32.xlu0 %v1400, 32
        %v1576 = vpop.permute.xlu0 %1575
        %1577 = vrot.lane.b32.xlu0 %v1401, 32
        %v1578 = vpop.permute.xlu0 %1577
        %1579 = vrot.lane.b32.xlu0 %v1402, 32
        %v1580 = vpop.permute.xlu0 %1579
        %1581 = vrot.lane.b32.xlu0 %v1403, 32
        %v1582 = vpop.permute.xlu0 %1581
        %1583 = vrot.lane.b32.xlu0 %v1404, 32
        %v1584 = vpop.permute.xlu0 %1583
        %vm1645 = vcmask 326912
        %1646 = vst.msk [vmem:[#allocation2] sm:$0xff] %vm1645, %v1466
        %1647 = vst.msk [vmem:[#allocation2 + $0x18] sm:$0xff] %vm1645, %v1468
        %vm1648 = vcmask 322816
        %1649 = vst.msk [vmem:[#allocation2 + $0x30] sm:$0xf] %vm1648, %v1470
        %1650 = vst.msk [vmem:[#allocation2 + $0x48] sm:$0xff] %vm1645, %v1472
        %1651 = vst.msk [vmem:[#allocation2 + $0x60] sm:$0xff] %vm1645, %v1474
        %1652 = vst.msk [vmem:[#allocation2 + $0x78] sm:$0xf] %vm1648, %v1476
        %1653 = vst.msk [vmem:[#allocation2 + $0x90] sm:$0xff] %vm1645, %v1478
        %1654 = vst.msk [vmem:[#allocation2 + $0xa8] sm:$0xff] %vm1645, %v1480
        %1655 = vst.msk [vmem:[#allocation2 + $0xc0] sm:$0xf] %vm1648, %v1482
        %1656 = vst.msk [vmem:[#allocation2 + $0xd8] sm:$0xff] %vm1645, %v1484
        %1657 = vst.msk [vmem:[#allocation2 + $0xf0] sm:$0xff] %vm1645, %v1486
        %1658 = vst.msk [vmem:[#allocation2 + $0x108] sm:$0xf] %vm1648, %v1488
        %1659 = vst.msk [vmem:[#allocation2 + $0x120] sm:$0xff] %vm1645, %v1490
        %1660 = vst.msk [vmem:[#allocation2 + $0x138] sm:$0xff] %vm1645, %v1492
        %1661 = vst.msk [vmem:[#allocation2 + $0x150] sm:$0xf] %vm1648, %v1494
        %1662 = vst.msk [vmem:[#allocation2 + $0x168] sm:$0xff] %vm1645, %v1496
        %1663 = vst.msk [vmem:[#allocation2 + $0x180] sm:$0xff] %vm1645, %v1498
        %1664 = vst.msk [vmem:[#allocation2 + $0x198] sm:$0xf] %vm1648, %v1500
        %1665 = vst.msk [vmem:[#allocation2 + $0x1b0] sm:$0xff] %vm1645, %v1502
        %1666 = vst.msk [vmem:[#allocation2 + $0x1c8] sm:$0xff] %vm1645, %v1504
        %1667 = vst.msk [vmem:[#allocation2 + $0x1e0] sm:$0xf] %vm1648, %v1506
        %1668 = vst.msk [vmem:[#allocation2 + $0x1f8] sm:$0xff] %vm1645, %v1508
        %1669 = vst.msk [vmem:[#allocation2 + $0x210] sm:$0xff] %vm1645, %v1510
        %1670 = vst.msk [vmem:[#allocation2 + $0x228] sm:$0xf] %vm1648, %v1512
        %1671 = vst.msk [vmem:[#allocation2 + $0x240] sm:$0xff] %vm1645, %v1514
        %1672 = vst.msk [vmem:[#allocation2 + $0x258] sm:$0xff] %vm1645, %v1516
        %1673 = vst.msk [vmem:[#allocation2 + $0x270] sm:$0xf] %vm1648, %v1518
        %1674 = vst.msk [vmem:[#allocation2 + $0x288] sm:$0xff] %vm1645, %v1520
        %1675 = vst.msk [vmem:[#allocation2 + $0x2a0] sm:$0xff] %vm1645, %v1522
        %1676 = vst.msk [vmem:[#allocation2 + $0x2b8] sm:$0xf] %vm1648, %v1524
        %1677 = vst.msk [vmem:[#allocation2 + $0x2d0] sm:$0xff] %vm1645, %v1526
        %1678 = vst.msk [vmem:[#allocation2 + $0x2e8] sm:$0xff] %vm1645, %v1528
        %1679 = vst.msk [vmem:[#allocation2 + $0x300] sm:$0xf] %vm1648, %v1530
        %1680 = vst.msk [vmem:[#allocation2 + $0x318] sm:$0xff] %vm1645, %v1532
        %1681 = vst.msk [vmem:[#allocation2 + $0x330] sm:$0xff] %vm1645, %v1534
        %1682 = vst.msk [vmem:[#allocation2 + $0x348] sm:$0xf] %vm1648, %v1536
        %1683 = vst.msk [vmem:[#allocation2 + $0x360] sm:$0xff] %vm1645, %v1538
        %1684 = vst.msk [vmem:[#allocation2 + $0x378] sm:$0xff] %vm1645, %v1540
        %1685 = vst.msk [vmem:[#allocation2 + $0x390] sm:$0xf] %vm1648, %v1542
        %1686 = vst.msk [vmem:[#allocation2 + $0x3a8] sm:$0xff] %vm1645, %v1544
        %1687 = vst.msk [vmem:[#allocation2 + $0x3c0] sm:$0xff] %vm1645, %v1546
        %1688 = vst.msk [vmem:[#allocation2 + $0x3d8] sm:$0xf] %vm1648, %v1548
        %1689 = vst.msk [vmem:[#allocation2 + $0x3f0] sm:$0xff] %vm1645, %v1550
        %1690 = vst.msk [vmem:[#allocation2 + $0x408] sm:$0xff] %vm1645, %v1552
        %1691 = vst.msk [vmem:[#allocation2 + $0x420] sm:$0xf] %vm1648, %v1554
        %1692 = vst.msk [vmem:[#allocation2 + $0x438] sm:$0xff] %vm1645, %v1556
        %1693 = vst.msk [vmem:[#allocation2 + $0x450] sm:$0xff] %vm1645, %v1558
        %1694 = vst.msk [vmem:[#allocation2 + $0x468] sm:$0xf] %vm1648, %v1560
        %1695 = vst.msk [vmem:[#allocation2 + $0x480] sm:$0xff] %vm1645, %v1562
        %1696 = vst.msk [vmem:[#allocation2 + $0x498] sm:$0xff] %vm1645, %v1564
        %1697 = vst.msk [vmem:[#allocation2 + $0x4b0] sm:$0xf] %vm1648, %v1566
        %1698 = vst.msk [vmem:[#allocation2 + $0x4c8] sm:$0xff] %vm1645, %v1568
        %1699 = vst.msk [vmem:[#allocation2 + $0x4e0] sm:$0xff] %vm1645, %v1570
        %1700 = vst.msk [vmem:[#allocation2 + $0x4f8] sm:$0xf] %vm1648, %v1572
        %1701 = vst.msk [vmem:[#allocation2 + $0x510] sm:$0xff] %vm1645, %v1574
        %1702 = vst.msk [vmem:[#allocation2 + $0x528] sm:$0xff] %vm1645, %v1576
        %1703 = vst.msk [vmem:[#allocation2 + $0x540] sm:$0xf] %vm1648, %v1578
        %1704 = vst.msk [vmem:[#allocation2 + $0x558] sm:$0xff] %vm1645, %v1580
        %1705 = vst.msk [vmem:[#allocation2 + $0x570] sm:$0xff] %vm1645, %v1582
        %1706 = vst.msk [vmem:[#allocation2 + $0x588] sm:$0xf] %vm1648, %v1584
        %v1707 = vld [vmem:[%s168 + $0x6] sm:$0xff]
        %v1708 = vld [vmem:[%s168 + $0xe] sm:$0x3f]
        %v1709 = vld [vmem:[%s168 + $0x1e] sm:$0xff]
        %v1710 = vld [vmem:[%s168 + $0x26] sm:$0x3f]
        %v1711 = vld [vmem:[%s168 + $0x36] sm:$0xff]
        %v1712 = vld [vmem:[%s168 + $0x3e] sm:$0x3f]
        %v1713 = vld [vmem:[%s168 + $0x4e] sm:$0xff]
        %v1714 = vld [vmem:[%s168 + $0x56] sm:$0x3f]
        %v1715 = vld [vmem:[%s168 + $0x66] sm:$0xff]
        %v1716 = vld [vmem:[%s168 + $0x6e] sm:$0x3f]
        %v1717 = vld [vmem:[%s168 + $0x7e] sm:$0xff]
        %v1718 = vld [vmem:[%s168 + $0x86] sm:$0x3f]
        %v1719 = vld [vmem:[%s168 + $0x96] sm:$0xff]
        %v1720 = vld [vmem:[%s168 + $0x9e] sm:$0x3f]
        %v1721 = vld [vmem:[%s168 + $0xae] sm:$0xff]
        %v1722 = vld [vmem:[%s168 + $0xb6] sm:$0x3f]
        %v1723 = vld [vmem:[%s168 + $0xc6] sm:$0xff]
        %v1724 = vld [vmem:[%s168 + $0xce] sm:$0x3f]
        %v1725 = vld [vmem:[%s168 + $0xde] sm:$0xff]
        %v1726 = vld [vmem:[%s168 + $0xe6] sm:$0x3f]
        %v1727 = vld [vmem:[%s168 + $0xf6] sm:$0xff]
        %v1728 = vld [vmem:[%s168 + $0xfe] sm:$0x3f]
        %v1729 = vld [vmem:[%s168 + $0x10e] sm:$0xff]
        %v1730 = vld [vmem:[%s168 + $0x116] sm:$0x3f]
        %v1731 = vld [vmem:[%s168 + $0x126] sm:$0xff]
        %v1732 = vld [vmem:[%s168 + $0x12e] sm:$0x3f]
        %v1733 = vld [vmem:[%s168 + $0x13e] sm:$0xff]
        %v1734 = vld [vmem:[%s168 + $0x146] sm:$0x3f]
        %v1735 = vld [vmem:[%s168 + $0x156] sm:$0xff]
        %v1736 = vld [vmem:[%s168 + $0x15e] sm:$0x3f]
        %v1737 = vld [vmem:[%s168 + $0x16e] sm:$0xff]
        %v1738 = vld [vmem:[%s168 + $0x176] sm:$0x3f]
        %v1739 = vld [vmem:[%s168 + $0x186] sm:$0xff]
        %v1740 = vld [vmem:[%s168 + $0x18e] sm:$0x3f]
        %v1741 = vld [vmem:[%s168 + $0x19e] sm:$0xff]
        %v1742 = vld [vmem:[%s168 + $0x1a6] sm:$0x3f]
        %v1743 = vld [vmem:[%s168 + $0x1b6] sm:$0xff]
        %v1744 = vld [vmem:[%s168 + $0x1be] sm:$0x3f]
        %v1745 = vld [vmem:[%s168 + $0x1ce] sm:$0xff]
        %v1746 = vld [vmem:[%s168 + $0x1d6] sm:$0x3f]
        %1787 = vrot.lane.b32.xlu0 %v1707, 40
        %v1788 = vpop.permute.xlu0 %1787
        %1789 = vrot.lane.b32.xlu0 %v1708, 40
        %v1790 = vpop.permute.xlu0 %1789
        %1791 = vrot.lane.b32.xlu0 %v1709, 40
        %v1792 = vpop.permute.xlu0 %1791
        %1793 = vrot.lane.b32.xlu0 %v1710, 40
        %v1794 = vpop.permute.xlu0 %1793
        %1795 = vrot.lane.b32.xlu0 %v1711, 40
        %v1796 = vpop.permute.xlu0 %1795
        %1797 = vrot.lane.b32.xlu0 %v1712, 40
        %v1798 = vpop.permute.xlu0 %1797
        %1799 = vrot.lane.b32.xlu0 %v1713, 40
        %v1800 = vpop.permute.xlu0 %1799
        %1801 = vrot.lane.b32.xlu0 %v1714, 40
        %v1802 = vpop.permute.xlu0 %1801
        %1803 = vrot.lane.b32.xlu0 %v1715, 40
        %v1804 = vpop.permute.xlu0 %1803
        %1805 = vrot.lane.b32.xlu0 %v1716, 40
        %v1806 = vpop.permute.xlu0 %1805
        %1807 = vrot.lane.b32.xlu0 %v1717, 40
        %v1808 = vpop.permute.xlu0 %1807
        %1809 = vrot.lane.b32.xlu0 %v1718, 40
        %v1810 = vpop.permute.xlu0 %1809
        %1811 = vrot.lane.b32.xlu0 %v1719, 40
        %v1812 = vpop.permute.xlu0 %1811
        %1813 = vrot.lane.b32.xlu0 %v1720, 40
        %v1814 = vpop.permute.xlu0 %1813
        %1815 = vrot.lane.b32.xlu0 %v1721, 40
        %v1816 = vpop.permute.xlu0 %1815
        %1817 = vrot.lane.b32.xlu0 %v1722, 40
        %v1818 = vpop.permute.xlu0 %1817
        %1819 = vrot.lane.b32.xlu0 %v1723, 40
        %v1820 = vpop.permute.xlu0 %1819
        %1821 = vrot.lane.b32.xlu0 %v1724, 40
        %v1822 = vpop.permute.xlu0 %1821
        %1823 = vrot.lane.b32.xlu0 %v1725, 40
        %v1824 = vpop.permute.xlu0 %1823
        %1825 = vrot.lane.b32.xlu0 %v1726, 40
        %v1826 = vpop.permute.xlu0 %1825
        %1827 = vrot.lane.b32.xlu0 %v1727, 40
        %v1828 = vpop.permute.xlu0 %1827
        %1829 = vrot.lane.b32.xlu0 %v1728, 40
        %v1830 = vpop.permute.xlu0 %1829
        %1831 = vrot.lane.b32.xlu0 %v1729, 40
        %v1832 = vpop.permute.xlu0 %1831
        %1833 = vrot.lane.b32.xlu0 %v1730, 40
        %v1834 = vpop.permute.xlu0 %1833
        %1835 = vrot.lane.b32.xlu0 %v1731, 40
        %v1836 = vpop.permute.xlu0 %1835
        %1837 = vrot.lane.b32.xlu0 %v1732, 40
        %v1838 = vpop.permute.xlu0 %1837
        %1839 = vrot.lane.b32.xlu0 %v1733, 40
        %v1840 = vpop.permute.xlu0 %1839
        %1841 = vrot.lane.b32.xlu0 %v1734, 40
        %v1842 = vpop.permute.xlu0 %1841
        %1843 = vrot.lane.b32.xlu0 %v1735, 40
        %v1844 = vpop.permute.xlu0 %1843
        %1845 = vrot.lane.b32.xlu0 %v1736, 40
        %v1846 = vpop.permute.xlu0 %1845
        %1847 = vrot.lane.b32.xlu0 %v1737, 40
        %v1848 = vpop.permute.xlu0 %1847
        %1849 = vrot.lane.b32.xlu0 %v1738, 40
        %v1850 = vpop.permute.xlu0 %1849
        %1851 = vrot.lane.b32.xlu0 %v1739, 40
        %v1852 = vpop.permute.xlu0 %1851
        %1853 = vrot.lane.b32.xlu0 %v1740, 40
        %v1854 = vpop.permute.xlu0 %1853
        %1855 = vrot.lane.b32.xlu0 %v1741, 40
        %v1856 = vpop.permute.xlu0 %1855
        %1857 = vrot.lane.b32.xlu0 %v1742, 40
        %v1858 = vpop.permute.xlu0 %1857
        %1859 = vrot.lane.b32.xlu0 %v1743, 40
        %v1860 = vpop.permute.xlu0 %1859
        %1861 = vrot.lane.b32.xlu0 %v1744, 40
        %v1862 = vpop.permute.xlu0 %1861
        %1863 = vrot.lane.b32.xlu0 %v1745, 40
        %v1864 = vpop.permute.xlu0 %1863
        %1865 = vrot.lane.b32.xlu0 %v1746, 40
        %v1866 = vpop.permute.xlu0 %1865
        %vm1907 = vcmask 392512
        %1908 = vst.msk [vmem:[#allocation2] sm:$0xff] %vm1907, %v1788
        %vm1909 = vcmask 390464
        %1910 = vst.msk [vmem:[#allocation2 + $0x18] sm:$0x3f] %vm1909, %v1790
        %1911 = vst.msk [vmem:[#allocation2 + $0x48] sm:$0xff] %vm1907, %v1792
        %1912 = vst.msk [vmem:[#allocation2 + $0x60] sm:$0x3f] %vm1909, %v1794
        %1913 = vst.msk [vmem:[#allocation2 + $0x90] sm:$0xff] %vm1907, %v1796
        %1914 = vst.msk [vmem:[#allocation2 + $0xa8] sm:$0x3f] %vm1909, %v1798
        %1915 = vst.msk [vmem:[#allocation2 + $0xd8] sm:$0xff] %vm1907, %v1800
        %1916 = vst.msk [vmem:[#allocation2 + $0xf0] sm:$0x3f] %vm1909, %v1802
        %1917 = vst.msk [vmem:[#allocation2 + $0x120] sm:$0xff] %vm1907, %v1804
        %1918 = vst.msk [vmem:[#allocation2 + $0x138] sm:$0x3f] %vm1909, %v1806
        %1919 = vst.msk [vmem:[#allocation2 + $0x168] sm:$0xff] %vm1907, %v1808
        %1920 = vst.msk [vmem:[#allocation2 + $0x180] sm:$0x3f] %vm1909, %v1810
        %1921 = vst.msk [vmem:[#allocation2 + $0x1b0] sm:$0xff] %vm1907, %v1812
        %1922 = vst.msk [vmem:[#allocation2 + $0x1c8] sm:$0x3f] %vm1909, %v1814
        %1923 = vst.msk [vmem:[#allocation2 + $0x1f8] sm:$0xff] %vm1907, %v1816
        %1924 = vst.msk [vmem:[#allocation2 + $0x210] sm:$0x3f] %vm1909, %v1818
        %1925 = vst.msk [vmem:[#allocation2 + $0x240] sm:$0xff] %vm1907, %v1820
        %1926 = vst.msk [vmem:[#allocation2 + $0x258] sm:$0x3f] %vm1909, %v1822
        %1927 = vst.msk [vmem:[#allocation2 + $0x288] sm:$0xff] %vm1907, %v1824
        %1928 = vst.msk [vmem:[#allocation2 + $0x2a0] sm:$0x3f] %vm1909, %v1826
        %1929 = vst.msk [vmem:[#allocation2 + $0x2d0] sm:$0xff] %vm1907, %v1828
        %1930 = vst.msk [vmem:[#allocation2 + $0x2e8] sm:$0x3f] %vm1909, %v1830
        %1931 = vst.msk [vmem:[#allocation2 + $0x318] sm:$0xff] %vm1907, %v1832
        %1932 = vst.msk [vmem:[#allocation2 + $0x330] sm:$0x3f] %vm1909, %v1834
        %1933 = vst.msk [vmem:[#allocation2 + $0x360] sm:$0xff] %vm1907, %v1836
        %1934 = vst.msk [vmem:[#allocation2 + $0x378] sm:$0x3f] %vm1909, %v1838
        %1935 = vst.msk [vmem:[#allocation2 + $0x3a8] sm:$0xff] %vm1907, %v1840
        %1936 = vst.msk [vmem:[#allocation2 + $0x3c0] sm:$0x3f] %vm1909, %v1842
        %1937 = vst.msk [vmem:[#allocation2 + $0x3f0] sm:$0xff] %vm1907, %v1844
        %1938 = vst.msk [vmem:[#allocation2 + $0x408] sm:$0x3f] %vm1909, %v1846
        %1939 = vst.msk [vmem:[#allocation2 + $0x438] sm:$0xff] %vm1907, %v1848
        %1940 = vst.msk [vmem:[#allocation2 + $0x450] sm:$0x3f] %vm1909, %v1850
        %1941 = vst.msk [vmem:[#allocation2 + $0x480] sm:$0xff] %vm1907, %v1852
        %1942 = vst.msk [vmem:[#allocation2 + $0x498] sm:$0x3f] %vm1909, %v1854
        %1943 = vst.msk [vmem:[#allocation2 + $0x4c8] sm:$0xff] %vm1907, %v1856
        %1944 = vst.msk [vmem:[#allocation2 + $0x4e0] sm:$0x3f] %vm1909, %v1858
        %1945 = vst.msk [vmem:[#allocation2 + $0x510] sm:$0xff] %vm1907, %v1860
        %1946 = vst.msk [vmem:[#allocation2 + $0x528] sm:$0x3f] %vm1909, %v1862
        %1947 = vst.msk [vmem:[#allocation2 + $0x558] sm:$0xff] %vm1907, %v1864
        %1948 = vst.msk [vmem:[#allocation2 + $0x570] sm:$0x3f] %vm1909, %v1866
        %s1949 = scalar_lea.vmem %s168, 144
        %v1950 = vld [vmem:[%s1949] sm:$0xff]
        %v1951 = vld [vmem:[%s1949 + $0x8] sm:$0x3f]
        %v1952 = vld [vmem:[%s1949 + $0x18] sm:$0xff]
        %v1953 = vld [vmem:[%s1949 + $0x20] sm:$0x3f]
        %v1954 = vld [vmem:[%s1949 + $0x30] sm:$0xff]
        %v1955 = vld [vmem:[%s1949 + $0x38] sm:$0x3f]
        %v1956 = vld [vmem:[%s1949 + $0x48] sm:$0xff]
        %v1957 = vld [vmem:[%s1949 + $0x50] sm:$0x3f]
        %v1958 = vld [vmem:[%s1949 + $0x60] sm:$0xff]
        %v1959 = vld [vmem:[%s1949 + $0x68] sm:$0x3f]
        %v1960 = vld [vmem:[%s1949 + $0x78] sm:$0xff]
        %v1961 = vld [vmem:[%s1949 + $0x80] sm:$0x3f]
        %v1962 = vld [vmem:[%s1949 + $0x90] sm:$0xff]
        %v1963 = vld [vmem:[%s1949 + $0x98] sm:$0x3f]
        %v1964 = vld [vmem:[%s1949 + $0xa8] sm:$0xff]
        %v1965 = vld [vmem:[%s1949 + $0xb0] sm:$0x3f]
        %v1966 = vld [vmem:[%s1949 + $0xc0] sm:$0xff]
        %v1967 = vld [vmem:[%s1949 + $0xc8] sm:$0x3f]
        %v1968 = vld [vmem:[%s1949 + $0xd8] sm:$0xff]
        %v1969 = vld [vmem:[%s1949 + $0xe0] sm:$0x3f]
        %v1970 = vld [vmem:[%s1949 + $0xf0] sm:$0xff]
        %v1971 = vld [vmem:[%s1949 + $0xf8] sm:$0x3f]
        %v1972 = vld [vmem:[%s1949 + $0x108] sm:$0xff]
        %v1973 = vld [vmem:[%s1949 + $0x110] sm:$0x3f]
        %v1974 = vld [vmem:[%s1949 + $0x120] sm:$0xff]
        %v1975 = vld [vmem:[%s1949 + $0x128] sm:$0x3f]
        %v1976 = vld [vmem:[%s1949 + $0x138] sm:$0xff]
        %v1977 = vld [vmem:[%s1949 + $0x140] sm:$0x3f]
        %v2006 = vrot.slane %v1950, 2
        %v2007 = vrot.slane %v1951, 2
        %v2008 = vsel %vm407, %v2006, %v2007
        %v2009 = vrot.slane %v1952, 2
        %v2010 = vrot.slane %v1953, 2
        %v2011 = vsel %vm407, %v2009, %v2010
        %v2012 = vrot.slane %v1954, 2
        %v2013 = vrot.slane %v1955, 2
        %v2014 = vsel %vm407, %v2012, %v2013
        %v2015 = vrot.slane %v1956, 2
        %v2016 = vrot.slane %v1957, 2
        %v2017 = vsel %vm407, %v2015, %v2016
        %v2018 = vrot.slane %v1958, 2
        %v2019 = vrot.slane %v1959, 2
        %v2020 = vsel %vm407, %v2018, %v2019
        %v2021 = vrot.slane %v1960, 2
        %v2022 = vrot.slane %v1961, 2
        %v2023 = vsel %vm407, %v2021, %v2022
        %v2024 = vrot.slane %v1962, 2
        %v2025 = vrot.slane %v1963, 2
        %v2026 = vsel %vm407, %v2024, %v2025
        %v2027 = vrot.slane %v1964, 2
        %v2028 = vrot.slane %v1965, 2
        %v2029 = vsel %vm407, %v2027, %v2028
        %v2030 = vrot.slane %v1966, 2
        %v2031 = vrot.slane %v1967, 2
        %v2032 = vsel %vm407, %v2030, %v2031
        %v2033 = vrot.slane %v1968, 2
        %v2034 = vrot.slane %v1969, 2
        %v2035 = vsel %vm407, %v2033, %v2034
        %v2036 = vrot.slane %v1970, 2
        %v2037 = vrot.slane %v1971, 2
        %v2038 = vsel %vm407, %v2036, %v2037
        %v2039 = vrot.slane %v1972, 2
        %v2040 = vrot.slane %v1973, 2
        %v2041 = vsel %vm407, %v2039, %v2040
        %v2042 = vrot.slane %v1974, 2
        %v2043 = vrot.slane %v1975, 2
        %v2044 = vsel %vm407, %v2042, %v2043
        %v2045 = vrot.slane %v1976, 2
        %v2046 = vrot.slane %v1977, 2
        %v2047 = vsel %vm407, %v2045, %v2046
        %2048 = vrot.lane.b32.xlu0 %v2006, 48
        %v2049 = vpop.permute.xlu0 %2048
        %2050 = vrot.lane.b32.xlu0 %v2008, 48
        %v2051 = vpop.permute.xlu0 %2050
        %2052 = vrot.lane.b32.xlu0 %v2007, 48
        %v2053 = vpop.permute.xlu0 %2052
        %2054 = vrot.lane.b32.xlu0 %v2009, 48
        %v2055 = vpop.permute.xlu0 %2054
        %2056 = vrot.lane.b32.xlu0 %v2011, 48
        %v2057 = vpop.permute.xlu0 %2056
        %2058 = vrot.lane.b32.xlu0 %v2010, 48
        %v2059 = vpop.permute.xlu0 %2058
        %2060 = vrot.lane.b32.xlu0 %v2012, 48
        %v2061 = vpop.permute.xlu0 %2060
        %2062 = vrot.lane.b32.xlu0 %v2014, 48
        %v2063 = vpop.permute.xlu0 %2062
        %2064 = vrot.lane.b32.xlu0 %v2013, 48
        %v2065 = vpop.permute.xlu0 %2064
        %2066 = vrot.lane.b32.xlu0 %v2015, 48
        %v2067 = vpop.permute.xlu0 %2066
        %2068 = vrot.lane.b32.xlu0 %v2017, 48
        %v2069 = vpop.permute.xlu0 %2068
        %2070 = vrot.lane.b32.xlu0 %v2016, 48
        %v2071 = vpop.permute.xlu0 %2070
        %2072 = vrot.lane.b32.xlu0 %v2018, 48
        %v2073 = vpop.permute.xlu0 %2072
        %2074 = vrot.lane.b32.xlu0 %v2020, 48
        %v2075 = vpop.permute.xlu0 %2074
        %2076 = vrot.lane.b32.xlu0 %v2019, 48
        %v2077 = vpop.permute.xlu0 %2076
        %2078 = vrot.lane.b32.xlu0 %v2021, 48
        %v2079 = vpop.permute.xlu0 %2078
        %2080 = vrot.lane.b32.xlu0 %v2023, 48
        %v2081 = vpop.permute.xlu0 %2080
        %2082 = vrot.lane.b32.xlu0 %v2022, 48
        %v2083 = vpop.permute.xlu0 %2082
        %2084 = vrot.lane.b32.xlu0 %v2024, 48
        %v2085 = vpop.permute.xlu0 %2084
        %2086 = vrot.lane.b32.xlu0 %v2026, 48
        %v2087 = vpop.permute.xlu0 %2086
        %2088 = vrot.lane.b32.xlu0 %v2025, 48
        %v2089 = vpop.permute.xlu0 %2088
        %2090 = vrot.lane.b32.xlu0 %v2027, 48
        %v2091 = vpop.permute.xlu0 %2090
        %2092 = vrot.lane.b32.xlu0 %v2029, 48
        %v2093 = vpop.permute.xlu0 %2092
        %2094 = vrot.lane.b32.xlu0 %v2028, 48
        %v2095 = vpop.permute.xlu0 %2094
        %2096 = vrot.lane.b32.xlu0 %v2030, 48
        %v2097 = vpop.permute.xlu0 %2096
        %2098 = vrot.lane.b32.xlu0 %v2032, 48
        %v2099 = vpop.permute.xlu0 %2098
        %2100 = vrot.lane.b32.xlu0 %v2031, 48
        %v2101 = vpop.permute.xlu0 %2100
        %2102 = vrot.lane.b32.xlu0 %v2033, 48
        %v2103 = vpop.permute.xlu0 %2102
        %2104 = vrot.lane.b32.xlu0 %v2035, 48
        %v2105 = vpop.permute.xlu0 %2104
        %2106 = vrot.lane.b32.xlu0 %v2034, 48
        %v2107 = vpop.permute.xlu0 %2106
        %2108 = vrot.lane.b32.xlu0 %v2036, 48
        %v2109 = vpop.permute.xlu0 %2108
        %2110 = vrot.lane.b32.xlu0 %v2038, 48
        %v2111 = vpop.permute.xlu0 %2110
        %2112 = vrot.lane.b32.xlu0 %v2037, 48
        %v2113 = vpop.permute.xlu0 %2112
        %2114 = vrot.lane.b32.xlu0 %v2039, 48
        %v2115 = vpop.permute.xlu0 %2114
        %2116 = vrot.lane.b32.xlu0 %v2041, 48
        %v2117 = vpop.permute.xlu0 %2116
        %2118 = vrot.lane.b32.xlu0 %v2040, 48
        %v2119 = vpop.permute.xlu0 %2118
        %2120 = vrot.lane.b32.xlu0 %v2042, 48
        %v2121 = vpop.permute.xlu0 %2120
        %2122 = vrot.lane.b32.xlu0 %v2044, 48
        %v2123 = vpop.permute.xlu0 %2122
        %2124 = vrot.lane.b32.xlu0 %v2043, 48
        %v2125 = vpop.permute.xlu0 %2124
        %2126 = vrot.lane.b32.xlu0 %v2045, 48
        %v2127 = vpop.permute.xlu0 %2126
        %2128 = vrot.lane.b32.xlu0 %v2047, 48
        %v2129 = vpop.permute.xlu0 %2128
        %2130 = vrot.lane.b32.xlu0 %v2046, 48
        %v2131 = vpop.permute.xlu0 %2130
        %vm2174 = vcmask 458118
        %2175 = vst.msk [vmem:[#allocation2] sm:$0xc0] %vm2174, %v2049
        %vm2176 = vcmask 458112
        %2177 = vst.msk [vmem:[#allocation2 + $0x18] sm:$0xff] %vm2176, %v2051
        %vm2178 = vcmask 454016
        %2179 = vst.msk [vmem:[#allocation2 + $0x30] sm:$0xf] %vm2178, %v2053
        %2180 = vst.msk [vmem:[#allocation2 + $0x48] sm:$0xc0] %vm2174, %v2055
        %2181 = vst.msk [vmem:[#allocation2 + $0x60] sm:$0xff] %vm2176, %v2057
        %2182 = vst.msk [vmem:[#allocation2 + $0x78] sm:$0xf] %vm2178, %v2059
        %2183 = vst.msk [vmem:[#allocation2 + $0x90] sm:$0xc0] %vm2174, %v2061
        %2184 = vst.msk [vmem:[#allocation2 + $0xa8] sm:$0xff] %vm2176, %v2063
        %2185 = vst.msk [vmem:[#allocation2 + $0xc0] sm:$0xf] %vm2178, %v2065
        %2186 = vst.msk [vmem:[#allocation2 + $0xd8] sm:$0xc0] %vm2174, %v2067
        %2187 = vst.msk [vmem:[#allocation2 + $0xf0] sm:$0xff] %vm2176, %v2069
        %2188 = vst.msk [vmem:[#allocation2 + $0x108] sm:$0xf] %vm2178, %v2071
        %2189 = vst.msk [vmem:[#allocation2 + $0x120] sm:$0xc0] %vm2174, %v2073
        %2190 = vst.msk [vmem:[#allocation2 + $0x138] sm:$0xff] %vm2176, %v2075
        %2191 = vst.msk [vmem:[#allocation2 + $0x150] sm:$0xf] %vm2178, %v2077
        %2192 = vst.msk [vmem:[#allocation2 + $0x168] sm:$0xc0] %vm2174, %v2079
        %2193 = vst.msk [vmem:[#allocation2 + $0x180] sm:$0xff] %vm2176, %v2081
        %2194 = vst.msk [vmem:[#allocation2 + $0x198] sm:$0xf] %vm2178, %v2083
        %2195 = vst.msk [vmem:[#allocation2 + $0x1b0] sm:$0xc0] %vm2174, %v2085
        %2196 = vst.msk [vmem:[#allocation2 + $0x1c8] sm:$0xff] %vm2176, %v2087
        %2197 = vst.msk [vmem:[#allocation2 + $0x1e0] sm:$0xf] %vm2178, %v2089
        %2198 = vst.msk [vmem:[#allocation2 + $0x1f8] sm:$0xc0] %vm2174, %v2091
        %2199 = vst.msk [vmem:[#allocation2 + $0x210] sm:$0xff] %vm2176, %v2093
        %2200 = vst.msk [vmem:[#allocation2 + $0x228] sm:$0xf] %vm2178, %v2095
        %2201 = vst.msk [vmem:[#allocation2 + $0x240] sm:$0xc0] %vm2174, %v2097
        %2202 = vst.msk [vmem:[#allocation2 + $0x258] sm:$0xff] %vm2176, %v2099
        %2203 = vst.msk [vmem:[#allocation2 + $0x270] sm:$0xf] %vm2178, %v2101
        %2204 = vst.msk [vmem:[#allocation2 + $0x288] sm:$0xc0] %vm2174, %v2103
        %2205 = vst.msk [vmem:[#allocation2 + $0x2a0] sm:$0xff] %vm2176, %v2105
        %2206 = vst.msk [vmem:[#allocation2 + $0x2b8] sm:$0xf] %vm2178, %v2107
        %2207 = vst.msk [vmem:[#allocation2 + $0x2d0] sm:$0xc0] %vm2174, %v2109
        %2208 = vst.msk [vmem:[#allocation2 + $0x2e8] sm:$0xff] %vm2176, %v2111
        %2209 = vst.msk [vmem:[#allocation2 + $0x300] sm:$0xf] %vm2178, %v2113
        %2210 = vst.msk [vmem:[#allocation2 + $0x318] sm:$0xc0] %vm2174, %v2115
        %2211 = vst.msk [vmem:[#allocation2 + $0x330] sm:$0xff] %vm2176, %v2117
        %2212 = vst.msk [vmem:[#allocation2 + $0x348] sm:$0xf] %vm2178, %v2119
        %2213 = vst.msk [vmem:[#allocation2 + $0x360] sm:$0xc0] %vm2174, %v2121
        %2214 = vst.msk [vmem:[#allocation2 + $0x378] sm:$0xff] %vm2176, %v2123
        %2215 = vst.msk [vmem:[#allocation2 + $0x390] sm:$0xf] %vm2178, %v2125
        %2216 = vst.msk [vmem:[#allocation2 + $0x3a8] sm:$0xc0] %vm2174, %v2127
        %2217 = vst.msk [vmem:[#allocation2 + $0x3c0] sm:$0xff] %vm2176, %v2129
        %2218 = vst.msk [vmem:[#allocation2 + $0x3d8] sm:$0xf] %vm2178, %v2131
        %v2219 = vld [vmem:[%s1949] sm:$0xff]
        %v2220 = vld [vmem:[%s1949 + $0x8] sm:$0xff]
        %v2221 = vld [vmem:[%s1949 + $0x10] sm:$0xf]
        %v2222 = vld [vmem:[%s1949 + $0x18] sm:$0xff]
        %v2223 = vld [vmem:[%s1949 + $0x20] sm:$0xff]
        %v2224 = vld [vmem:[%s1949 + $0x28] sm:$0xf]
        %v2225 = vld [vmem:[%s1949 + $0x30] sm:$0xff]
        %v2226 = vld [vmem:[%s1949 + $0x38] sm:$0xff]
        %v2227 = vld [vmem:[%s1949 + $0x40] sm:$0xf]
        %v2228 = vld [vmem:[%s1949 + $0x48] sm:$0xff]
        %v2229 = vld [vmem:[%s1949 + $0x50] sm:$0xff]
        %v2230 = vld [vmem:[%s1949 + $0x58] sm:$0xf]
        %v2231 = vld [vmem:[%s1949 + $0x60] sm:$0xff]
        %v2232 = vld [vmem:[%s1949 + $0x68] sm:$0xff]
        %v2233 = vld [vmem:[%s1949 + $0x70] sm:$0xf]
        %v2234 = vld [vmem:[%s1949 + $0x78] sm:$0xff]
        %v2235 = vld [vmem:[%s1949 + $0x80] sm:$0xff]
        %v2236 = vld [vmem:[%s1949 + $0x88] sm:$0xf]
        %v2237 = vld [vmem:[%s1949 + $0x90] sm:$0xff]
        %v2238 = vld [vmem:[%s1949 + $0x98] sm:$0xff]
        %v2239 = vld [vmem:[%s1949 + $0xa0] sm:$0xf]
        %v2240 = vld [vmem:[%s1949 + $0xa8] sm:$0xff]
        %v2241 = vld [vmem:[%s1949 + $0xb0] sm:$0xff]
        %v2242 = vld [vmem:[%s1949 + $0xb8] sm:$0xf]
        %v2243 = vld [vmem:[%s1949 + $0xc0] sm:$0xff]
        %v2244 = vld [vmem:[%s1949 + $0xc8] sm:$0xff]
        %v2245 = vld [vmem:[%s1949 + $0xd0] sm:$0xf]
        %v2246 = vld [vmem:[%s1949 + $0xd8] sm:$0xff]
        %v2247 = vld [vmem:[%s1949 + $0xe0] sm:$0xff]
        %v2248 = vld [vmem:[%s1949 + $0xe8] sm:$0xf]
        %v2249 = vld [vmem:[%s1949 + $0xf0] sm:$0xff]
        %v2250 = vld [vmem:[%s1949 + $0xf8] sm:$0xff]
        %v2251 = vld [vmem:[%s1949 + $0x100] sm:$0xf]
        %v2252 = vld [vmem:[%s1949 + $0x108] sm:$0xff]
        %v2253 = vld [vmem:[%s1949 + $0x110] sm:$0xff]
        %v2254 = vld [vmem:[%s1949 + $0x118] sm:$0xf]
        %v2255 = vld [vmem:[%s1949 + $0x120] sm:$0xff]
        %v2256 = vld [vmem:[%s1949 + $0x128] sm:$0xff]
        %v2257 = vld [vmem:[%s1949 + $0x130] sm:$0xf]
        %v2258 = vld [vmem:[%s1949 + $0x138] sm:$0xff]
        %v2259 = vld [vmem:[%s1949 + $0x140] sm:$0xff]
        %v2260 = vld [vmem:[%s1949 + $0x148] sm:$0xf]
        %2303 = vrot.lane.b32.xlu0 %v2219, 56
        %v2304 = vpop.permute.xlu0 %2303
        %2305 = vrot.lane.b32.xlu0 %v2220, 56
        %v2306 = vpop.permute.xlu0 %2305
        %2307 = vrot.lane.b32.xlu0 %v2221, 56
        %v2308 = vpop.permute.xlu0 %2307
        %2309 = vrot.lane.b32.xlu0 %v2222, 56
        %v2310 = vpop.permute.xlu0 %2309
        %2311 = vrot.lane.b32.xlu0 %v2223, 56
        %v2312 = vpop.permute.xlu0 %2311
        %2313 = vrot.lane.b32.xlu0 %v2224, 56
        %v2314 = vpop.permute.xlu0 %2313
        %2315 = vrot.lane.b32.xlu0 %v2225, 56
        %v2316 = vpop.permute.xlu0 %2315
        %2317 = vrot.lane.b32.xlu0 %v2226, 56
        %v2318 = vpop.permute.xlu0 %2317
        %2319 = vrot.lane.b32.xlu0 %v2227, 56
        %v2320 = vpop.permute.xlu0 %2319
        %2321 = vrot.lane.b32.xlu0 %v2228, 56
        %v2322 = vpop.permute.xlu0 %2321
        %2323 = vrot.lane.b32.xlu0 %v2229, 56
        %v2324 = vpop.permute.xlu0 %2323
        %2325 = vrot.lane.b32.xlu0 %v2230, 56
        %v2326 = vpop.permute.xlu0 %2325
        %2327 = vrot.lane.b32.xlu0 %v2231, 56
        %v2328 = vpop.permute.xlu0 %2327
        %2329 = vrot.lane.b32.xlu0 %v2232, 56
        %v2330 = vpop.permute.xlu0 %2329
        %2331 = vrot.lane.b32.xlu0 %v2233, 56
        %v2332 = vpop.permute.xlu0 %2331
        %2333 = vrot.lane.b32.xlu0 %v2234, 56
        %v2334 = vpop.permute.xlu0 %2333
        %2335 = vrot.lane.b32.xlu0 %v2235, 56
        %v2336 = vpop.permute.xlu0 %2335
        %2337 = vrot.lane.b32.xlu0 %v2236, 56
        %v2338 = vpop.permute.xlu0 %2337
        %2339 = vrot.lane.b32.xlu0 %v2237, 56
        %v2340 = vpop.permute.xlu0 %2339
        %2341 = vrot.lane.b32.xlu0 %v2238, 56
        %v2342 = vpop.permute.xlu0 %2341
        %2343 = vrot.lane.b32.xlu0 %v2239, 56
        %v2344 = vpop.permute.xlu0 %2343
        %2345 = vrot.lane.b32.xlu0 %v2240, 56
        %v2346 = vpop.permute.xlu0 %2345
        %2347 = vrot.lane.b32.xlu0 %v2241, 56
        %v2348 = vpop.permute.xlu0 %2347
        %2349 = vrot.lane.b32.xlu0 %v2242, 56
        %v2350 = vpop.permute.xlu0 %2349
        %2351 = vrot.lane.b32.xlu0 %v2243, 56
        %v2352 = vpop.permute.xlu0 %2351
        %2353 = vrot.lane.b32.xlu0 %v2244, 56
        %v2354 = vpop.permute.xlu0 %2353
        %2355 = vrot.lane.b32.xlu0 %v2245, 56
        %v2356 = vpop.permute.xlu0 %2355
        %2357 = vrot.lane.b32.xlu0 %v2246, 56
        %v2358 = vpop.permute.xlu0 %2357
        %2359 = vrot.lane.b32.xlu0 %v2247, 56
        %v2360 = vpop.permute.xlu0 %2359
        %2361 = vrot.lane.b32.xlu0 %v2248, 56
        %v2362 = vpop.permute.xlu0 %2361
        %2363 = vrot.lane.b32.xlu0 %v2249, 56
        %v2364 = vpop.permute.xlu0 %2363
        %2365 = vrot.lane.b32.xlu0 %v2250, 56
        %v2366 = vpop.permute.xlu0 %2365
        %2367 = vrot.lane.b32.xlu0 %v2251, 56
        %v2368 = vpop.permute.xlu0 %2367
        %2369 = vrot.lane.b32.xlu0 %v2252, 56
        %v2370 = vpop.permute.xlu0 %2369
        %2371 = vrot.lane.b32.xlu0 %v2253, 56
        %v2372 = vpop.permute.xlu0 %2371
        %2373 = vrot.lane.b32.xlu0 %v2254, 56
        %v2374 = vpop.permute.xlu0 %2373
        %2375 = vrot.lane.b32.xlu0 %v2255, 56
        %v2376 = vpop.permute.xlu0 %2375
        %2377 = vrot.lane.b32.xlu0 %v2256, 56
        %v2378 = vpop.permute.xlu0 %2377
        %2379 = vrot.lane.b32.xlu0 %v2257, 56
        %v2380 = vpop.permute.xlu0 %2379
        %2381 = vrot.lane.b32.xlu0 %v2258, 56
        %v2382 = vpop.permute.xlu0 %2381
        %2383 = vrot.lane.b32.xlu0 %v2259, 56
        %v2384 = vpop.permute.xlu0 %2383
        %2385 = vrot.lane.b32.xlu0 %v2260, 56
        %v2386 = vpop.permute.xlu0 %2385
        %vm2429 = vcmask 523712
        %2430 = vst.msk [vmem:[#allocation2] sm:$0xff] %vm2429, %v2304
        %2431 = vst.msk [vmem:[#allocation2 + $0x18] sm:$0xff] %vm2429, %v2306
        %vm2432 = vcmask 519616
        %2433 = vst.msk [vmem:[#allocation2 + $0x30] sm:$0xf] %vm2432, %v2308
        %2434 = vst.msk [vmem:[#allocation2 + $0x48] sm:$0xff] %vm2429, %v2310
        %2435 = vst.msk [vmem:[#allocation2 + $0x60] sm:$0xff] %vm2429, %v2312
        %2436 = vst.msk [vmem:[#allocation2 + $0x78] sm:$0xf] %vm2432, %v2314
        %2437 = vst.msk [vmem:[#allocation2 + $0x90] sm:$0xff] %vm2429, %v2316
        %2438 = vst.msk [vmem:[#allocation2 + $0xa8] sm:$0xff] %vm2429, %v2318
        %2439 = vst.msk [vmem:[#allocation2 + $0xc0] sm:$0xf] %vm2432, %v2320
        %2440 = vst.msk [vmem:[#allocation2 + $0xd8] sm:$0xff] %vm2429, %v2322
        %2441 = vst.msk [vmem:[#allocation2 + $0xf0] sm:$0xff] %vm2429, %v2324
        %2442 = vst.msk [vmem:[#allocation2 + $0x108] sm:$0xf] %vm2432, %v2326
        %2443 = vst.msk [vmem:[#allocation2 + $0x120] sm:$0xff] %vm2429, %v2328
        %2444 = vst.msk [vmem:[#allocation2 + $0x138] sm:$0xff] %vm2429, %v2330
        %2445 = vst.msk [vmem:[#allocation2 + $0x150] sm:$0xf] %vm2432, %v2332
        %2446 = vst.msk [vmem:[#allocation2 + $0x168] sm:$0xff] %vm2429, %v2334
        %2447 = vst.msk [vmem:[#allocation2 + $0x180] sm:$0xff] %vm2429, %v2336
        %2448 = vst.msk [vmem:[#allocation2 + $0x198] sm:$0xf] %vm2432, %v2338
        %2449 = vst.msk [vmem:[#allocation2 + $0x1b0] sm:$0xff] %vm2429, %v2340
        %2450 = vst.msk [vmem:[#allocation2 + $0x1c8] sm:$0xff] %vm2429, %v2342
        %2451 = vst.msk [vmem:[#allocation2 + $0x1e0] sm:$0xf] %vm2432, %v2344
        %2452 = vst.msk [vmem:[#allocation2 + $0x1f8] sm:$0xff] %vm2429, %v2346
        %2453 = vst.msk [vmem:[#allocation2 + $0x210] sm:$0xff] %vm2429, %v2348
        %2454 = vst.msk [vmem:[#allocation2 + $0x228] sm:$0xf] %vm2432, %v2350
        %2455 = vst.msk [vmem:[#allocation2 + $0x240] sm:$0xff] %vm2429, %v2352
        %2456 = vst.msk [vmem:[#allocation2 + $0x258] sm:$0xff] %vm2429, %v2354
        %2457 = vst.msk [vmem:[#allocation2 + $0x270] sm:$0xf] %vm2432, %v2356
        %2458 = vst.msk [vmem:[#allocation2 + $0x288] sm:$0xff] %vm2429, %v2358
        %2459 = vst.msk [vmem:[#allocation2 + $0x2a0] sm:$0xff] %vm2429, %v2360
        %2460 = vst.msk [vmem:[#allocation2 + $0x2b8] sm:$0xf] %vm2432, %v2362
        %2461 = vst.msk [vmem:[#allocation2 + $0x2d0] sm:$0xff] %vm2429, %v2364
        %2462 = vst.msk [vmem:[#allocation2 + $0x2e8] sm:$0xff] %vm2429, %v2366
        %2463 = vst.msk [vmem:[#allocation2 + $0x300] sm:$0xf] %vm2432, %v2368
        %2464 = vst.msk [vmem:[#allocation2 + $0x318] sm:$0xff] %vm2429, %v2370
        %2465 = vst.msk [vmem:[#allocation2 + $0x330] sm:$0xff] %vm2429, %v2372
        %2466 = vst.msk [vmem:[#allocation2 + $0x348] sm:$0xf] %vm2432, %v2374
        %2467 = vst.msk [vmem:[#allocation2 + $0x360] sm:$0xff] %vm2429, %v2376
        %2468 = vst.msk [vmem:[#allocation2 + $0x378] sm:$0xff] %vm2429, %v2378
        %2469 = vst.msk [vmem:[#allocation2 + $0x390] sm:$0xf] %vm2432, %v2380
        %2470 = vst.msk [vmem:[#allocation2 + $0x3a8] sm:$0xff] %vm2429, %v2382
        %2471 = vst.msk [vmem:[#allocation2 + $0x3c0] sm:$0xff] %vm2429, %v2384
        %2472 = vst.msk [vmem:[#allocation2 + $0x3d8] sm:$0xf] %vm2432, %v2386
        %v2473 = vld [vmem:[%s1949 + $0x6] sm:$0xff]
        %v2474 = vld [vmem:[%s1949 + $0xe] sm:$0x3f]
        %v2475 = vld [vmem:[%s1949 + $0x1e] sm:$0xff]
        %v2476 = vld [vmem:[%s1949 + $0x26] sm:$0x3f]
        %v2477 = vld [vmem:[%s1949 + $0x36] sm:$0xff]
        %v2478 = vld [vmem:[%s1949 + $0x3e] sm:$0x3f]
        %v2479 = vld [vmem:[%s1949 + $0x4e] sm:$0xff]
        %v2480 = vld [vmem:[%s1949 + $0x56] sm:$0x3f]
        %v2481 = vld [vmem:[%s1949 + $0x66] sm:$0xff]
        %v2482 = vld [vmem:[%s1949 + $0x6e] sm:$0x3f]
        %v2483 = vld [vmem:[%s1949 + $0x7e] sm:$0xff]
        %v2484 = vld [vmem:[%s1949 + $0x86] sm:$0x3f]
        %v2485 = vld [vmem:[%s1949 + $0x96] sm:$0xff]
        %v2486 = vld [vmem:[%s1949 + $0x9e] sm:$0x3f]
        %v2487 = vld [vmem:[%s1949 + $0xae] sm:$0xff]
        %v2488 = vld [vmem:[%s1949 + $0xb6] sm:$0x3f]
        %v2489 = vld [vmem:[%s1949 + $0xc6] sm:$0xff]
        %v2490 = vld [vmem:[%s1949 + $0xce] sm:$0x3f]
        %v2491 = vld [vmem:[%s1949 + $0xde] sm:$0xff]
        %v2492 = vld [vmem:[%s1949 + $0xe6] sm:$0x3f]
        %v2493 = vld [vmem:[%s1949 + $0xf6] sm:$0xff]
        %v2494 = vld [vmem:[%s1949 + $0xfe] sm:$0x3f]
        %v2495 = vld [vmem:[%s1949 + $0x10e] sm:$0xff]
        %v2496 = vld [vmem:[%s1949 + $0x116] sm:$0x3f]
        %v2497 = vld [vmem:[%s1949 + $0x126] sm:$0xff]
        %v2498 = vld [vmem:[%s1949 + $0x12e] sm:$0x3f]
        %v2499 = vld [vmem:[%s1949 + $0x13e] sm:$0xff]
        %v2500 = vld [vmem:[%s1949 + $0x146] sm:$0x3f]
        %2529 = vrot.lane.b32.xlu0 %v2473, 64
        %v2530 = vpop.permute.xlu0 %2529
        %2531 = vrot.lane.b32.xlu0 %v2474, 64
        %v2532 = vpop.permute.xlu0 %2531
        %2533 = vrot.lane.b32.xlu0 %v2475, 64
        %v2534 = vpop.permute.xlu0 %2533
        %2535 = vrot.lane.b32.xlu0 %v2476, 64
        %v2536 = vpop.permute.xlu0 %2535
        %2537 = vrot.lane.b32.xlu0 %v2477, 64
        %v2538 = vpop.permute.xlu0 %2537
        %2539 = vrot.lane.b32.xlu0 %v2478, 64
        %v2540 = vpop.permute.xlu0 %2539
        %2541 = vrot.lane.b32.xlu0 %v2479, 64
        %v2542 = vpop.permute.xlu0 %2541
        %2543 = vrot.lane.b32.xlu0 %v2480, 64
        %v2544 = vpop.permute.xlu0 %2543
        %2545 = vrot.lane.b32.xlu0 %v2481, 64
        %v2546 = vpop.permute.xlu0 %2545
        %2547 = vrot.lane.b32.xlu0 %v2482, 64
        %v2548 = vpop.permute.xlu0 %2547
        %2549 = vrot.lane.b32.xlu0 %v2483, 64
        %v2550 = vpop.permute.xlu0 %2549
        %2551 = vrot.lane.b32.xlu0 %v2484, 64
        %v2552 = vpop.permute.xlu0 %2551
        %2553 = vrot.lane.b32.xlu0 %v2485, 64
        %v2554 = vpop.permute.xlu0 %2553
        %2555 = vrot.lane.b32.xlu0 %v2486, 64
        %v2556 = vpop.permute.xlu0 %2555
        %2557 = vrot.lane.b32.xlu0 %v2487, 64
        %v2558 = vpop.permute.xlu0 %2557
        %2559 = vrot.lane.b32.xlu0 %v2488, 64
        %v2560 = vpop.permute.xlu0 %2559
        %2561 = vrot.lane.b32.xlu0 %v2489, 64
        %v2562 = vpop.permute.xlu0 %2561
        %2563 = vrot.lane.b32.xlu0 %v2490, 64
        %v2564 = vpop.permute.xlu0 %2563
        %2565 = vrot.lane.b32.xlu0 %v2491, 64
        %v2566 = vpop.permute.xlu0 %2565
        %2567 = vrot.lane.b32.xlu0 %v2492, 64
        %v2568 = vpop.permute.xlu0 %2567
        %2569 = vrot.lane.b32.xlu0 %v2493, 64
        %v2570 = vpop.permute.xlu0 %2569
        %2571 = vrot.lane.b32.xlu0 %v2494, 64
        %v2572 = vpop.permute.xlu0 %2571
        %2573 = vrot.lane.b32.xlu0 %v2495, 64
        %v2574 = vpop.permute.xlu0 %2573
        %2575 = vrot.lane.b32.xlu0 %v2496, 64
        %v2576 = vpop.permute.xlu0 %2575
        %2577 = vrot.lane.b32.xlu0 %v2497, 64
        %v2578 = vpop.permute.xlu0 %2577
        %2579 = vrot.lane.b32.xlu0 %v2498, 64
        %v2580 = vpop.permute.xlu0 %2579
        %2581 = vrot.lane.b32.xlu0 %v2499, 64
        %v2582 = vpop.permute.xlu0 %2581
        %2583 = vrot.lane.b32.xlu0 %v2500, 64
        %v2584 = vpop.permute.xlu0 %2583
        %vm2613 = vcmask 589312
        %2614 = vst.msk [vmem:[#allocation2] sm:$0xff] %vm2613, %v2530
        %vm2615 = vcmask 587264
        %2616 = vst.msk [vmem:[#allocation2 + $0x18] sm:$0x3f] %vm2615, %v2532
        %2617 = vst.msk [vmem:[#allocation2 + $0x48] sm:$0xff] %vm2613, %v2534
        %2618 = vst.msk [vmem:[#allocation2 + $0x60] sm:$0x3f] %vm2615, %v2536
        %2619 = vst.msk [vmem:[#allocation2 + $0x90] sm:$0xff] %vm2613, %v2538
        %2620 = vst.msk [vmem:[#allocation2 + $0xa8] sm:$0x3f] %vm2615, %v2540
        %2621 = vst.msk [vmem:[#allocation2 + $0xd8] sm:$0xff] %vm2613, %v2542
        %2622 = vst.msk [vmem:[#allocation2 + $0xf0] sm:$0x3f] %vm2615, %v2544
        %2623 = vst.msk [vmem:[#allocation2 + $0x120] sm:$0xff] %vm2613, %v2546
        %2624 = vst.msk [vmem:[#allocation2 + $0x138] sm:$0x3f] %vm2615, %v2548
        %2625 = vst.msk [vmem:[#allocation2 + $0x168] sm:$0xff] %vm2613, %v2550
        %2626 = vst.msk [vmem:[#allocation2 + $0x180] sm:$0x3f] %vm2615, %v2552
        %2627 = vst.msk [vmem:[#allocation2 + $0x1b0] sm:$0xff] %vm2613, %v2554
        %2628 = vst.msk [vmem:[#allocation2 + $0x1c8] sm:$0x3f] %vm2615, %v2556
        %2629 = vst.msk [vmem:[#allocation2 + $0x1f8] sm:$0xff] %vm2613, %v2558
        %2630 = vst.msk [vmem:[#allocation2 + $0x210] sm:$0x3f] %vm2615, %v2560
        %2631 = vst.msk [vmem:[#allocation2 + $0x240] sm:$0xff] %vm2613, %v2562
        %2632 = vst.msk [vmem:[#allocation2 + $0x258] sm:$0x3f] %vm2615, %v2564
        %2633 = vst.msk [vmem:[#allocation2 + $0x288] sm:$0xff] %vm2613, %v2566
        %2634 = vst.msk [vmem:[#allocation2 + $0x2a0] sm:$0x3f] %vm2615, %v2568
        %2635 = vst.msk [vmem:[#allocation2 + $0x2d0] sm:$0xff] %vm2613, %v2570
        %2636 = vst.msk [vmem:[#allocation2 + $0x2e8] sm:$0x3f] %vm2615, %v2572
        %2637 = vst.msk [vmem:[#allocation2 + $0x318] sm:$0xff] %vm2613, %v2574
        %2638 = vst.msk [vmem:[#allocation2 + $0x330] sm:$0x3f] %vm2615, %v2576
        %2639 = vst.msk [vmem:[#allocation2 + $0x360] sm:$0xff] %vm2613, %v2578
        %2640 = vst.msk [vmem:[#allocation2 + $0x378] sm:$0x3f] %vm2615, %v2580
        %2641 = vst.msk [vmem:[#allocation2 + $0x3a8] sm:$0xff] %vm2613, %v2582
        %2642 = vst.msk [vmem:[#allocation2 + $0x3c0] sm:$0x3f] %vm2615, %v2584
        %v2643 = vld [vmem:[%s168] sm:$0xff]
        %v2644 = vld [vmem:[%s168 + $0x18] sm:$0xff]
        %v2645 = vld [vmem:[%s168 + $0x30] sm:$0xff]
        %v2646 = vld [vmem:[%s168 + $0x48] sm:$0xff]
        %v2647 = vld [vmem:[%s168 + $0x60] sm:$0xff]
        %v2648 = vld [vmem:[%s168 + $0x78] sm:$0xff]
        %v2649 = vld [vmem:[%s168 + $0x90] sm:$0xff]
        %v2650 = vld [vmem:[%s168 + $0xa8] sm:$0xff]
        %v2659 = vrot.slane %v2643, 4
        %v2660 = vrot.slane %v2644, 4
        %v2661 = vrot.slane %v2645, 4
        %v2662 = vrot.slane %v2646, 4
        %v2663 = vrot.slane %v2647, 4
        %v2664 = vrot.slane %v2648, 4
        %v2665 = vrot.slane %v2649, 4
        %v2666 = vrot.slane %v2650, 4
        %2667 = vrot.lane.b32.xlu0 %v2659, 72
        %v2668 = vpop.permute.xlu0 %2667
        %2669 = vrot.lane.b32.xlu0 %v2660, 72
        %v2670 = vpop.permute.xlu0 %2669
        %2671 = vrot.lane.b32.xlu0 %v2661, 72
        %v2672 = vpop.permute.xlu0 %2671
        %2673 = vrot.lane.b32.xlu0 %v2662, 72
        %v2674 = vpop.permute.xlu0 %2673
        %2675 = vrot.lane.b32.xlu0 %v2663, 72
        %v2676 = vpop.permute.xlu0 %2675
        %2677 = vrot.lane.b32.xlu0 %v2664, 72
        %v2678 = vpop.permute.xlu0 %2677
        %2679 = vrot.lane.b32.xlu0 %v2665, 72
        %v2680 = vpop.permute.xlu0 %2679
        %2681 = vrot.lane.b32.xlu0 %v2666, 72
        %v2682 = vpop.permute.xlu0 %2681
        %s2691 = scalar_lea.vmem [#allocation2], 864
        %vm2692 = vcmask 654916
        %2693 = vst.msk [vmem:[%s2691 + $0x18] sm:$0xf0] %vm2692, %v2668
        %vm2694 = vcmask 650816
        %2695 = vst.msk [vmem:[%s2691 + $0x30] sm:$0xf] %vm2694, %v2668
        %2696 = vst.msk [vmem:[%s2691 + $0x60] sm:$0xf0] %vm2692, %v2670
        %2697 = vst.msk [vmem:[%s2691 + $0x78] sm:$0xf] %vm2694, %v2670
        %2698 = vst.msk [vmem:[%s2691 + $0xa8] sm:$0xf0] %vm2692, %v2672
        %2699 = vst.msk [vmem:[%s2691 + $0xc0] sm:$0xf] %vm2694, %v2672
        %2700 = vst.msk [vmem:[%s2691 + $0xf0] sm:$0xf0] %vm2692, %v2674
        %2701 = vst.msk [vmem:[%s2691 + $0x108] sm:$0xf] %vm2694, %v2674
        %2702 = vst.msk [vmem:[%s2691 + $0x138] sm:$0xf0] %vm2692, %v2676
        %2703 = vst.msk [vmem:[%s2691 + $0x150] sm:$0xf] %vm2694, %v2676
        %2704 = vst.msk [vmem:[%s2691 + $0x180] sm:$0xf0] %vm2692, %v2678
        %2705 = vst.msk [vmem:[%s2691 + $0x198] sm:$0xf] %vm2694, %v2678
        %2706 = vst.msk [vmem:[%s2691 + $0x1c8] sm:$0xf0] %vm2692, %v2680
        %2707 = vst.msk [vmem:[%s2691 + $0x1e0] sm:$0xf] %vm2694, %v2680
        %2708 = vst.msk [vmem:[%s2691 + $0x210] sm:$0xf0] %vm2692, %v2682
        %2709 = vst.msk [vmem:[%s2691 + $0x228] sm:$0xf] %vm2694, %v2682
        %v2710 = vld [vmem:[%s168] sm:$0xff]
        %v2711 = vld [vmem:[%s168 + $0x8] sm:$0xff]
        %v2712 = vld [vmem:[%s168 + $0x10] sm:$0xf]
        %v2713 = vld [vmem:[%s168 + $0x18] sm:$0xff]
        %v2714 = vld [vmem:[%s168 + $0x20] sm:$0xff]
        %v2715 = vld [vmem:[%s168 + $0x28] sm:$0xf]
        %v2716 = vld [vmem:[%s168 + $0x30] sm:$0xff]
        %v2717 = vld [vmem:[%s168 + $0x38] sm:$0xff]
        %v2718 = vld [vmem:[%s168 + $0x40] sm:$0xf]
        %v2719 = vld [vmem:[%s168 + $0x48] sm:$0xff]
        %v2720 = vld [vmem:[%s168 + $0x50] sm:$0xff]
        %v2721 = vld [vmem:[%s168 + $0x58] sm:$0xf]
        %v2722 = vld [vmem:[%s168 + $0x60] sm:$0xff]
        %v2723 = vld [vmem:[%s168 + $0x68] sm:$0xff]
        %v2724 = vld [vmem:[%s168 + $0x70] sm:$0xf]
        %v2725 = vld [vmem:[%s168 + $0x78] sm:$0xff]
        %v2726 = vld [vmem:[%s168 + $0x80] sm:$0xff]
        %v2727 = vld [vmem:[%s168 + $0x88] sm:$0xf]
        %v2728 = vld [vmem:[%s168 + $0x90] sm:$0xff]
        %v2729 = vld [vmem:[%s168 + $0x98] sm:$0xff]
        %v2730 = vld [vmem:[%s168 + $0xa0] sm:$0xf]
        %v2731 = vld [vmem:[%s168 + $0xa8] sm:$0xff]
        %v2732 = vld [vmem:[%s168 + $0xb0] sm:$0xff]
        %v2733 = vld [vmem:[%s168 + $0xb8] sm:$0xf]
        %2758 = vrot.lane.b32.xlu0 %v2710, 80
        %v2759 = vpop.permute.xlu0 %2758
        %2760 = vrot.lane.b32.xlu0 %v2711, 80
        %v2761 = vpop.permute.xlu0 %2760
        %2762 = vrot.lane.b32.xlu0 %v2712, 80
        %v2763 = vpop.permute.xlu0 %2762
        %2764 = vrot.lane.b32.xlu0 %v2713, 80
        %v2765 = vpop.permute.xlu0 %2764
        %2766 = vrot.lane.b32.xlu0 %v2714, 80
        %v2767 = vpop.permute.xlu0 %2766
        %2768 = vrot.lane.b32.xlu0 %v2715, 80
        %v2769 = vpop.permute.xlu0 %2768
        %2770 = vrot.lane.b32.xlu0 %v2716, 80
        %v2771 = vpop.permute.xlu0 %2770
        %2772 = vrot.lane.b32.xlu0 %v2717, 80
        %v2773 = vpop.permute.xlu0 %2772
        %2774 = vrot.lane.b32.xlu0 %v2718, 80
        %v2775 = vpop.permute.xlu0 %2774
        %2776 = vrot.lane.b32.xlu0 %v2719, 80
        %v2777 = vpop.permute.xlu0 %2776
        %2778 = vrot.lane.b32.xlu0 %v2720, 80
        %v2779 = vpop.permute.xlu0 %2778
        %2780 = vrot.lane.b32.xlu0 %v2721, 80
        %v2781 = vpop.permute.xlu0 %2780
        %2782 = vrot.lane.b32.xlu0 %v2722, 80
        %v2783 = vpop.permute.xlu0 %2782
        %2784 = vrot.lane.b32.xlu0 %v2723, 80
        %v2785 = vpop.permute.xlu0 %2784
        %2786 = vrot.lane.b32.xlu0 %v2724, 80
        %v2787 = vpop.permute.xlu0 %2786
        %2788 = vrot.lane.b32.xlu0 %v2725, 80
        %v2789 = vpop.permute.xlu0 %2788
        %2790 = vrot.lane.b32.xlu0 %v2726, 80
        %v2791 = vpop.permute.xlu0 %2790
        %2792 = vrot.lane.b32.xlu0 %v2727, 80
        %v2793 = vpop.permute.xlu0 %2792
        %2794 = vrot.lane.b32.xlu0 %v2728, 80
        %v2795 = vpop.permute.xlu0 %2794
        %2796 = vrot.lane.b32.xlu0 %v2729, 80
        %v2797 = vpop.permute.xlu0 %2796
        %2798 = vrot.lane.b32.xlu0 %v2730, 80
        %v2799 = vpop.permute.xlu0 %2798
        %2800 = vrot.lane.b32.xlu0 %v2731, 80
        %v2801 = vpop.permute.xlu0 %2800
        %2802 = vrot.lane.b32.xlu0 %v2732, 80
        %v2803 = vpop.permute.xlu0 %2802
        %2804 = vrot.lane.b32.xlu0 %v2733, 80
        %v2805 = vpop.permute.xlu0 %2804
        %vm2830 = vcmask 720512
        %2831 = vst.msk [vmem:[%s2691] sm:$0xff] %vm2830, %v2759
        %2832 = vst.msk [vmem:[%s2691 + $0x18] sm:$0xff] %vm2830, %v2761
        %vm2833 = vcmask 716416
        %2834 = vst.msk [vmem:[%s2691 + $0x30] sm:$0xf] %vm2833, %v2763
        %2835 = vst.msk [vmem:[%s2691 + $0x48] sm:$0xff] %vm2830, %v2765
        %2836 = vst.msk [vmem:[%s2691 + $0x60] sm:$0xff] %vm2830, %v2767
        %2837 = vst.msk [vmem:[%s2691 + $0x78] sm:$0xf] %vm2833, %v2769
        %2838 = vst.msk [vmem:[%s2691 + $0x90] sm:$0xff] %vm2830, %v2771
        %2839 = vst.msk [vmem:[%s2691 + $0xa8] sm:$0xff] %vm2830, %v2773
        %2840 = vst.msk [vmem:[%s2691 + $0xc0] sm:$0xf] %vm2833, %v2775
        %2841 = vst.msk [vmem:[%s2691 + $0xd8] sm:$0xff] %vm2830, %v2777
        %2842 = vst.msk [vmem:[%s2691 + $0xf0] sm:$0xff] %vm2830, %v2779
        %2843 = vst.msk [vmem:[%s2691 + $0x108] sm:$0xf] %vm2833, %v2781
        %2844 = vst.msk [vmem:[%s2691 + $0x120] sm:$0xff] %vm2830, %v2783
        %2845 = vst.msk [vmem:[%s2691 + $0x138] sm:$0xff] %vm2830, %v2785
        %2846 = vst.msk [vmem:[%s2691 + $0x150] sm:$0xf] %vm2833, %v2787
        %2847 = vst.msk [vmem:[%s2691 + $0x168] sm:$0xff] %vm2830, %v2789
        %2848 = vst.msk [vmem:[%s2691 + $0x180] sm:$0xff] %vm2830, %v2791
        %2849 = vst.msk [vmem:[%s2691 + $0x198] sm:$0xf] %vm2833, %v2793
        %2850 = vst.msk [vmem:[%s2691 + $0x1b0] sm:$0xff] %vm2830, %v2795
        %2851 = vst.msk [vmem:[%s2691 + $0x1c8] sm:$0xff] %vm2830, %v2797
        %2852 = vst.msk [vmem:[%s2691 + $0x1e0] sm:$0xf] %vm2833, %v2799
        %2853 = vst.msk [vmem:[%s2691 + $0x1f8] sm:$0xff] %vm2830, %v2801
        %2854 = vst.msk [vmem:[%s2691 + $0x210] sm:$0xff] %vm2830, %v2803
        %2855 = vst.msk [vmem:[%s2691 + $0x228] sm:$0xf] %vm2833, %v2805
        %v2856 = vld [vmem:[%s168 + $0xc] sm:$0xff]
        %v2857 = vld [vmem:[%s168 + $0x24] sm:$0xff]
        %v2858 = vld [vmem:[%s168 + $0x3c] sm:$0xff]
        %v2859 = vld [vmem:[%s168 + $0x54] sm:$0xff]
        %v2860 = vld [vmem:[%s168 + $0x6c] sm:$0xff]
        %v2861 = vld [vmem:[%s168 + $0x84] sm:$0xff]
        %v2862 = vld [vmem:[%s168 + $0x9c] sm:$0xff]
        %v2863 = vld [vmem:[%s168 + $0xb4] sm:$0xff]
        %2872 = vrot.lane.b32.xlu0 %v2856, 88
        %v2873 = vpop.permute.xlu0 %2872
        %2874 = vrot.lane.b32.xlu0 %v2857, 88
        %v2875 = vpop.permute.xlu0 %2874
        %2876 = vrot.lane.b32.xlu0 %v2858, 88
        %v2877 = vpop.permute.xlu0 %2876
        %2878 = vrot.lane.b32.xlu0 %v2859, 88
        %v2879 = vpop.permute.xlu0 %2878
        %2880 = vrot.lane.b32.xlu0 %v2860, 88
        %v2881 = vpop.permute.xlu0 %2880
        %2882 = vrot.lane.b32.xlu0 %v2861, 88
        %v2883 = vpop.permute.xlu0 %2882
        %2884 = vrot.lane.b32.xlu0 %v2862, 88
        %v2885 = vpop.permute.xlu0 %2884
        %2886 = vrot.lane.b32.xlu0 %v2863, 88
        %v2887 = vpop.permute.xlu0 %2886
        %vm2896 = vcmask 786112
        %2897 = vst.msk [vmem:[%s2691] sm:$0xff] %vm2896, %v2873
        %2898 = vst.msk [vmem:[%s2691 + $0x48] sm:$0xff] %vm2896, %v2875
        %2899 = vst.msk [vmem:[%s2691 + $0x90] sm:$0xff] %vm2896, %v2877
        %2900 = vst.msk [vmem:[%s2691 + $0xd8] sm:$0xff] %vm2896, %v2879
        %2901 = vst.msk [vmem:[%s2691 + $0x120] sm:$0xff] %vm2896, %v2881
        %2902 = vst.msk [vmem:[%s2691 + $0x168] sm:$0xff] %vm2896, %v2883
        %2903 = vst.msk [vmem:[%s2691 + $0x1b0] sm:$0xff] %vm2896, %v2885
        %2904 = vst.msk [vmem:[%s2691 + $0x1f8] sm:$0xff] %vm2896, %v2887
        %v2905 = vld [vmem:[%s168] sm:$0xff]
        %v2906 = vld [vmem:[%s168 + $0x18] sm:$0xff]
        %v2907 = vld [vmem:[%s168 + $0x30] sm:$0xff]
        %v2908 = vld [vmem:[%s168 + $0x48] sm:$0xff]
        %v2909 = vld [vmem:[%s168 + $0x60] sm:$0xff]
        %v2910 = vld [vmem:[%s168 + $0x78] sm:$0xff]
        %v2911 = vld [vmem:[%s168 + $0x90] sm:$0xff]
        %v2912 = vld [vmem:[%s168 + $0xa8] sm:$0xff]
        %v2913 = vld [vmem:[%s168 + $0xc0] sm:$0xff]
        %v2914 = vld [vmem:[%s168 + $0xd8] sm:$0xff]
        %v2915 = vld [vmem:[%s168 + $0xf0] sm:$0xff]
        %v2916 = vld [vmem:[%s168 + $0x108] sm:$0xff]
        %v2917 = vld [vmem:[%s168 + $0x120] sm:$0xff]
        %v2918 = vld [vmem:[%s168 + $0x138] sm:$0xff]
        %v2919 = vld [vmem:[%s168 + $0x150] sm:$0xff]
        %v2920 = vld [vmem:[%s168 + $0x168] sm:$0xff]
        %v2921 = vld [vmem:[%s168 + $0x180] sm:$0xff]
        %v2922 = vld [vmem:[%s168 + $0x198] sm:$0xff]
        %v2923 = vld [vmem:[%s168 + $0x1b0] sm:$0xff]
        %v2924 = vld [vmem:[%s168 + $0x1c8] sm:$0xff]
        %v2945 = vrot.slane %v2905, 4
        %v2946 = vrot.slane %v2906, 4
        %v2947 = vrot.slane %v2907, 4
        %v2948 = vrot.slane %v2908, 4
        %v2949 = vrot.slane %v2909, 4
        %v2950 = vrot.slane %v2910, 4
        %v2951 = vrot.slane %v2911, 4
        %v2952 = vrot.slane %v2912, 4
        %v2953 = vrot.slane %v2913, 4
        %v2954 = vrot.slane %v2914, 4
        %v2955 = vrot.slane %v2915, 4
        %v2956 = vrot.slane %v2916, 4
        %v2957 = vrot.slane %v2917, 4
        %v2958 = vrot.slane %v2918, 4
        %v2959 = vrot.slane %v2919, 4
        %v2960 = vrot.slane %v2920, 4
        %v2961 = vrot.slane %v2921, 4
        %v2962 = vrot.slane %v2922, 4
        %v2963 = vrot.slane %v2923, 4
        %v2964 = vrot.slane %v2924, 4
        %2965 = vrot.lane.b32.xlu0 %v2945, 96
        %v2966 = vpop.permute.xlu0 %2965
        %2967 = vrot.lane.b32.xlu0 %v2946, 96
        %v2968 = vpop.permute.xlu0 %2967
        %2969 = vrot.lane.b32.xlu0 %v2947, 96
        %v2970 = vpop.permute.xlu0 %2969
        %2971 = vrot.lane.b32.xlu0 %v2948, 96
        %v2972 = vpop.permute.xlu0 %2971
        %2973 = vrot.lane.b32.xlu0 %v2949, 96
        %v2974 = vpop.permute.xlu0 %2973
        %2975 = vrot.lane.b32.xlu0 %v2950, 96
        %v2976 = vpop.permute.xlu0 %2975
        %2977 = vrot.lane.b32.xlu0 %v2951, 96
        %v2978 = vpop.permute.xlu0 %2977
        %2979 = vrot.lane.b32.xlu0 %v2952, 96
        %v2980 = vpop.permute.xlu0 %2979
        %2981 = vrot.lane.b32.xlu0 %v2953, 96
        %v2982 = vpop.permute.xlu0 %2981
        %2983 = vrot.lane.b32.xlu0 %v2954, 96
        %v2984 = vpop.permute.xlu0 %2983
        %2985 = vrot.lane.b32.xlu0 %v2955, 96
        %v2986 = vpop.permute.xlu0 %2985
        %2987 = vrot.lane.b32.xlu0 %v2956, 96
        %v2988 = vpop.permute.xlu0 %2987
        %2989 = vrot.lane.b32.xlu0 %v2957, 96
        %v2990 = vpop.permute.xlu0 %2989
        %2991 = vrot.lane.b32.xlu0 %v2958, 96
        %v2992 = vpop.permute.xlu0 %2991
        %2993 = vrot.lane.b32.xlu0 %v2959, 96
        %v2994 = vpop.permute.xlu0 %2993
        %2995 = vrot.lane.b32.xlu0 %v2960, 96
        %v2996 = vpop.permute.xlu0 %2995
        %2997 = vrot.lane.b32.xlu0 %v2961, 96
        %v2998 = vpop.permute.xlu0 %2997
        %2999 = vrot.lane.b32.xlu0 %v2962, 96
        %v3000 = vpop.permute.xlu0 %2999
        %3001 = vrot.lane.b32.xlu0 %v2963, 96
        %v3002 = vpop.permute.xlu0 %3001
        %3003 = vrot.lane.b32.xlu0 %v2964, 96
        %v3004 = vpop.permute.xlu0 %3003
        %vm3025 = vcmask 851716
        %3026 = vst.msk [vmem:[#allocation2 + $0x18] sm:$0xf0] %vm3025, %v2966
        %vm3027 = vcmask 847616
        %3028 = vst.msk [vmem:[#allocation2 + $0x30] sm:$0xf] %vm3027, %v2966
        %3029 = vst.msk [vmem:[#allocation2 + $0x60] sm:$0xf0] %vm3025, %v2968
        %3030 = vst.msk [vmem:[#allocation2 + $0x78] sm:$0xf] %vm3027, %v2968
        %3031 = vst.msk [vmem:[#allocation2 + $0xa8] sm:$0xf0] %vm3025, %v2970
        %3032 = vst.msk [vmem:[#allocation2 + $0xc0] sm:$0xf] %vm3027, %v2970
        %3033 = vst.msk [vmem:[#allocation2 + $0xf0] sm:$0xf0] %vm3025, %v2972
        %3034 = vst.msk [vmem:[#allocation2 + $0x108] sm:$0xf] %vm3027, %v2972
        %3035 = vst.msk [vmem:[#allocation2 + $0x138] sm:$0xf0] %vm3025, %v2974
        %3036 = vst.msk [vmem:[#allocation2 + $0x150] sm:$0xf] %vm3027, %v2974
        %3037 = vst.msk [vmem:[#allocation2 + $0x180] sm:$0xf0] %vm3025, %v2976
        %3038 = vst.msk [vmem:[#allocation2 + $0x198] sm:$0xf] %vm3027, %v2976
        %3039 = vst.msk [vmem:[#allocation2 + $0x1c8] sm:$0xf0] %vm3025, %v2978
        %3040 = vst.msk [vmem:[#allocation2 + $0x1e0] sm:$0xf] %vm3027, %v2978
        %3041 = vst.msk [vmem:[#allocation2 + $0x210] sm:$0xf0] %vm3025, %v2980
        %3042 = vst.msk [vmem:[#allocation2 + $0x228] sm:$0xf] %vm3027, %v2980
        %3043 = vst.msk [vmem:[#allocation2 + $0x258] sm:$0xf0] %vm3025, %v2982
        %3044 = vst.msk [vmem:[#allocation2 + $0x270] sm:$0xf] %vm3027, %v2982
        %3045 = vst.msk [vmem:[#allocation2 + $0x2a0] sm:$0xf0] %vm3025, %v2984
        %3046 = vst.msk [vmem:[#allocation2 + $0x2b8] sm:$0xf] %vm3027, %v2984
        %3047 = vst.msk [vmem:[#allocation2 + $0x2e8] sm:$0xf0] %vm3025, %v2986
        %3048 = vst.msk [vmem:[#allocation2 + $0x300] sm:$0xf] %vm3027, %v2986
        %3049 = vst.msk [vmem:[#allocation2 + $0x330] sm:$0xf0] %vm3025, %v2988
        %3050 = vst.msk [vmem:[#allocation2 + $0x348] sm:$0xf] %vm3027, %v2988
        %3051 = vst.msk [vmem:[#allocation2 + $0x378] sm:$0xf0] %vm3025, %v2990
        %3052 = vst.msk [vmem:[#allocation2 + $0x390] sm:$0xf] %vm3027, %v2990
        %3053 = vst.msk [vmem:[#allocation2 + $0x3c0] sm:$0xf0] %vm3025, %v2992
        %3054 = vst.msk [vmem:[#allocation2 + $0x3d8] sm:$0xf] %vm3027, %v2992
        %3055 = vst.msk [vmem:[#allocation2 + $0x408] sm:$0xf0] %vm3025, %v2994
        %3056 = vst.msk [vmem:[#allocation2 + $0x420] sm:$0xf] %vm3027, %v2994
        %3057 = vst.msk [vmem:[#allocation2 + $0x450] sm:$0xf0] %vm3025, %v2996
        %3058 = vst.msk [vmem:[#allocation2 + $0x468] sm:$0xf] %vm3027, %v2996
        %3059 = vst.msk [vmem:[#allocation2 + $0x498] sm:$0xf0] %vm3025, %v2998
        %3060 = vst.msk [vmem:[#allocation2 + $0x4b0] sm:$0xf] %vm3027, %v2998
        %3061 = vst.msk [vmem:[#allocation2 + $0x4e0] sm:$0xf0] %vm3025, %v3000
        %3062 = vst.msk [vmem:[#allocation2 + $0x4f8] sm:$0xf] %vm3027, %v3000
        %3063 = vst.msk [vmem:[#allocation2 + $0x528] sm:$0xf0] %vm3025, %v3002
        %3064 = vst.msk [vmem:[#allocation2 + $0x540] sm:$0xf] %vm3027, %v3002
        %3065 = vst.msk [vmem:[#allocation2 + $0x570] sm:$0xf0] %vm3025, %v3004
        %3066 = vst.msk [vmem:[#allocation2 + $0x588] sm:$0xf] %vm3027, %v3004
        %v3067 = vld [vmem:[%s168] sm:$0xff]
        %v3068 = vld [vmem:[%s168 + $0x8] sm:$0xff]
        %v3069 = vld [vmem:[%s168 + $0x10] sm:$0xf]
        %v3070 = vld [vmem:[%s168 + $0x18] sm:$0xff]
        %v3071 = vld [vmem:[%s168 + $0x20] sm:$0xff]
        %v3072 = vld [vmem:[%s168 + $0x28] sm:$0xf]
        %v3073 = vld [vmem:[%s168 + $0x30] sm:$0xff]
        %v3074 = vld [vmem:[%s168 + $0x38] sm:$0xff]
        %v3075 = vld [vmem:[%s168 + $0x40] sm:$0xf]
        %v3076 = vld [vmem:[%s168 + $0x48] sm:$0xff]
        %v3077 = vld [vmem:[%s168 + $0x50] sm:$0xff]
        %v3078 = vld [vmem:[%s168 + $0x58] sm:$0xf]
        %v3079 = vld [vmem:[%s168 + $0x60] sm:$0xff]
        %v3080 = vld [vmem:[%s168 + $0x68] sm:$0xff]
        %v3081 = vld [vmem:[%s168 + $0x70] sm:$0xf]
        %v3082 = vld [vmem:[%s168 + $0x78] sm:$0xff]
        %v3083 = vld [vmem:[%s168 + $0x80] sm:$0xff]
        %v3084 = vld [vmem:[%s168 + $0x88] sm:$0xf]
        %v3085 = vld [vmem:[%s168 + $0x90] sm:$0xff]
        %v3086 = vld [vmem:[%s168 + $0x98] sm:$0xff]
        %v3087 = vld [vmem:[%s168 + $0xa0] sm:$0xf]
        %v3088 = vld [vmem:[%s168 + $0xa8] sm:$0xff]
        %v3089 = vld [vmem:[%s168 + $0xb0] sm:$0xff]
        %v3090 = vld [vmem:[%s168 + $0xb8] sm:$0xf]
        %v3091 = vld [vmem:[%s168 + $0xc0] sm:$0xff]
        %v3092 = vld [vmem:[%s168 + $0xc8] sm:$0xff]
        %v3093 = vld [vmem:[%s168 + $0xd0] sm:$0xf]
        %v3094 = vld [vmem:[%s168 + $0xd8] sm:$0xff]
        %v3095 = vld [vmem:[%s168 + $0xe0] sm:$0xff]
        %v3096 = vld [vmem:[%s168 + $0xe8] sm:$0xf]
        %v3097 = vld [vmem:[%s168 + $0xf0] sm:$0xff]
        %v3098 = vld [vmem:[%s168 + $0xf8] sm:$0xff]
        %v3099 = vld [vmem:[%s168 + $0x100] sm:$0xf]
        %v3100 = vld [vmem:[%s168 + $0x108] sm:$0xff]
        %v3101 = vld [vmem:[%s168 + $0x110] sm:$0xff]
        %v3102 = vld [vmem:[%s168 + $0x118] sm:$0xf]
        %v3103 = vld [vmem:[%s168 + $0x120] sm:$0xff]
        %v3104 = vld [vmem:[%s168 + $0x128] sm:$0xff]
        %v3105 = vld [vmem:[%s168 + $0x130] sm:$0xf]
        %v3106 = vld [vmem:[%s168 + $0x138] sm:$0xff]
        %v3107 = vld [vmem:[%s168 + $0x140] sm:$0xff]
        %v3108 = vld [vmem:[%s168 + $0x148] sm:$0xf]
        %v3109 = vld [vmem:[%s168 + $0x150] sm:$0xff]
        %v3110 = vld [vmem:[%s168 + $0x158] sm:$0xff]
        %v3111 = vld [vmem:[%s168 + $0x160] sm:$0xf]
        %v3112 = vld [vmem:[%s168 + $0x168] sm:$0xff]
        %v3113 = vld [vmem:[%s168 + $0x170] sm:$0xff]
        %v3114 = vld [vmem:[%s168 + $0x178] sm:$0xf]
        %v3115 = vld [vmem:[%s168 + $0x180] sm:$0xff]
        %v3116 = vld [vmem:[%s168 + $0x188] sm:$0xff]
        %v3117 = vld [vmem:[%s168 + $0x190] sm:$0xf]
        %v3118 = vld [vmem:[%s168 + $0x198] sm:$0xff]
        %v3119 = vld [vmem:[%s168 + $0x1a0] sm:$0xff]
        %v3120 = vld [vmem:[%s168 + $0x1a8] sm:$0xf]
        %v3121 = vld [vmem:[%s168 + $0x1b0] sm:$0xff]
        %v3122 = vld [vmem:[%s168 + $0x1b8] sm:$0xff]
        %v3123 = vld [vmem:[%s168 + $0x1c0] sm:$0xf]
        %v3124 = vld [vmem:[%s168 + $0x1c8] sm:$0xff]
        %v3125 = vld [vmem:[%s168 + $0x1d0] sm:$0xff]
        %v3126 = vld [vmem:[%s168 + $0x1d8] sm:$0xf]
        %3187 = vrot.lane.b32.xlu0 %v3067, 104
        %v3188 = vpop.permute.xlu0 %3187
        %3189 = vrot.lane.b32.xlu0 %v3068, 104
        %v3190 = vpop.permute.xlu0 %3189
        %3191 = vrot.lane.b32.xlu0 %v3069, 104
        %v3192 = vpop.permute.xlu0 %3191
        %3193 = vrot.lane.b32.xlu0 %v3070, 104
        %v3194 = vpop.permute.xlu0 %3193
        %3195 = vrot.lane.b32.xlu0 %v3071, 104
        %v3196 = vpop.permute.xlu0 %3195
        %3197 = vrot.lane.b32.xlu0 %v3072, 104
        %v3198 = vpop.permute.xlu0 %3197
        %3199 = vrot.lane.b32.xlu0 %v3073, 104
        %v3200 = vpop.permute.xlu0 %3199
        %3201 = vrot.lane.b32.xlu0 %v3074, 104
        %v3202 = vpop.permute.xlu0 %3201
        %3203 = vrot.lane.b32.xlu0 %v3075, 104
        %v3204 = vpop.permute.xlu0 %3203
        %3205 = vrot.lane.b32.xlu0 %v3076, 104
        %v3206 = vpop.permute.xlu0 %3205
        %3207 = vrot.lane.b32.xlu0 %v3077, 104
        %v3208 = vpop.permute.xlu0 %3207
        %3209 = vrot.lane.b32.xlu0 %v3078, 104
        %v3210 = vpop.permute.xlu0 %3209
        %3211 = vrot.lane.b32.xlu0 %v3079, 104
        %v3212 = vpop.permute.xlu0 %3211
        %3213 = vrot.lane.b32.xlu0 %v3080, 104
        %v3214 = vpop.permute.xlu0 %3213
        %3215 = vrot.lane.b32.xlu0 %v3081, 104
        %v3216 = vpop.permute.xlu0 %3215
        %3217 = vrot.lane.b32.xlu0 %v3082, 104
        %v3218 = vpop.permute.xlu0 %3217
        %3219 = vrot.lane.b32.xlu0 %v3083, 104
        %v3220 = vpop.permute.xlu0 %3219
        %3221 = vrot.lane.b32.xlu0 %v3084, 104
        %v3222 = vpop.permute.xlu0 %3221
        %3223 = vrot.lane.b32.xlu0 %v3085, 104
        %v3224 = vpop.permute.xlu0 %3223
        %3225 = vrot.lane.b32.xlu0 %v3086, 104
        %v3226 = vpop.permute.xlu0 %3225
        %3227 = vrot.lane.b32.xlu0 %v3087, 104
        %v3228 = vpop.permute.xlu0 %3227
        %3229 = vrot.lane.b32.xlu0 %v3088, 104
        %v3230 = vpop.permute.xlu0 %3229
        %3231 = vrot.lane.b32.xlu0 %v3089, 104
        %v3232 = vpop.permute.xlu0 %3231
        %3233 = vrot.lane.b32.xlu0 %v3090, 104
        %v3234 = vpop.permute.xlu0 %3233
        %3235 = vrot.lane.b32.xlu0 %v3091, 104
        %v3236 = vpop.permute.xlu0 %3235
        %3237 = vrot.lane.b32.xlu0 %v3092, 104
        %v3238 = vpop.permute.xlu0 %3237
        %3239 = vrot.lane.b32.xlu0 %v3093, 104
        %v3240 = vpop.permute.xlu0 %3239
        %3241 = vrot.lane.b32.xlu0 %v3094, 104
        %v3242 = vpop.permute.xlu0 %3241
        %3243 = vrot.lane.b32.xlu0 %v3095, 104
        %v3244 = vpop.permute.xlu0 %3243
        %3245 = vrot.lane.b32.xlu0 %v3096, 104
        %v3246 = vpop.permute.xlu0 %3245
        %3247 = vrot.lane.b32.xlu0 %v3097, 104
        %v3248 = vpop.permute.xlu0 %3247
        %3249 = vrot.lane.b32.xlu0 %v3098, 104
        %v3250 = vpop.permute.xlu0 %3249
        %3251 = vrot.lane.b32.xlu0 %v3099, 104
        %v3252 = vpop.permute.xlu0 %3251
        %3253 = vrot.lane.b32.xlu0 %v3100, 104
        %v3254 = vpop.permute.xlu0 %3253
        %3255 = vrot.lane.b32.xlu0 %v3101, 104
        %v3256 = vpop.permute.xlu0 %3255
        %3257 = vrot.lane.b32.xlu0 %v3102, 104
        %v3258 = vpop.permute.xlu0 %3257
        %3259 = vrot.lane.b32.xlu0 %v3103, 104
        %v3260 = vpop.permute.xlu0 %3259
        %3261 = vrot.lane.b32.xlu0 %v3104, 104
        %v3262 = vpop.permute.xlu0 %3261
        %3263 = vrot.lane.b32.xlu0 %v3105, 104
        %v3264 = vpop.permute.xlu0 %3263
        %3265 = vrot.lane.b32.xlu0 %v3106, 104
        %v3266 = vpop.permute.xlu0 %3265
        %3267 = vrot.lane.b32.xlu0 %v3107, 104
        %v3268 = vpop.permute.xlu0 %3267
        %3269 = vrot.lane.b32.xlu0 %v3108, 104
        %v3270 = vpop.permute.xlu0 %3269
        %3271 = vrot.lane.b32.xlu0 %v3109, 104
        %v3272 = vpop.permute.xlu0 %3271
        %3273 = vrot.lane.b32.xlu0 %v3110, 104
        %v3274 = vpop.permute.xlu0 %3273
        %3275 = vrot.lane.b32.xlu0 %v3111, 104
        %v3276 = vpop.permute.xlu0 %3275
        %3277 = vrot.lane.b32.xlu0 %v3112, 104
        %v3278 = vpop.permute.xlu0 %3277
        %3279 = vrot.lane.b32.xlu0 %v3113, 104
        %v3280 = vpop.permute.xlu0 %3279
        %3281 = vrot.lane.b32.xlu0 %v3114, 104
        %v3282 = vpop.permute.xlu0 %3281
        %3283 = vrot.lane.b32.xlu0 %v3115, 104
        %v3284 = vpop.permute.xlu0 %3283
        %3285 = vrot.lane.b32.xlu0 %v3116, 104
        %v3286 = vpop.permute.xlu0 %3285
        %3287 = vrot.lane.b32.xlu0 %v3117, 104
        %v3288 = vpop.permute.xlu0 %3287
        %3289 = vrot.lane.b32.xlu0 %v3118, 104
        %v3290 = vpop.permute.xlu0 %3289
        %3291 = vrot.lane.b32.xlu0 %v3119, 104
        %v3292 = vpop.permute.xlu0 %3291
        %3293 = vrot.lane.b32.xlu0 %v3120, 104
        %v3294 = vpop.permute.xlu0 %3293
        %3295 = vrot.lane.b32.xlu0 %v3121, 104
        %v3296 = vpop.permute.xlu0 %3295
        %3297 = vrot.lane.b32.xlu0 %v3122, 104
        %v3298 = vpop.permute.xlu0 %3297
        %3299 = vrot.lane.b32.xlu0 %v3123, 104
        %v3300 = vpop.permute.xlu0 %3299
        %3301 = vrot.lane.b32.xlu0 %v3124, 104
        %v3302 = vpop.permute.xlu0 %3301
        %3303 = vrot.lane.b32.xlu0 %v3125, 104
        %v3304 = vpop.permute.xlu0 %3303
        %3305 = vrot.lane.b32.xlu0 %v3126, 104
        %v3306 = vpop.permute.xlu0 %3305
        %vm3367 = vcmask 917312
        %3368 = vst.msk [vmem:[#allocation2] sm:$0xff] %vm3367, %v3188
        %3369 = vst.msk [vmem:[#allocation2 + $0x18] sm:$0xff] %vm3367, %v3190
        %vm3370 = vcmask 913216
        %3371 = vst.msk [vmem:[#allocation2 + $0x30] sm:$0xf] %vm3370, %v3192
        %3372 = vst.msk [vmem:[#allocation2 + $0x48] sm:$0xff] %vm3367, %v3194
        %3373 = vst.msk [vmem:[#allocation2 + $0x60] sm:$0xff] %vm3367, %v3196
        %3374 = vst.msk [vmem:[#allocation2 + $0x78] sm:$0xf] %vm3370, %v3198
        %3375 = vst.msk [vmem:[#allocation2 + $0x90] sm:$0xff] %vm3367, %v3200
        %3376 = vst.msk [vmem:[#allocation2 + $0xa8] sm:$0xff] %vm3367, %v3202
        %3377 = vst.msk [vmem:[#allocation2 + $0xc0] sm:$0xf] %vm3370, %v3204
        %3378 = vst.msk [vmem:[#allocation2 + $0xd8] sm:$0xff] %vm3367, %v3206
        %3379 = vst.msk [vmem:[#allocation2 + $0xf0] sm:$0xff] %vm3367, %v3208
        %3380 = vst.msk [vmem:[#allocation2 + $0x108] sm:$0xf] %vm3370, %v3210
        %3381 = vst.msk [vmem:[#allocation2 + $0x120] sm:$0xff] %vm3367, %v3212
        %3382 = vst.msk [vmem:[#allocation2 + $0x138] sm:$0xff] %vm3367, %v3214
        %3383 = vst.msk [vmem:[#allocation2 + $0x150] sm:$0xf] %vm3370, %v3216
        %3384 = vst.msk [vmem:[#allocation2 + $0x168] sm:$0xff] %vm3367, %v3218
        %3385 = vst.msk [vmem:[#allocation2 + $0x180] sm:$0xff] %vm3367, %v3220
        %3386 = vst.msk [vmem:[#allocation2 + $0x198] sm:$0xf] %vm3370, %v3222
        %3387 = vst.msk [vmem:[#allocation2 + $0x1b0] sm:$0xff] %vm3367, %v3224
        %3388 = vst.msk [vmem:[#allocation2 + $0x1c8] sm:$0xff] %vm3367, %v3226
        %3389 = vst.msk [vmem:[#allocation2 + $0x1e0] sm:$0xf] %vm3370, %v3228
        %3390 = vst.msk [vmem:[#allocation2 + $0x1f8] sm:$0xff] %vm3367, %v3230
        %3391 = vst.msk [vmem:[#allocation2 + $0x210] sm:$0xff] %vm3367, %v3232
        %3392 = vst.msk [vmem:[#allocation2 + $0x228] sm:$0xf] %vm3370, %v3234
        %3393 = vst.msk [vmem:[#allocation2 + $0x240] sm:$0xff] %vm3367, %v3236
        %3394 = vst.msk [vmem:[#allocation2 + $0x258] sm:$0xff] %vm3367, %v3238
        %3395 = vst.msk [vmem:[#allocation2 + $0x270] sm:$0xf] %vm3370, %v3240
        %3396 = vst.msk [vmem:[#allocation2 + $0x288] sm:$0xff] %vm3367, %v3242
        %3397 = vst.msk [vmem:[#allocation2 + $0x2a0] sm:$0xff] %vm3367, %v3244
        %3398 = vst.msk [vmem:[#allocation2 + $0x2b8] sm:$0xf] %vm3370, %v3246
        %3399 = vst.msk [vmem:[#allocation2 + $0x2d0] sm:$0xff] %vm3367, %v3248
        %3400 = vst.msk [vmem:[#allocation2 + $0x2e8] sm:$0xff] %vm3367, %v3250
        %3401 = vst.msk [vmem:[#allocation2 + $0x300] sm:$0xf] %vm3370, %v3252
        %3402 = vst.msk [vmem:[#allocation2 + $0x318] sm:$0xff] %vm3367, %v3254
        %3403 = vst.msk [vmem:[#allocation2 + $0x330] sm:$0xff] %vm3367, %v3256
        %3404 = vst.msk [vmem:[#allocation2 + $0x348] sm:$0xf] %vm3370, %v3258
        %3405 = vst.msk [vmem:[#allocation2 + $0x360] sm:$0xff] %vm3367, %v3260
        %3406 = vst.msk [vmem:[#allocation2 + $0x378] sm:$0xff] %vm3367, %v3262
        %3407 = vst.msk [vmem:[#allocation2 + $0x390] sm:$0xf] %vm3370, %v3264
        %3408 = vst.msk [vmem:[#allocation2 + $0x3a8] sm:$0xff] %vm3367, %v3266
        %3409 = vst.msk [vmem:[#allocation2 + $0x3c0] sm:$0xff] %vm3367, %v3268
        %3410 = vst.msk [vmem:[#allocation2 + $0x3d8] sm:$0xf] %vm3370, %v3270
        %3411 = vst.msk [vmem:[#allocation2 + $0x3f0] sm:$0xff] %vm3367, %v3272
        %3412 = vst.msk [vmem:[#allocation2 + $0x408] sm:$0xff] %vm3367, %v3274
        %3413 = vst.msk [vmem:[#allocation2 + $0x420] sm:$0xf] %vm3370, %v3276
        %3414 = vst.msk [vmem:[#allocation2 + $0x438] sm:$0xff] %vm3367, %v3278
        %3415 = vst.msk [vmem:[#allocation2 + $0x450] sm:$0xff] %vm3367, %v3280
        %3416 = vst.msk [vmem:[#allocation2 + $0x468] sm:$0xf] %vm3370, %v3282
        %3417 = vst.msk [vmem:[#allocation2 + $0x480] sm:$0xff] %vm3367, %v3284
        %3418 = vst.msk [vmem:[#allocation2 + $0x498] sm:$0xff] %vm3367, %v3286
        %3419 = vst.msk [vmem:[#allocation2 + $0x4b0] sm:$0xf] %vm3370, %v3288
        %3420 = vst.msk [vmem:[#allocation2 + $0x4c8] sm:$0xff] %vm3367, %v3290
        %3421 = vst.msk [vmem:[#allocation2 + $0x4e0] sm:$0xff] %vm3367, %v3292
        %3422 = vst.msk [vmem:[#allocation2 + $0x4f8] sm:$0xf] %vm3370, %v3294
        %3423 = vst.msk [vmem:[#allocation2 + $0x510] sm:$0xff] %vm3367, %v3296
        %3424 = vst.msk [vmem:[#allocation2 + $0x528] sm:$0xff] %vm3367, %v3298
        %3425 = vst.msk [vmem:[#allocation2 + $0x540] sm:$0xf] %vm3370, %v3300
        %3426 = vst.msk [vmem:[#allocation2 + $0x558] sm:$0xff] %vm3367, %v3302
        %3427 = vst.msk [vmem:[#allocation2 + $0x570] sm:$0xff] %vm3367, %v3304
        %3428 = vst.msk [vmem:[#allocation2 + $0x588] sm:$0xf] %vm3370, %v3306
        %v3429 = vld [vmem:[%s168 + $0xc] sm:$0xff]
        %v3430 = vld [vmem:[%s168 + $0x24] sm:$0xff]
        %v3431 = vld [vmem:[%s168 + $0x3c] sm:$0xff]
        %v3432 = vld [vmem:[%s168 + $0x54] sm:$0xff]
        %v3433 = vld [vmem:[%s168 + $0x6c] sm:$0xff]
        %v3434 = vld [vmem:[%s168 + $0x84] sm:$0xff]
        %v3435 = vld [vmem:[%s168 + $0x9c] sm:$0xff]
        %v3436 = vld [vmem:[%s168 + $0xb4] sm:$0xff]
        %v3437 = vld [vmem:[%s168 + $0xcc] sm:$0xff]
        %v3438 = vld [vmem:[%s168 + $0xe4] sm:$0xff]
        %v3439 = vld [vmem:[%s168 + $0xfc] sm:$0xff]
        %v3440 = vld [vmem:[%s168 + $0x114] sm:$0xff]
        %v3441 = vld [vmem:[%s168 + $0x12c] sm:$0xff]
        %v3442 = vld [vmem:[%s168 + $0x144] sm:$0xff]
        %v3443 = vld [vmem:[%s168 + $0x15c] sm:$0xff]
        %v3444 = vld [vmem:[%s168 + $0x174] sm:$0xff]
        %v3445 = vld [vmem:[%s168 + $0x18c] sm:$0xff]
        %v3446 = vld [vmem:[%s168 + $0x1a4] sm:$0xff]
        %v3447 = vld [vmem:[%s168 + $0x1bc] sm:$0xff]
        %v3448 = vld [vmem:[%s168 + $0x1d4] sm:$0xff]
        %3469 = vrot.lane.b32.xlu0 %v3429, 112
        %v3470 = vpop.permute.xlu0 %3469
        %3471 = vrot.lane.b32.xlu0 %v3430, 112
        %v3472 = vpop.permute.xlu0 %3471
        %3473 = vrot.lane.b32.xlu0 %v3431, 112
        %v3474 = vpop.permute.xlu0 %3473
        %3475 = vrot.lane.b32.xlu0 %v3432, 112
        %v3476 = vpop.permute.xlu0 %3475
        %3477 = vrot.lane.b32.xlu0 %v3433, 112
        %v3478 = vpop.permute.xlu0 %3477
        %3479 = vrot.lane.b32.xlu0 %v3434, 112
        %v3480 = vpop.permute.xlu0 %3479
        %3481 = vrot.lane.b32.xlu0 %v3435, 112
        %v3482 = vpop.permute.xlu0 %3481
        %3483 = vrot.lane.b32.xlu0 %v3436, 112
        %v3484 = vpop.permute.xlu0 %3483
        %3485 = vrot.lane.b32.xlu0 %v3437, 112
        %v3486 = vpop.permute.xlu0 %3485
        %3487 = vrot.lane.b32.xlu0 %v3438, 112
        %v3488 = vpop.permute.xlu0 %3487
        %3489 = vrot.lane.b32.xlu0 %v3439, 112
        %v3490 = vpop.permute.xlu0 %3489
        %3491 = vrot.lane.b32.xlu0 %v3440, 112
        %v3492 = vpop.permute.xlu0 %3491
        %3493 = vrot.lane.b32.xlu0 %v3441, 112
        %v3494 = vpop.permute.xlu0 %3493
        %3495 = vrot.lane.b32.xlu0 %v3442, 112
        %v3496 = vpop.permute.xlu0 %3495
        %3497 = vrot.lane.b32.xlu0 %v3443, 112
        %v3498 = vpop.permute.xlu0 %3497
        %3499 = vrot.lane.b32.xlu0 %v3444, 112
        %v3500 = vpop.permute.xlu0 %3499
        %3501 = vrot.lane.b32.xlu0 %v3445, 112
        %v3502 = vpop.permute.xlu0 %3501
        %3503 = vrot.lane.b32.xlu0 %v3446, 112
        %v3504 = vpop.permute.xlu0 %3503
        %3505 = vrot.lane.b32.xlu0 %v3447, 112
        %v3506 = vpop.permute.xlu0 %3505
        %3507 = vrot.lane.b32.xlu0 %v3448, 112
        %v3508 = vpop.permute.xlu0 %3507
        %vm3529 = vcmask 982912
        %3530 = vst.msk [vmem:[#allocation2] sm:$0xff] %vm3529, %v3470
        %3531 = vst.msk [vmem:[#allocation2 + $0x48] sm:$0xff] %vm3529, %v3472
        %3532 = vst.msk [vmem:[#allocation2 + $0x90] sm:$0xff] %vm3529, %v3474
        %3533 = vst.msk [vmem:[#allocation2 + $0xd8] sm:$0xff] %vm3529, %v3476
        %3534 = vst.msk [vmem:[#allocation2 + $0x120] sm:$0xff] %vm3529, %v3478
        %3535 = vst.msk [vmem:[#allocation2 + $0x168] sm:$0xff] %vm3529, %v3480
        %3536 = vst.msk [vmem:[#allocation2 + $0x1b0] sm:$0xff] %vm3529, %v3482
        %3537 = vst.msk [vmem:[#allocation2 + $0x1f8] sm:$0xff] %vm3529, %v3484
        %3538 = vst.msk [vmem:[#allocation2 + $0x240] sm:$0xff] %vm3529, %v3486
        %3539 = vst.msk [vmem:[#allocation2 + $0x288] sm:$0xff] %vm3529, %v3488
        %3540 = vst.msk [vmem:[#allocation2 + $0x2d0] sm:$0xff] %vm3529, %v3490
        %3541 = vst.msk [vmem:[#allocation2 + $0x318] sm:$0xff] %vm3529, %v3492
        %3542 = vst.msk [vmem:[#allocation2 + $0x360] sm:$0xff] %vm3529, %v3494
        %3543 = vst.msk [vmem:[#allocation2 + $0x3a8] sm:$0xff] %vm3529, %v3496
        %3544 = vst.msk [vmem:[#allocation2 + $0x3f0] sm:$0xff] %vm3529, %v3498
        %3545 = vst.msk [vmem:[#allocation2 + $0x438] sm:$0xff] %vm3529, %v3500
        %3546 = vst.msk [vmem:[#allocation2 + $0x480] sm:$0xff] %vm3529, %v3502
        %3547 = vst.msk [vmem:[#allocation2 + $0x4c8] sm:$0xff] %vm3529, %v3504
        %3548 = vst.msk [vmem:[#allocation2 + $0x510] sm:$0xff] %vm3529, %v3506
        %3549 = vst.msk [vmem:[#allocation2 + $0x558] sm:$0xff] %vm3529, %v3508
        %s3550 = scalar_lea.vmem %s168, 288
        %v3551 = vld [vmem:[%s3550] sm:$0xff]
        %v3552 = vld [vmem:[%s3550 + $0x18] sm:$0xff]
        %v3553 = vld [vmem:[%s3550 + $0x30] sm:$0xff]
        %v3554 = vld [vmem:[%s3550 + $0x48] sm:$0xff]
        %v3555 = vld [vmem:[%s3550 + $0x60] sm:$0xff]
        %v3556 = vld [vmem:[%s3550 + $0x78] sm:$0xff]
        %v3557 = vld [vmem:[%s3550 + $0x90] sm:$0xff]
        %v3558 = vld [vmem:[%s3550 + $0xa8] sm:$0xff]
        %v3567 = vrot.slane %v3551, 4
        %v3568 = vrot.slane %v3552, 4
        %v3569 = vrot.slane %v3553, 4
        %v3570 = vrot.slane %v3554, 4
        %v3571 = vrot.slane %v3555, 4
        %v3572 = vrot.slane %v3556, 4
        %v3573 = vrot.slane %v3557, 4
        %v3574 = vrot.slane %v3558, 4
        %3575 = vrot.lane.b32.xlu0 %v3567, 120
        %v3576 = vpop.permute.xlu0 %3575
        %3577 = vrot.lane.b32.xlu0 %v3568, 120
        %v3578 = vpop.permute.xlu0 %3577
        %3579 = vrot.lane.b32.xlu0 %v3569, 120
        %v3580 = vpop.permute.xlu0 %3579
        %3581 = vrot.lane.b32.xlu0 %v3570, 120
        %v3582 = vpop.permute.xlu0 %3581
        %3583 = vrot.lane.b32.xlu0 %v3571, 120
        %v3584 = vpop.permute.xlu0 %3583
        %3585 = vrot.lane.b32.xlu0 %v3572, 120
        %v3586 = vpop.permute.xlu0 %3585
        %3587 = vrot.lane.b32.xlu0 %v3573, 120
        %v3588 = vpop.permute.xlu0 %3587
        %3589 = vrot.lane.b32.xlu0 %v3574, 120
        %v3590 = vpop.permute.xlu0 %3589
        %vm3599 = vcmask 1048516
        %3600 = vst.msk [vmem:[#allocation2 + $0x18] sm:$0xf0] %vm3599, %v3576
        %vm3601 = vcmask 1044416
        %3602 = vst.msk [vmem:[#allocation2 + $0x30] sm:$0xf] %vm3601, %v3576
        %3603 = vst.msk [vmem:[#allocation2 + $0x60] sm:$0xf0] %vm3599, %v3578
        %3604 = vst.msk [vmem:[#allocation2 + $0x78] sm:$0xf] %vm3601, %v3578
        %3605 = vst.msk [vmem:[#allocation2 + $0xa8] sm:$0xf0] %vm3599, %v3580
        %3606 = vst.msk [vmem:[#allocation2 + $0xc0] sm:$0xf] %vm3601, %v3580
        %3607 = vst.msk [vmem:[#allocation2 + $0xf0] sm:$0xf0] %vm3599, %v3582
        %3608 = vst.msk [vmem:[#allocation2 + $0x108] sm:$0xf] %vm3601, %v3582
        %3609 = vst.msk [vmem:[#allocation2 + $0x138] sm:$0xf0] %vm3599, %v3584
        %3610 = vst.msk [vmem:[#allocation2 + $0x150] sm:$0xf] %vm3601, %v3584
        %3611 = vst.msk [vmem:[#allocation2 + $0x180] sm:$0xf0] %vm3599, %v3586
        %3612 = vst.msk [vmem:[#allocation2 + $0x198] sm:$0xf] %vm3601, %v3586
        %3613 = vst.msk [vmem:[#allocation2 + $0x1c8] sm:$0xf0] %vm3599, %v3588
        %3614 = vst.msk [vmem:[#allocation2 + $0x1e0] sm:$0xf] %vm3601, %v3588
        %3615 = vst.msk [vmem:[#allocation2 + $0x210] sm:$0xf0] %vm3599, %v3590
        %3616 = vst.msk [vmem:[#allocation2 + $0x228] sm:$0xf] %vm3601, %v3590
        %v3617 = vld [vmem:[%s3550] sm:$0xff]
        %v3618 = vld [vmem:[%s3550 + $0x8] sm:$0xff]
        %v3619 = vld [vmem:[%s3550 + $0x10] sm:$0xf]
        %v3620 = vld [vmem:[%s3550 + $0x18] sm:$0xff]
        %v3621 = vld [vmem:[%s3550 + $0x20] sm:$0xff]
        %v3622 = vld [vmem:[%s3550 + $0x28] sm:$0xf]
        %v3623 = vld [vmem:[%s3550 + $0x30] sm:$0xff]
        %v3624 = vld [vmem:[%s3550 + $0x38] sm:$0xff]
        %v3625 = vld [vmem:[%s3550 + $0x40] sm:$0xf]
        %v3626 = vld [vmem:[%s3550 + $0x48] sm:$0xff]
        %v3627 = vld [vmem:[%s3550 + $0x50] sm:$0xff]
        %v3628 = vld [vmem:[%s3550 + $0x58] sm:$0xf]
        %v3629 = vld [vmem:[%s3550 + $0x60] sm:$0xff]
        %v3630 = vld [vmem:[%s3550 + $0x68] sm:$0xff]
        %v3631 = vld [vmem:[%s3550 + $0x70] sm:$0xf]
        %v3632 = vld [vmem:[%s3550 + $0x78] sm:$0xff]
        %v3633 = vld [vmem:[%s3550 + $0x80] sm:$0xff]
        %v3634 = vld [vmem:[%s3550 + $0x88] sm:$0xf]
        %v3635 = vld [vmem:[%s3550 + $0x90] sm:$0xff]
        %v3636 = vld [vmem:[%s3550 + $0x98] sm:$0xff]
        %v3637 = vld [vmem:[%s3550 + $0xa0] sm:$0xf]
        %v3638 = vld [vmem:[%s3550 + $0xa8] sm:$0xff]
        %v3639 = vld [vmem:[%s3550 + $0xb0] sm:$0xff]
        %v3640 = vld [vmem:[%s3550 + $0xb8] sm:$0xf]
        %3641 = vst.msk [vmem:[#allocation2 + $0x8] sm:$0xff] %vm495, %v3617
        %3642 = vst.msk [vmem:[#allocation2 + $0x20] sm:$0xff] %vm495, %v3618
        %3643 = vst.msk [vmem:[#allocation2 + $0x38] sm:$0xf] %vm497, %v3619
        %3644 = vst.msk [vmem:[#allocation2 + $0x50] sm:$0xff] %vm495, %v3620
        %3645 = vst.msk [vmem:[#allocation2 + $0x68] sm:$0xff] %vm495, %v3621
        %3646 = vst.msk [vmem:[#allocation2 + $0x80] sm:$0xf] %vm497, %v3622
        %3647 = vst.msk [vmem:[#allocation2 + $0x98] sm:$0xff] %vm495, %v3623
        %3648 = vst.msk [vmem:[#allocation2 + $0xb0] sm:$0xff] %vm495, %v3624
        %3649 = vst.msk [vmem:[#allocation2 + $0xc8] sm:$0xf] %vm497, %v3625
        %3650 = vst.msk [vmem:[#allocation2 + $0xe0] sm:$0xff] %vm495, %v3626
        %3651 = vst.msk [vmem:[#allocation2 + $0xf8] sm:$0xff] %vm495, %v3627
        %3652 = vst.msk [vmem:[#allocation2 + $0x110] sm:$0xf] %vm497, %v3628
        %3653 = vst.msk [vmem:[#allocation2 + $0x128] sm:$0xff] %vm495, %v3629
        %3654 = vst.msk [vmem:[#allocation2 + $0x140] sm:$0xff] %vm495, %v3630
        %3655 = vst.msk [vmem:[#allocation2 + $0x158] sm:$0xf] %vm497, %v3631
        %3656 = vst.msk [vmem:[#allocation2 + $0x170] sm:$0xff] %vm495, %v3632
        %3657 = vst.msk [vmem:[#allocation2 + $0x188] sm:$0xff] %vm495, %v3633
        %3658 = vst.msk [vmem:[#allocation2 + $0x1a0] sm:$0xf] %vm497, %v3634
        %3659 = vst.msk [vmem:[#allocation2 + $0x1b8] sm:$0xff] %vm495, %v3635
        %3660 = vst.msk [vmem:[#allocation2 + $0x1d0] sm:$0xff] %vm495, %v3636
        %3661 = vst.msk [vmem:[#allocation2 + $0x1e8] sm:$0xf] %vm497, %v3637
        %3662 = vst.msk [vmem:[#allocation2 + $0x200] sm:$0xff] %vm495, %v3638
        %3663 = vst.msk [vmem:[#allocation2 + $0x218] sm:$0xff] %vm495, %v3639
        %3664 = vst.msk [vmem:[#allocation2 + $0x230] sm:$0xf] %vm497, %v3640
        %v3665 = vld [vmem:[%s3550 + $0xc] sm:$0xff]
        %v3666 = vld [vmem:[%s3550 + $0x24] sm:$0xff]
        %v3667 = vld [vmem:[%s3550 + $0x3c] sm:$0xff]
        %v3668 = vld [vmem:[%s3550 + $0x54] sm:$0xff]
        %v3669 = vld [vmem:[%s3550 + $0x6c] sm:$0xff]
        %v3670 = vld [vmem:[%s3550 + $0x84] sm:$0xff]
        %v3671 = vld [vmem:[%s3550 + $0x9c] sm:$0xff]
        %v3672 = vld [vmem:[%s3550 + $0xb4] sm:$0xff]
        %3681 = vrot.lane.b32.xlu0 %v3665, 8
        %v3682 = vpop.permute.xlu0 %3681
        %3683 = vrot.lane.b32.xlu0 %v3666, 8
        %v3684 = vpop.permute.xlu0 %3683
        %3685 = vrot.lane.b32.xlu0 %v3667, 8
        %v3686 = vpop.permute.xlu0 %3685
        %3687 = vrot.lane.b32.xlu0 %v3668, 8
        %v3688 = vpop.permute.xlu0 %3687
        %3689 = vrot.lane.b32.xlu0 %v3669, 8
        %v3690 = vpop.permute.xlu0 %3689
        %3691 = vrot.lane.b32.xlu0 %v3670, 8
        %v3692 = vpop.permute.xlu0 %3691
        %3693 = vrot.lane.b32.xlu0 %v3671, 8
        %v3694 = vpop.permute.xlu0 %3693
        %3695 = vrot.lane.b32.xlu0 %v3672, 8
        %v3696 = vpop.permute.xlu0 %3695
        %3705 = vst.msk [vmem:[#allocation2 + $0x8] sm:$0xff] %vm748, %v3682
        %3706 = vst.msk [vmem:[#allocation2 + $0x50] sm:$0xff] %vm748, %v3684
        %3707 = vst.msk [vmem:[#allocation2 + $0x98] sm:$0xff] %vm748, %v3686
        %3708 = vst.msk [vmem:[#allocation2 + $0xe0] sm:$0xff] %vm748, %v3688
        %3709 = vst.msk [vmem:[#allocation2 + $0x128] sm:$0xff] %vm748, %v3690
        %3710 = vst.msk [vmem:[#allocation2 + $0x170] sm:$0xff] %vm748, %v3692
        %3711 = vst.msk [vmem:[#allocation2 + $0x1b8] sm:$0xff] %vm748, %v3694
        %3712 = vst.msk [vmem:[#allocation2 + $0x200] sm:$0xff] %vm748, %v3696
        %v3713 = vld [vmem:[%s168] sm:$0x3]
        %v3714 = vld [vmem:[%s168 + $0x18] sm:$0x3]
        %v3717 = vrot.slane %v3713, 6
        %v3718 = vrot.slane %v3714, 6
        %3719 = vrot.lane.b32.xlu0 %v3717, 16
        %v3720 = vpop.permute.xlu0 %3719
        %3721 = vrot.lane.b32.xlu0 %v3718, 16
        %v3722 = vpop.permute.xlu0 %3721
        %s3725 = scalar_lea.vmem [#allocation2], 1296
        %vm3726 = vcmask 191618
        %3727 = vst.msk [vmem:[%s3725 + $0x38] sm:$0xc] %vm3726, %v3720
        %3728 = vst.msk [vmem:[%s3725 + $0x80] sm:$0xc] %vm3726, %v3722
        %v3729 = vld [vmem:[%s168] sm:$0xff]
        %v3730 = vld [vmem:[%s168 + $0x8] sm:$0xff]
        %v3731 = vld [vmem:[%s168 + $0x10] sm:$0xf]
        %v3732 = vld [vmem:[%s168 + $0x18] sm:$0xff]
        %v3733 = vld [vmem:[%s168 + $0x20] sm:$0xff]
        %v3734 = vld [vmem:[%s168 + $0x28] sm:$0xf]
        %3741 = vrot.lane.b32.xlu0 %v3729, 24
        %v3742 = vpop.permute.xlu0 %3741
        %3743 = vrot.lane.b32.xlu0 %v3730, 24
        %v3744 = vpop.permute.xlu0 %3743
        %3745 = vrot.lane.b32.xlu0 %v3731, 24
        %v3746 = vpop.permute.xlu0 %3745
        %3747 = vrot.lane.b32.xlu0 %v3732, 24
        %v3748 = vpop.permute.xlu0 %3747
        %3749 = vrot.lane.b32.xlu0 %v3733, 24
        %v3750 = vpop.permute.xlu0 %3749
        %3751 = vrot.lane.b32.xlu0 %v3734, 24
        %v3752 = vpop.permute.xlu0 %3751
        %3759 = vst.msk [vmem:[%s3725 + $0x8] sm:$0xff] %vm1284, %v3742
        %3760 = vst.msk [vmem:[%s3725 + $0x20] sm:$0xff] %vm1284, %v3744
        %3761 = vst.msk [vmem:[%s3725 + $0x38] sm:$0xf] %vm1286, %v3746
        %3762 = vst.msk [vmem:[%s3725 + $0x50] sm:$0xff] %vm1284, %v3748
        %3763 = vst.msk [vmem:[%s3725 + $0x68] sm:$0xff] %vm1284, %v3750
        %3764 = vst.msk [vmem:[%s3725 + $0x80] sm:$0xf] %vm1286, %v3752
        %v3765 = vld [vmem:[%s168 + $0x12] sm:$0x3]
        %v3766 = vld [vmem:[%s168 + $0x2a] sm:$0x3]
        %3769 = vrot.lane.b32.xlu0 %v3765, 32
        %v3770 = vpop.permute.xlu0 %3769
        %3771 = vrot.lane.b32.xlu0 %v3766, 32
        %v3772 = vpop.permute.xlu0 %3771
        %vm3775 = vcmask 320768
        %3776 = vst.msk [vmem:[%s3725 + $0x8] sm:$0x3] %vm3775, %v3770
        %3777 = vst.msk [vmem:[%s3725 + $0x50] sm:$0x3] %vm3775, %v3772
        %v3778 = vld [vmem:[%s168] sm:$0x3]
        %v3779 = vld [vmem:[%s168 + $0x18] sm:$0x3]
        %v3780 = vld [vmem:[%s168 + $0x30] sm:$0x3]
        %v3781 = vld [vmem:[%s168 + $0x48] sm:$0x3]
        %v3782 = vld [vmem:[%s168 + $0x60] sm:$0x3]
        %v3783 = vld [vmem:[%s168 + $0x78] sm:$0x3]
        %v3784 = vld [vmem:[%s168 + $0x90] sm:$0x3]
        %v3785 = vld [vmem:[%s168 + $0xa8] sm:$0x3]
        %v3786 = vld [vmem:[%s168 + $0xc0] sm:$0x3]
        %v3787 = vld [vmem:[%s168 + $0xd8] sm:$0x3]
        %v3788 = vld [vmem:[%s168 + $0xf0] sm:$0x3]
        %v3789 = vld [vmem:[%s168 + $0x108] sm:$0x3]
        %v3790 = vld [vmem:[%s168 + $0x120] sm:$0x3]
        %v3791 = vld [vmem:[%s168 + $0x138] sm:$0x3]
        %v3792 = vld [vmem:[%s168 + $0x150] sm:$0x3]
        %v3793 = vld [vmem:[%s168 + $0x168] sm:$0x3]
        %v3794 = vld [vmem:[%s168 + $0x180] sm:$0x3]
        %v3795 = vld [vmem:[%s168 + $0x198] sm:$0x3]
        %v3796 = vld [vmem:[%s168 + $0x1b0] sm:$0x3]
        %v3797 = vld [vmem:[%s168 + $0x1c8] sm:$0x3]
        %v3818 = vrot.slane %v3778, 6
        %v3819 = vrot.slane %v3779, 6
        %v3820 = vrot.slane %v3780, 6
        %v3821 = vrot.slane %v3781, 6
        %v3822 = vrot.slane %v3782, 6
        %v3823 = vrot.slane %v3783, 6
        %v3824 = vrot.slane %v3784, 6
        %v3825 = vrot.slane %v3785, 6
        %v3826 = vrot.slane %v3786, 6
        %v3827 = vrot.slane %v3787, 6
        %v3828 = vrot.slane %v3788, 6
        %v3829 = vrot.slane %v3789, 6
        %v3830 = vrot.slane %v3790, 6
        %v3831 = vrot.slane %v3791, 6
        %v3832 = vrot.slane %v3792, 6
        %v3833 = vrot.slane %v3793, 6
        %v3834 = vrot.slane %v3794, 6
        %v3835 = vrot.slane %v3795, 6
        %v3836 = vrot.slane %v3796, 6
        %v3837 = vrot.slane %v3797, 6
        %3838 = vrot.lane.b32.xlu0 %v3818, 40
        %v3839 = vpop.permute.xlu0 %3838
        %3840 = vrot.lane.b32.xlu0 %v3819, 40
        %v3841 = vpop.permute.xlu0 %3840
        %3842 = vrot.lane.b32.xlu0 %v3820, 40
        %v3843 = vpop.permute.xlu0 %3842
        %3844 = vrot.lane.b32.xlu0 %v3821, 40
        %v3845 = vpop.permute.xlu0 %3844
        %3846 = vrot.lane.b32.xlu0 %v3822, 40
        %v3847 = vpop.permute.xlu0 %3846
        %3848 = vrot.lane.b32.xlu0 %v3823, 40
        %v3849 = vpop.permute.xlu0 %3848
        %3850 = vrot.lane.b32.xlu0 %v3824, 40
        %v3851 = vpop.permute.xlu0 %3850
        %3852 = vrot.lane.b32.xlu0 %v3825, 40
        %v3853 = vpop.permute.xlu0 %3852
        %3854 = vrot.lane.b32.xlu0 %v3826, 40
        %v3855 = vpop.permute.xlu0 %3854
        %3856 = vrot.lane.b32.xlu0 %v3827, 40
        %v3857 = vpop.permute.xlu0 %3856
        %3858 = vrot.lane.b32.xlu0 %v3828, 40
        %v3859 = vpop.permute.xlu0 %3858
        %3860 = vrot.lane.b32.xlu0 %v3829, 40
        %v3861 = vpop.permute.xlu0 %3860
        %3862 = vrot.lane.b32.xlu0 %v3830, 40
        %v3863 = vpop.permute.xlu0 %3862
        %3864 = vrot.lane.b32.xlu0 %v3831, 40
        %v3865 = vpop.permute.xlu0 %3864
        %3866 = vrot.lane.b32.xlu0 %v3832, 40
        %v3867 = vpop.permute.xlu0 %3866
        %3868 = vrot.lane.b32.xlu0 %v3833, 40
        %v3869 = vpop.permute.xlu0 %3868
        %3870 = vrot.lane.b32.xlu0 %v3834, 40
        %v3871 = vpop.permute.xlu0 %3870
        %3872 = vrot.lane.b32.xlu0 %v3835, 40
        %v3873 = vpop.permute.xlu0 %3872
        %3874 = vrot.lane.b32.xlu0 %v3836, 40
        %v3875 = vpop.permute.xlu0 %3874
        %3876 = vrot.lane.b32.xlu0 %v3837, 40
        %v3877 = vpop.permute.xlu0 %3876
        %vm3898 = vcmask 388418
        %3899 = vst.msk [vmem:[#allocation2 + $0x38] sm:$0xc] %vm3898, %v3839
        %3900 = vst.msk [vmem:[#allocation2 + $0x80] sm:$0xc] %vm3898, %v3841
        %3901 = vst.msk [vmem:[#allocation2 + $0xc8] sm:$0xc] %vm3898, %v3843
        %3902 = vst.msk [vmem:[#allocation2 + $0x110] sm:$0xc] %vm3898, %v3845
        %3903 = vst.msk [vmem:[#allocation2 + $0x158] sm:$0xc] %vm3898, %v3847
        %3904 = vst.msk [vmem:[#allocation2 + $0x1a0] sm:$0xc] %vm3898, %v3849
        %3905 = vst.msk [vmem:[#allocation2 + $0x1e8] sm:$0xc] %vm3898, %v3851
        %3906 = vst.msk [vmem:[#allocation2 + $0x230] sm:$0xc] %vm3898, %v3853
        %3907 = vst.msk [vmem:[#allocation2 + $0x278] sm:$0xc] %vm3898, %v3855
        %3908 = vst.msk [vmem:[#allocation2 + $0x2c0] sm:$0xc] %vm3898, %v3857
        %3909 = vst.msk [vmem:[#allocation2 + $0x308] sm:$0xc] %vm3898, %v3859
        %3910 = vst.msk [vmem:[#allocation2 + $0x350] sm:$0xc] %vm3898, %v3861
        %3911 = vst.msk [vmem:[#allocation2 + $0x398] sm:$0xc] %vm3898, %v3863
        %3912 = vst.msk [vmem:[#allocation2 + $0x3e0] sm:$0xc] %vm3898, %v3865
        %3913 = vst.msk [vmem:[#allocation2 + $0x428] sm:$0xc] %vm3898, %v3867
        %3914 = vst.msk [vmem:[#allocation2 + $0x470] sm:$0xc] %vm3898, %v3869
        %3915 = vst.msk [vmem:[#allocation2 + $0x4b8] sm:$0xc] %vm3898, %v3871
        %3916 = vst.msk [vmem:[#allocation2 + $0x500] sm:$0xc] %vm3898, %v3873
        %3917 = vst.msk [vmem:[#allocation2 + $0x548] sm:$0xc] %vm3898, %v3875
        %3918 = vst.msk [vmem:[#allocation2 + $0x590] sm:$0xc] %vm3898, %v3877
        %v3919 = vld [vmem:[%s168] sm:$0xff]
        %v3920 = vld [vmem:[%s168 + $0x8] sm:$0xff]
        %v3921 = vld [vmem:[%s168 + $0x10] sm:$0xf]
        %v3922 = vld [vmem:[%s168 + $0x18] sm:$0xff]
        %v3923 = vld [vmem:[%s168 + $0x20] sm:$0xff]
        %v3924 = vld [vmem:[%s168 + $0x28] sm:$0xf]
        %v3925 = vld [vmem:[%s168 + $0x30] sm:$0xff]
        %v3926 = vld [vmem:[%s168 + $0x38] sm:$0xff]
        %v3927 = vld [vmem:[%s168 + $0x40] sm:$0xf]
        %v3928 = vld [vmem:[%s168 + $0x48] sm:$0xff]
        %v3929 = vld [vmem:[%s168 + $0x50] sm:$0xff]
        %v3930 = vld [vmem:[%s168 + $0x58] sm:$0xf]
        %v3931 = vld [vmem:[%s168 + $0x60] sm:$0xff]
        %v3932 = vld [vmem:[%s168 + $0x68] sm:$0xff]
        %v3933 = vld [vmem:[%s168 + $0x70] sm:$0xf]
        %v3934 = vld [vmem:[%s168 + $0x78] sm:$0xff]
        %v3935 = vld [vmem:[%s168 + $0x80] sm:$0xff]
        %v3936 = vld [vmem:[%s168 + $0x88] sm:$0xf]
        %v3937 = vld [vmem:[%s168 + $0x90] sm:$0xff]
        %v3938 = vld [vmem:[%s168 + $0x98] sm:$0xff]
        %v3939 = vld [vmem:[%s168 + $0xa0] sm:$0xf]
        %v3940 = vld [vmem:[%s168 + $0xa8] sm:$0xff]
        %v3941 = vld [vmem:[%s168 + $0xb0] sm:$0xff]
        %v3942 = vld [vmem:[%s168 + $0xb8] sm:$0xf]
        %v3943 = vld [vmem:[%s168 + $0xc0] sm:$0xff]
        %v3944 = vld [vmem:[%s168 + $0xc8] sm:$0xff]
        %v3945 = vld [vmem:[%s168 + $0xd0] sm:$0xf]
        %v3946 = vld [vmem:[%s168 + $0xd8] sm:$0xff]
        %v3947 = vld [vmem:[%s168 + $0xe0] sm:$0xff]
        %v3948 = vld [vmem:[%s168 + $0xe8] sm:$0xf]
        %v3949 = vld [vmem:[%s168 + $0xf0] sm:$0xff]
        %v3950 = vld [vmem:[%s168 + $0xf8] sm:$0xff]
        %v3951 = vld [vmem:[%s168 + $0x100] sm:$0xf]
        %v3952 = vld [vmem:[%s168 + $0x108] sm:$0xff]
        %v3953 = vld [vmem:[%s168 + $0x110] sm:$0xff]
        %v3954 = vld [vmem:[%s168 + $0x118] sm:$0xf]
        %v3955 = vld [vmem:[%s168 + $0x120] sm:$0xff]
        %v3956 = vld [vmem:[%s168 + $0x128] sm:$0xff]
        %v3957 = vld [vmem:[%s168 + $0x130] sm:$0xf]
        %v3958 = vld [vmem:[%s168 + $0x138] sm:$0xff]
        %v3959 = vld [vmem:[%s168 + $0x140] sm:$0xff]
        %v3960 = vld [vmem:[%s168 + $0x148] sm:$0xf]
        %v3961 = vld [vmem:[%s168 + $0x150] sm:$0xff]
        %v3962 = vld [vmem:[%s168 + $0x158] sm:$0xff]
        %v3963 = vld [vmem:[%s168 + $0x160] sm:$0xf]
        %v3964 = vld [vmem:[%s168 + $0x168] sm:$0xff]
        %v3965 = vld [vmem:[%s168 + $0x170] sm:$0xff]
        %v3966 = vld [vmem:[%s168 + $0x178] sm:$0xf]
        %v3967 = vld [vmem:[%s168 + $0x180] sm:$0xff]
        %v3968 = vld [vmem:[%s168 + $0x188] sm:$0xff]
        %v3969 = vld [vmem:[%s168 + $0x190] sm:$0xf]
        %v3970 = vld [vmem:[%s168 + $0x198] sm:$0xff]
        %v3971 = vld [vmem:[%s168 + $0x1a0] sm:$0xff]
        %v3972 = vld [vmem:[%s168 + $0x1a8] sm:$0xf]
        %v3973 = vld [vmem:[%s168 + $0x1b0] sm:$0xff]
        %v3974 = vld [vmem:[%s168 + $0x1b8] sm:$0xff]
        %v3975 = vld [vmem:[%s168 + $0x1c0] sm:$0xf]
        %v3976 = vld [vmem:[%s168 + $0x1c8] sm:$0xff]
        %v3977 = vld [vmem:[%s168 + $0x1d0] sm:$0xff]
        %v3978 = vld [vmem:[%s168 + $0x1d8] sm:$0xf]
        %4039 = vrot.lane.b32.xlu0 %v3919, 48
        %v4040 = vpop.permute.xlu0 %4039
        %4041 = vrot.lane.b32.xlu0 %v3920, 48
        %v4042 = vpop.permute.xlu0 %4041
        %4043 = vrot.lane.b32.xlu0 %v3921, 48
        %v4044 = vpop.permute.xlu0 %4043
        %4045 = vrot.lane.b32.xlu0 %v3922, 48
        %v4046 = vpop.permute.xlu0 %4045
        %4047 = vrot.lane.b32.xlu0 %v3923, 48
        %v4048 = vpop.permute.xlu0 %4047
        %4049 = vrot.lane.b32.xlu0 %v3924, 48
        %v4050 = vpop.permute.xlu0 %4049
        %4051 = vrot.lane.b32.xlu0 %v3925, 48
        %v4052 = vpop.permute.xlu0 %4051
        %4053 = vrot.lane.b32.xlu0 %v3926, 48
        %v4054 = vpop.permute.xlu0 %4053
        %4055 = vrot.lane.b32.xlu0 %v3927, 48
        %v4056 = vpop.permute.xlu0 %4055
        %4057 = vrot.lane.b32.xlu0 %v3928, 48
        %v4058 = vpop.permute.xlu0 %4057
        %4059 = vrot.lane.b32.xlu0 %v3929, 48
        %v4060 = vpop.permute.xlu0 %4059
        %4061 = vrot.lane.b32.xlu0 %v3930, 48
        %v4062 = vpop.permute.xlu0 %4061
        %4063 = vrot.lane.b32.xlu0 %v3931, 48
        %v4064 = vpop.permute.xlu0 %4063
        %4065 = vrot.lane.b32.xlu0 %v3932, 48
        %v4066 = vpop.permute.xlu0 %4065
        %4067 = vrot.lane.b32.xlu0 %v3933, 48
        %v4068 = vpop.permute.xlu0 %4067
        %4069 = vrot.lane.b32.xlu0 %v3934, 48
        %v4070 = vpop.permute.xlu0 %4069
        %4071 = vrot.lane.b32.xlu0 %v3935, 48
        %v4072 = vpop.permute.xlu0 %4071
        %4073 = vrot.lane.b32.xlu0 %v3936, 48
        %v4074 = vpop.permute.xlu0 %4073
        %4075 = vrot.lane.b32.xlu0 %v3937, 48
        %v4076 = vpop.permute.xlu0 %4075
        %4077 = vrot.lane.b32.xlu0 %v3938, 48
        %v4078 = vpop.permute.xlu0 %4077
        %4079 = vrot.lane.b32.xlu0 %v3939, 48
        %v4080 = vpop.permute.xlu0 %4079
        %4081 = vrot.lane.b32.xlu0 %v3940, 48
        %v4082 = vpop.permute.xlu0 %4081
        %4083 = vrot.lane.b32.xlu0 %v3941, 48
        %v4084 = vpop.permute.xlu0 %4083
        %4085 = vrot.lane.b32.xlu0 %v3942, 48
        %v4086 = vpop.permute.xlu0 %4085
        %4087 = vrot.lane.b32.xlu0 %v3943, 48
        %v4088 = vpop.permute.xlu0 %4087
        %4089 = vrot.lane.b32.xlu0 %v3944, 48
        %v4090 = vpop.permute.xlu0 %4089
        %4091 = vrot.lane.b32.xlu0 %v3945, 48
        %v4092 = vpop.permute.xlu0 %4091
        %4093 = vrot.lane.b32.xlu0 %v3946, 48
        %v4094 = vpop.permute.xlu0 %4093
        %4095 = vrot.lane.b32.xlu0 %v3947, 48
        %v4096 = vpop.permute.xlu0 %4095
        %4097 = vrot.lane.b32.xlu0 %v3948, 48
        %v4098 = vpop.permute.xlu0 %4097
        %4099 = vrot.lane.b32.xlu0 %v3949, 48
        %v4100 = vpop.permute.xlu0 %4099
        %4101 = vrot.lane.b32.xlu0 %v3950, 48
        %v4102 = vpop.permute.xlu0 %4101
        %4103 = vrot.lane.b32.xlu0 %v3951, 48
        %v4104 = vpop.permute.xlu0 %4103
        %4105 = vrot.lane.b32.xlu0 %v3952, 48
        %v4106 = vpop.permute.xlu0 %4105
        %4107 = vrot.lane.b32.xlu0 %v3953, 48
        %v4108 = vpop.permute.xlu0 %4107
        %4109 = vrot.lane.b32.xlu0 %v3954, 48
        %v4110 = vpop.permute.xlu0 %4109
        %4111 = vrot.lane.b32.xlu0 %v3955, 48
        %v4112 = vpop.permute.xlu0 %4111
        %4113 = vrot.lane.b32.xlu0 %v3956, 48
        %v4114 = vpop.permute.xlu0 %4113
        %4115 = vrot.lane.b32.xlu0 %v3957, 48
        %v4116 = vpop.permute.xlu0 %4115
        %4117 = vrot.lane.b32.xlu0 %v3958, 48
        %v4118 = vpop.permute.xlu0 %4117
        %4119 = vrot.lane.b32.xlu0 %v3959, 48
        %v4120 = vpop.permute.xlu0 %4119
        %4121 = vrot.lane.b32.xlu0 %v3960, 48
        %v4122 = vpop.permute.xlu0 %4121
        %4123 = vrot.lane.b32.xlu0 %v3961, 48
        %v4124 = vpop.permute.xlu0 %4123
        %4125 = vrot.lane.b32.xlu0 %v3962, 48
        %v4126 = vpop.permute.xlu0 %4125
        %4127 = vrot.lane.b32.xlu0 %v3963, 48
        %v4128 = vpop.permute.xlu0 %4127
        %4129 = vrot.lane.b32.xlu0 %v3964, 48
        %v4130 = vpop.permute.xlu0 %4129
        %4131 = vrot.lane.b32.xlu0 %v3965, 48
        %v4132 = vpop.permute.xlu0 %4131
        %4133 = vrot.lane.b32.xlu0 %v3966, 48
        %v4134 = vpop.permute.xlu0 %4133
        %4135 = vrot.lane.b32.xlu0 %v3967, 48
        %v4136 = vpop.permute.xlu0 %4135
        %4137 = vrot.lane.b32.xlu0 %v3968, 48
        %v4138 = vpop.permute.xlu0 %4137
        %4139 = vrot.lane.b32.xlu0 %v3969, 48
        %v4140 = vpop.permute.xlu0 %4139
        %4141 = vrot.lane.b32.xlu0 %v3970, 48
        %v4142 = vpop.permute.xlu0 %4141
        %4143 = vrot.lane.b32.xlu0 %v3971, 48
        %v4144 = vpop.permute.xlu0 %4143
        %4145 = vrot.lane.b32.xlu0 %v3972, 48
        %v4146 = vpop.permute.xlu0 %4145
        %4147 = vrot.lane.b32.xlu0 %v3973, 48
        %v4148 = vpop.permute.xlu0 %4147
        %4149 = vrot.lane.b32.xlu0 %v3974, 48
        %v4150 = vpop.permute.xlu0 %4149
        %4151 = vrot.lane.b32.xlu0 %v3975, 48
        %v4152 = vpop.permute.xlu0 %4151
        %4153 = vrot.lane.b32.xlu0 %v3976, 48
        %v4154 = vpop.permute.xlu0 %4153
        %4155 = vrot.lane.b32.xlu0 %v3977, 48
        %v4156 = vpop.permute.xlu0 %4155
        %4157 = vrot.lane.b32.xlu0 %v3978, 48
        %v4158 = vpop.permute.xlu0 %4157
        %4219 = vst.msk [vmem:[#allocation2 + $0x8] sm:$0xff] %vm2176, %v4040
        %4220 = vst.msk [vmem:[#allocation2 + $0x20] sm:$0xff] %vm2176, %v4042
        %4221 = vst.msk [vmem:[#allocation2 + $0x38] sm:$0xf] %vm2178, %v4044
        %4222 = vst.msk [vmem:[#allocation2 + $0x50] sm:$0xff] %vm2176, %v4046
        %4223 = vst.msk [vmem:[#allocation2 + $0x68] sm:$0xff] %vm2176, %v4048
        %4224 = vst.msk [vmem:[#allocation2 + $0x80] sm:$0xf] %vm2178, %v4050
        %4225 = vst.msk [vmem:[#allocation2 + $0x98] sm:$0xff] %vm2176, %v4052
        %4226 = vst.msk [vmem:[#allocation2 + $0xb0] sm:$0xff] %vm2176, %v4054
        %4227 = vst.msk [vmem:[#allocation2 + $0xc8] sm:$0xf] %vm2178, %v4056
        %4228 = vst.msk [vmem:[#allocation2 + $0xe0] sm:$0xff] %vm2176, %v4058
        %4229 = vst.msk [vmem:[#allocation2 + $0xf8] sm:$0xff] %vm2176, %v4060
        %4230 = vst.msk [vmem:[#allocation2 + $0x110] sm:$0xf] %vm2178, %v4062
        %4231 = vst.msk [vmem:[#allocation2 + $0x128] sm:$0xff] %vm2176, %v4064
        %4232 = vst.msk [vmem:[#allocation2 + $0x140] sm:$0xff] %vm2176, %v4066
        %4233 = vst.msk [vmem:[#allocation2 + $0x158] sm:$0xf] %vm2178, %v4068
        %4234 = vst.msk [vmem:[#allocation2 + $0x170] sm:$0xff] %vm2176, %v4070
        %4235 = vst.msk [vmem:[#allocation2 + $0x188] sm:$0xff] %vm2176, %v4072
        %4236 = vst.msk [vmem:[#allocation2 + $0x1a0] sm:$0xf] %vm2178, %v4074
        %4237 = vst.msk [vmem:[#allocation2 + $0x1b8] sm:$0xff] %vm2176, %v4076
        %4238 = vst.msk [vmem:[#allocation2 + $0x1d0] sm:$0xff] %vm2176, %v4078
        %4239 = vst.msk [vmem:[#allocation2 + $0x1e8] sm:$0xf] %vm2178, %v4080
        %4240 = vst.msk [vmem:[#allocation2 + $0x200] sm:$0xff] %vm2176, %v4082
        %4241 = vst.msk [vmem:[#allocation2 + $0x218] sm:$0xff] %vm2176, %v4084
        %4242 = vst.msk [vmem:[#allocation2 + $0x230] sm:$0xf] %vm2178, %v4086
        %4243 = vst.msk [vmem:[#allocation2 + $0x248] sm:$0xff] %vm2176, %v4088
        %4244 = vst.msk [vmem:[#allocation2 + $0x260] sm:$0xff] %vm2176, %v4090
        %4245 = vst.msk [vmem:[#allocation2 + $0x278] sm:$0xf] %vm2178, %v4092
        %4246 = vst.msk [vmem:[#allocation2 + $0x290] sm:$0xff] %vm2176, %v4094
        %4247 = vst.msk [vmem:[#allocation2 + $0x2a8] sm:$0xff] %vm2176, %v4096
        %4248 = vst.msk [vmem:[#allocation2 + $0x2c0] sm:$0xf] %vm2178, %v4098
        %4249 = vst.msk [vmem:[#allocation2 + $0x2d8] sm:$0xff] %vm2176, %v4100
        %4250 = vst.msk [vmem:[#allocation2 + $0x2f0] sm:$0xff] %vm2176, %v4102
        %4251 = vst.msk [vmem:[#allocation2 + $0x308] sm:$0xf] %vm2178, %v4104
        %4252 = vst.msk [vmem:[#allocation2 + $0x320] sm:$0xff] %vm2176, %v4106
        %4253 = vst.msk [vmem:[#allocation2 + $0x338] sm:$0xff] %vm2176, %v4108
        %4254 = vst.msk [vmem:[#allocation2 + $0x350] sm:$0xf] %vm2178, %v4110
        %4255 = vst.msk [vmem:[#allocation2 + $0x368] sm:$0xff] %vm2176, %v4112
        %4256 = vst.msk [vmem:[#allocation2 + $0x380] sm:$0xff] %vm2176, %v4114
        %4257 = vst.msk [vmem:[#allocation2 + $0x398] sm:$0xf] %vm2178, %v4116
        %4258 = vst.msk [vmem:[#allocation2 + $0x3b0] sm:$0xff] %vm2176, %v4118
        %4259 = vst.msk [vmem:[#allocation2 + $0x3c8] sm:$0xff] %vm2176, %v4120
        %4260 = vst.msk [vmem:[#allocation2 + $0x3e0] sm:$0xf] %vm2178, %v4122
        %4261 = vst.msk [vmem:[#allocation2 + $0x3f8] sm:$0xff] %vm2176, %v4124
        %4262 = vst.msk [vmem:[#allocation2 + $0x410] sm:$0xff] %vm2176, %v4126
        %4263 = vst.msk [vmem:[#allocation2 + $0x428] sm:$0xf] %vm2178, %v4128
        %4264 = vst.msk [vmem:[#allocation2 + $0x440] sm:$0xff] %vm2176, %v4130
        %4265 = vst.msk [vmem:[#allocation2 + $0x458] sm:$0xff] %vm2176, %v4132
        %4266 = vst.msk [vmem:[#allocation2 + $0x470] sm:$0xf] %vm2178, %v4134
        %4267 = vst.msk [vmem:[#allocation2 + $0x488] sm:$0xff] %vm2176, %v4136
        %4268 = vst.msk [vmem:[#allocation2 + $0x4a0] sm:$0xff] %vm2176, %v4138
        %4269 = vst.msk [vmem:[#allocation2 + $0x4b8] sm:$0xf] %vm2178, %v4140
        %4270 = vst.msk [vmem:[#allocation2 + $0x4d0] sm:$0xff] %vm2176, %v4142
        %4271 = vst.msk [vmem:[#allocation2 + $0x4e8] sm:$0xff] %vm2176, %v4144
        %4272 = vst.msk [vmem:[#allocation2 + $0x500] sm:$0xf] %vm2178, %v4146
        %4273 = vst.msk [vmem:[#allocation2 + $0x518] sm:$0xff] %vm2176, %v4148
        %4274 = vst.msk [vmem:[#allocation2 + $0x530] sm:$0xff] %vm2176, %v4150
        %4275 = vst.msk [vmem:[#allocation2 + $0x548] sm:$0xf] %vm2178, %v4152
        %4276 = vst.msk [vmem:[#allocation2 + $0x560] sm:$0xff] %vm2176, %v4154
        %4277 = vst.msk [vmem:[#allocation2 + $0x578] sm:$0xff] %vm2176, %v4156
        %4278 = vst.msk [vmem:[#allocation2 + $0x590] sm:$0xf] %vm2178, %v4158
        %v4279 = vld [vmem:[%s168 + $0x12] sm:$0x3]
        %v4280 = vld [vmem:[%s168 + $0x2a] sm:$0x3]
        %v4281 = vld [vmem:[%s168 + $0x42] sm:$0x3]
        %v4282 = vld [vmem:[%s168 + $0x5a] sm:$0x3]
        %v4283 = vld [vmem:[%s168 + $0x72] sm:$0x3]
        %v4284 = vld [vmem:[%s168 + $0x8a] sm:$0x3]
        %v4285 = vld [vmem:[%s168 + $0xa2] sm:$0x3]
        %v4286 = vld [vmem:[%s168 + $0xba] sm:$0x3]
        %v4287 = vld [vmem:[%s168 + $0xd2] sm:$0x3]
        %v4288 = vld [vmem:[%s168 + $0xea] sm:$0x3]
        %v4289 = vld [vmem:[%s168 + $0x102] sm:$0x3]
        %v4290 = vld [vmem:[%s168 + $0x11a] sm:$0x3]
        %v4291 = vld [vmem:[%s168 + $0x132] sm:$0x3]
        %v4292 = vld [vmem:[%s168 + $0x14a] sm:$0x3]
        %v4293 = vld [vmem:[%s168 + $0x162] sm:$0x3]
        %v4294 = vld [vmem:[%s168 + $0x17a] sm:$0x3]
        %v4295 = vld [vmem:[%s168 + $0x192] sm:$0x3]
        %v4296 = vld [vmem:[%s168 + $0x1aa] sm:$0x3]
        %v4297 = vld [vmem:[%s168 + $0x1c2] sm:$0x3]
        %v4298 = vld [vmem:[%s168 + $0x1da] sm:$0x3]
        %4319 = vrot.lane.b32.xlu0 %v4279, 56
        %v4320 = vpop.permute.xlu0 %4319
        %4321 = vrot.lane.b32.xlu0 %v4280, 56
        %v4322 = vpop.permute.xlu0 %4321
        %4323 = vrot.lane.b32.xlu0 %v4281, 56
        %v4324 = vpop.permute.xlu0 %4323
        %4325 = vrot.lane.b32.xlu0 %v4282, 56
        %v4326 = vpop.permute.xlu0 %4325
        %4327 = vrot.lane.b32.xlu0 %v4283, 56
        %v4328 = vpop.permute.xlu0 %4327
        %4329 = vrot.lane.b32.xlu0 %v4284, 56
        %v4330 = vpop.permute.xlu0 %4329
        %4331 = vrot.lane.b32.xlu0 %v4285, 56
        %v4332 = vpop.permute.xlu0 %4331
        %4333 = vrot.lane.b32.xlu0 %v4286, 56
        %v4334 = vpop.permute.xlu0 %4333
        %4335 = vrot.lane.b32.xlu0 %v4287, 56
        %v4336 = vpop.permute.xlu0 %4335
        %4337 = vrot.lane.b32.xlu0 %v4288, 56
        %v4338 = vpop.permute.xlu0 %4337
        %4339 = vrot.lane.b32.xlu0 %v4289, 56
        %v4340 = vpop.permute.xlu0 %4339
        %4341 = vrot.lane.b32.xlu0 %v4290, 56
        %v4342 = vpop.permute.xlu0 %4341
        %4343 = vrot.lane.b32.xlu0 %v4291, 56
        %v4344 = vpop.permute.xlu0 %4343
        %4345 = vrot.lane.b32.xlu0 %v4292, 56
        %v4346 = vpop.permute.xlu0 %4345
        %4347 = vrot.lane.b32.xlu0 %v4293, 56
        %v4348 = vpop.permute.xlu0 %4347
        %4349 = vrot.lane.b32.xlu0 %v4294, 56
        %v4350 = vpop.permute.xlu0 %4349
        %4351 = vrot.lane.b32.xlu0 %v4295, 56
        %v4352 = vpop.permute.xlu0 %4351
        %4353 = vrot.lane.b32.xlu0 %v4296, 56
        %v4354 = vpop.permute.xlu0 %4353
        %4355 = vrot.lane.b32.xlu0 %v4297, 56
        %v4356 = vpop.permute.xlu0 %4355
        %4357 = vrot.lane.b32.xlu0 %v4298, 56
        %v4358 = vpop.permute.xlu0 %4357
        %vm4379 = vcmask 517568
        %4380 = vst.msk [vmem:[#allocation2 + $0x8] sm:$0x3] %vm4379, %v4320
        %4381 = vst.msk [vmem:[#allocation2 + $0x50] sm:$0x3] %vm4379, %v4322
        %4382 = vst.msk [vmem:[#allocation2 + $0x98] sm:$0x3] %vm4379, %v4324
        %4383 = vst.msk [vmem:[#allocation2 + $0xe0] sm:$0x3] %vm4379, %v4326
        %4384 = vst.msk [vmem:[#allocation2 + $0x128] sm:$0x3] %vm4379, %v4328
        %4385 = vst.msk [vmem:[#allocation2 + $0x170] sm:$0x3] %vm4379, %v4330
        %4386 = vst.msk [vmem:[#allocation2 + $0x1b8] sm:$0x3] %vm4379, %v4332
        %4387 = vst.msk [vmem:[#allocation2 + $0x200] sm:$0x3] %vm4379, %v4334
        %4388 = vst.msk [vmem:[#allocation2 + $0x248] sm:$0x3] %vm4379, %v4336
        %4389 = vst.msk [vmem:[#allocation2 + $0x290] sm:$0x3] %vm4379, %v4338
        %4390 = vst.msk [vmem:[#allocation2 + $0x2d8] sm:$0x3] %vm4379, %v4340
        %4391 = vst.msk [vmem:[#allocation2 + $0x320] sm:$0x3] %vm4379, %v4342
        %4392 = vst.msk [vmem:[#allocation2 + $0x368] sm:$0x3] %vm4379, %v4344
        %4393 = vst.msk [vmem:[#allocation2 + $0x3b0] sm:$0x3] %vm4379, %v4346
        %4394 = vst.msk [vmem:[#allocation2 + $0x3f8] sm:$0x3] %vm4379, %v4348
        %4395 = vst.msk [vmem:[#allocation2 + $0x440] sm:$0x3] %vm4379, %v4350
        %4396 = vst.msk [vmem:[#allocation2 + $0x488] sm:$0x3] %vm4379, %v4352
        %4397 = vst.msk [vmem:[#allocation2 + $0x4d0] sm:$0x3] %vm4379, %v4354
        %4398 = vst.msk [vmem:[#allocation2 + $0x518] sm:$0x3] %vm4379, %v4356
        %4399 = vst.msk [vmem:[#allocation2 + $0x560] sm:$0x3] %vm4379, %v4358
        %s4400 = scalar_lea.vmem %s168, 432
        %v4401 = vld [vmem:[%s4400] sm:$0x3]
        %v4402 = vld [vmem:[%s4400 + $0x18] sm:$0x3]
        %v4405 = vrot.slane %v4401, 6
        %v4406 = vrot.slane %v4402, 6
        %4407 = vrot.lane.b32.xlu0 %v4405, 64
        %v4408 = vpop.permute.xlu0 %4407
        %4409 = vrot.lane.b32.xlu0 %v4406, 64
        %v4410 = vpop.permute.xlu0 %4409
        %vm4413 = vcmask 585218
        %4414 = vst.msk [vmem:[#allocation2 + $0x38] sm:$0xc] %vm4413, %v4408
        %4415 = vst.msk [vmem:[#allocation2 + $0x80] sm:$0xc] %vm4413, %v4410
        %v4416 = vld [vmem:[%s4400] sm:$0xff]
        %v4417 = vld [vmem:[%s4400 + $0x8] sm:$0xff]
        %v4418 = vld [vmem:[%s4400 + $0x10] sm:$0xf]
        %v4419 = vld [vmem:[%s4400 + $0x18] sm:$0xff]
        %v4420 = vld [vmem:[%s4400 + $0x20] sm:$0xff]
        %v4421 = vld [vmem:[%s4400 + $0x28] sm:$0xf]
        %4428 = vrot.lane.b32.xlu0 %v4416, 72
        %v4429 = vpop.permute.xlu0 %4428
        %4430 = vrot.lane.b32.xlu0 %v4417, 72
        %v4431 = vpop.permute.xlu0 %4430
        %4432 = vrot.lane.b32.xlu0 %v4418, 72
        %v4433 = vpop.permute.xlu0 %4432
        %4434 = vrot.lane.b32.xlu0 %v4419, 72
        %v4435 = vpop.permute.xlu0 %4434
        %4436 = vrot.lane.b32.xlu0 %v4420, 72
        %v4437 = vpop.permute.xlu0 %4436
        %4438 = vrot.lane.b32.xlu0 %v4421, 72
        %v4439 = vpop.permute.xlu0 %4438
        %vm4446 = vcmask 654912
        %4447 = vst.msk [vmem:[#allocation2 + $0x8] sm:$0xff] %vm4446, %v4429
        %4448 = vst.msk [vmem:[#allocation2 + $0x20] sm:$0xff] %vm4446, %v4431
        %4449 = vst.msk [vmem:[#allocation2 + $0x38] sm:$0xf] %vm2694, %v4433
        %4450 = vst.msk [vmem:[#allocation2 + $0x50] sm:$0xff] %vm4446, %v4435
        %4451 = vst.msk [vmem:[#allocation2 + $0x68] sm:$0xff] %vm4446, %v4437
        %4452 = vst.msk [vmem:[#allocation2 + $0x80] sm:$0xf] %vm2694, %v4439
        %v4453 = vld [vmem:[%s4400 + $0x12] sm:$0x3]
        %v4454 = vld [vmem:[%s4400 + $0x2a] sm:$0x3]
        %4457 = vrot.lane.b32.xlu0 %v4453, 80
        %v4458 = vpop.permute.xlu0 %4457
        %4459 = vrot.lane.b32.xlu0 %v4454, 80
        %v4460 = vpop.permute.xlu0 %4459
        %vm4463 = vcmask 714368
        %4464 = vst.msk [vmem:[#allocation2 + $0x8] sm:$0x3] %vm4463, %v4458
        %4465 = vst.msk [vmem:[#allocation2 + $0x50] sm:$0x3] %vm4463, %v4460
        %v4466 = vld [vmem:[%s168] sm:$0xff]
        %v4467 = vld [vmem:[%s168 + $0x8] sm:$0xff]
        %v4468 = vld [vmem:[%s168 + $0x10] sm:$0xf]
        %v4469 = vld [vmem:[%s168 + $0x18] sm:$0xff]
        %v4470 = vld [vmem:[%s168 + $0x20] sm:$0xff]
        %v4471 = vld [vmem:[%s168 + $0x28] sm:$0xf]
        %v4472 = vld [vmem:[%s168 + $0x30] sm:$0xff]
        %v4473 = vld [vmem:[%s168 + $0x38] sm:$0xff]
        %v4474 = vld [vmem:[%s168 + $0x40] sm:$0xf]
        %v4475 = vld [vmem:[%s168 + $0x48] sm:$0xff]
        %v4476 = vld [vmem:[%s168 + $0x50] sm:$0xff]
        %v4477 = vld [vmem:[%s168 + $0x58] sm:$0xf]
        %v4478 = vld [vmem:[%s168 + $0x60] sm:$0xff]
        %v4479 = vld [vmem:[%s168 + $0x68] sm:$0xff]
        %v4480 = vld [vmem:[%s168 + $0x70] sm:$0xf]
        %v4481 = vld [vmem:[%s168 + $0x78] sm:$0xff]
        %v4482 = vld [vmem:[%s168 + $0x80] sm:$0xff]
        %v4483 = vld [vmem:[%s168 + $0x88] sm:$0xf]
        %v4484 = vld [vmem:[%s168 + $0x90] sm:$0xff]
        %v4485 = vld [vmem:[%s168 + $0x98] sm:$0xff]
        %v4486 = vld [vmem:[%s168 + $0xa0] sm:$0xf]
        %v4487 = vld [vmem:[%s168 + $0xa8] sm:$0xff]
        %v4488 = vld [vmem:[%s168 + $0xb0] sm:$0xff]
        %v4489 = vld [vmem:[%s168 + $0xb8] sm:$0xf]
        %v4490 = vld [vmem:[%s168 + $0xc0] sm:$0xff]
        %v4491 = vld [vmem:[%s168 + $0xc8] sm:$0xff]
        %v4492 = vld [vmem:[%s168 + $0xd0] sm:$0xf]
        %v4493 = vld [vmem:[%s168 + $0xd8] sm:$0xff]
        %v4494 = vld [vmem:[%s168 + $0xe0] sm:$0xff]
        %v4495 = vld [vmem:[%s168 + $0xe8] sm:$0xf]
        %v4496 = vld [vmem:[%s168 + $0xf0] sm:$0xff]
        %v4497 = vld [vmem:[%s168 + $0xf8] sm:$0xff]
        %v4498 = vld [vmem:[%s168 + $0x100] sm:$0xf]
        %v4499 = vld [vmem:[%s168 + $0x108] sm:$0xff]
        %v4500 = vld [vmem:[%s168 + $0x110] sm:$0xff]
        %v4501 = vld [vmem:[%s168 + $0x118] sm:$0xf]
        %v4502 = vld [vmem:[%s168 + $0x120] sm:$0xff]
        %v4503 = vld [vmem:[%s168 + $0x128] sm:$0xff]
        %v4504 = vld [vmem:[%s168 + $0x130] sm:$0xf]
        %v4505 = vld [vmem:[%s168 + $0x138] sm:$0xff]
        %v4506 = vld [vmem:[%s168 + $0x140] sm:$0xff]
        %v4507 = vld [vmem:[%s168 + $0x148] sm:$0xf]
        %v4508 = vld [vmem:[%s168 + $0x150] sm:$0xff]
        %v4509 = vld [vmem:[%s168 + $0x158] sm:$0xff]
        %v4510 = vld [vmem:[%s168 + $0x160] sm:$0xf]
        %v4511 = vld [vmem:[%s168 + $0x168] sm:$0xff]
        %v4512 = vld [vmem:[%s168 + $0x170] sm:$0xff]
        %v4513 = vld [vmem:[%s168 + $0x178] sm:$0xf]
        %v4514 = vld [vmem:[%s168 + $0x180] sm:$0xff]
        %v4515 = vld [vmem:[%s168 + $0x188] sm:$0xff]
        %v4516 = vld [vmem:[%s168 + $0x190] sm:$0xf]
        %v4517 = vld [vmem:[%s168 + $0x198] sm:$0xff]
        %v4518 = vld [vmem:[%s168 + $0x1a0] sm:$0xff]
        %v4519 = vld [vmem:[%s168 + $0x1a8] sm:$0xf]
        %v4520 = vld [vmem:[%s168 + $0x1b0] sm:$0xff]
        %v4521 = vld [vmem:[%s168 + $0x1b8] sm:$0xff]
        %v4522 = vld [vmem:[%s168 + $0x1c0] sm:$0xf]
        %v4523 = vld [vmem:[%s168 + $0x1c8] sm:$0xff]
        %v4524 = vld [vmem:[%s168 + $0x1d0] sm:$0xff]
        %v4525 = vld [vmem:[%s168 + $0x1d8] sm:$0xf]
        %4586 = vrot.lane.b32.xlu0 %v4466, 120
        %v4587 = vpop.permute.xlu0 %4586
        %4588 = vrot.lane.b32.xlu0 %v4467, 120
        %v4589 = vpop.permute.xlu0 %4588
        %4590 = vrot.lane.b32.xlu0 %v4468, 120
        %v4591 = vpop.permute.xlu0 %4590
        %4592 = vrot.lane.b32.xlu0 %v4469, 120
        %v4593 = vpop.permute.xlu0 %4592
        %4594 = vrot.lane.b32.xlu0 %v4470, 120
        %v4595 = vpop.permute.xlu0 %4594
        %4596 = vrot.lane.b32.xlu0 %v4471, 120
        %v4597 = vpop.permute.xlu0 %4596
        %4598 = vrot.lane.b32.xlu0 %v4472, 120
        %v4599 = vpop.permute.xlu0 %4598
        %4600 = vrot.lane.b32.xlu0 %v4473, 120
        %v4601 = vpop.permute.xlu0 %4600
        %4602 = vrot.lane.b32.xlu0 %v4474, 120
        %v4603 = vpop.permute.xlu0 %4602
        %4604 = vrot.lane.b32.xlu0 %v4475, 120
        %v4605 = vpop.permute.xlu0 %4604
        %4606 = vrot.lane.b32.xlu0 %v4476, 120
        %v4607 = vpop.permute.xlu0 %4606
        %4608 = vrot.lane.b32.xlu0 %v4477, 120
        %v4609 = vpop.permute.xlu0 %4608
        %4610 = vrot.lane.b32.xlu0 %v4478, 120
        %v4611 = vpop.permute.xlu0 %4610
        %4612 = vrot.lane.b32.xlu0 %v4479, 120
        %v4613 = vpop.permute.xlu0 %4612
        %4614 = vrot.lane.b32.xlu0 %v4480, 120
        %v4615 = vpop.permute.xlu0 %4614
        %4616 = vrot.lane.b32.xlu0 %v4481, 120
        %v4617 = vpop.permute.xlu0 %4616
        %4618 = vrot.lane.b32.xlu0 %v4482, 120
        %v4619 = vpop.permute.xlu0 %4618
        %4620 = vrot.lane.b32.xlu0 %v4483, 120
        %v4621 = vpop.permute.xlu0 %4620
        %4622 = vrot.lane.b32.xlu0 %v4484, 120
        %v4623 = vpop.permute.xlu0 %4622
        %4624 = vrot.lane.b32.xlu0 %v4485, 120
        %v4625 = vpop.permute.xlu0 %4624
        %4626 = vrot.lane.b32.xlu0 %v4486, 120
        %v4627 = vpop.permute.xlu0 %4626
        %4628 = vrot.lane.b32.xlu0 %v4487, 120
        %v4629 = vpop.permute.xlu0 %4628
        %4630 = vrot.lane.b32.xlu0 %v4488, 120
        %v4631 = vpop.permute.xlu0 %4630
        %4632 = vrot.lane.b32.xlu0 %v4489, 120
        %v4633 = vpop.permute.xlu0 %4632
        %4634 = vrot.lane.b32.xlu0 %v4490, 120
        %v4635 = vpop.permute.xlu0 %4634
        %4636 = vrot.lane.b32.xlu0 %v4491, 120
        %v4637 = vpop.permute.xlu0 %4636
        %4638 = vrot.lane.b32.xlu0 %v4492, 120
        %v4639 = vpop.permute.xlu0 %4638
        %4640 = vrot.lane.b32.xlu0 %v4493, 120
        %v4641 = vpop.permute.xlu0 %4640
        %4642 = vrot.lane.b32.xlu0 %v4494, 120
        %v4643 = vpop.permute.xlu0 %4642
        %4644 = vrot.lane.b32.xlu0 %v4495, 120
        %v4645 = vpop.permute.xlu0 %4644
        %4646 = vrot.lane.b32.xlu0 %v4496, 120
        %v4647 = vpop.permute.xlu0 %4646
        %4648 = vrot.lane.b32.xlu0 %v4497, 120
        %v4649 = vpop.permute.xlu0 %4648
        %4650 = vrot.lane.b32.xlu0 %v4498, 120
        %v4651 = vpop.permute.xlu0 %4650
        %4652 = vrot.lane.b32.xlu0 %v4499, 120
        %v4653 = vpop.permute.xlu0 %4652
        %4654 = vrot.lane.b32.xlu0 %v4500, 120
        %v4655 = vpop.permute.xlu0 %4654
        %4656 = vrot.lane.b32.xlu0 %v4501, 120
        %v4657 = vpop.permute.xlu0 %4656
        %4658 = vrot.lane.b32.xlu0 %v4502, 120
        %v4659 = vpop.permute.xlu0 %4658
        %4660 = vrot.lane.b32.xlu0 %v4503, 120
        %v4661 = vpop.permute.xlu0 %4660
        %4662 = vrot.lane.b32.xlu0 %v4504, 120
        %v4663 = vpop.permute.xlu0 %4662
        %4664 = vrot.lane.b32.xlu0 %v4505, 120
        %v4665 = vpop.permute.xlu0 %4664
        %4666 = vrot.lane.b32.xlu0 %v4506, 120
        %v4667 = vpop.permute.xlu0 %4666
        %4668 = vrot.lane.b32.xlu0 %v4507, 120
        %v4669 = vpop.permute.xlu0 %4668
        %4670 = vrot.lane.b32.xlu0 %v4508, 120
        %v4671 = vpop.permute.xlu0 %4670
        %4672 = vrot.lane.b32.xlu0 %v4509, 120
        %v4673 = vpop.permute.xlu0 %4672
        %4674 = vrot.lane.b32.xlu0 %v4510, 120
        %v4675 = vpop.permute.xlu0 %4674
        %4676 = vrot.lane.b32.xlu0 %v4511, 120
        %v4677 = vpop.permute.xlu0 %4676
        %4678 = vrot.lane.b32.xlu0 %v4512, 120
        %v4679 = vpop.permute.xlu0 %4678
        %4680 = vrot.lane.b32.xlu0 %v4513, 120
        %v4681 = vpop.permute.xlu0 %4680
        %4682 = vrot.lane.b32.xlu0 %v4514, 120
        %v4683 = vpop.permute.xlu0 %4682
        %4684 = vrot.lane.b32.xlu0 %v4515, 120
        %v4685 = vpop.permute.xlu0 %4684
        %4686 = vrot.lane.b32.xlu0 %v4516, 120
        %v4687 = vpop.permute.xlu0 %4686
        %4688 = vrot.lane.b32.xlu0 %v4517, 120
        %v4689 = vpop.permute.xlu0 %4688
        %4690 = vrot.lane.b32.xlu0 %v4518, 120
        %v4691 = vpop.permute.xlu0 %4690
        %4692 = vrot.lane.b32.xlu0 %v4519, 120
        %v4693 = vpop.permute.xlu0 %4692
        %4694 = vrot.lane.b32.xlu0 %v4520, 120
        %v4695 = vpop.permute.xlu0 %4694
        %4696 = vrot.lane.b32.xlu0 %v4521, 120
        %v4697 = vpop.permute.xlu0 %4696
        %4698 = vrot.lane.b32.xlu0 %v4522, 120
        %v4699 = vpop.permute.xlu0 %4698
        %4700 = vrot.lane.b32.xlu0 %v4523, 120
        %v4701 = vpop.permute.xlu0 %4700
        %4702 = vrot.lane.b32.xlu0 %v4524, 120
        %v4703 = vpop.permute.xlu0 %4702
        %4704 = vrot.lane.b32.xlu0 %v4525, 120
        %v4705 = vpop.permute.xlu0 %4704
        %vm4766 = vcmask 1048512
        %4767 = vst.msk [vmem:[#allocation2 + $0x8] sm:$0xff] %vm4766, %v4587
        %4768 = vst.msk [vmem:[#allocation2 + $0x20] sm:$0xff] %vm4766, %v4589
        %4769 = vst.msk [vmem:[#allocation2 + $0x38] sm:$0xf] %vm3601, %v4591
        %4770 = vst.msk [vmem:[#allocation2 + $0x50] sm:$0xff] %vm4766, %v4593
        %4771 = vst.msk [vmem:[#allocation2 + $0x68] sm:$0xff] %vm4766, %v4595
        %4772 = vst.msk [vmem:[#allocation2 + $0x80] sm:$0xf] %vm3601, %v4597
        %4773 = vst.msk [vmem:[#allocation2 + $0x98] sm:$0xff] %vm4766, %v4599
        %4774 = vst.msk [vmem:[#allocation2 + $0xb0] sm:$0xff] %vm4766, %v4601
        %4775 = vst.msk [vmem:[#allocation2 + $0xc8] sm:$0xf] %vm3601, %v4603
        %4776 = vst.msk [vmem:[#allocation2 + $0xe0] sm:$0xff] %vm4766, %v4605
        %4777 = vst.msk [vmem:[#allocation2 + $0xf8] sm:$0xff] %vm4766, %v4607
        %4778 = vst.msk [vmem:[#allocation2 + $0x110] sm:$0xf] %vm3601, %v4609
        %4779 = vst.msk [vmem:[#allocation2 + $0x128] sm:$0xff] %vm4766, %v4611
        %4780 = vst.msk [vmem:[#allocation2 + $0x140] sm:$0xff] %vm4766, %v4613
        %4781 = vst.msk [vmem:[#allocation2 + $0x158] sm:$0xf] %vm3601, %v4615
        %4782 = vst.msk [vmem:[#allocation2 + $0x170] sm:$0xff] %vm4766, %v4617
        %4783 = vst.msk [vmem:[#allocation2 + $0x188] sm:$0xff] %vm4766, %v4619
        %4784 = vst.msk [vmem:[#allocation2 + $0x1a0] sm:$0xf] %vm3601, %v4621
        %4785 = vst.msk [vmem:[#allocation2 + $0x1b8] sm:$0xff] %vm4766, %v4623
        %4786 = vst.msk [vmem:[#allocation2 + $0x1d0] sm:$0xff] %vm4766, %v4625
        %4787 = vst.msk [vmem:[#allocation2 + $0x1e8] sm:$0xf] %vm3601, %v4627
        %4788 = vst.msk [vmem:[#allocation2 + $0x200] sm:$0xff] %vm4766, %v4629
        %4789 = vst.msk [vmem:[#allocation2 + $0x218] sm:$0xff] %vm4766, %v4631
        %4790 = vst.msk [vmem:[#allocation2 + $0x230] sm:$0xf] %vm3601, %v4633
        %4791 = vst.msk [vmem:[#allocation2 + $0x248] sm:$0xff] %vm4766, %v4635
        %4792 = vst.msk [vmem:[#allocation2 + $0x260] sm:$0xff] %vm4766, %v4637
        %4793 = vst.msk [vmem:[#allocation2 + $0x278] sm:$0xf] %vm3601, %v4639
        %4794 = vst.msk [vmem:[#allocation2 + $0x290] sm:$0xff] %vm4766, %v4641
        %4795 = vst.msk [vmem:[#allocation2 + $0x2a8] sm:$0xff] %vm4766, %v4643
        %4796 = vst.msk [vmem:[#allocation2 + $0x2c0] sm:$0xf] %vm3601, %v4645
        %4797 = vst.msk [vmem:[#allocation2 + $0x2d8] sm:$0xff] %vm4766, %v4647
        %4798 = vst.msk [vmem:[#allocation2 + $0x2f0] sm:$0xff] %vm4766, %v4649
        %4799 = vst.msk [vmem:[#allocation2 + $0x308] sm:$0xf] %vm3601, %v4651
        %4800 = vst.msk [vmem:[#allocation2 + $0x320] sm:$0xff] %vm4766, %v4653
        %4801 = vst.msk [vmem:[#allocation2 + $0x338] sm:$0xff] %vm4766, %v4655
        %4802 = vst.msk [vmem:[#allocation2 + $0x350] sm:$0xf] %vm3601, %v4657
        %4803 = vst.msk [vmem:[#allocation2 + $0x368] sm:$0xff] %vm4766, %v4659
        %4804 = vst.msk [vmem:[#allocation2 + $0x380] sm:$0xff] %vm4766, %v4661
        %4805 = vst.msk [vmem:[#allocation2 + $0x398] sm:$0xf] %vm3601, %v4663
        %4806 = vst.msk [vmem:[#allocation2 + $0x3b0] sm:$0xff] %vm4766, %v4665
        %4807 = vst.msk [vmem:[#allocation2 + $0x3c8] sm:$0xff] %vm4766, %v4667
        %4808 = vst.msk [vmem:[#allocation2 + $0x3e0] sm:$0xf] %vm3601, %v4669
        %4809 = vst.msk [vmem:[#allocation2 + $0x3f8] sm:$0xff] %vm4766, %v4671
        %4810 = vst.msk [vmem:[#allocation2 + $0x410] sm:$0xff] %vm4766, %v4673
        %4811 = vst.msk [vmem:[#allocation2 + $0x428] sm:$0xf] %vm3601, %v4675
        %4812 = vst.msk [vmem:[#allocation2 + $0x440] sm:$0xff] %vm4766, %v4677
        %4813 = vst.msk [vmem:[#allocation2 + $0x458] sm:$0xff] %vm4766, %v4679
        %4814 = vst.msk [vmem:[#allocation2 + $0x470] sm:$0xf] %vm3601, %v4681
        %4815 = vst.msk [vmem:[#allocation2 + $0x488] sm:$0xff] %vm4766, %v4683
        %4816 = vst.msk [vmem:[#allocation2 + $0x4a0] sm:$0xff] %vm4766, %v4685
        %4817 = vst.msk [vmem:[#allocation2 + $0x4b8] sm:$0xf] %vm3601, %v4687
        %4818 = vst.msk [vmem:[#allocation2 + $0x4d0] sm:$0xff] %vm4766, %v4689
        %4819 = vst.msk [vmem:[#allocation2 + $0x4e8] sm:$0xff] %vm4766, %v4691
        %4820 = vst.msk [vmem:[#allocation2 + $0x500] sm:$0xf] %vm3601, %v4693
        %4821 = vst.msk [vmem:[#allocation2 + $0x518] sm:$0xff] %vm4766, %v4695
        %4822 = vst.msk [vmem:[#allocation2 + $0x530] sm:$0xff] %vm4766, %v4697
        %4823 = vst.msk [vmem:[#allocation2 + $0x548] sm:$0xf] %vm3601, %v4699
        %4824 = vst.msk [vmem:[#allocation2 + $0x560] sm:$0xff] %vm4766, %v4701
        %4825 = vst.msk [vmem:[#allocation2 + $0x578] sm:$0xff] %vm4766, %v4703
        %4826 = vst.msk [vmem:[#allocation2 + $0x590] sm:$0xf] %vm3601, %v4705
        %v4827 = vld [vmem:[#allocation2] sm:$0xff]
        %v4828 = vld [vmem:[#allocation2 + $0x8] sm:$0xff]
        %v4829 = vld [vmem:[#allocation2 + $0x10] sm:$0xff]
        %v4830 = vld [vmem:[#allocation2 + $0x18] sm:$0xff]
        %v4831 = vld [vmem:[#allocation2 + $0x20] sm:$0xff]
        %v4832 = vld [vmem:[#allocation2 + $0x28] sm:$0xff]
        %v4833 = vld [vmem:[#allocation2 + $0x30] sm:$0xf]
        %v4834 = vld [vmem:[#allocation2 + $0x38] sm:$0xf]
        %v4835 = vld [vmem:[#allocation2 + $0x40] sm:$0xf]
        %v4836 = vld [vmem:[#allocation2 + $0x48] sm:$0xff]
        %v4837 = vld [vmem:[#allocation2 + $0x50] sm:$0xff]
        %v4838 = vld [vmem:[#allocation2 + $0x58] sm:$0xff]
        %v4839 = vld [vmem:[#allocation2 + $0x60] sm:$0xff]
        %v4840 = vld [vmem:[#allocation2 + $0x68] sm:$0xff]
        %v4841 = vld [vmem:[#allocation2 + $0x70] sm:$0xff]
        %v4842 = vld [vmem:[#allocation2 + $0x78] sm:$0xf]
        %v4843 = vld [vmem:[#allocation2 + $0x80] sm:$0xf]
        %v4844 = vld [vmem:[#allocation2 + $0x88] sm:$0xf]
        %v4845 = vld [vmem:[#allocation2 + $0x90] sm:$0xff]
        %v4846 = vld [vmem:[#allocation2 + $0x98] sm:$0xff]
        %v4847 = vld [vmem:[#allocation2 + $0xa0] sm:$0xff]
        %v4848 = vld [vmem:[#allocation2 + $0xa8] sm:$0xff]
        %v4849 = vld [vmem:[#allocation2 + $0xb0] sm:$0xff]
        %v4850 = vld [vmem:[#allocation2 + $0xb8] sm:$0xff]
        %v4851 = vld [vmem:[#allocation2 + $0xc0] sm:$0xf]
        %v4852 = vld [vmem:[#allocation2 + $0xc8] sm:$0xf]
        %v4853 = vld [vmem:[#allocation2 + $0xd0] sm:$0xf]
        %v4854 = vld [vmem:[#allocation2 + $0xd8] sm:$0xff]
        %v4855 = vld [vmem:[#allocation2 + $0xe0] sm:$0xff]
        %v4856 = vld [vmem:[#allocation2 + $0xe8] sm:$0xff]
        %v4857 = vld [vmem:[#allocation2 + $0xf0] sm:$0xff]
        %v4858 = vld [vmem:[#allocation2 + $0xf8] sm:$0xff]
        %v4859 = vld [vmem:[#allocation2 + $0x100] sm:$0xff]
        %v4860 = vld [vmem:[#allocation2 + $0x108] sm:$0xf]
        %v4861 = vld [vmem:[#allocation2 + $0x110] sm:$0xf]
        %v4862 = vld [vmem:[#allocation2 + $0x118] sm:$0xf]
        %v4863 = vld [vmem:[#allocation2 + $0x120] sm:$0xff]
        %v4864 = vld [vmem:[#allocation2 + $0x128] sm:$0xff]
        %v4865 = vld [vmem:[#allocation2 + $0x130] sm:$0xff]
        %v4866 = vld [vmem:[#allocation2 + $0x138] sm:$0xff]
        %v4867 = vld [vmem:[#allocation2 + $0x140] sm:$0xff]
        %v4868 = vld [vmem:[#allocation2 + $0x148] sm:$0xff]
        %v4869 = vld [vmem:[#allocation2 + $0x150] sm:$0xf]
        %v4870 = vld [vmem:[#allocation2 + $0x158] sm:$0xf]
        %v4871 = vld [vmem:[#allocation2 + $0x160] sm:$0xf]
        %v4872 = vld [vmem:[#allocation2 + $0x168] sm:$0xff]
        %v4873 = vld [vmem:[#allocation2 + $0x170] sm:$0xff]
        %v4874 = vld [vmem:[#allocation2 + $0x178] sm:$0xff]
        %v4875 = vld [vmem:[#allocation2 + $0x180] sm:$0xff]
        %v4876 = vld [vmem:[#allocation2 + $0x188] sm:$0xff]
        %v4877 = vld [vmem:[#allocation2 + $0x190] sm:$0xff]
        %v4878 = vld [vmem:[#allocation2 + $0x198] sm:$0xf]
        %v4879 = vld [vmem:[#allocation2 + $0x1a0] sm:$0xf]
        %v4880 = vld [vmem:[#allocation2 + $0x1a8] sm:$0xf]
        %v4881 = vld [vmem:[#allocation2 + $0x1b0] sm:$0xff]
        %v4882 = vld [vmem:[#allocation2 + $0x1b8] sm:$0xff]
        %v4883 = vld [vmem:[#allocation2 + $0x1c0] sm:$0xff]
        %v4884 = vld [vmem:[#allocation2 + $0x1c8] sm:$0xff]
        %v4885 = vld [vmem:[#allocation2 + $0x1d0] sm:$0xff]
        %v4886 = vld [vmem:[#allocation2 + $0x1d8] sm:$0xff]
        %v4887 = vld [vmem:[#allocation2 + $0x1e0] sm:$0xf]
        %v4888 = vld [vmem:[#allocation2 + $0x1e8] sm:$0xf]
        %v4889 = vld [vmem:[#allocation2 + $0x1f0] sm:$0xf]
        %v4890 = vld [vmem:[#allocation2 + $0x1f8] sm:$0xff]
        %v4891 = vld [vmem:[#allocation2 + $0x200] sm:$0xff]
        %v4892 = vld [vmem:[#allocation2 + $0x208] sm:$0xff]
        %v4893 = vld [vmem:[#allocation2 + $0x210] sm:$0xff]
        %v4894 = vld [vmem:[#allocation2 + $0x218] sm:$0xff]
        %v4895 = vld [vmem:[#allocation2 + $0x220] sm:$0xff]
        %v4896 = vld [vmem:[#allocation2 + $0x228] sm:$0xf]
        %v4897 = vld [vmem:[#allocation2 + $0x230] sm:$0xf]
        %v4898 = vld [vmem:[#allocation2 + $0x238] sm:$0xf]
        %v4899 = vld [vmem:[#allocation2 + $0x240] sm:$0xff]
        %v4900 = vld [vmem:[#allocation2 + $0x248] sm:$0xff]
        %v4901 = vld [vmem:[#allocation2 + $0x250] sm:$0xff]
        %v4902 = vld [vmem:[#allocation2 + $0x258] sm:$0xff]
        %v4903 = vld [vmem:[#allocation2 + $0x260] sm:$0xff]
        %v4904 = vld [vmem:[#allocation2 + $0x268] sm:$0xff]
        %v4905 = vld [vmem:[#allocation2 + $0x270] sm:$0xf]
        %v4906 = vld [vmem:[#allocation2 + $0x278] sm:$0xf]
        %v4907 = vld [vmem:[#allocation2 + $0x280] sm:$0xf]
        %v4908 = vld [vmem:[#allocation2 + $0x288] sm:$0xff]
        %v4909 = vld [vmem:[#allocation2 + $0x290] sm:$0xff]
        %v4910 = vld [vmem:[#allocation2 + $0x298] sm:$0xff]
        %v4911 = vld [vmem:[#allocation2 + $0x2a0] sm:$0xff]
        %v4912 = vld [vmem:[#allocation2 + $0x2a8] sm:$0xff]
        %v4913 = vld [vmem:[#allocation2 + $0x2b0] sm:$0xff]
        %v4914 = vld [vmem:[#allocation2 + $0x2b8] sm:$0xf]
        %v4915 = vld [vmem:[#allocation2 + $0x2c0] sm:$0xf]
        %v4916 = vld [vmem:[#allocation2 + $0x2c8] sm:$0xf]
        %v4917 = vld [vmem:[#allocation2 + $0x2d0] sm:$0xff]
        %v4918 = vld [vmem:[#allocation2 + $0x2d8] sm:$0xff]
        %v4919 = vld [vmem:[#allocation2 + $0x2e0] sm:$0xff]
        %v4920 = vld [vmem:[#allocation2 + $0x2e8] sm:$0xff]
        %v4921 = vld [vmem:[#allocation2 + $0x2f0] sm:$0xff]
        %v4922 = vld [vmem:[#allocation2 + $0x2f8] sm:$0xff]
        %v4923 = vld [vmem:[#allocation2 + $0x300] sm:$0xf]
        %v4924 = vld [vmem:[#allocation2 + $0x308] sm:$0xf]
        %v4925 = vld [vmem:[#allocation2 + $0x310] sm:$0xf]
        %v4926 = vld [vmem:[#allocation2 + $0x318] sm:$0xff]
        %v4927 = vld [vmem:[#allocation2 + $0x320] sm:$0xff]
        %v4928 = vld [vmem:[#allocation2 + $0x328] sm:$0xff]
        %v4929 = vld [vmem:[#allocation2 + $0x330] sm:$0xff]
        %v4930 = vld [vmem:[#allocation2 + $0x338] sm:$0xff]
        %v4931 = vld [vmem:[#allocation2 + $0x340] sm:$0xff]
        %v4932 = vld [vmem:[#allocation2 + $0x348] sm:$0xf]
        %v4933 = vld [vmem:[#allocation2 + $0x350] sm:$0xf]
        %v4934 = vld [vmem:[#allocation2 + $0x358] sm:$0xf]
        %v4935 = vld [vmem:[#allocation2 + $0x360] sm:$0xff]
        %v4936 = vld [vmem:[#allocation2 + $0x368] sm:$0xff]
        %v4937 = vld [vmem:[#allocation2 + $0x370] sm:$0xff]
        %v4938 = vld [vmem:[#allocation2 + $0x378] sm:$0xff]
        %v4939 = vld [vmem:[#allocation2 + $0x380] sm:$0xff]
        %v4940 = vld [vmem:[#allocation2 + $0x388] sm:$0xff]
        %v4941 = vld [vmem:[#allocation2 + $0x390] sm:$0xf]
        %v4942 = vld [vmem:[#allocation2 + $0x398] sm:$0xf]
        %v4943 = vld [vmem:[#allocation2 + $0x3a0] sm:$0xf]
        %v4944 = vld [vmem:[#allocation2 + $0x3a8] sm:$0xff]
        %v4945 = vld [vmem:[#allocation2 + $0x3b0] sm:$0xff]
        %v4946 = vld [vmem:[#allocation2 + $0x3b8] sm:$0xff]
        %v4947 = vld [vmem:[#allocation2 + $0x3c0] sm:$0xff]
        %v4948 = vld [vmem:[#allocation2 + $0x3c8] sm:$0xff]
        %v4949 = vld [vmem:[#allocation2 + $0x3d0] sm:$0xff]
        %v4950 = vld [vmem:[#allocation2 + $0x3d8] sm:$0xf]
        %v4951 = vld [vmem:[#allocation2 + $0x3e0] sm:$0xf]
        %v4952 = vld [vmem:[#allocation2 + $0x3e8] sm:$0xf]
        %v4953 = vld [vmem:[#allocation2 + $0x3f0] sm:$0xff]
        %v4954 = vld [vmem:[#allocation2 + $0x3f8] sm:$0xff]
        %v4955 = vld [vmem:[#allocation2 + $0x400] sm:$0xff]
        %v4956 = vld [vmem:[#allocation2 + $0x408] sm:$0xff]
        %v4957 = vld [vmem:[#allocation2 + $0x410] sm:$0xff]
        %v4958 = vld [vmem:[#allocation2 + $0x418] sm:$0xff]
        %v4959 = vld [vmem:[#allocation2 + $0x420] sm:$0xf]
        %v4960 = vld [vmem:[#allocation2 + $0x428] sm:$0xf]
        %v4961 = vld [vmem:[#allocation2 + $0x430] sm:$0xf]
        %v4962 = vld [vmem:[#allocation2 + $0x438] sm:$0xff]
        %v4963 = vld [vmem:[#allocation2 + $0x440] sm:$0xff]
        %v4964 = vld [vmem:[#allocation2 + $0x448] sm:$0xff]
        %v4965 = vld [vmem:[#allocation2 + $0x450] sm:$0xff]
        %v4966 = vld [vmem:[#allocation2 + $0x458] sm:$0xff]
        %v4967 = vld [vmem:[#allocation2 + $0x460] sm:$0xff]
        %v4968 = vld [vmem:[#allocation2 + $0x468] sm:$0xf]
        %v4969 = vld [vmem:[#allocation2 + $0x470] sm:$0xf]
        %v4970 = vld [vmem:[#allocation2 + $0x478] sm:$0xf]
        %v4971 = vld [vmem:[#allocation2 + $0x480] sm:$0xff]
        %v4972 = vld [vmem:[#allocation2 + $0x488] sm:$0xff]
        %v4973 = vld [vmem:[#allocation2 + $0x490] sm:$0xff]
        %v4974 = vld [vmem:[#allocation2 + $0x498] sm:$0xff]
        %v4975 = vld [vmem:[#allocation2 + $0x4a0] sm:$0xff]
        %v4976 = vld [vmem:[#allocation2 + $0x4a8] sm:$0xff]
        %v4977 = vld [vmem:[#allocation2 + $0x4b0] sm:$0xf]
        %v4978 = vld [vmem:[#allocation2 + $0x4b8] sm:$0xf]
        %v4979 = vld [vmem:[#allocation2 + $0x4c0] sm:$0xf]
        %v4980 = vld [vmem:[#allocation2 + $0x4c8] sm:$0xff]
        %v4981 = vld [vmem:[#allocation2 + $0x4d0] sm:$0xff]
        %v4982 = vld [vmem:[#allocation2 + $0x4d8] sm:$0xff]
        %v4983 = vld [vmem:[#allocation2 + $0x4e0] sm:$0xff]
        %v4984 = vld [vmem:[#allocation2 + $0x4e8] sm:$0xff]
        %v4985 = vld [vmem:[#allocation2 + $0x4f0] sm:$0xff]
        %v4986 = vld [vmem:[#allocation2 + $0x4f8] sm:$0xf]
        %v4987 = vld [vmem:[#allocation2 + $0x500] sm:$0xf]
        %v4988 = vld [vmem:[#allocation2 + $0x508] sm:$0xf]
        %v4989 = vld [vmem:[#allocation2 + $0x510] sm:$0xff]
        %v4990 = vld [vmem:[#allocation2 + $0x518] sm:$0xff]
        %v4991 = vld [vmem:[#allocation2 + $0x520] sm:$0xff]
        %v4992 = vld [vmem:[#allocation2 + $0x528] sm:$0xff]
        %v4993 = vld [vmem:[#allocation2 + $0x530] sm:$0xff]
        %v4994 = vld [vmem:[#allocation2 + $0x538] sm:$0xff]
        %v4995 = vld [vmem:[#allocation2 + $0x540] sm:$0xf]
        %v4996 = vld [vmem:[#allocation2 + $0x548] sm:$0xf]
        %v4997 = vld [vmem:[#allocation2 + $0x550] sm:$0xf]
        %v4998 = vld [vmem:[#allocation2 + $0x558] sm:$0xff]
        %v4999 = vld [vmem:[#allocation2 + $0x560] sm:$0xff]
        %v5000 = vld [vmem:[#allocation2 + $0x568] sm:$0xff]
        %v5001 = vld [vmem:[#allocation2 + $0x570] sm:$0xff]
        %v5002 = vld [vmem:[#allocation2 + $0x578] sm:$0xff]
        %v5003 = vld [vmem:[#allocation2 + $0x580] sm:$0xff]
        %v5004 = vld [vmem:[#allocation2 + $0x588] sm:$0xf]
        %v5005 = vld [vmem:[#allocation2 + $0x590] sm:$0xf]
        %v5006 = vld [vmem:[#allocation2 + $0x598] sm:$0xf]
        %v5187 = vrot.slane %v4828, 4
        %v5188 = vrot.slane %v4831, 4
        %v5189 = vrot.slane %v4834, 4
        %v5190 = vrot.slane %v4837, 4
        %v5191 = vrot.slane %v4840, 4
        %v5192 = vrot.slane %v4843, 4
        %v5193 = vrot.slane %v4846, 4
        %v5194 = vrot.slane %v4849, 4
        %v5195 = vrot.slane %v4852, 4
        %v5196 = vrot.slane %v4855, 4
        %v5197 = vrot.slane %v4858, 4
        %v5198 = vrot.slane %v4861, 4
        %v5199 = vrot.slane %v4864, 4
        %v5200 = vrot.slane %v4867, 4
        %v5201 = vrot.slane %v4870, 4
        %v5202 = vrot.slane %v4873, 4
        %v5203 = vrot.slane %v4876, 4
        %v5204 = vrot.slane %v4879, 4
        %v5205 = vrot.slane %v4882, 4
        %v5206 = vrot.slane %v4885, 4
        %v5207 = vrot.slane %v4888, 4
        %v5208 = vrot.slane %v4891, 4
        %v5209 = vrot.slane %v4894, 4
        %v5210 = vrot.slane %v4897, 4
        %v5211 = vrot.slane %v4900, 4
        %v5212 = vrot.slane %v4903, 4
        %v5213 = vrot.slane %v4906, 4
        %v5214 = vrot.slane %v4909, 4
        %v5215 = vrot.slane %v4912, 4
        %v5216 = vrot.slane %v4915, 4
        %v5217 = vrot.slane %v4918, 4
        %v5218 = vrot.slane %v4921, 4
        %v5219 = vrot.slane %v4924, 4
        %v5220 = vrot.slane %v4927, 4
        %v5221 = vrot.slane %v4930, 4
        %v5222 = vrot.slane %v4933, 4
        %v5223 = vrot.slane %v4936, 4
        %v5224 = vrot.slane %v4939, 4
        %v5225 = vrot.slane %v4942, 4
        %v5226 = vrot.slane %v4945, 4
        %v5227 = vrot.slane %v4948, 4
        %v5228 = vrot.slane %v4951, 4
        %v5229 = vrot.slane %v4954, 4
        %v5230 = vrot.slane %v4957, 4
        %v5231 = vrot.slane %v4960, 4
        %v5232 = vrot.slane %v4963, 4
        %v5233 = vrot.slane %v4966, 4
        %v5234 = vrot.slane %v4969, 4
        %v5235 = vrot.slane %v4972, 4
        %v5236 = vrot.slane %v4975, 4
        %v5237 = vrot.slane %v4978, 4
        %v5238 = vrot.slane %v4981, 4
        %v5239 = vrot.slane %v4984, 4
        %v5240 = vrot.slane %v4987, 4
        %v5241 = vrot.slane %v4990, 4
        %v5242 = vrot.slane %v4993, 4
        %v5243 = vrot.slane %v4996, 4
        %v5244 = vrot.slane %v4999, 4
        %v5245 = vrot.slane %v5002, 4
        %v5246 = vrot.slane %v5005, 4
        %vm5247 = vcmask 1043456
        %v5248 = vsel %vm5247, %v4827, %v5187
        %v5249 = vsel %vm5247, %v5187, %v4827
        %v5250 = vrot.slane %v5249, 4
        %v5251 = vrot.slane %v4829, 4
        %v5252 = vsel %vm5247, %v4830, %v5188
        %v5253 = vsel %vm5247, %v5188, %v4830
        %v5254 = vrot.slane %v5253, 4
        %v5255 = vrot.slane %v4832, 4
        %v5256 = vsel %vm5247, %v4833, %v5189
        %v5257 = vsel %vm5247, %v4836, %v5190
        %v5258 = vsel %vm5247, %v5190, %v4836
        %v5259 = vrot.slane %v5258, 4
        %v5260 = vrot.slane %v4838, 4
        %v5261 = vsel %vm5247, %v4839, %v5191
        %v5262 = vsel %vm5247, %v5191, %v4839
        %v5263 = vrot.slane %v5262, 4
        %v5264 = vrot.slane %v4841, 4
        %v5265 = vsel %vm5247, %v4842, %v5192
        %v5266 = vsel %vm5247, %v4845, %v5193
        %v5267 = vsel %vm5247, %v5193, %v4845
        %v5268 = vrot.slane %v5267, 4
        %v5269 = vrot.slane %v4847, 4
        %v5270 = vsel %vm5247, %v4848, %v5194
        %v5271 = vsel %vm5247, %v5194, %v4848
        %v5272 = vrot.slane %v5271, 4
        %v5273 = vrot.slane %v4850, 4
        %v5274 = vsel %vm5247, %v4851, %v5195
        %v5275 = vsel %vm5247, %v4854, %v5196
        %v5276 = vsel %vm5247, %v5196, %v4854
        %v5277 = vrot.slane %v5276, 4
        %v5278 = vrot.slane %v4856, 4
        %v5279 = vsel %vm5247, %v4857, %v5197
        %v5280 = vsel %vm5247, %v5197, %v4857
        %v5281 = vrot.slane %v5280, 4
        %v5282 = vrot.slane %v4859, 4
        %v5283 = vsel %vm5247, %v4860, %v5198
        %v5284 = vsel %vm5247, %v4863, %v5199
        %v5285 = vsel %vm5247, %v5199, %v4863
        %v5286 = vrot.slane %v5285, 4
        %v5287 = vrot.slane %v4865, 4
        %v5288 = vsel %vm5247, %v4866, %v5200
        %v5289 = vsel %vm5247, %v5200, %v4866
        %v5290 = vrot.slane %v5289, 4
        %v5291 = vrot.slane %v4868, 4
        %v5292 = vsel %vm5247, %v4869, %v5201
        %v5293 = vsel %vm5247, %v4872, %v5202
        %v5294 = vsel %vm5247, %v5202, %v4872
        %v5295 = vrot.slane %v5294, 4
        %v5296 = vrot.slane %v4874, 4
        %v5297 = vsel %vm5247, %v4875, %v5203
        %v5298 = vsel %vm5247, %v5203, %v4875
        %v5299 = vrot.slane %v5298, 4
        %v5300 = vrot.slane %v4877, 4
        %v5301 = vsel %vm5247, %v4878, %v5204
        %v5302 = vsel %vm5247, %v4881, %v5205
        %v5303 = vsel %vm5247, %v5205, %v4881
        %v5304 = vrot.slane %v5303, 4
        %v5305 = vrot.slane %v4883, 4
        %v5306 = vsel %vm5247, %v4884, %v5206
        %v5307 = vsel %vm5247, %v5206, %v4884
        %v5308 = vrot.slane %v5307, 4
        %v5309 = vrot.slane %v4886, 4
        %v5310 = vsel %vm5247, %v4887, %v5207
        %v5311 = vsel %vm5247, %v4890, %v5208
        %v5312 = vsel %vm5247, %v5208, %v4890
        %v5313 = vrot.slane %v5312, 4
        %v5314 = vrot.slane %v4892, 4
        %v5315 = vsel %vm5247, %v4893, %v5209
        %v5316 = vsel %vm5247, %v5209, %v4893
        %v5317 = vrot.slane %v5316, 4
        %v5318 = vrot.slane %v4895, 4
        %v5319 = vsel %vm5247, %v4896, %v5210
        %v5320 = vsel %vm5247, %v4899, %v5211
        %v5321 = vsel %vm5247, %v5211, %v4899
        %v5322 = vrot.slane %v5321, 4
        %v5323 = vrot.slane %v4901, 4
        %v5324 = vsel %vm5247, %v4902, %v5212
        %v5325 = vsel %vm5247, %v5212, %v4902
        %v5326 = vrot.slane %v5325, 4
        %v5327 = vrot.slane %v4904, 4
        %v5328 = vsel %vm5247, %v4905, %v5213
        %v5329 = vsel %vm5247, %v4908, %v5214
        %v5330 = vsel %vm5247, %v5214, %v4908
        %v5331 = vrot.slane %v5330, 4
        %v5332 = vrot.slane %v4910, 4
        %v5333 = vsel %vm5247, %v4911, %v5215
        %v5334 = vsel %vm5247, %v5215, %v4911
        %v5335 = vrot.slane %v5334, 4
        %v5336 = vrot.slane %v4913, 4
        %v5337 = vsel %vm5247, %v4914, %v5216
        %v5338 = vsel %vm5247, %v4917, %v5217
        %v5339 = vsel %vm5247, %v5217, %v4917
        %v5340 = vrot.slane %v5339, 4
        %v5341 = vrot.slane %v4919, 4
        %v5342 = vsel %vm5247, %v4920, %v5218
        %v5343 = vsel %vm5247, %v5218, %v4920
        %v5344 = vrot.slane %v5343, 4
        %v5345 = vrot.slane %v4922, 4
        %v5346 = vsel %vm5247, %v4923, %v5219
        %v5347 = vsel %vm5247, %v4926, %v5220
        %v5348 = vsel %vm5247, %v5220, %v4926
        %v5349 = vrot.slane %v5348, 4
        %v5350 = vrot.slane %v4928, 4
        %v5351 = vsel %vm5247, %v4929, %v5221
        %v5352 = vsel %vm5247, %v5221, %v4929
        %v5353 = vrot.slane %v5352, 4
        %v5354 = vrot.slane %v4931, 4
        %v5355 = vsel %vm5247, %v4932, %v5222
        %v5356 = vsel %vm5247, %v4935, %v5223
        %v5357 = vsel %vm5247, %v5223, %v4935
        %v5358 = vrot.slane %v5357, 4
        %v5359 = vrot.slane %v4937, 4
        %v5360 = vsel %vm5247, %v4938, %v5224
        %v5361 = vsel %vm5247, %v5224, %v4938
        %v5362 = vrot.slane %v5361, 4
        %v5363 = vrot.slane %v4940, 4
        %v5364 = vsel %vm5247, %v4941, %v5225
        %v5365 = vsel %vm5247, %v4944, %v5226
        %v5366 = vsel %vm5247, %v5226, %v4944
        %v5367 = vrot.slane %v5366, 4
        %v5368 = vrot.slane %v4946, 4
        %v5369 = vsel %vm5247, %v4947, %v5227
        %v5370 = vsel %vm5247, %v5227, %v4947
        %v5371 = vrot.slane %v5370, 4
        %v5372 = vrot.slane %v4949, 4
        %v5373 = vsel %vm5247, %v4950, %v5228
        %v5374 = vsel %vm5247, %v4953, %v5229
        %v5375 = vsel %vm5247, %v5229, %v4953
        %v5376 = vrot.slane %v5375, 4
        %v5377 = vrot.slane %v4955, 4
        %v5378 = vsel %vm5247, %v4956, %v5230
        %v5379 = vsel %vm5247, %v5230, %v4956
        %v5380 = vrot.slane %v5379, 4
        %v5381 = vrot.slane %v4958, 4
        %v5382 = vsel %vm5247, %v4959, %v5231
        %v5383 = vsel %vm5247, %v4962, %v5232
        %v5384 = vsel %vm5247, %v5232, %v4962
        %v5385 = vrot.slane %v5384, 4
        %v5386 = vrot.slane %v4964, 4
        %v5387 = vsel %vm5247, %v4965, %v5233
        %v5388 = vsel %vm5247, %v5233, %v4965
        %v5389 = vrot.slane %v5388, 4
        %v5390 = vrot.slane %v4967, 4
        %v5391 = vsel %vm5247, %v4968, %v5234
        %v5392 = vsel %vm5247, %v4971, %v5235
        %v5393 = vsel %vm5247, %v5235, %v4971
        %v5394 = vrot.slane %v5393, 4
        %v5395 = vrot.slane %v4973, 4
        %v5396 = vsel %vm5247, %v4974, %v5236
        %v5397 = vsel %vm5247, %v5236, %v4974
        %v5398 = vrot.slane %v5397, 4
        %v5399 = vrot.slane %v4976, 4
        %v5400 = vsel %vm5247, %v4977, %v5237
        %v5401 = vsel %vm5247, %v4980, %v5238
        %v5402 = vsel %vm5247, %v5238, %v4980
        %v5403 = vrot.slane %v5402, 4
        %v5404 = vrot.slane %v4982, 4
        %v5405 = vsel %vm5247, %v4983, %v5239
        %v5406 = vsel %vm5247, %v5239, %v4983
        %v5407 = vrot.slane %v5406, 4
        %v5408 = vrot.slane %v4985, 4
        %v5409 = vsel %vm5247, %v4986, %v5240
        %v5410 = vsel %vm5247, %v4989, %v5241
        %v5411 = vsel %vm5247, %v5241, %v4989
        %v5412 = vrot.slane %v5411, 4
        %v5413 = vrot.slane %v4991, 4
        %v5414 = vsel %vm5247, %v4992, %v5242
        %v5415 = vsel %vm5247, %v5242, %v4992
        %v5416 = vrot.slane %v5415, 4
        %v5417 = vrot.slane %v4994, 4
        %v5418 = vsel %vm5247, %v4995, %v5243
        %v5419 = vsel %vm5247, %v4998, %v5244
        %v5420 = vsel %vm5247, %v5244, %v4998
        %v5421 = vrot.slane %v5420, 4
        %v5422 = vrot.slane %v5000, 4
        %v5423 = vsel %vm5247, %v5001, %v5245
        %v5424 = vsel %vm5247, %v5245, %v5001
        %v5425 = vrot.slane %v5424, 4
        %v5426 = vrot.slane %v5003, 4
        %v5427 = vsel %vm5247, %v5004, %v5246
        %v5428 = vld [vmem:[%s1] sm:$0xff]
        %v5429 = vld [vmem:[%s1 + $0x8] sm:$0xff]
        %v5430 = vld [vmem:[%s1 + $0x10] sm:$0xff]
        %v5431 = vld [vmem:[%s1 + $0x18] sm:$0xff]
        %v5432 = vld [vmem:[%s1 + $0x20] sm:$0xff]
        %v5433 = vld [vmem:[%s1 + $0x28] sm:$0xff]
        %v5434 = vld [vmem:[%s1 + $0x30] sm:$0xff]
        %v5435 = vld [vmem:[%s1 + $0x38] sm:$0xff]
        %v5436 = vld [vmem:[%s1 + $0x40] sm:$0xff]
        %v5437 = vld [vmem:[%s1 + $0x48] sm:$0xff]
        %v5438 = vld [vmem:[%s1 + $0x50] sm:$0xff]
        %v5439 = vld [vmem:[%s1 + $0x58] sm:$0xff]
        %v5440 = vld [vmem:[%s1 + $0x60] sm:$0xff]
        %v5441 = vld [vmem:[%s1 + $0x68] sm:$0xff]
        %v5442 = vld [vmem:[%s1 + $0x70] sm:$0xff]
        %v5443 = vld [vmem:[%s1 + $0x78] sm:$0xff]
        %v5444 = vld [vmem:[%s1 + $0x80] sm:$0xff]
        %v5445 = vld [vmem:[%s1 + $0x88] sm:$0xff]
        %v5446 = vld [vmem:[%s1 + $0x90] sm:$0xff]
        %v5447 = vld [vmem:[%s1 + $0x98] sm:$0xff]
        %v5448 = vld [vmem:[%s1 + $0xa0] sm:$0xff]
        %v5449 = vld [vmem:[%s1 + $0xa8] sm:$0xff]
        %v5450 = vld [vmem:[%s1 + $0xb0] sm:$0xff]
        %v5451 = vld [vmem:[%s1 + $0xb8] sm:$0xff]
        %v5452 = vld [vmem:[%s1 + $0xc0] sm:$0xff]
        %v5453 = vld [vmem:[%s1 + $0xc8] sm:$0xff]
        %v5454 = vld [vmem:[%s1 + $0xd0] sm:$0xff]
        %v5455 = vld [vmem:[%s1 + $0xd8] sm:$0xff]
        %v5456 = vld [vmem:[%s1 + $0xe0] sm:$0xff]
        %v5457 = vld [vmem:[%s1 + $0xe8] sm:$0xff]
        %v5458 = vld [vmem:[%s1 + $0xf0] sm:$0xff]
        %v5459 = vld [vmem:[%s1 + $0xf8] sm:$0xff]
        %v5460 = vld [vmem:[%s1 + $0x100] sm:$0xff]
        %v5461 = vld [vmem:[%s1 + $0x108] sm:$0xff]
        %v5462 = vld [vmem:[%s1 + $0x110] sm:$0xff]
        %v5463 = vld [vmem:[%s1 + $0x118] sm:$0xff]
        %v5464 = vld [vmem:[%s2] sm:$0x1]
        %v5466 = vperm.slane %v5464, 0
        %5468 = vst [vmem:[#allocation1] ss:$2 sm:$0xff] %v5248
        %s5469 = scalar_lea.vmem [#allocation1], 1
        %5470 = vst [vmem:[%s5469] ss:$2 sm:$0xff] %v5250
        %s5471 = scalar_lea.vmem [#allocation1], 16
        %5472 = vst [vmem:[%s5471] ss:$2 sm:$0xff] %v4829
        %s5473 = scalar_lea.vmem [#allocation1], 17
        %5474 = vst [vmem:[%s5473] ss:$2 sm:$0xff] %v5251
        %s5475 = scalar_lea.vmem [#allocation1], 32
        %5476 = vst [vmem:[%s5475] ss:$2 sm:$0xff] %v5252
        %s5477 = scalar_lea.vmem [#allocation1], 33
        %5478 = vst [vmem:[%s5477] ss:$2 sm:$0xff] %v5254
        %s5479 = scalar_lea.vmem [#allocation1], 48
        %5480 = vst [vmem:[%s5479] ss:$2 sm:$0xff] %v4832
        %s5481 = scalar_lea.vmem [#allocation1], 49
        %5482 = vst [vmem:[%s5481] ss:$2 sm:$0xff] %v5255
        %v5483 = vld.sshfl [vmem:[#allocation1] sm:$0xff pattern:$0x75316420]
        %v5484 = vld.sshfl [vmem:[#allocation1 + $0x8] sm:$0xff pattern:$0x75316420]
        %v5485 = vld.sshfl [vmem:[#allocation1 + $0x10] sm:$0xff pattern:$0x75316420]
        %v5486 = vld.sshfl [vmem:[#allocation1 + $0x20] sm:$0xff pattern:$0x75316420]
        %v5487 = vld.sshfl [vmem:[#allocation1 + $0x28] sm:$0xff pattern:$0x75316420]
        %v5488 = vld.sshfl [vmem:[#allocation1 + $0x30] sm:$0xff pattern:$0x75316420]
        %5489 = vst [vmem:[#allocation1] ss:$2 sm:$0xff] %v5256
        %5490 = vst [vmem:[%s5469] ss:$2 sm:$0xff] %v5257
        %5491 = vst [vmem:[%s5471] ss:$2 sm:$0xff] %v4835
        %5492 = vst [vmem:[%s5473] ss:$2 sm:$0xff] %v4838
        %5493 = vst [vmem:[%s5475] ss:$2 sm:$0xff] %v5259
        %5494 = vst [vmem:[%s5477] ss:$2 sm:$0xff] %v5261
        %5495 = vst [vmem:[%s5479] ss:$2 sm:$0xff] %v5260
        %5496 = vst [vmem:[%s5481] ss:$2 sm:$0xff] %v4841
        %v5497 = vld.sshfl [vmem:[#allocation1] sm:$0xff pattern:$0x75316420]
        %v5498 = vld.sshfl [vmem:[#allocation1 + $0x8] sm:$0xff pattern:$0x75316420]
        %v5499 = vld.sshfl [vmem:[#allocation1 + $0x10] sm:$0xff pattern:$0x75316420]
        %v5500 = vld.sshfl [vmem:[#allocation1 + $0x20] sm:$0xff pattern:$0x75316420]
        %v5501 = vld.sshfl [vmem:[#allocation1 + $0x28] sm:$0xff pattern:$0x75316420]
        %v5502 = vld.sshfl [vmem:[#allocation1 + $0x30] sm:$0xff pattern:$0x75316420]
        %5503 = vst [vmem:[#allocation1] ss:$2 sm:$0xff] %v5263
        %5504 = vst [vmem:[%s5469] ss:$2 sm:$0xff] %v5265
        %5505 = vst [vmem:[%s5471] ss:$2 sm:$0xff] %v5264
        %5506 = vst [vmem:[%s5473] ss:$2 sm:$0xff] %v4844
        %5507 = vst [vmem:[%s5475] ss:$2 sm:$0xff] %v5266
        %5508 = vst [vmem:[%s5477] ss:$2 sm:$0xff] %v5268
        %5509 = vst [vmem:[%s5479] ss:$2 sm:$0xff] %v4847
        %5510 = vst [vmem:[%s5481] ss:$2 sm:$0xff] %v5269
        %v5511 = vld.sshfl [vmem:[#allocation1] sm:$0xff pattern:$0x75316420]
        %v5512 = vld.sshfl [vmem:[#allocation1 + $0x8] sm:$0xff pattern:$0x75316420]
        %v5513 = vld.sshfl [vmem:[#allocation1 + $0x10] sm:$0xff pattern:$0x75316420]
        %v5514 = vld.sshfl [vmem:[#allocation1 + $0x20] sm:$0xff pattern:$0x75316420]
        %v5515 = vld.sshfl [vmem:[#allocation1 + $0x28] sm:$0xff pattern:$0x75316420]
        %v5516 = vld.sshfl [vmem:[#allocation1 + $0x30] sm:$0xff pattern:$0x75316420]
        %5517 = vst [vmem:[#allocation1] ss:$2 sm:$0xff] %v5270
        %5518 = vst [vmem:[%s5469] ss:$2 sm:$0xff] %v5272
        %5519 = vst [vmem:[%s5471] ss:$2 sm:$0xff] %v4850
        %5520 = vst [vmem:[%s5473] ss:$2 sm:$0xff] %v5273
        %5521 = vst [vmem:[%s5475] ss:$2 sm:$0xff] %v5274
        %5522 = vst [vmem:[%s5477] ss:$2 sm:$0xff] %v5275
        %5523 = vst [vmem:[%s5479] ss:$2 sm:$0xff] %v4853
        %5524 = vst [vmem:[%s5481] ss:$2 sm:$0xff] %v4856
        %v5525 = vld.sshfl [vmem:[#allocation1] sm:$0xff pattern:$0x75316420]
        %v5526 = vld.sshfl [vmem:[#allocation1 + $0x8] sm:$0xff pattern:$0x75316420]
        %v5527 = vld.sshfl [vmem:[#allocation1 + $0x10] sm:$0xff pattern:$0x75316420]
        %v5528 = vld.sshfl [vmem:[#allocation1 + $0x20] sm:$0xff pattern:$0x75316420]
        %v5529 = vld.sshfl [vmem:[#allocation1 + $0x28] sm:$0xff pattern:$0x75316420]
        %v5530 = vld.sshfl [vmem:[#allocation1 + $0x30] sm:$0xff pattern:$0x75316420]
        %5531 = vst [vmem:[#allocation1] ss:$2 sm:$0xff] %v5277
        %5532 = vst [vmem:[%s5469] ss:$2 sm:$0xff] %v5279
        %5533 = vst [vmem:[%s5471] ss:$2 sm:$0xff] %v5278
        %5534 = vst [vmem:[%s5473] ss:$2 sm:$0xff] %v4859
        %5535 = vst [vmem:[%s5475] ss:$2 sm:$0xff] %v5281
        %5536 = vst [vmem:[%s5477] ss:$2 sm:$0xff] %v5283
        %5537 = vst [vmem:[%s5479] ss:$2 sm:$0xff] %v5282
        %5538 = vst [vmem:[%s5481] ss:$2 sm:$0xff] %v4862
        %v5539 = vld.sshfl [vmem:[#allocation1] sm:$0xff pattern:$0x75316420]
        %v5540 = vld.sshfl [vmem:[#allocation1 + $0x8] sm:$0xff pattern:$0x75316420]
        %v5541 = vld.sshfl [vmem:[#allocation1 + $0x10] sm:$0xff pattern:$0x75316420]
        %v5542 = vld.sshfl [vmem:[#allocation1 + $0x20] sm:$0xff pattern:$0x75316420]
        %v5543 = vld.sshfl [vmem:[#allocation1 + $0x28] sm:$0xff pattern:$0x75316420]
        %v5544 = vld.sshfl [vmem:[#allocation1 + $0x30] sm:$0xff pattern:$0x75316420]
        %5545 = vst [vmem:[#allocation1] ss:$2 sm:$0xff] %v5284
        %5546 = vst [vmem:[%s5469] ss:$2 sm:$0xff] %v5286
        %5547 = vst [vmem:[%s5471] ss:$2 sm:$0xff] %v4865
        %5548 = vst [vmem:[%s5473] ss:$2 sm:$0xff] %v5287
        %5549 = vst [vmem:[%s5475] ss:$2 sm:$0xff] %v5288
        %5550 = vst [vmem:[%s5477] ss:$2 sm:$0xff] %v5290
        %5551 = vst [vmem:[%s5479] ss:$2 sm:$0xff] %v4868
        %5552 = vst [vmem:[%s5481] ss:$2 sm:$0xff] %v5291
        %v5553 = vld.sshfl [vmem:[#allocation1] sm:$0xff pattern:$0x75316420]
        %v5554 = vld.sshfl [vmem:[#allocation1 + $0x8] sm:$0xff pattern:$0x75316420]
        %v5555 = vld.sshfl [vmem:[#allocation1 + $0x10] sm:$0xff pattern:$0x75316420]
        %v5556 = vld.sshfl [vmem:[#allocation1 + $0x20] sm:$0xff pattern:$0x75316420]
        %v5557 = vld.sshfl [vmem:[#allocation1 + $0x28] sm:$0xff pattern:$0x75316420]
        %v5558 = vld.sshfl [vmem:[#allocation1 + $0x30] sm:$0xff pattern:$0x75316420]
        %5559 = vst [vmem:[#allocation1] ss:$2 sm:$0xff] %v5292
        %5560 = vst [vmem:[%s5469] ss:$2 sm:$0xff] %v5293
        %5561 = vst [vmem:[%s5471] ss:$2 sm:$0xff] %v4871
        %5562 = vst [vmem:[%s5473] ss:$2 sm:$0xff] %v4874
        %5563 = vst [vmem:[%s5475] ss:$2 sm:$0xff] %v5295
        %5564 = vst [vmem:[%s5477] ss:$2 sm:$0xff] %v5297
        %5565 = vst [vmem:[%s5479] ss:$2 sm:$0xff] %v5296
        %5566 = vst [vmem:[%s5481] ss:$2 sm:$0xff] %v4877
        %v5567 = vld.sshfl [vmem:[#allocation1] sm:$0xff pattern:$0x75316420]
        %v5568 = vld.sshfl [vmem:[#allocation1 + $0x8] sm:$0xff pattern:$0x75316420]
        %v5569 = vld.sshfl [vmem:[#allocation1 + $0x10] sm:$0xff pattern:$0x75316420]
        %v5570 = vld.sshfl [vmem:[#allocation1 + $0x20] sm:$0xff pattern:$0x75316420]
        %v5571 = vld.sshfl [vmem:[#allocation1 + $0x28] sm:$0xff pattern:$0x75316420]
        %v5572 = vld.sshfl [vmem:[#allocation1 + $0x30] sm:$0xff pattern:$0x75316420]
        %5573 = vst [vmem:[#allocation1] ss:$2 sm:$0xff] %v5299
        %5574 = vst [vmem:[%s5469] ss:$2 sm:$0xff] %v5301
        %5575 = vst [vmem:[%s5471] ss:$2 sm:$0xff] %v5300
        %5576 = vst [vmem:[%s5473] ss:$2 sm:$0xff] %v4880
        %5577 = vst [vmem:[%s5475] ss:$2 sm:$0xff] %v5302
        %5578 = vst [vmem:[%s5477] ss:$2 sm:$0xff] %v5304
        %5579 = vst [vmem:[%s5479] ss:$2 sm:$0xff] %v4883
        %5580 = vst [vmem:[%s5481] ss:$2 sm:$0xff] %v5305
        %v5581 = vld.sshfl [vmem:[#allocation1] sm:$0xff pattern:$0x75316420]
        %v5582 = vld.sshfl [vmem:[#allocation1 + $0x8] sm:$0xff pattern:$0x75316420]
        %v5583 = vld.sshfl [vmem:[#allocation1 + $0x10] sm:$0xff pattern:$0x75316420]
        %v5584 = vld.sshfl [vmem:[#allocation1 + $0x20] sm:$0xff pattern:$0x75316420]
        %v5585 = vld.sshfl [vmem:[#allocation1 + $0x28] sm:$0xff pattern:$0x75316420]
        %v5586 = vld.sshfl [vmem:[#allocation1 + $0x30] sm:$0xff pattern:$0x75316420]
        %5587 = vst [vmem:[#allocation1] ss:$2 sm:$0xff] %v5306
        %5588 = vst [vmem:[%s5469] ss:$2 sm:$0xff] %v5308
        %5589 = vst [vmem:[%s5471] ss:$2 sm:$0xff] %v4886
        %5590 = vst [vmem:[%s5473] ss:$2 sm:$0xff] %v5309
        %5591 = vst [vmem:[%s5475] ss:$2 sm:$0xff] %v5310
        %5592 = vst [vmem:[%s5477] ss:$2 sm:$0xff] %v5311
        %5593 = vst [vmem:[%s5479] ss:$2 sm:$0xff] %v4889
        %5594 = vst [vmem:[%s5481] ss:$2 sm:$0xff] %v4892
        %v5595 = vld.sshfl [vmem:[#allocation1] sm:$0xff pattern:$0x75316420]
        %v5596 = vld.sshfl [vmem:[#allocation1 + $0x8] sm:$0xff pattern:$0x75316420]
        %v5597 = vld.sshfl [vmem:[#allocation1 + $0x10] sm:$0xff pattern:$0x75316420]
        %v5598 = vld.sshfl [vmem:[#allocation1 + $0x20] sm:$0xff pattern:$0x75316420]
        %v5599 = vld.sshfl [vmem:[#allocation1 + $0x28] sm:$0xff pattern:$0x75316420]
        %v5600 = vld.sshfl [vmem:[#allocation1 + $0x30] sm:$0xff pattern:$0x75316420]
        %5601 = vst [vmem:[#allocation1] ss:$2 sm:$0xff] %v5313
        %5602 = vst [vmem:[%s5469] ss:$2 sm:$0xff] %v5315
        %5603 = vst [vmem:[%s5471] ss:$2 sm:$0xff] %v5314
        %5604 = vst [vmem:[%s5473] ss:$2 sm:$0xff] %v4895
        %5605 = vst [vmem:[%s5475] ss:$2 sm:$0xff] %v5317
        %5606 = vst [vmem:[%s5477] ss:$2 sm:$0xff] %v5319
        %5607 = vst [vmem:[%s5479] ss:$2 sm:$0xff] %v5318
        %5608 = vst [vmem:[%s5481] ss:$2 sm:$0xff] %v4898
        %v5609 = vld.sshfl [vmem:[#allocation1] sm:$0xff pattern:$0x75316420]
        %v5610 = vld.sshfl [vmem:[#allocation1 + $0x8] sm:$0xff pattern:$0x75316420]
        %v5611 = vld.sshfl [vmem:[#allocation1 + $0x10] sm:$0xff pattern:$0x75316420]
        %v5612 = vld.sshfl [vmem:[#allocation1 + $0x20] sm:$0xff pattern:$0x75316420]
        %v5613 = vld.sshfl [vmem:[#allocation1 + $0x28] sm:$0xff pattern:$0x75316420]
        %v5614 = vld.sshfl [vmem:[#allocation1 + $0x30] sm:$0xff pattern:$0x75316420]
        %5615 = vst [vmem:[#allocation1] ss:$2 sm:$0xff] %v5320
        %5616 = vst [vmem:[%s5469] ss:$2 sm:$0xff] %v5322
        %5617 = vst [vmem:[%s5471] ss:$2 sm:$0xff] %v4901
        %5618 = vst [vmem:[%s5473] ss:$2 sm:$0xff] %v5323
        %5619 = vst [vmem:[%s5475] ss:$2 sm:$0xff] %v5324
        %5620 = vst [vmem:[%s5477] ss:$2 sm:$0xff] %v5326
        %5621 = vst [vmem:[%s5479] ss:$2 sm:$0xff] %v4904
        %5622 = vst [vmem:[%s5481] ss:$2 sm:$0xff] %v5327
        %v5623 = vld.sshfl [vmem:[#allocation1] sm:$0xff pattern:$0x75316420]
        %v5624 = vld.sshfl [vmem:[#allocation1 + $0x8] sm:$0xff pattern:$0x75316420]
        %v5625 = vld.sshfl [vmem:[#allocation1 + $0x10] sm:$0xff pattern:$0x75316420]
        %v5626 = vld.sshfl [vmem:[#allocation1 + $0x20] sm:$0xff pattern:$0x75316420]
        %v5627 = vld.sshfl [vmem:[#allocation1 + $0x28] sm:$0xff pattern:$0x75316420]
        %v5628 = vld.sshfl [vmem:[#allocation1 + $0x30] sm:$0xff pattern:$0x75316420]
        %5629 = vst [vmem:[#allocation1] ss:$2 sm:$0xff] %v5328
        %5630 = vst [vmem:[%s5469] ss:$2 sm:$0xff] %v5329
        %5631 = vst [vmem:[%s5471] ss:$2 sm:$0xff] %v4907
        %5632 = vst [vmem:[%s5473] ss:$2 sm:$0xff] %v4910
        %5633 = vst [vmem:[%s5475] ss:$2 sm:$0xff] %v5331
        %5634 = vst [vmem:[%s5477] ss:$2 sm:$0xff] %v5333
        %5635 = vst [vmem:[%s5479] ss:$2 sm:$0xff] %v5332
        %5636 = vst [vmem:[%s5481] ss:$2 sm:$0xff] %v4913
        %v5637 = vld.sshfl [vmem:[#allocation1] sm:$0xff pattern:$0x75316420]
        %v5638 = vld.sshfl [vmem:[#allocation1 + $0x8] sm:$0xff pattern:$0x75316420]
        %v5639 = vld.sshfl [vmem:[#allocation1 + $0x10] sm:$0xff pattern:$0x75316420]
        %v5640 = vld.sshfl [vmem:[#allocation1 + $0x20] sm:$0xff pattern:$0x75316420]
        %v5641 = vld.sshfl [vmem:[#allocation1 + $0x28] sm:$0xff pattern:$0x75316420]
        %v5642 = vld.sshfl [vmem:[#allocation1 + $0x30] sm:$0xff pattern:$0x75316420]
        %5643 = vst [vmem:[#allocation1] ss:$2 sm:$0xff] %v5335
        %5644 = vst [vmem:[%s5469] ss:$2 sm:$0xff] %v5337
        %5645 = vst [vmem:[%s5471] ss:$2 sm:$0xff] %v5336
        %5646 = vst [vmem:[%s5473] ss:$2 sm:$0xff] %v4916
        %5647 = vst [vmem:[%s5475] ss:$2 sm:$0xff] %v5338
        %5648 = vst [vmem:[%s5477] ss:$2 sm:$0xff] %v5340
        %5649 = vst [vmem:[%s5479] ss:$2 sm:$0xff] %v4919
        %5650 = vst [vmem:[%s5481] ss:$2 sm:$0xff] %v5341
        %v5651 = vld.sshfl [vmem:[#allocation1] sm:$0xff pattern:$0x75316420]
        %v5652 = vld.sshfl [vmem:[#allocation1 + $0x8] sm:$0xff pattern:$0x75316420]
        %v5653 = vld.sshfl [vmem:[#allocation1 + $0x10] sm:$0xff pattern:$0x75316420]
        %v5654 = vld.sshfl [vmem:[#allocation1 + $0x20] sm:$0xff pattern:$0x75316420]
        %v5655 = vld.sshfl [vmem:[#allocation1 + $0x28] sm:$0xff pattern:$0x75316420]
        %v5656 = vld.sshfl [vmem:[#allocation1 + $0x30] sm:$0xff pattern:$0x75316420]
        %5657 = vst [vmem:[#allocation1] ss:$2 sm:$0xff] %v5342
        %5658 = vst [vmem:[%s5469] ss:$2 sm:$0xff] %v5344
        %5659 = vst [vmem:[%s5471] ss:$2 sm:$0xff] %v4922
        %5660 = vst [vmem:[%s5473] ss:$2 sm:$0xff] %v5345
        %5661 = vst [vmem:[%s5475] ss:$2 sm:$0xff] %v5346
        %5662 = vst [vmem:[%s5477] ss:$2 sm:$0xff] %v5347
        %5663 = vst [vmem:[%s5479] ss:$2 sm:$0xff] %v4925
        %5664 = vst [vmem:[%s5481] ss:$2 sm:$0xff] %v4928
        %v5665 = vld.sshfl [vmem:[#allocation1] sm:$0xff pattern:$0x75316420]
        %v5666 = vld.sshfl [vmem:[#allocation1 + $0x8] sm:$0xff pattern:$0x75316420]
        %v5667 = vld.sshfl [vmem:[#allocation1 + $0x10] sm:$0xff pattern:$0x75316420]
        %v5668 = vld.sshfl [vmem:[#allocation1 + $0x20] sm:$0xff pattern:$0x75316420]
        %v5669 = vld.sshfl [vmem:[#allocation1 + $0x28] sm:$0xff pattern:$0x75316420]
        %v5670 = vld.sshfl [vmem:[#allocation1 + $0x30] sm:$0xff pattern:$0x75316420]
        %5671 = vst [vmem:[#allocation1] ss:$2 sm:$0xff] %v5349
        %5672 = vst [vmem:[%s5469] ss:$2 sm:$0xff] %v5351
        %5673 = vst [vmem:[%s5471] ss:$2 sm:$0xff] %v5350
        %5674 = vst [vmem:[%s5473] ss:$2 sm:$0xff] %v4931
        %5675 = vst [vmem:[%s5475] ss:$2 sm:$0xff] %v5353
        %5676 = vst [vmem:[%s5477] ss:$2 sm:$0xff] %v5355
        %5677 = vst [vmem:[%s5479] ss:$2 sm:$0xff] %v5354
        %5678 = vst [vmem:[%s5481] ss:$2 sm:$0xff] %v4934
        %v5679 = vld.sshfl [vmem:[#allocation1] sm:$0xff pattern:$0x75316420]
        %v5680 = vld.sshfl [vmem:[#allocation1 + $0x8] sm:$0xff pattern:$0x75316420]
        %v5681 = vld.sshfl [vmem:[#allocation1 + $0x10] sm:$0xff pattern:$0x75316420]
        %v5682 = vld.sshfl [vmem:[#allocation1 + $0x20] sm:$0xff pattern:$0x75316420]
        %v5683 = vld.sshfl [vmem:[#allocation1 + $0x28] sm:$0xff pattern:$0x75316420]
        %v5684 = vld.sshfl [vmem:[#allocation1 + $0x30] sm:$0xff pattern:$0x75316420]
        %5685 = vst [vmem:[#allocation1] ss:$2 sm:$0xff] %v5356
        %5686 = vst [vmem:[%s5469] ss:$2 sm:$0xff] %v5358
        %5687 = vst [vmem:[%s5471] ss:$2 sm:$0xff] %v4937
        %5688 = vst [vmem:[%s5473] ss:$2 sm:$0xff] %v5359
        %5689 = vst [vmem:[%s5475] ss:$2 sm:$0xff] %v5360
        %5690 = vst [vmem:[%s5477] ss:$2 sm:$0xff] %v5362
        %5691 = vst [vmem:[%s5479] ss:$2 sm:$0xff] %v4940
        %5692 = vst [vmem:[%s5481] ss:$2 sm:$0xff] %v5363
        %v5693 = vld.sshfl [vmem:[#allocation1] sm:$0xff pattern:$0x75316420]
        %v5694 = vld.sshfl [vmem:[#allocation1 + $0x8] sm:$0xff pattern:$0x75316420]
        %v5695 = vld.sshfl [vmem:[#allocation1 + $0x10] sm:$0xff pattern:$0x75316420]
        %v5696 = vld.sshfl [vmem:[#allocation1 + $0x20] sm:$0xff pattern:$0x75316420]
        %v5697 = vld.sshfl [vmem:[#allocation1 + $0x28] sm:$0xff pattern:$0x75316420]
        %v5698 = vld.sshfl [vmem:[#allocation1 + $0x30] sm:$0xff pattern:$0x75316420]
        %5699 = vst [vmem:[#allocation1] ss:$2 sm:$0xff] %v5364
        %5700 = vst [vmem:[%s5469] ss:$2 sm:$0xff] %v5365
        %5701 = vst [vmem:[%s5471] ss:$2 sm:$0xff] %v4943
        %5702 = vst [vmem:[%s5473] ss:$2 sm:$0xff] %v4946
        %5703 = vst [vmem:[%s5475] ss:$2 sm:$0xff] %v5367
        %5704 = vst [vmem:[%s5477] ss:$2 sm:$0xff] %v5369
        %5705 = vst [vmem:[%s5479] ss:$2 sm:$0xff] %v5368
        %5706 = vst [vmem:[%s5481] ss:$2 sm:$0xff] %v4949
        %v5707 = vld.sshfl [vmem:[#allocation1] sm:$0xff pattern:$0x75316420]
        %v5708 = vld.sshfl [vmem:[#allocation1 + $0x8] sm:$0xff pattern:$0x75316420]
        %v5709 = vld.sshfl [vmem:[#allocation1 + $0x10] sm:$0xff pattern:$0x75316420]
        %v5710 = vld.sshfl [vmem:[#allocation1 + $0x20] sm:$0xff pattern:$0x75316420]
        %v5711 = vld.sshfl [vmem:[#allocation1 + $0x28] sm:$0xff pattern:$0x75316420]
        %v5712 = vld.sshfl [vmem:[#allocation1 + $0x30] sm:$0xff pattern:$0x75316420]
        %5713 = vst [vmem:[#allocation1] ss:$2 sm:$0xff] %v5371
        %5714 = vst [vmem:[%s5469] ss:$2 sm:$0xff] %v5373
        %5715 = vst [vmem:[%s5471] ss:$2 sm:$0xff] %v5372
        %5716 = vst [vmem:[%s5473] ss:$2 sm:$0xff] %v4952
        %5717 = vst [vmem:[%s5475] ss:$2 sm:$0xff] %v5374
        %5718 = vst [vmem:[%s5477] ss:$2 sm:$0xff] %v5376
        %5719 = vst [vmem:[%s5479] ss:$2 sm:$0xff] %v4955
        %5720 = vst [vmem:[%s5481] ss:$2 sm:$0xff] %v5377
        %v5721 = vld.sshfl [vmem:[#allocation1] sm:$0xff pattern:$0x75316420]
        %v5722 = vld.sshfl [vmem:[#allocation1 + $0x8] sm:$0xff pattern:$0x75316420]
        %v5723 = vld.sshfl [vmem:[#allocation1 + $0x10] sm:$0xff pattern:$0x75316420]
        %v5724 = vld.sshfl [vmem:[#allocation1 + $0x20] sm:$0xff pattern:$0x75316420]
        %v5725 = vld.sshfl [vmem:[#allocation1 + $0x28] sm:$0xff pattern:$0x75316420]
        %v5726 = vld.sshfl [vmem:[#allocation1 + $0x30] sm:$0xff pattern:$0x75316420]
        %5727 = vst [vmem:[#allocation1] ss:$2 sm:$0xff] %v5378
        %5728 = vst [vmem:[%s5469] ss:$2 sm:$0xff] %v5380
        %5729 = vst [vmem:[%s5471] ss:$2 sm:$0xff] %v4958
        %5730 = vst [vmem:[%s5473] ss:$2 sm:$0xff] %v5381
        %5731 = vst [vmem:[%s5475] ss:$2 sm:$0xff] %v5382
        %5732 = vst [vmem:[%s5477] ss:$2 sm:$0xff] %v5383
        %5733 = vst [vmem:[%s5479] ss:$2 sm:$0xff] %v4961
        %5734 = vst [vmem:[%s5481] ss:$2 sm:$0xff] %v4964
        %v5735 = vld.sshfl [vmem:[#allocation1] sm:$0xff pattern:$0x75316420]
        %v5736 = vld.sshfl [vmem:[#allocation1 + $0x8] sm:$0xff pattern:$0x75316420]
        %v5737 = vld.sshfl [vmem:[#allocation1 + $0x10] sm:$0xff pattern:$0x75316420]
        %v5738 = vld.sshfl [vmem:[#allocation1 + $0x20] sm:$0xff pattern:$0x75316420]
        %v5739 = vld.sshfl [vmem:[#allocation1 + $0x28] sm:$0xff pattern:$0x75316420]
        %v5740 = vld.sshfl [vmem:[#allocation1 + $0x30] sm:$0xff pattern:$0x75316420]
        %5741 = vst [vmem:[#allocation1] ss:$2 sm:$0xff] %v5385
        %5742 = vst [vmem:[%s5469] ss:$2 sm:$0xff] %v5387
        %5743 = vst [vmem:[%s5471] ss:$2 sm:$0xff] %v5386
        %5744 = vst [vmem:[%s5473] ss:$2 sm:$0xff] %v4967
        %5745 = vst [vmem:[%s5475] ss:$2 sm:$0xff] %v5389
        %5746 = vst [vmem:[%s5477] ss:$2 sm:$0xff] %v5391
        %5747 = vst [vmem:[%s5479] ss:$2 sm:$0xff] %v5390
        %5748 = vst [vmem:[%s5481] ss:$2 sm:$0xff] %v4970
        %v5749 = vld.sshfl [vmem:[#allocation1] sm:$0xff pattern:$0x75316420]
        %v5750 = vld.sshfl [vmem:[#allocation1 + $0x8] sm:$0xff pattern:$0x75316420]
        %v5751 = vld.sshfl [vmem:[#allocation1 + $0x10] sm:$0xff pattern:$0x75316420]
        %v5752 = vld.sshfl [vmem:[#allocation1 + $0x20] sm:$0xff pattern:$0x75316420]
        %v5753 = vld.sshfl [vmem:[#allocation1 + $0x28] sm:$0xff pattern:$0x75316420]
        %v5754 = vld.sshfl [vmem:[#allocation1 + $0x30] sm:$0xff pattern:$0x75316420]
        %5755 = vst [vmem:[#allocation1] ss:$2 sm:$0xff] %v5392
        %5756 = vst [vmem:[%s5469] ss:$2 sm:$0xff] %v5394
        %5757 = vst [vmem:[%s5471] ss:$2 sm:$0xff] %v4973
        %5758 = vst [vmem:[%s5473] ss:$2 sm:$0xff] %v5395
        %5759 = vst [vmem:[%s5475] ss:$2 sm:$0xff] %v5396
        %5760 = vst [vmem:[%s5477] ss:$2 sm:$0xff] %v5398
        %5761 = vst [vmem:[%s5479] ss:$2 sm:$0xff] %v4976
        %5762 = vst [vmem:[%s5481] ss:$2 sm:$0xff] %v5399
        %v5763 = vld.sshfl [vmem:[#allocation1] sm:$0xff pattern:$0x75316420]
        %v5764 = vld.sshfl [vmem:[#allocation1 + $0x8] sm:$0xff pattern:$0x75316420]
        %v5765 = vld.sshfl [vmem:[#allocation1 + $0x10] sm:$0xff pattern:$0x75316420]
        %v5766 = vld.sshfl [vmem:[#allocation1 + $0x20] sm:$0xff pattern:$0x75316420]
        %v5767 = vld.sshfl [vmem:[#allocation1 + $0x28] sm:$0xff pattern:$0x75316420]
        %v5768 = vld.sshfl [vmem:[#allocation1 + $0x30] sm:$0xff pattern:$0x75316420]
        %5769 = vst [vmem:[#allocation1] ss:$2 sm:$0xff] %v5400
        %5770 = vst [vmem:[%s5469] ss:$2 sm:$0xff] %v5401
        %5771 = vst [vmem:[%s5471] ss:$2 sm:$0xff] %v4979
        %5772 = vst [vmem:[%s5473] ss:$2 sm:$0xff] %v4982
        %5773 = vst [vmem:[%s5475] ss:$2 sm:$0xff] %v5403
        %5774 = vst [vmem:[%s5477] ss:$2 sm:$0xff] %v5405
        %5775 = vst [vmem:[%s5479] ss:$2 sm:$0xff] %v5404
        %5776 = vst [vmem:[%s5481] ss:$2 sm:$0xff] %v4985
        %v5777 = vld.sshfl [vmem:[#allocation1] sm:$0xff pattern:$0x75316420]
        %v5778 = vld.sshfl [vmem:[#allocation1 + $0x8] sm:$0xff pattern:$0x75316420]
        %v5779 = vld.sshfl [vmem:[#allocation1 + $0x10] sm:$0xff pattern:$0x75316420]
        %v5780 = vld.sshfl [vmem:[#allocation1 + $0x20] sm:$0xff pattern:$0x75316420]
        %v5781 = vld.sshfl [vmem:[#allocation1 + $0x28] sm:$0xff pattern:$0x75316420]
        %v5782 = vld.sshfl [vmem:[#allocation1 + $0x30] sm:$0xff pattern:$0x75316420]
        %5783 = vst [vmem:[#allocation1] ss:$2 sm:$0xff] %v5407
        %5784 = vst [vmem:[%s5469] ss:$2 sm:$0xff] %v5409
        %5785 = vst [vmem:[%s5471] ss:$2 sm:$0xff] %v5408
        %5786 = vst [vmem:[%s5473] ss:$2 sm:$0xff] %v4988
        %5787 = vst [vmem:[%s5475] ss:$2 sm:$0xff] %v5410
        %5788 = vst [vmem:[%s5477] ss:$2 sm:$0xff] %v5412
        %5789 = vst [vmem:[%s5479] ss:$2 sm:$0xff] %v4991
        %5790 = vst [vmem:[%s5481] ss:$2 sm:$0xff] %v5413
        %v5791 = vld.sshfl [vmem:[#allocation1] sm:$0xff pattern:$0x75316420]
        %v5792 = vld.sshfl [vmem:[#allocation1 + $0x8] sm:$0xff pattern:$0x75316420]
        %v5793 = vld.sshfl [vmem:[#allocation1 + $0x10] sm:$0xff pattern:$0x75316420]
        %v5794 = vld.sshfl [vmem:[#allocation1 + $0x20] sm:$0xff pattern:$0x75316420]
        %v5795 = vld.sshfl [vmem:[#allocation1 + $0x28] sm:$0xff pattern:$0x75316420]
        %v5796 = vld.sshfl [vmem:[#allocation1 + $0x30] sm:$0xff pattern:$0x75316420]
        %5797 = vst [vmem:[#allocation1] ss:$2 sm:$0xff] %v5414
        %5798 = vst [vmem:[%s5469] ss:$2 sm:$0xff] %v5416
        %5799 = vst [vmem:[%s5471] ss:$2 sm:$0xff] %v4994
        %5800 = vst [vmem:[%s5473] ss:$2 sm:$0xff] %v5417
        %5801 = vst [vmem:[%s5475] ss:$2 sm:$0xff] %v5418
        %5802 = vst [vmem:[%s5477] ss:$2 sm:$0xff] %v5419
        %5803 = vst [vmem:[%s5479] ss:$2 sm:$0xff] %v4997
        %5804 = vst [vmem:[%s5481] ss:$2 sm:$0xff] %v5000
        %v5805 = vld.sshfl [vmem:[#allocation1] sm:$0xff pattern:$0x75316420]
        %v5806 = vld.sshfl [vmem:[#allocation1 + $0x8] sm:$0xff pattern:$0x75316420]
        %v5807 = vld.sshfl [vmem:[#allocation1 + $0x10] sm:$0xff pattern:$0x75316420]
        %v5808 = vld.sshfl [vmem:[#allocation1 + $0x20] sm:$0xff pattern:$0x75316420]
        %v5809 = vld.sshfl [vmem:[#allocation1 + $0x28] sm:$0xff pattern:$0x75316420]
        %v5810 = vld.sshfl [vmem:[#allocation1 + $0x30] sm:$0xff pattern:$0x75316420]
        %5811 = vst [vmem:[#allocation1] ss:$2 sm:$0xff] %v5421
        %5812 = vst [vmem:[%s5469] ss:$2 sm:$0xff] %v5423
        %5813 = vst [vmem:[%s5471] ss:$2 sm:$0xff] %v5422
        %5814 = vst [vmem:[%s5473] ss:$2 sm:$0xff] %v5003
        %5815 = vst [vmem:[%s5475] ss:$2 sm:$0xff] %v5425
        %5816 = vst [vmem:[%s5477] ss:$2 sm:$0xff] %v5427
        %5817 = vst [vmem:[%s5479] ss:$2 sm:$0xff] %v5426
        %5818 = vst [vmem:[%s5481] ss:$2 sm:$0xff] %v5006
        %v5819 = vld.sshfl [vmem:[#allocation1] sm:$0xff pattern:$0x75316420]
        %v5820 = vld.sshfl [vmem:[#allocation1 + $0x8] sm:$0xff pattern:$0x75316420]
        %v5821 = vld.sshfl [vmem:[#allocation1 + $0x10] sm:$0xff pattern:$0x75316420]
        %v5822 = vld.sshfl [vmem:[#allocation1 + $0x20] sm:$0xff pattern:$0x75316420]
        %v5823 = vld.sshfl [vmem:[#allocation1 + $0x28] sm:$0xff pattern:$0x75316420]
        %v5824 = vld.sshfl [vmem:[#allocation1 + $0x30] sm:$0xff pattern:$0x75316420]
        %v5925 = vsel %vm171, %v5485, 0
        %v5927 = vsel %vm171, %v5488, 0
        %v5929 = vsel %vm171, %v5499, 0
        %v5931 = vsel %vm171, %v5502, 0
        %v5933 = vsel %vm171, %v5513, 0
        %v5935 = vsel %vm171, %v5516, 0
        %v5937 = vsel %vm171, %v5527, 0
        %v5939 = vsel %vm171, %v5530, 0
        %v5941 = vsel %vm171, %v5541, 0
        %v5943 = vsel %vm171, %v5544, 0
        %v5945 = vsel %vm171, %v5555, 0
        %v5947 = vsel %vm171, %v5558, 0
        %v5949 = vsel %vm171, %v5569, 0
        %v5951 = vsel %vm171, %v5572, 0
        %v5953 = vsel %vm171, %v5583, 0
        %v5955 = vsel %vm171, %v5586, 0
        %v5957 = vsel %vm171, %v5597, 0
        %v5959 = vsel %vm171, %v5600, 0
        %v5961 = vsel %vm171, %v5611, 0
        %v5963 = vsel %vm171, %v5614, 0
        %v5965 = vsel %vm171, %v5625, 0
        %v5967 = vsel %vm171, %v5628, 0
        %v5969 = vsel %vm171, %v5639, 0
        %v5971 = vsel %vm171, %v5642, 0
        %v5973 = vsel %vm171, %v5653, 0
        %v5975 = vsel %vm171, %v5656, 0
        %v5977 = vsel %vm171, %v5667, 0
        %v5979 = vsel %vm171, %v5670, 0
        %v5981 = vsel %vm171, %v5681, 0
        %v5983 = vsel %vm171, %v5684, 0
        %v5985 = vsel %vm171, %v5695, 0
        %v5987 = vsel %vm171, %v5698, 0
        %v5989 = vsel %vm171, %v5709, 0
        %v5991 = vsel %vm171, %v5712, 0
        %v5993 = vsel %vm171, %v5723, 0
        %v5995 = vsel %vm171, %v5726, 0
        %v5997 = vsel %vm171, %v5737, 0
        %v5999 = vsel %vm171, %v5740, 0
        %v6001 = vsel %vm171, %v5751, 0
        %v6003 = vsel %vm171, %v5754, 0
        %v6005 = vsel %vm171, %v5765, 0
        %v6007 = vsel %vm171, %v5768, 0
        %v6009 = vsel %vm171, %v5779, 0
        %v6011 = vsel %vm171, %v5782, 0
        %v6013 = vsel %vm171, %v5793, 0
        %v6015 = vsel %vm171, %v5796, 0
        %v6017 = vsel %vm171, %v5807, 0
        %v6019 = vsel %vm171, %v5810, 0
        %v6021 = vsel %vm171, %v5821, 0
        %v6023 = vsel %vm171, %v5824, 0
        %6025 = vmatpush.msra.mxu0 %v5443
        %6026 = vmatpush.msra.mxu0 %v5442
        %6027 = vmatpush.msra.mxu0 %v5441
        %6028 = vmatpush.msra.mxu0 %v5440
        %6029 = vmatpush.msra.mxu0 %v5439
        %6030 = vmatpush.msra.mxu0 %v5438
        %6031 = vmatpush.msra.mxu0 %v5437
        %6032 = vmatpush.msra.mxu0 %v5436
        %6033 = vmatpush.msra.mxu0 %v5435
        %6034 = vmatpush.msra.mxu0 %v5434
        %6035 = vmatpush.msra.mxu0 %v5433
        %6036 = vmatpush.msra.mxu0 %v5432
        %6037 = vmatpush.msra.mxu0 %v5431
        %6038 = vmatpush.msra.mxu0 %v5430
        %6039 = vmatpush.msra.mxu0 %v5429
        %6040 = vmatpush.msra.mxu0 %v5428
        %6041 = vmatmul.f32.gmra.mxu0 %v5483
        %v6042 = vpop.f32.mrf.mxu0
        %v6043 = vadd.f32 %v5466, %v6042
        %6044 = vmatmul.f32.gmra.mxu0 %v5486
        %v6045 = vpop.f32.mrf.mxu0
        %v6046 = vadd.f32 %v5466, %v6045
        %6047 = vmatmul.f32.gmra.mxu0 %v5497
        %v6048 = vpop.f32.mrf.mxu0
        %v6049 = vadd.f32 %v5466, %v6048
        %6050 = vmatmul.f32.gmra.mxu0 %v5500
        %v6051 = vpop.f32.mrf.mxu0
        %v6052 = vadd.f32 %v5466, %v6051
        %6053 = vmatmul.f32.gmra.mxu0 %v5511
        %v6054 = vpop.f32.mrf.mxu0
        %v6055 = vadd.f32 %v5466, %v6054
        %6056 = vmatmul.f32.gmra.mxu0 %v5514
        %v6057 = vpop.f32.mrf.mxu0
        %v6058 = vadd.f32 %v5466, %v6057
        %6059 = vmatmul.f32.gmra.mxu0 %v5525
        %v6060 = vpop.f32.mrf.mxu0
        %v6061 = vadd.f32 %v5466, %v6060
        %6062 = vmatmul.f32.gmra.mxu0 %v5528
        %v6063 = vpop.f32.mrf.mxu0
        %v6064 = vadd.f32 %v5466, %v6063
        %6065 = vmatmul.f32.gmra.mxu0 %v5539
        %v6066 = vpop.f32.mrf.mxu0
        %v6067 = vadd.f32 %v5466, %v6066
        %6068 = vmatmul.f32.gmra.mxu0 %v5542
        %v6069 = vpop.f32.mrf.mxu0
        %v6070 = vadd.f32 %v5466, %v6069
        %6071 = vmatmul.f32.gmra.mxu0 %v5553
        %v6072 = vpop.f32.mrf.mxu0
        %v6073 = vadd.f32 %v5466, %v6072
        %6074 = vmatmul.f32.gmra.mxu0 %v5556
        %v6075 = vpop.f32.mrf.mxu0
        %v6076 = vadd.f32 %v5466, %v6075
        %6077 = vmatmul.f32.gmra.mxu0 %v5567
        %v6078 = vpop.f32.mrf.mxu0
        %v6079 = vadd.f32 %v5466, %v6078
        %6080 = vmatmul.f32.gmra.mxu0 %v5570
        %v6081 = vpop.f32.mrf.mxu0
        %v6082 = vadd.f32 %v5466, %v6081
        %6083 = vmatmul.f32.gmra.mxu0 %v5581
        %v6084 = vpop.f32.mrf.mxu0
        %v6085 = vadd.f32 %v5466, %v6084
        %6086 = vmatmul.f32.gmra.mxu0 %v5584
        %v6087 = vpop.f32.mrf.mxu0
        %v6088 = vadd.f32 %v5466, %v6087
        %6089 = vmatmul.f32.gmra.mxu0 %v5595
        %v6090 = vpop.f32.mrf.mxu0
        %v6091 = vadd.f32 %v5466, %v6090
        %6092 = vmatmul.f32.gmra.mxu0 %v5598
        %v6093 = vpop.f32.mrf.mxu0
        %v6094 = vadd.f32 %v5466, %v6093
        %6095 = vmatmul.f32.gmra.mxu0 %v5609
        %v6096 = vpop.f32.mrf.mxu0
        %v6097 = vadd.f32 %v5466, %v6096
        %6098 = vmatmul.f32.gmra.mxu0 %v5612
        %v6099 = vpop.f32.mrf.mxu0
        %v6100 = vadd.f32 %v5466, %v6099
        %6101 = vmatmul.f32.gmra.mxu0 %v5623
        %v6102 = vpop.f32.mrf.mxu0
        %v6103 = vadd.f32 %v5466, %v6102
        %6104 = vmatmul.f32.gmra.mxu0 %v5626
        %v6105 = vpop.f32.mrf.mxu0
        %v6106 = vadd.f32 %v5466, %v6105
        %6107 = vmatmul.f32.gmra.mxu0 %v5637
        %v6108 = vpop.f32.mrf.mxu0
        %v6109 = vadd.f32 %v5466, %v6108
        %6110 = vmatmul.f32.gmra.mxu0 %v5640
        %v6111 = vpop.f32.mrf.mxu0
        %v6112 = vadd.f32 %v5466, %v6111
        %6113 = vmatmul.f32.gmra.mxu0 %v5651
        %v6114 = vpop.f32.mrf.mxu0
        %v6115 = vadd.f32 %v5466, %v6114
        %6116 = vmatmul.f32.gmra.mxu0 %v5654
        %v6117 = vpop.f32.mrf.mxu0
        %v6118 = vadd.f32 %v5466, %v6117
        %6119 = vmatmul.f32.gmra.mxu0 %v5665
        %v6120 = vpop.f32.mrf.mxu0
        %v6121 = vadd.f32 %v5466, %v6120
        %6122 = vmatmul.f32.gmra.mxu0 %v5668
        %v6123 = vpop.f32.mrf.mxu0
        %v6124 = vadd.f32 %v5466, %v6123
        %6125 = vmatmul.f32.gmra.mxu0 %v5679
        %v6126 = vpop.f32.mrf.mxu0
        %v6127 = vadd.f32 %v5466, %v6126
        %6128 = vmatmul.f32.gmra.mxu0 %v5682
        %v6129 = vpop.f32.mrf.mxu0
        %v6130 = vadd.f32 %v5466, %v6129
        %6131 = vmatmul.f32.gmra.mxu0 %v5693
        %v6132 = vpop.f32.mrf.mxu0
        %v6133 = vadd.f32 %v5466, %v6132
        %6134 = vmatmul.f32.gmra.mxu0 %v5696
        %v6135 = vpop.f32.mrf.mxu0
        %v6136 = vadd.f32 %v5466, %v6135
        %6137 = vmatmul.f32.gmra.mxu0 %v5707
        %v6138 = vpop.f32.mrf.mxu0
        %v6139 = vadd.f32 %v5466, %v6138
        %6140 = vmatmul.f32.gmra.mxu0 %v5710
        %v6141 = vpop.f32.mrf.mxu0
        %v6142 = vadd.f32 %v5466, %v6141
        %6143 = vmatmul.f32.gmra.mxu0 %v5721
        %v6144 = vpop.f32.mrf.mxu0
        %v6145 = vadd.f32 %v5466, %v6144
        %6146 = vmatmul.f32.gmra.mxu0 %v5724
        %v6147 = vpop.f32.mrf.mxu0
        %v6148 = vadd.f32 %v5466, %v6147
        %6149 = vmatmul.f32.gmra.mxu0 %v5735
        %v6150 = vpop.f32.mrf.mxu0
        %v6151 = vadd.f32 %v5466, %v6150
        %6152 = vmatmul.f32.gmra.mxu0 %v5738
        %v6153 = vpop.f32.mrf.mxu0
        %v6154 = vadd.f32 %v5466, %v6153
        %6155 = vmatmul.f32.gmra.mxu0 %v5749
        %v6156 = vpop.f32.mrf.mxu0
        %v6157 = vadd.f32 %v5466, %v6156
        %6158 = vmatmul.f32.gmra.mxu0 %v5752
        %v6159 = vpop.f32.mrf.mxu0
        %v6160 = vadd.f32 %v5466, %v6159
        %6161 = vmatmul.f32.gmra.mxu0 %v5763
        %v6162 = vpop.f32.mrf.mxu0
        %v6163 = vadd.f32 %v5466, %v6162
        %6164 = vmatmul.f32.gmra.mxu0 %v5766
        %v6165 = vpop.f32.mrf.mxu0
        %v6166 = vadd.f32 %v5466, %v6165
        %6167 = vmatmul.f32.gmra.mxu0 %v5777
        %v6168 = vpop.f32.mrf.mxu0
        %v6169 = vadd.f32 %v5466, %v6168
        %6170 = vmatmul.f32.gmra.mxu0 %v5780
        %v6171 = vpop.f32.mrf.mxu0
        %v6172 = vadd.f32 %v5466, %v6171
        %6173 = vmatmul.f32.gmra.mxu0 %v5791
        %v6174 = vpop.f32.mrf.mxu0
        %v6175 = vadd.f32 %v5466, %v6174
        %6176 = vmatmul.f32.gmra.mxu0 %v5794
        %v6177 = vpop.f32.mrf.mxu0
        %v6178 = vadd.f32 %v5466, %v6177
        %6179 = vmatmul.f32.gmra.mxu0 %v5805
        %v6180 = vpop.f32.mrf.mxu0
        %v6181 = vadd.f32 %v5466, %v6180
        %6182 = vmatmul.f32.gmra.mxu0 %v5808
        %v6183 = vpop.f32.mrf.mxu0
        %v6184 = vadd.f32 %v5466, %v6183
        %6185 = vmatmul.f32.gmra.mxu0 %v5819
        %v6186 = vpop.f32.mrf.mxu0
        %v6187 = vadd.f32 %v5466, %v6186
        %6188 = vmatmul.f32.gmra.mxu0 %v5822
        %v6189 = vpop.f32.mrf.mxu0
        %v6190 = vadd.f32 %v5466, %v6189
        %6191 = vdwg.mxu0
        %6192 = vmatpush.msra.mxu0 %v5459
        %6193 = vmatpush.msra.mxu0 %v5458
        %6194 = vmatpush.msra.mxu0 %v5457
        %6195 = vmatpush.msra.mxu0 %v5456
        %6196 = vmatpush.msra.mxu0 %v5455
        %6197 = vmatpush.msra.mxu0 %v5454
        %6198 = vmatpush.msra.mxu0 %v5453
        %6199 = vmatpush.msra.mxu0 %v5452
        %6200 = vmatpush.msra.mxu0 %v5451
        %6201 = vmatpush.msra.mxu0 %v5450
        %6202 = vmatpush.msra.mxu0 %v5449
        %6203 = vmatpush.msra.mxu0 %v5448
        %6204 = vmatpush.msra.mxu0 %v5447
        %6205 = vmatpush.msra.mxu0 %v5446
        %6206 = vmatpush.msra.mxu0 %v5445
        %6207 = vmatpush.msra.mxu0 %v5444
        %6208 = vmatmul.f32.gmra.mxu0 %v5484
        %v6209 = vpop.f32.mrf.mxu0
        %v6210 = vadd.f32 %v6043, %v6209
        %6211 = vmatmul.f32.gmra.mxu0 %v5487
        %v6212 = vpop.f32.mrf.mxu0
        %v6213 = vadd.f32 %v6046, %v6212
        %6214 = vmatmul.f32.gmra.mxu0 %v5498
        %v6215 = vpop.f32.mrf.mxu0
        %v6216 = vadd.f32 %v6049, %v6215
        %6217 = vmatmul.f32.gmra.mxu0 %v5501
        %v6218 = vpop.f32.mrf.mxu0
        %v6219 = vadd.f32 %v6052, %v6218
        %6220 = vmatmul.f32.gmra.mxu0 %v5512
        %v6221 = vpop.f32.mrf.mxu0
        %v6222 = vadd.f32 %v6055, %v6221
        %6223 = vmatmul.f32.gmra.mxu0 %v5515
        %v6224 = vpop.f32.mrf.mxu0
        %v6225 = vadd.f32 %v6058, %v6224
        %6226 = vmatmul.f32.gmra.mxu0 %v5526
        %v6227 = vpop.f32.mrf.mxu0
        %v6228 = vadd.f32 %v6061, %v6227
        %6229 = vmatmul.f32.gmra.mxu0 %v5529
        %v6230 = vpop.f32.mrf.mxu0
        %v6231 = vadd.f32 %v6064, %v6230
        %6232 = vmatmul.f32.gmra.mxu0 %v5540
        %v6233 = vpop.f32.mrf.mxu0
        %v6234 = vadd.f32 %v6067, %v6233
        %6235 = vmatmul.f32.gmra.mxu0 %v5543
        %v6236 = vpop.f32.mrf.mxu0
        %v6237 = vadd.f32 %v6070, %v6236
        %6238 = vmatmul.f32.gmra.mxu0 %v5554
        %v6239 = vpop.f32.mrf.mxu0
        %v6240 = vadd.f32 %v6073, %v6239
        %6241 = vmatmul.f32.gmra.mxu0 %v5557
        %v6242 = vpop.f32.mrf.mxu0
        %v6243 = vadd.f32 %v6076, %v6242
        %6244 = vmatmul.f32.gmra.mxu0 %v5568
        %v6245 = vpop.f32.mrf.mxu0
        %v6246 = vadd.f32 %v6079, %v6245
        %6247 = vmatmul.f32.gmra.mxu0 %v5571
        %v6248 = vpop.f32.mrf.mxu0
        %v6249 = vadd.f32 %v6082, %v6248
        %6250 = vmatmul.f32.gmra.mxu0 %v5582
        %v6251 = vpop.f32.mrf.mxu0
        %v6252 = vadd.f32 %v6085, %v6251
        %6253 = vmatmul.f32.gmra.mxu0 %v5585
        %v6254 = vpop.f32.mrf.mxu0
        %v6255 = vadd.f32 %v6088, %v6254
        %6256 = vmatmul.f32.gmra.mxu0 %v5596
        %v6257 = vpop.f32.mrf.mxu0
        %v6258 = vadd.f32 %v6091, %v6257
        %6259 = vmatmul.f32.gmra.mxu0 %v5599
        %v6260 = vpop.f32.mrf.mxu0
        %v6261 = vadd.f32 %v6094, %v6260
        %6262 = vmatmul.f32.gmra.mxu0 %v5610
        %v6263 = vpop.f32.mrf.mxu0
        %v6264 = vadd.f32 %v6097, %v6263
        %6265 = vmatmul.f32.gmra.mxu0 %v5613
        %v6266 = vpop.f32.mrf.mxu0
        %v6267 = vadd.f32 %v6100, %v6266
        %6268 = vmatmul.f32.gmra.mxu0 %v5624
        %v6269 = vpop.f32.mrf.mxu0
        %v6270 = vadd.f32 %v6103, %v6269
        %6271 = vmatmul.f32.gmra.mxu0 %v5627
        %v6272 = vpop.f32.mrf.mxu0
        %v6273 = vadd.f32 %v6106, %v6272
        %6274 = vmatmul.f32.gmra.mxu0 %v5638
        %v6275 = vpop.f32.mrf.mxu0
        %v6276 = vadd.f32 %v6109, %v6275
        %6277 = vmatmul.f32.gmra.mxu0 %v5641
        %v6278 = vpop.f32.mrf.mxu0
        %v6279 = vadd.f32 %v6112, %v6278
        %6280 = vmatmul.f32.gmra.mxu0 %v5652
        %v6281 = vpop.f32.mrf.mxu0
        %v6282 = vadd.f32 %v6115, %v6281
        %6283 = vmatmul.f32.gmra.mxu0 %v5655
        %v6284 = vpop.f32.mrf.mxu0
        %v6285 = vadd.f32 %v6118, %v6284
        %6286 = vmatmul.f32.gmra.mxu0 %v5666
        %v6287 = vpop.f32.mrf.mxu0
        %v6288 = vadd.f32 %v6121, %v6287
        %6289 = vmatmul.f32.gmra.mxu0 %v5669
        %v6290 = vpop.f32.mrf.mxu0
        %v6291 = vadd.f32 %v6124, %v6290
        %6292 = vmatmul.f32.gmra.mxu0 %v5680
        %v6293 = vpop.f32.mrf.mxu0
        %v6294 = vadd.f32 %v6127, %v6293
        %6295 = vmatmul.f32.gmra.mxu0 %v5683
        %v6296 = vpop.f32.mrf.mxu0
        %v6297 = vadd.f32 %v6130, %v6296
        %6298 = vmatmul.f32.gmra.mxu0 %v5694
        %v6299 = vpop.f32.mrf.mxu0
        %v6300 = vadd.f32 %v6133, %v6299
        %6301 = vmatmul.f32.gmra.mxu0 %v5697
        %v6302 = vpop.f32.mrf.mxu0
        %v6303 = vadd.f32 %v6136, %v6302
        %6304 = vmatmul.f32.gmra.mxu0 %v5708
        %v6305 = vpop.f32.mrf.mxu0
        %v6306 = vadd.f32 %v6139, %v6305
        %6307 = vmatmul.f32.gmra.mxu0 %v5711
        %v6308 = vpop.f32.mrf.mxu0
        %v6309 = vadd.f32 %v6142, %v6308
        %6310 = vmatmul.f32.gmra.mxu0 %v5722
        %v6311 = vpop.f32.mrf.mxu0
        %v6312 = vadd.f32 %v6145, %v6311
        %6313 = vmatmul.f32.gmra.mxu0 %v5725
        %v6314 = vpop.f32.mrf.mxu0
        %v6315 = vadd.f32 %v6148, %v6314
        %6316 = vmatmul.f32.gmra.mxu0 %v5736
        %v6317 = vpop.f32.mrf.mxu0
        %v6318 = vadd.f32 %v6151, %v6317
        %6319 = vmatmul.f32.gmra.mxu0 %v5739
        %v6320 = vpop.f32.mrf.mxu0
        %v6321 = vadd.f32 %v6154, %v6320
        %6322 = vmatmul.f32.gmra.mxu0 %v5750
        %v6323 = vpop.f32.mrf.mxu0
        %v6324 = vadd.f32 %v6157, %v6323
        %6325 = vmatmul.f32.gmra.mxu0 %v5753
        %v6326 = vpop.f32.mrf.mxu0
        %v6327 = vadd.f32 %v6160, %v6326
        %6328 = vmatmul.f32.gmra.mxu0 %v5764
        %v6329 = vpop.f32.mrf.mxu0
        %v6330 = vadd.f32 %v6163, %v6329
        %6331 = vmatmul.f32.gmra.mxu0 %v5767
        %v6332 = vpop.f32.mrf.mxu0
        %v6333 = vadd.f32 %v6166, %v6332
        %6334 = vmatmul.f32.gmra.mxu0 %v5778
        %v6335 = vpop.f32.mrf.mxu0
        %v6336 = vadd.f32 %v6169, %v6335
        %6337 = vmatmul.f32.gmra.mxu0 %v5781
        %v6338 = vpop.f32.mrf.mxu0
        %v6339 = vadd.f32 %v6172, %v6338
        %6340 = vmatmul.f32.gmra.mxu0 %v5792
        %v6341 = vpop.f32.mrf.mxu0
        %v6342 = vadd.f32 %v6175, %v6341
        %6343 = vmatmul.f32.gmra.mxu0 %v5795
        %v6344 = vpop.f32.mrf.mxu0
        %v6345 = vadd.f32 %v6178, %v6344
        %6346 = vmatmul.f32.gmra.mxu0 %v5806
        %v6347 = vpop.f32.mrf.mxu0
        %v6348 = vadd.f32 %v6181, %v6347
        %6349 = vmatmul.f32.gmra.mxu0 %v5809
        %v6350 = vpop.f32.mrf.mxu0
        %v6351 = vadd.f32 %v6184, %v6350
        %6352 = vmatmul.f32.gmra.mxu0 %v5820
        %v6353 = vpop.f32.mrf.mxu0
        %v6354 = vadd.f32 %v6187, %v6353
        %6355 = vmatmul.f32.gmra.mxu0 %v5823
        %v6356 = vpop.f32.mrf.mxu0
        %v6357 = vadd.f32 %v6190, %v6356
        %6358 = vdwg.mxu0
        %6359 = vmatpush.msra.mxu0 0.0
        %6360 = vmatpush.msra.mxu0 0.0
        %6361 = vmatpush.msra.mxu0 0.0
        %6362 = vmatpush.msra.mxu0 0.0
        %6363 = vmatpush.msra.mxu0 0.0
        %6364 = vmatpush.msra.mxu0 0.0
        %6365 = vmatpush.msra.mxu0 0.0
        %6366 = vmatpush.msra.mxu0 0.0
        %6367 = vmatpush.msra.mxu0 0.0
        %6368 = vmatpush.msra.mxu0 0.0
        %6369 = vmatpush.msra.mxu0 0.0
        %6370 = vmatpush.msra.mxu0 0.0
        %6371 = vmatpush.msra.mxu0 %v5463
        %6372 = vmatpush.msra.mxu0 %v5462
        %6373 = vmatpush.msra.mxu0 %v5461
        %6374 = vmatpush.msra.mxu0 %v5460
        %6375 = vmatmul.f32.gmra.mxu0 %v5925
        %v6376 = vpop.f32.mrf.mxu0
        %v6377 = vadd.f32 %v6210, %v6376
        %6378 = vmatmul.f32.gmra.mxu0 %v5927
        %v6379 = vpop.f32.mrf.mxu0
        %v6380 = vadd.f32 %v6213, %v6379
        %6381 = vmatmul.f32.gmra.mxu0 %v5929
        %v6382 = vpop.f32.mrf.mxu0
        %v6383 = vadd.f32 %v6216, %v6382
        %6384 = vmatmul.f32.gmra.mxu0 %v5931
        %v6385 = vpop.f32.mrf.mxu0
        %v6386 = vadd.f32 %v6219, %v6385
        %6387 = vmatmul.f32.gmra.mxu0 %v5933
        %v6388 = vpop.f32.mrf.mxu0
        %v6389 = vadd.f32 %v6222, %v6388
        %6390 = vmatmul.f32.gmra.mxu0 %v5935
        %v6391 = vpop.f32.mrf.mxu0
        %v6392 = vadd.f32 %v6225, %v6391
        %6393 = vmatmul.f32.gmra.mxu0 %v5937
        %v6394 = vpop.f32.mrf.mxu0
        %v6395 = vadd.f32 %v6228, %v6394
        %6396 = vmatmul.f32.gmra.mxu0 %v5939
        %v6397 = vpop.f32.mrf.mxu0
        %v6398 = vadd.f32 %v6231, %v6397
        %6399 = vmatmul.f32.gmra.mxu0 %v5941
        %v6400 = vpop.f32.mrf.mxu0
        %v6401 = vadd.f32 %v6234, %v6400
        %6402 = vmatmul.f32.gmra.mxu0 %v5943
        %v6403 = vpop.f32.mrf.mxu0
        %v6404 = vadd.f32 %v6237, %v6403
        %6405 = vmatmul.f32.gmra.mxu0 %v5945
        %v6406 = vpop.f32.mrf.mxu0
        %v6407 = vadd.f32 %v6240, %v6406
        %6408 = vmatmul.f32.gmra.mxu0 %v5947
        %v6409 = vpop.f32.mrf.mxu0
        %v6410 = vadd.f32 %v6243, %v6409
        %6411 = vmatmul.f32.gmra.mxu0 %v5949
        %v6412 = vpop.f32.mrf.mxu0
        %v6413 = vadd.f32 %v6246, %v6412
        %6414 = vmatmul.f32.gmra.mxu0 %v5951
        %v6415 = vpop.f32.mrf.mxu0
        %v6416 = vadd.f32 %v6249, %v6415
        %6417 = vmatmul.f32.gmra.mxu0 %v5953
        %v6418 = vpop.f32.mrf.mxu0
        %v6419 = vadd.f32 %v6252, %v6418
        %6420 = vmatmul.f32.gmra.mxu0 %v5955
        %v6421 = vpop.f32.mrf.mxu0
        %v6422 = vadd.f32 %v6255, %v6421
        %6423 = vmatmul.f32.gmra.mxu0 %v5957
        %v6424 = vpop.f32.mrf.mxu0
        %v6425 = vadd.f32 %v6258, %v6424
        %6426 = vmatmul.f32.gmra.mxu0 %v5959
        %v6427 = vpop.f32.mrf.mxu0
        %v6428 = vadd.f32 %v6261, %v6427
        %6429 = vmatmul.f32.gmra.mxu0 %v5961
        %v6430 = vpop.f32.mrf.mxu0
        %v6431 = vadd.f32 %v6264, %v6430
        %6432 = vmatmul.f32.gmra.mxu0 %v5963
        %v6433 = vpop.f32.mrf.mxu0
        %v6434 = vadd.f32 %v6267, %v6433
        %6435 = vmatmul.f32.gmra.mxu0 %v5965
        %v6436 = vpop.f32.mrf.mxu0
        %v6437 = vadd.f32 %v6270, %v6436
        %6438 = vmatmul.f32.gmra.mxu0 %v5967
        %v6439 = vpop.f32.mrf.mxu0
        %v6440 = vadd.f32 %v6273, %v6439
        %6441 = vmatmul.f32.gmra.mxu0 %v5969
        %v6442 = vpop.f32.mrf.mxu0
        %v6443 = vadd.f32 %v6276, %v6442
        %6444 = vmatmul.f32.gmra.mxu0 %v5971
        %v6445 = vpop.f32.mrf.mxu0
        %v6446 = vadd.f32 %v6279, %v6445
        %6447 = vmatmul.f32.gmra.mxu0 %v5973
        %v6448 = vpop.f32.mrf.mxu0
        %v6449 = vadd.f32 %v6282, %v6448
        %6450 = vmatmul.f32.gmra.mxu0 %v5975
        %v6451 = vpop.f32.mrf.mxu0
        %v6452 = vadd.f32 %v6285, %v6451
        %6453 = vmatmul.f32.gmra.mxu0 %v5977
        %v6454 = vpop.f32.mrf.mxu0
        %v6455 = vadd.f32 %v6288, %v6454
        %6456 = vmatmul.f32.gmra.mxu0 %v5979
        %v6457 = vpop.f32.mrf.mxu0
        %v6458 = vadd.f32 %v6291, %v6457
        %6459 = vmatmul.f32.gmra.mxu0 %v5981
        %v6460 = vpop.f32.mrf.mxu0
        %v6461 = vadd.f32 %v6294, %v6460
        %6462 = vmatmul.f32.gmra.mxu0 %v5983
        %v6463 = vpop.f32.mrf.mxu0
        %v6464 = vadd.f32 %v6297, %v6463
        %6465 = vmatmul.f32.gmra.mxu0 %v5985
        %v6466 = vpop.f32.mrf.mxu0
        %v6467 = vadd.f32 %v6300, %v6466
        %6468 = vmatmul.f32.gmra.mxu0 %v5987
        %v6469 = vpop.f32.mrf.mxu0
        %v6470 = vadd.f32 %v6303, %v6469
        %6471 = vmatmul.f32.gmra.mxu0 %v5989
        %v6472 = vpop.f32.mrf.mxu0
        %v6473 = vadd.f32 %v6306, %v6472
        %6474 = vmatmul.f32.gmra.mxu0 %v5991
        %v6475 = vpop.f32.mrf.mxu0
        %v6476 = vadd.f32 %v6309, %v6475
        %6477 = vmatmul.f32.gmra.mxu0 %v5993
        %v6478 = vpop.f32.mrf.mxu0
        %v6479 = vadd.f32 %v6312, %v6478
        %6480 = vmatmul.f32.gmra.mxu0 %v5995
        %v6481 = vpop.f32.mrf.mxu0
        %v6482 = vadd.f32 %v6315, %v6481
        %6483 = vmatmul.f32.gmra.mxu0 %v5997
        %v6484 = vpop.f32.mrf.mxu0
        %v6485 = vadd.f32 %v6318, %v6484
        %6486 = vmatmul.f32.gmra.mxu0 %v5999
        %v6487 = vpop.f32.mrf.mxu0
        %v6488 = vadd.f32 %v6321, %v6487
        %6489 = vmatmul.f32.gmra.mxu0 %v6001
        %v6490 = vpop.f32.mrf.mxu0
        %v6491 = vadd.f32 %v6324, %v6490
        %6492 = vmatmul.f32.gmra.mxu0 %v6003
        %v6493 = vpop.f32.mrf.mxu0
        %v6494 = vadd.f32 %v6327, %v6493
        %6495 = vmatmul.f32.gmra.mxu0 %v6005
        %v6496 = vpop.f32.mrf.mxu0
        %v6497 = vadd.f32 %v6330, %v6496
        %6498 = vmatmul.f32.gmra.mxu0 %v6007
        %v6499 = vpop.f32.mrf.mxu0
        %v6500 = vadd.f32 %v6333, %v6499
        %6501 = vmatmul.f32.gmra.mxu0 %v6009
        %v6502 = vpop.f32.mrf.mxu0
        %v6503 = vadd.f32 %v6336, %v6502
        %6504 = vmatmul.f32.gmra.mxu0 %v6011
        %v6505 = vpop.f32.mrf.mxu0
        %v6506 = vadd.f32 %v6339, %v6505
        %6507 = vmatmul.f32.gmra.mxu0 %v6013
        %v6508 = vpop.f32.mrf.mxu0
        %v6509 = vadd.f32 %v6342, %v6508
        %6510 = vmatmul.f32.gmra.mxu0 %v6015
        %v6511 = vpop.f32.mrf.mxu0
        %v6512 = vadd.f32 %v6345, %v6511
        %6513 = vmatmul.f32.gmra.mxu0 %v6017
        %v6514 = vpop.f32.mrf.mxu0
        %v6515 = vadd.f32 %v6348, %v6514
        %6516 = vmatmul.f32.gmra.mxu0 %v6019
        %v6517 = vpop.f32.mrf.mxu0
        %v6518 = vadd.f32 %v6351, %v6517
        %6519 = vmatmul.f32.gmra.mxu0 %v6021
        %v6520 = vpop.f32.mrf.mxu0
        %v6521 = vadd.f32 %v6354, %v6520
        %6522 = vmatmul.f32.gmra.mxu0 %v6023
        %v6523 = vpop.f32.mrf.mxu0
        %v6524 = vadd.f32 %v6357, %v6523
        %6525 = vdwg.mxu0
        %6526 = vst [vmem:[%s163] sm:$0xff] %v6377
        %6527 = vst [vmem:[%s163 + $0x8] sm:$0xff] %v6380
        %6528 = vst [vmem:[%s163 + $0x10] sm:$0xff] %v6383
        %6529 = vst [vmem:[%s163 + $0x18] sm:$0xff] %v6386
        %6530 = vst [vmem:[%s163 + $0x20] sm:$0xff] %v6389
        %6531 = vst [vmem:[%s163 + $0x28] sm:$0xff] %v6392
        %6532 = vst [vmem:[%s163 + $0x30] sm:$0xff] %v6395
        %6533 = vst [vmem:[%s163 + $0x38] sm:$0xff] %v6398
        %6534 = vst [vmem:[%s163 + $0x40] sm:$0xff] %v6401
        %6535 = vst [vmem:[%s163 + $0x48] sm:$0xff] %v6404
        %6536 = vst [vmem:[%s163 + $0x50] sm:$0xff] %v6407
        %6537 = vst [vmem:[%s163 + $0x58] sm:$0xff] %v6410
        %6538 = vst [vmem:[%s163 + $0x60] sm:$0xff] %v6413
        %6539 = vst [vmem:[%s163 + $0x68] sm:$0xff] %v6416
        %6540 = vst [vmem:[%s163 + $0x70] sm:$0xff] %v6419
        %6541 = vst [vmem:[%s163 + $0x78] sm:$0xff] %v6422
        %6542 = vst [vmem:[%s163 + $0x80] sm:$0xff] %v6425
        %6543 = vst [vmem:[%s163 + $0x88] sm:$0xff] %v6428
        %6544 = vst [vmem:[%s163 + $0x90] sm:$0xff] %v6431
        %6545 = vst [vmem:[%s163 + $0x98] sm:$0xff] %v6434
        %6546 = vst [vmem:[%s163 + $0xa0] sm:$0xff] %v6437
        %6547 = vst [vmem:[%s163 + $0xa8] sm:$0xff] %v6440
        %6548 = vst [vmem:[%s163 + $0xb0] sm:$0xff] %v6443
        %6549 = vst [vmem:[%s163 + $0xb8] sm:$0xff] %v6446
        %6550 = vst [vmem:[%s163 + $0xc0] sm:$0xff] %v6449
        %6551 = vst [vmem:[%s163 + $0xc8] sm:$0xff] %v6452
        %6552 = vst [vmem:[%s163 + $0xd0] sm:$0xff] %v6455
        %6553 = vst [vmem:[%s163 + $0xd8] sm:$0xff] %v6458
        %6554 = vst [vmem:[%s163 + $0xe0] sm:$0xff] %v6461
        %6555 = vst [vmem:[%s163 + $0xe8] sm:$0xff] %v6464
        %6556 = vst [vmem:[%s163 + $0xf0] sm:$0xff] %v6467
        %6557 = vst [vmem:[%s163 + $0xf8] sm:$0xff] %v6470
        %6558 = vst [vmem:[%s163 + $0x100] sm:$0xff] %v6473
        %6559 = vst [vmem:[%s163 + $0x108] sm:$0xff] %v6476
        %6560 = vst [vmem:[%s163 + $0x110] sm:$0xff] %v6479
        %6561 = vst [vmem:[%s163 + $0x118] sm:$0xff] %v6482
        %6562 = vst [vmem:[%s163 + $0x120] sm:$0xff] %v6485
        %6563 = vst [vmem:[%s163 + $0x128] sm:$0xff] %v6488
        %6564 = vst [vmem:[%s163 + $0x130] sm:$0xff] %v6491
        %6565 = vst [vmem:[%s163 + $0x138] sm:$0xff] %v6494
        %6566 = vst [vmem:[%s163 + $0x140] sm:$0xff] %v6497
        %6567 = vst [vmem:[%s163 + $0x148] sm:$0xff] %v6500
        %6568 = vst [vmem:[%s163 + $0x150] sm:$0xff] %v6503
        %6569 = vst [vmem:[%s163 + $0x158] sm:$0xff] %v6506
        %6570 = vst [vmem:[%s163 + $0x160] sm:$0xff] %v6509
        %6571 = vst [vmem:[%s163 + $0x168] sm:$0xff] %v6512
        %6572 = vst [vmem:[%s163 + $0x170] sm:$0xff] %v6515
        %6573 = vst [vmem:[%s163 + $0x178] sm:$0xff] %v6518
        %6574 = vst [vmem:[%s163 + $0x180] sm:$0xff] %v6521
        %6575 = vst [vmem:[%s163 + $0x188] sm:$0xff] %v6524
        %s6576 = sand.u32 %s93, 1
        %s6577 = scalar_lea.sflag [#allocation4], %s6576
        %s6578 = sand.u32 %s93, 1
        %s6579 = smul.addr %s6578, 400
        %s6580 = scalar_lea.vmem [#allocation3], %s6579
        // Predicated region
        $region33: #{tpu_custom_call.1} parent=31 // pred_check
          %p6581 = pneg %p103
        $region34: #{tpu_custom_call.1} parent=31 // pred_check_branch
          %6583 = sbr.rel (%p6581) target = $region36
        $region35: #{tpu_custom_call.1} parent=31 // pred_region
          %6585 = vsyncadd %s6577, 0
          %s6586 = smul.addr %s17, 50
          %s6587 = smul.addr %s6586, 8
          %s6588 = scalar_lea.hbm %s3, %s6587
          %s6589 = sshll.u32 %s6580, 4
          %s6590 = int_to_ptr.vmem [resolvable:$true] %s6589
          %s6591 = sshll.u32 %s6588, 4
          %s6592 = int_to_ptr.hbm [resolvable:$true] %s6591
          %6597 = dma.vmem_to_hbm [thread:$0]  %s6590, 6400, %s6592, %s6577, 128, 128, 8
        $region36: #{tpu_custom_call.1} parent=31 // pred_fallthru
          _
      $region32: #{tpu_custom_call.1} parent=5 // pred_fallthru
        _
      %p6598 = scmp.le.s32.totalorder 2, %s12
      // Predicated region
      $region37: #{tpu_custom_call.1} parent=5 // pred_check
        %p6599 = pneg %p6598
      $region38: #{tpu_custom_call.1} parent=5 // pred_check_branch
        %6601 = sbr.rel (%p6599) target = $region40
      $region39: #{tpu_custom_call.1} parent=5 // pred_region
        %s6602 = ssub.s32 %s12, 2
        // Predicated region
        $region41: #{tpu_custom_call.1} parent=39 // pred_check
          %p6603 = pneg %p109
        $region42: #{tpu_custom_call.1} parent=39 // pred_check_branch
          %6605 = sbr.rel (%p6603) target = $region44
        $region43: #{tpu_custom_call.1} parent=39 // pred_region
          %s6606 = sand.u32 %s94, 1
          %s6607 = scalar_lea.sflag [#allocation4], %s6606
          %s6608 = sand.u32 %s94, 1
          %s6609 = smul.addr %s6608, 400
          %s6610 = scalar_lea.vmem [#allocation3], %s6609
          %6612 = dma.done %s6607, 6400
        $region44: #{tpu_custom_call.1} parent=39 // pred_fallthru
          _
      $region40: #{tpu_custom_call.1} parent=5 // pred_fallthru
        _
    $region6: #{tpu_custom_call.1} parent=1 // loop_footer
      %s16 = sadd.s32 1, %s12
    $region7: #{tpu_custom_call.1} parent=1 // loop_footer_branch
      %11 = sbr.rel target = $region3
    $region8: #{tpu_custom_call.1} parent=1 // loop_exit
      _
    %6613 = vsyncpa [#allocation4], 1
    %s6614 = scalar_lea.sflag [#allocation4], 1
    %6615 = vsyncpa %s6614, 1

</llo_original>
